<compile_context>
chip_gen: v6e
topology: v6e:2x2x1
jax: 0.10.0
libtpu: 0.0.40
codegen_flags: <defaults>
</compile_context>

<pallas_src>
import functools

import jax
import jax.numpy as jnp
from jax.experimental import pallas as pl
from jax.experimental.pallas import tpu as pltpu

HEAD_LANES = 128                      # packed dueling-head lane width
VMEM_LIMIT = 32 * 1024 * 1024


def _round_up(x, m):
    return (x + m - 1) // m * m


# ---------------------------------------------------------------------------
# Kernel 1: tiled  y = relu(x @ w + b)   (all three conv layers via im2col)
# ---------------------------------------------------------------------------
def _mm_bias_relu_kernel(x_ref, w_ref, b_ref, o_ref):
    acc = jnp.dot(x_ref[...], w_ref[...], preferred_element_type=jnp.float32)
    o_ref[...] = jnp.maximum(acc + b_ref[...], 0.0).astype(o_ref.dtype)


def conv_matmul(x, w, b):
    """x:(M,K) bf16 patches, w:(K,N) bf16, b:(1,N) f32  ->  (M,N) bf16."""
    M, K = x.shape
    K2, N = w.shape
    assert K == K2
    # >= 2 M-tiles whenever possible (v7x: both TensorCores get work), tile is
    # a multiple of 16 rows (bf16 sublane packing), capped at 512 rows.
    tile_m = min(512, _round_up(pl.cdiv(M, 2), 16))
    grid_m = pl.cdiv(M, tile_m)
    cost = pl.CostEstimate(
        flops=2 * M * K * N, transcendentals=0,
        bytes_accessed=M * K * 2 + K * N * 2 + N * 4 + M * N * 2)
    return pl.pallas_call(
        _mm_bias_relu_kernel,
        out_shape=jax.ShapeDtypeStruct((M, N), jnp.bfloat16),
        grid=(grid_m,),
        in_specs=[pl.BlockSpec((tile_m, K), lambda i: (i, 0)),
                  pl.BlockSpec((K, N), lambda i: (0, 0)),     # weight resident
                  pl.BlockSpec((1, N), lambda i: (0, 0))],    # bias resident
        out_specs=pl.BlockSpec((tile_m, N), lambda i: (i, 0)),
        compiler_params=pltpu.CompilerParams(
            dimension_semantics=("parallel",),
            vmem_limit_bytes=VMEM_LIMIT),
        cost_estimate=cost,
    )(x, w, b)


# ---------------------------------------------------------------------------
# Kernel 2: fused FC stack + packed dueling head, gridded over the 2 streams.
#   j = 0:  h = relu(x @ fc1_a + b_a);  head[0] = h @ [fc3 | 0...]  -> V lane 0
#   j = 1:  h = relu(x @ fc1_b + b_b);  head[1] = h @ [fc2 | 0...]  -> A lanes
# Both streams are independent -> "parallel" grid (2 TCs on v7x, weight-half
# double-buffering on v5e/v6e).  Dueling combine happens on (2,B,128) outside.
# ---------------------------------------------------------------------------
def _fc_head_kernel(x_ref, w1_ref, b1_ref, wh_ref, bh_ref, out_ref):
    h = jnp.dot(x_ref[...], w1_ref[...], preferred_element_type=jnp.float32)
    h = jnp.maximum(h + b1_ref[0], 0.0)                       # (B, 512) f32
    head = jnp.dot(h.astype(jnp.bfloat16), wh_ref[0],
                   preferred_element_type=jnp.float32) + bh_ref[0]
    out_ref[0] = head.astype(out_ref.dtype)


def fc_dueling_head(x, w1, b1, wh, bh):
    """x:(B,3136) bf16, w1:(3136,1024) bf16, b1:(2,1,512) f32,
    wh:(2,512,128) bf16, bh:(2,1,128) f32 -> (2,B,128) f32 partial heads."""
    B, K = x.shape
    H = w1.shape[1]
    Hh = H // 2
    HW = wh.shape[-1]
    cost = pl.CostEstimate(
        flops=2 * B * (K * H + H * HW), transcendentals=0,
        bytes_accessed=(x.size * 2 + w1.size * 2 + b1.size * 4
                        + wh.size * 2 + bh.size * 4 + 2 * B * HW * 4))
    return pl.pallas_call(
        _fc_head_kernel,
        out_shape=jax.ShapeDtypeStruct((2, B, HW), jnp.float32),
        grid=(2,),
        in_specs=[pl.BlockSpec((B, K), lambda j: (0, 0)),         # activations
                  pl.BlockSpec((K, Hh), lambda j: (0, j)),        # fc1 half
                  pl.BlockSpec((1, 1, Hh), lambda j: (j, 0, 0)),  # fc1 bias
                  pl.BlockSpec((1, Hh, HW), lambda j: (j, 0, 0)), # head weight
                  pl.BlockSpec((1, 1, HW), lambda j: (j, 0, 0))], # head bias
        out_specs=pl.BlockSpec((1, B, HW), lambda j: (j, 0, 0)),
        compiler_params=pltpu.CompilerParams(
            dimension_semantics=("parallel",),
            vmem_limit_bytes=VMEM_LIMIT),
        cost_estimate=cost,
    )(x, w1, b1, wh, bh)


# ---------------------------------------------------------------------------
# Plain-JAX glue: NHWC im2col (feature order = (kh, kw, c), matching the
# prepared weight layout).  TODO(synk): move inside the conv kernels.
# ---------------------------------------------------------------------------
def im2col_nhwc(x, k, stride):
    """x:(B,H,W,C) -> (B*OH*OW, k*k*C), feature order (KH, KW, C)."""
    B, H, W, C = x.shape
    OH = (H - k) // stride + 1
    OW = (W - k) // stride + 1
    cols = []
    for kh in range(k):
        for kw in range(k):
            cols.append(x[:, kh:kh + stride * OH:stride,
                          kw:kw + stride * OW:stride, :])      # (B,OH,OW,C)
    p = jnp.stack(cols, axis=3)                                 # (B,OH,OW,k*k,C)
    return p.reshape(B * OH * OW, k * k * C), (B, OH, OW)


# ---------------------------------------------------------------------------
# Parameter construction (PyTorch layout, synthetic) + one-time preparation.
# ---------------------------------------------------------------------------
def _xavier_normal(key, shape, fan_in, fan_out):
    std = (2.0 / (fan_in + fan_out)) ** 0.5
    return std * jax.random.normal(key, shape, dtype=jnp.float32)


def _bias_uniform(key, shape, fan_in):
    bound = 1.0 / (fan_in ** 0.5)
    return jax.random.uniform(key, shape, jnp.float32, -bound, bound)


def init_params(key, input_dims, n_actions):
    ks = jax.random.split(key, 14)
    p = {}
    p['w1'] = _xavier_normal(ks[0], (32, input_dims, 8, 8),
                             input_dims * 64, 32 * 64)
    p['b1'] = _bias_uniform(ks[1], (32,), input_dims * 64)
    p['w2'] = _xavier_normal(ks[2], (64, 32, 4, 4), 32 * 16, 64 * 16)
    p['b2'] = _bias_uniform(ks[3], (64,), 32 * 16)
    p['w3'] = _xavier_normal(ks[4], (64, 64, 3, 3), 64 * 9, 64 * 9)
    p['b3'] = _bias_uniform(ks[5], (64,), 64 * 9)
    flat = 64 * 7 * 7
    p['fc1_a_w'] = _xavier_normal(ks[6], (flat, 512), flat, 512)   # (in, out)
    p['fc1_a_b'] = _bias_uniform(ks[7], (512,), flat)
    p['fc1_b_w'] = _xavier_normal(ks[8], (flat, 512), flat, 512)
    p['fc1_b_b'] = _bias_uniform(ks[9], (512,), flat)
    p['fc2_w'] = _xavier_normal(ks[10], (512, n_actions), 512, n_actions)
    p['fc2_b'] = _bias_uniform(ks[11], (n_actions,), 512)
    p['fc3_w'] = _xavier_normal(ks[12], (512, 1), 512, 1)
    p['fc3_b'] = _bias_uniform(ks[13], (1,), 512)
    return p


def _prep_conv(w, b):
    """torch w:(OC,IC,KH,KW) -> (KH*KW*IC, OC) bf16  (no channel padding)."""
    OC, IC, KH, KW = w.shape
    wt = jnp.transpose(w, (2, 3, 1, 0)).reshape(KH * KW * IC, OC)
    return wt.astype(jnp.bfloat16), b.reshape(1, OC).astype(jnp.float32)


def _prep_fc1(w):
    """torch-order rows (c*49 + h*7 + w) -> rows ordered (h, w, c) — matches
    the NHWC flatten of the conv3 output.  3136 real rows, no zero padding."""
    w = w.reshape(64, 7, 7, 512)
    w = jnp.transpose(w, (1, 2, 0, 3))                         # (h, w, c, out)
    return w.reshape(7 * 7 * 64, 512)


def prepare_params(p, n_actions):
    assert n_actions <= HEAD_LANES
    prep = {}
    prep['c1_w'], prep['c1_b'] = _prep_conv(p['w1'], p['b1'])
    prep['c2_w'], prep['c2_b'] = _prep_conv(p['w2'], p['b2'])
    prep['c3_w'], prep['c3_b'] = _prep_conv(p['w3'], p['b3'])
    # fused fc1: [fc1_a | fc1_b] on 3136 real rows -> (3136, 1024) bf16
    prep['fc1_w'] = jnp.concatenate(
        [_prep_fc1(p['fc1_a_w']), _prep_fc1(p['fc1_b_w'])],
        axis=1).astype(jnp.bfloat16)
    prep['fc1_b'] = jnp.stack([p['fc1_a_b'], p['fc1_b_b']]
                              )[:, None, :].astype(jnp.float32)   # (2,1,512)
    # packed head: stream 0 -> fc3 (V in lane 0), stream 1 -> fc2 (A lanes)
    wh = jnp.zeros((2, 512, HEAD_LANES), jnp.float32)
    wh = wh.at[0, :, 0:1].set(p['fc3_w'])
    wh = wh.at[1, :, :n_actions].set(p['fc2_w'])
    prep['head_w'] = wh.astype(jnp.bfloat16)
    bh = jnp.zeros((2, 1, HEAD_LANES), jnp.float32)
    bh = bh.at[0, 0, 0].set(p['fc3_b'][0])
    bh = bh.at[1, 0, :n_actions].set(p['fc2_b'])
    prep['head_b'] = bh
    return prep


# ---------------------------------------------------------------------------
# Forward pass (DUELING=True branch of the PyTorch forward)
# ---------------------------------------------------------------------------
@functools.partial(jax.jit, static_argnames=("n_actions",))
def cnn_forward(prep, x_nchw, *, n_actions):
    x = jnp.transpose(x_nchw, (0, 2, 3, 1)).astype(jnp.bfloat16)   # NHWC, once
    # conv1: k=8, s=4 -> (B,20,20,32)
    patches, (B, OH, OW) = im2col_nhwc(x, 8, 4)
    x = conv_matmul(patches, prep['c1_w'], prep['c1_b']).reshape(B, OH, OW, -1)
    # conv2: k=4, s=2 -> (B,9,9,64)
    patches, (B, OH, OW) = im2col_nhwc(x, 4, 2)
    x = conv_matmul(patches, prep['c2_w'], prep['c2_b']).reshape(B, OH, OW, -1)
    # conv3: k=3, s=1 -> (B*49, 64)
    patches, (B, OH, OW) = im2col_nhwc(x, 3, 1)
    x = conv_matmul(patches, prep['c3_w'], prep['c3_b'])
    x_flat = x.reshape(B, OH * OW * 64)                            # (B, 3136)
    # fused fc1_a/fc1_b + packed dueling head (parallel 2-stream grid)
    head = fc_dueling_head(x_flat, prep['fc1_w'], prep['fc1_b'],
                           prep['head_w'], prep['head_b'])         # (2,B,128)
    v = head[0, :, 0:1]                                            # fc3(x_a)
    a = head[1, :, :n_actions]                                     # fc2(x_b)
    return v + (a - jnp.mean(a, axis=1, keepdims=True))             # (B, A)


# ---------------------------------------------------------------------------
# Pure-f32 XLA reference (same math as the PyTorch forward, dueling branch)
# ---------------------------------------------------------------------------
def reference_forward(p, x):
    def conv(x, w, b, s):
        y = jax.lax.conv_general_dilated(
            x, w, (s, s), 'VALID',
            dimension_numbers=('NCHW', 'OIHW', 'NCHW'))
        return jax.nn.relu(y + b[None, :, None, None])
    x = x.astype(jnp.float32)
    x = conv(x, p['w1'], p['b1'], 4)
    x = conv(x, p['w2'], p['b2'], 2)
    x = conv(x, p['w3'], p['b3'], 1)
    x = x.reshape(x.shape[0], -1)                     # torch (c,h,w) flatten
    xa = jax.nn.relu(x @ p['fc1_a_w'] + p['fc1_a_b'])
    xb = jax.nn.relu(x @ p['fc1_b_w'] + p['fc1_b_b'])
    v = xa @ p['fc3_w'] + p['fc3_b']
    a = xb @ p['fc2_w'] + p['fc2_b']
    return v + (a - jnp.mean(a, axis=1, keepdims=True))


if __name__ == "__main__":
    key = jax.random.PRNGKey(0)
    k_params, k_x = jax.random.split(key)

    # Flatten is hard-coded to 64*7*7 in the module -> requires 84x84 input.
    B, C, H, W = 2, 4, 84, 84
    n_actions = 6

    raw_params = init_params(k_params, input_dims=C, n_actions=n_actions)
    prep = prepare_params(raw_params, n_actions)
    x = jax.random.normal(k_x, (B, C, H, W), dtype=jnp.float32)

    q = jax.block_until_ready(cnn_forward(prep, x, n_actions=n_actions))
    assert q.shape == (B, n_actions)
    assert bool(jnp.all(jnp.isfinite(q)))

    q_ref = jax.block_until_ready(reference_forward(raw_params, x))
    err = float(jnp.max(jnp.abs(q - q_ref)))
    assert err < 1e-1, f"mismatch vs f32 reference: max abs err = {err}"

    print("KERNEL_OK")
</pallas_src>

<mosaic_0001>
module attributes {stable_mosaic.version = 11 : i64} {
  func.func @_mm_bias_relu_kernel(%arg0: i32, %arg1: memref<400x256xbf16, #tpu.memory_space<vmem>>, %arg2: memref<256x32xbf16, #tpu.memory_space<vmem>>, %arg3: memref<1x32xf32, #tpu.memory_space<vmem>>, %arg4: memref<400x32xbf16, #tpu.memory_space<vmem>>) attributes {dimension_semantics = [#tpu.dimension_semantics<parallel>], iteration_bounds = array<i64: 2>, scalar_prefetch = 0 : i64, scratch_operands = 0 : i64, tpu.core_type = #tpu.core_type<tc>, window_params = [{transform_indices = @transform_0, window_bounds = array<i64: 400, 256>}, {pipeline_mode = #tpu.pipeline_mode<synchronous>, transform_indices = @transform_1, window_bounds = array<i64: 256, 32>}, {pipeline_mode = #tpu.pipeline_mode<synchronous>, transform_indices = @transform_2, window_bounds = array<i64: 1, 32>}, {transform_indices = @transform_3, window_bounds = array<i64: 400, 32>}]} {
    %c0 = arith.constant 0 : index
    %c0_0 = arith.constant 0 : index
    %0 = vector.load %arg1[%c0, %c0_0] : memref<400x256xbf16, #tpu.memory_space<vmem>>, vector<400x256xbf16>
    %c0_1 = arith.constant 0 : index
    %c0_2 = arith.constant 0 : index
    %1 = vector.load %arg2[%c0_1, %c0_2] : memref<256x32xbf16, #tpu.memory_space<vmem>>, vector<256x32xbf16>
    %cst = arith.constant dense<0.000000e+00> : vector<400x32xf32>
    %2 = tpu.matmul %0, %1, %cst {dimension_numbers = #tpu.dot_dimension_numbers<[1], [0], [0], [1], [0, 0, 1, 1], [], []>} : vector<400x256xbf16>, vector<256x32xbf16>, vector<400x32xf32> -> vector<400x32xf32>
    %c0_3 = arith.constant 0 : index
    %c0_4 = arith.constant 0 : index
    %3 = vector.load %arg3[%c0_3, %c0_4] : memref<1x32xf32, #tpu.memory_space<vmem>>, vector<1x32xf32>
    %4 = vector.broadcast %3 : vector<1x32xf32> to vector<400x32xf32>
    %5 = arith.addf %2, %4 : vector<400x32xf32>
    %cst_5 = arith.constant 0.000000e+00 : f32
    %6 = vector.broadcast %cst_5 : f32 to vector<400x32xf32>
    %7 = arith.maximumf %5, %6 : vector<400x32xf32>
    %8 = arith.truncf %7 : vector<400x32xf32> to vector<400x32xbf16>
    %c0_6 = arith.constant 0 : index
    %c0_7 = arith.constant 0 : index
    %9 = vector.load %arg4[%c0_6, %c0_7] : memref<400x32xbf16, #tpu.memory_space<vmem>>, vector<400x32xbf16>
    tpu.vector_store %arg4[%c0_6, %c0_7], %8 {strides = array<i32>} : memref<400x32xbf16, #tpu.memory_space<vmem>>, vector<400x32xbf16>,
    return
  }
  func.func @transform_0(%arg0: i32) -> (i32, i32) {
    %c0_i32 = arith.constant 0 : i32
    %c0_i32_0 = arith.constant 0 : i32
    return %arg0, %c0_i32 : i32, i32
  }
  func.func @transform_1(%arg0: i32) -> (i32, i32) {
    %c0_i32 = arith.constant 0 : i32
    %c0_i32_0 = arith.constant 0 : i32
    %c0_i32_1 = arith.constant 0 : i32
    return %c0_i32, %c0_i32_0 : i32, i32
  }
  func.func @transform_2(%arg0: i32) -> (i32, i32) {
    %c0_i32 = arith.constant 0 : i32
    %c0_i32_0 = arith.constant 0 : i32
    %c0_i32_1 = arith.constant 0 : i32
    return %c0_i32, %c0_i32_0 : i32, i32
  }
  func.func @transform_3(%arg0: i32) -> (i32, i32) {
    %c0_i32 = arith.constant 0 : i32
    %c0_i32_0 = arith.constant 0 : i32
    return %arg0, %c0_i32 : i32, i32
  }
}

module attributes {stable_mosaic.version = 11 : i64} {
  func.func @_mm_bias_relu_kernel(%arg0: i32, %arg1: memref<96x512xbf16, #tpu.memory_space<vmem>>, %arg2: memref<512x64xbf16, #tpu.memory_space<vmem>>, %arg3: memref<1x64xf32, #tpu.memory_space<vmem>>, %arg4: memref<96x64xbf16, #tpu.memory_space<vmem>>) attributes {dimension_semantics = [#tpu.dimension_semantics<parallel>], iteration_bounds = array<i64: 2>, scalar_prefetch = 0 : i64, scratch_operands = 0 : i64, tpu.core_type = #tpu.core_type<tc>, window_params = [{transform_indices = @transform_0, window_bounds = array<i64: 96, 512>}, {pipeline_mode = #tpu.pipeline_mode<synchronous>, transform_indices = @transform_1, window_bounds = array<i64: 512, 64>}, {pipeline_mode = #tpu.pipeline_mode<synchronous>, transform_indices = @transform_2, window_bounds = array<i64: 1, 64>}, {transform_indices = @transform_3, window_bounds = array<i64: 96, 64>}]} {
    %c0 = arith.constant 0 : index
    %c0_0 = arith.constant 0 : index
    %0 = vector.load %arg1[%c0, %c0_0] : memref<96x512xbf16, #tpu.memory_space<vmem>>, vector<96x512xbf16>
    %c0_1 = arith.constant 0 : index
    %c0_2 = arith.constant 0 : index
    %1 = vector.load %arg2[%c0_1, %c0_2] : memref<512x64xbf16, #tpu.memory_space<vmem>>, vector<512x64xbf16>
    %cst = arith.constant dense<0.000000e+00> : vector<96x64xf32>
    %2 = tpu.matmul %0, %1, %cst {dimension_numbers = #tpu.dot_dimension_numbers<[1], [0], [0], [1], [0, 0, 1, 1], [], []>} : vector<96x512xbf16>, vector<512x64xbf16>, vector<96x64xf32> -> vector<96x64xf32>
    %c0_3 = arith.constant 0 : index
    %c0_4 = arith.constant 0 : index
    %3 = vector.load %arg3[%c0_3, %c0_4] : memref<1x64xf32, #tpu.memory_space<vmem>>, vector<1x64xf32>
    %4 = vector.broadcast %3 : vector<1x64xf32> to vector<96x64xf32>
    %5 = arith.addf %2, %4 : vector<96x64xf32>
    %cst_5 = arith.constant 0.000000e+00 : f32
    %6 = vector.broadcast %cst_5 : f32 to vector<96x64xf32>
    %7 = arith.maximumf %5, %6 : vector<96x64xf32>
    %8 = arith.truncf %7 : vector<96x64xf32> to vector<96x64xbf16>
    %c0_6 = arith.constant 0 : index
    %c0_7 = arith.constant 0 : index
    %9 = vector.load %arg4[%c0_6, %c0_7] : memref<96x64xbf16, #tpu.memory_space<vmem>>, vector<96x64xbf16>
    tpu.vector_store %arg4[%c0_6, %c0_7], %8 {strides = array<i32>} : memref<96x64xbf16, #tpu.memory_space<vmem>>, vector<96x64xbf16>,
    return
  }
  func.func @transform_0(%arg0: i32) -> (i32, i32) {
    %c0_i32 = arith.constant 0 : i32
    %c0_i32_0 = arith.constant 0 : i32
    return %arg0, %c0_i32 : i32, i32
  }
  func.func @transform_1(%arg0: i32) -> (i32, i32) {
    %c0_i32 = arith.constant 0 : i32
    %c0_i32_0 = arith.constant 0 : i32
    %c0_i32_1 = arith.constant 0 : i32
    return %c0_i32, %c0_i32_0 : i32, i32
  }
  func.func @transform_2(%arg0: i32) -> (i32, i32) {
    %c0_i32 = arith.constant 0 : i32
    %c0_i32_0 = arith.constant 0 : i32
    %c0_i32_1 = arith.constant 0 : i32
    return %c0_i32, %c0_i32_0 : i32, i32
  }
  func.func @transform_3(%arg0: i32) -> (i32, i32) {
    %c0_i32 = arith.constant 0 : i32
    %c0_i32_0 = arith.constant 0 : i32
    return %arg0, %c0_i32 : i32, i32
  }
}

module attributes {stable_mosaic.version = 11 : i64} {
  func.func @_mm_bias_relu_kernel(%arg0: i32, %arg1: memref<64x576xbf16, #tpu.memory_space<vmem>>, %arg2: memref<576x64xbf16, #tpu.memory_space<vmem>>, %arg3: memref<1x64xf32, #tpu.memory_space<vmem>>, %arg4: memref<64x64xbf16, #tpu.memory_space<vmem>>) attributes {dimension_semantics = [#tpu.dimension_semantics<parallel>], iteration_bounds = array<i64: 2>, scalar_prefetch = 0 : i64, scratch_operands = 0 : i64, tpu.core_type = #tpu.core_type<tc>, window_params = [{transform_indices = @transform_0, window_bounds = array<i64: 64, 576>}, {pipeline_mode = #tpu.pipeline_mode<synchronous>, transform_indices = @transform_1, window_bounds = array<i64: 576, 64>}, {pipeline_mode = #tpu.pipeline_mode<synchronous>, transform_indices = @transform_2, window_bounds = array<i64: 1, 64>}, {transform_indices = @transform_3, window_bounds = array<i64: 64, 64>}]} {
    %c0 = arith.constant 0 : index
    %c0_0 = arith.constant 0 : index
    %0 = vector.load %arg1[%c0, %c0_0] : memref<64x576xbf16, #tpu.memory_space<vmem>>, vector<64x576xbf16>
    %c0_1 = arith.constant 0 : index
    %c0_2 = arith.constant 0 : index
    %1 = vector.load %arg2[%c0_1, %c0_2] : memref<576x64xbf16, #tpu.memory_space<vmem>>, vector<576x64xbf16>
    %cst = arith.constant dense<0.000000e+00> : vector<64x64xf32>
    %2 = tpu.matmul %0, %1, %cst {dimension_numbers = #tpu.dot_dimension_numbers<[1], [0], [0], [1], [0, 0, 1, 1], [], []>} : vector<64x576xbf16>, vector<576x64xbf16>, vector<64x64xf32> -> vector<64x64xf32>
    %c0_3 = arith.constant 0 : index
    %c0_4 = arith.constant 0 : index
    %3 = vector.load %arg3[%c0_3, %c0_4] : memref<1x64xf32, #tpu.memory_space<vmem>>, vector<1x64xf32>
    %4 = vector.broadcast %3 : vector<1x64xf32> to vector<64x64xf32>
    %5 = arith.addf %2, %4 : vector<64x64xf32>
    %cst_5 = arith.constant 0.000000e+00 : f32
    %6 = vector.broadcast %cst_5 : f32 to vector<64x64xf32>
    %7 = arith.maximumf %5, %6 : vector<64x64xf32>
    %8 = arith.truncf %7 : vector<64x64xf32> to vector<64x64xbf16>
    %c0_6 = arith.constant 0 : index
    %c0_7 = arith.constant 0 : index
    %9 = vector.load %arg4[%c0_6, %c0_7] : memref<64x64xbf16, #tpu.memory_space<vmem>>, vector<64x64xbf16>
    tpu.vector_store %arg4[%c0_6, %c0_7], %8 {strides = array<i32>} : memref<64x64xbf16, #tpu.memory_space<vmem>>, vector<64x64xbf16>,
    return
  }
  func.func @transform_0(%arg0: i32) -> (i32, i32) {
    %c0_i32 = arith.constant 0 : i32
    %c0_i32_0 = arith.constant 0 : i32
    return %arg0, %c0_i32 : i32, i32
  }
  func.func @transform_1(%arg0: i32) -> (i32, i32) {
    %c0_i32 = arith.constant 0 : i32
    %c0_i32_0 = arith.constant 0 : i32
    %c0_i32_1 = arith.constant 0 : i32
    return %c0_i32, %c0_i32_0 : i32, i32
  }
  func.func @transform_2(%arg0: i32) -> (i32, i32) {
    %c0_i32 = arith.constant 0 : i32
    %c0_i32_0 = arith.constant 0 : i32
    %c0_i32_1 = arith.constant 0 : i32
    return %c0_i32, %c0_i32_0 : i32, i32
  }
  func.func @transform_3(%arg0: i32) -> (i32, i32) {
    %c0_i32 = arith.constant 0 : i32
    %c0_i32_0 = arith.constant 0 : i32
    return %arg0, %c0_i32 : i32, i32
  }
}

module attributes {stable_mosaic.version = 11 : i64} {
  func.func @_fc_head_kernel(%arg0: i32, %arg1: memref<2x3136xbf16, #tpu.memory_space<vmem>>, %arg2: memref<3136x512xbf16, #tpu.memory_space<vmem>>, %arg3: memref<1x1x512xf32, #tpu.memory_space<vmem>>, %arg4: memref<1x512x128xbf16, #tpu.memory_space<vmem>>, %arg5: memref<1x1x128xf32, #tpu.memory_space<vmem>>, %arg6: memref<1x2x128xf32, #tpu.memory_space<vmem>>) attributes {dimension_semantics = [#tpu.dimension_semantics<parallel>], iteration_bounds = array<i64: 2>, scalar_prefetch = 0 : i64, scratch_operands = 0 : i64, tpu.core_type = #tpu.core_type<tc>, window_params = [{pipeline_mode = #tpu.pipeline_mode<synchronous>, transform_indices = @transform_0, window_bounds = array<i64: 2, 3136>}, {transform_indices = @transform_1, window_bounds = array<i64: 3136, 512>}, {transform_indices = @transform_2, window_bounds = array<i64: 1, 1, 512>}, {transform_indices = @transform_3, window_bounds = array<i64: 1, 512, 128>}, {transform_indices = @transform_4, window_bounds = array<i64: 1, 1, 128>}, {transform_indices = @transform_5, window_bounds = array<i64: 1, 2, 128>}]} {
    %c0 = arith.constant 0 : index
    %c0_0 = arith.constant 0 : index
    %0 = vector.load %arg1[%c0, %c0_0] : memref<2x3136xbf16, #tpu.memory_space<vmem>>, vector<2x3136xbf16>
    %c0_1 = arith.constant 0 : index
    %c0_2 = arith.constant 0 : index
    %1 = vector.load %arg2[%c0_1, %c0_2] : memref<3136x512xbf16, #tpu.memory_space<vmem>>, vector<3136x512xbf16>
    %cst = arith.constant dense<0.000000e+00> : vector<2x512xf32>
    %2 = tpu.matmul %0, %1, %cst {dimension_numbers = #tpu.dot_dimension_numbers<[1], [0], [0], [1], [0, 0, 1, 1], [], []>} : vector<2x3136xbf16>, vector<3136x512xbf16>, vector<2x512xf32> -> vector<2x512xf32>
    %c0_3 = arith.constant 0 : index
    %c0_4 = arith.constant 0 : index
    %c0_5 = arith.constant 0 : index
    %3 = vector.load %arg3[%c0_3, %c0_4, %c0_5] : memref<1x1x512xf32, #tpu.memory_space<vmem>>, vector<1x1x512xf32>
    %4 = vector.shape_cast %3 : vector<1x1x512xf32> to vector<1x512xf32>
    %5 = vector.broadcast %4 : vector<1x512xf32> to vector<2x512xf32>
    %6 = arith.addf %2, %5 : vector<2x512xf32>
    %cst_6 = arith.constant 0.000000e+00 : f32
    %7 = vector.broadcast %cst_6 : f32 to vector<2x512xf32>
    %8 = arith.maximumf %6, %7 : vector<2x512xf32>
    %9 = arith.truncf %8 : vector<2x512xf32> to vector<2x512xbf16>
    %c0_7 = arith.constant 0 : index
    %c0_8 = arith.constant 0 : index
    %c0_9 = arith.constant 0 : index
    %10 = vector.load %arg4[%c0_7, %c0_8, %c0_9] : memref<1x512x128xbf16, #tpu.memory_space<vmem>>, vector<1x512x128xbf16>
    %11 = vector.shape_cast %10 : vector<1x512x128xbf16> to vector<512x128xbf16>
    %cst_10 = arith.constant dense<0.000000e+00> : vector<2x128xf32>
    %12 = tpu.matmul %9, %11, %cst_10 {dimension_numbers = #tpu.dot_dimension_numbers<[1], [0], [0], [1], [0, 0, 1, 1], [], []>} : vector<2x512xbf16>, vector<512x128xbf16>, vector<2x128xf32> -> vector<2x128xf32>
    %c0_11 = arith.constant 0 : index
    %c0_12 = arith.constant 0 : index
    %c0_13 = arith.constant 0 : index
    %13 = vector.load %arg5[%c0_11, %c0_12, %c0_13] : memref<1x1x128xf32, #tpu.memory_space<vmem>>, vector<1x1x128xf32>
    %14 = vector.shape_cast %13 : vector<1x1x128xf32> to vector<1x128xf32>
    %15 = vector.broadcast %14 : vector<1x128xf32> to vector<2x128xf32>
    %16 = arith.addf %12, %15 : vector<2x128xf32>
    %c0_14 = arith.constant 0 : index
    %c0_15 = arith.constant 0 : index
    %c0_16 = arith.constant 0 : index
    %17 = vector.load %arg6[%c0_14, %c0_15, %c0_16] : memref<1x2x128xf32, #tpu.memory_space<vmem>>, vector<1x2x128xf32>
    %18 = vector.shape_cast %17 : vector<1x2x128xf32> to vector<2x128xf32>
    %19 = vector.shape_cast %16 : vector<2x128xf32> to vector<1x2x128xf32>
    tpu.vector_store %arg6[%c0_14, %c0_15, %c0_16], %19 {strides = array<i32>} : memref<1x2x128xf32, #tpu.memory_space<vmem>>, vector<1x2x128xf32>,
    return
  }
  func.func @transform_0(%arg0: i32) -> (i32, i32) {
    %c0_i32 = arith.constant 0 : i32
    %c0_i32_0 = arith.constant 0 : i32
    %c0_i32_1 = arith.constant 0 : i32
    return %c0_i32, %c0_i32_0 : i32, i32
  }
  func.func @transform_1(%arg0: i32) -> (i32, i32) {
    %c0_i32 = arith.constant 0 : i32
    %c0_i32_0 = arith.constant 0 : i32
    return %c0_i32, %arg0 : i32, i32
  }
  func.func @transform_2(%arg0: i32) -> (i32, i32, i32) {
    %c0_i32 = arith.constant 0 : i32
    %c0_i32_0 = arith.constant 0 : i32
    %c0_i32_1 = arith.constant 0 : i32
    return %arg0, %c0_i32, %c0_i32_0 : i32, i32, i32
  }
  func.func @transform_3(%arg0: i32) -> (i32, i32, i32) {
    %c0_i32 = arith.constant 0 : i32
    %c0_i32_0 = arith.constant 0 : i32
    %c0_i32_1 = arith.constant 0 : i32
    return %arg0, %c0_i32, %c0_i32_0 : i32, i32, i32
  }
  func.func @transform_4(%arg0: i32) -> (i32, i32, i32) {
    %c0_i32 = arith.constant 0 : i32
    %c0_i32_0 = arith.constant 0 : i32
    %c0_i32_1 = arith.constant 0 : i32
    return %arg0, %c0_i32, %c0_i32_0 : i32, i32, i32
  }
  func.func @transform_5(%arg0: i32) -> (i32, i32, i32) {
    %c0_i32 = arith.constant 0 : i32
    %c0_i32_0 = arith.constant 0 : i32
    %c0_i32_1 = arith.constant 0 : i32
    return %arg0, %c0_i32, %c0_i32_0 : i32, i32, i32
  }
}

</mosaic_0001>

<llo_original>
// kernel: cnn_forward.4
$region0: #{cnn_forward.4}
  #allocation0 [shape = 'u32[]', space=smem, size = 0x4, offset = 0x4, fixed_abs, tag = 'smem constant byte address 0x4 - core index']
  #allocation1 [shape = 'u32[144,128]{1,0:T(1,128)}', space=vmem, size = 0x12000, scoped, tag = 'internal scratch']
  %s0 = inlined_call_operand.vmem [shape: bf16[800,256], index: 0, kind: input, shape index: {}]
  %s1 = inlined_call_operand.vmem [shape: bf16[256,32], index: 1, kind: input, shape index: {}]
  %s2 = inlined_call_operand.vmem [shape: f32[1,32], index: 2, kind: input, shape index: {}]
  %s3 = inlined_call_operand.vmem [shape: bf16[800,32], index: 3, kind: output, shape index: {}]
  %s4 = sld [smem:[#allocation0]]
  $region45: #{cnn_forward.4} parent=0
    _
  %s6 = ssub.s32 1, %s4
  %s7 = scalar_select 0, %s6, %s4
  loop: start=0, step=1, limit=4
  $region2: #{cnn_forward.4} parent=0 // loop_pre_header
    _
  $region3: #{cnn_forward.4} parent=0 // loop_header
    %s9 = sphi 0, %s13
    %p10 = scmp.ge.s32.totalorder %s9, 4
    %s19 = sphi 0, %s21
    %s22 = sphi 0, %s19
    %s23 = sphi 0, %s22
    %s39 = sphi 0, %s23
    %s43 = sphi 0, %s43
    %s45 = sphi 0, %s43
    %s46 = sphi 0, %s45
    %s60 = sphi 0, %s46
    %s64 = sphi 0, %s64
    %s66 = sphi 0, %s64
    %s67 = sphi 0, %s66
    %s81 = sphi 0, %s67
    %s87 = sphi 0, %s89
    %s90 = sphi 0, %s87
    %s91 = sphi 0, %s90
    %s107 = sphi 0, %s91
  $region4: #{cnn_forward.4} parent=0 // loop_header_branch
    %12 = sbr.rel (%p10) target = $region8
  $region5: #{cnn_forward.4} parent=0 // loop_body
    %s14 = ssub.s32 %s9, 1
    %s15 = ssub.s32 %s9, 2
    %s16 = sadd.s32 %s9, 1
    %s17 = ssub.s32 %s9, %s16
    %p18 = scmp.eq.s32.totalorder %s17, 0
    %s20 = sadd.s32 %s19, 1
    %s21 = scalar_select %p18, %s19, %s20
    %p24 = pneg %p18
    %p25 = scmp.eq.s32.totalorder %s9, 1
    %p26 = por %p24, %p25
    %p27 = scmp.ne.s32.totalorder %s19, %s22
    %p28 = scmp.eq.s32.totalorder %s9, 0
    %p29 = por %p27, %p28
    %p30 = scmp.ne.s32.totalorder %s19, %s22
    %p31 = scmp.eq.s32.totalorder %s14, 1
    %p32 = por %p30, %p31
    %p33 = scmp.ne.s32.totalorder %s22, %s23
    %p34 = scmp.eq.s32.totalorder %s14, 0
    %p35 = por %p33, %p34
    %p36 = scmp.ne.s32.totalorder %s22, %s23
    %p37 = scmp.eq.s32.totalorder %s15, 1
    %p38 = por %p36, %p37
    %p40 = scmp.ne.s32.totalorder %s23, %s39
    %p41 = scmp.eq.s32.totalorder %s15, 0
    %p42 = por %p40, %p41
    %s44 = sadd.s32 %s43, 1
    %p47 = scmp.eq.s32.totalorder %s9, 1
    %p48 = scmp.ne.s32.totalorder %s43, %s45
    %p49 = scmp.eq.s32.totalorder %s9, 0
    %p50 = por %p48, %p49
    %p51 = scmp.ne.s32.totalorder %s43, %s45
    %p52 = scmp.eq.s32.totalorder %s14, 1
    %p53 = por %p51, %p52
    %p54 = scmp.ne.s32.totalorder %s45, %s46
    %p55 = scmp.eq.s32.totalorder %s14, 0
    %p56 = por %p54, %p55
    %p57 = scmp.ne.s32.totalorder %s45, %s46
    %p58 = scmp.eq.s32.totalorder %s15, 1
    %p59 = por %p57, %p58
    %p61 = scmp.ne.s32.totalorder %s46, %s60
    %p62 = scmp.eq.s32.totalorder %s15, 0
    %p63 = por %p61, %p62
    %s65 = sadd.s32 %s64, 1
    %p68 = scmp.eq.s32.totalorder %s9, 1
    %p69 = scmp.ne.s32.totalorder %s64, %s66
    %p70 = scmp.eq.s32.totalorder %s9, 0
    %p71 = por %p69, %p70
    %p72 = scmp.ne.s32.totalorder %s64, %s66
    %p73 = scmp.eq.s32.totalorder %s14, 1
    %p74 = por %p72, %p73
    %p75 = scmp.ne.s32.totalorder %s66, %s67
    %p76 = scmp.eq.s32.totalorder %s14, 0
    %p77 = por %p75, %p76
    %p78 = scmp.ne.s32.totalorder %s66, %s67
    %p79 = scmp.eq.s32.totalorder %s15, 1
    %p80 = por %p78, %p79
    %p82 = scmp.ne.s32.totalorder %s67, %s81
    %p83 = scmp.eq.s32.totalorder %s15, 0
    %p84 = por %p82, %p83
    %s85 = ssub.s32 %s9, %s16
    %p86 = scmp.eq.s32.totalorder %s85, 0
    %s88 = sadd.s32 %s87, 1
    %s89 = scalar_select %p86, %s87, %s88
    %p92 = pneg %p86
    %p93 = scmp.eq.s32.totalorder %s9, 1
    %p94 = por %p92, %p93
    %p95 = scmp.ne.s32.totalorder %s87, %s90
    %p96 = scmp.eq.s32.totalorder %s9, 0
    %p97 = por %p95, %p96
    %p98 = scmp.ne.s32.totalorder %s87, %s90
    %p99 = scmp.eq.s32.totalorder %s14, 1
    %p100 = por %p98, %p99
    %p101 = scmp.ne.s32.totalorder %s90, %s91
    %p102 = scmp.eq.s32.totalorder %s14, 0
    %p103 = por %p101, %p102
    %p104 = scmp.ne.s32.totalorder %s90, %s91
    %p105 = scmp.eq.s32.totalorder %s15, 1
    %p106 = por %p104, %p105
    %p108 = scmp.ne.s32.totalorder %s91, %s107
    %p109 = scmp.eq.s32.totalorder %s15, 0
    %p110 = por %p108, %p109
    %p111 = scmp.le.s32.totalorder 1, %s9
    %p112 = scmp.lt.s32.totalorder %s9, 3
    %p113 = pnand %p111, %p112
    %p114 = pneg %p113
    // Predicated region
    $region9: #{cnn_forward.4} parent=5 // pred_check
      _
    $region10: #{cnn_forward.4} parent=5 // pred_check_branch
      %116 = sbr.rel (%p113) target = $region12
    $region11: #{cnn_forward.4} parent=5 // pred_region
      %s117 = ssub.s32 %s9, 1
      // Predicated region
      $region13: #{cnn_forward.4} parent=11 // pred_check
        %p118 = pneg %p56
      $region14: #{cnn_forward.4} parent=11 // pred_check_branch
        %120 = sbr.rel (%p118) target = $region16
      $region15: #{cnn_forward.4} parent=11 // pred_region
        _
      $region16: #{cnn_forward.4} parent=11 // pred_fallthru
        _
      // Predicated region
      $region17: #{cnn_forward.4} parent=11 // pred_check
        %p121 = pneg %p77
      $region18: #{cnn_forward.4} parent=11 // pred_check_branch
        %123 = sbr.rel (%p121) target = $region20
      $region19: #{cnn_forward.4} parent=11 // pred_region
        _
      $region20: #{cnn_forward.4} parent=11 // pred_fallthru
        _
    $region12: #{cnn_forward.4} parent=5 // pred_fallthru
      _
    %p124 = scmp.lt.s32.totalorder %s9, 2
    // Predicated region
    $region21: #{cnn_forward.4} parent=5 // pred_check
      %p125 = pneg %p124
    $region22: #{cnn_forward.4} parent=5 // pred_check_branch
      %127 = sbr.rel (%p125) target = $region24
    $region23: #{cnn_forward.4} parent=5 // pred_region
      // Predicated region
      $region25: #{cnn_forward.4} parent=23 // pred_check
        %p128 = pneg %p29
      $region26: #{cnn_forward.4} parent=23 // pred_check_branch
        %130 = sbr.rel (%p128) target = $region28
      $region27: #{cnn_forward.4} parent=23 // pred_region
        %s131 = smul.u32 50, %s9
        %p132 = scmp.lt.s32.totalorder %s131, 99
        %s133 = scalar_select %p132, %s131, 99
        %s134 = smul.addr %s133, 2
        %s135 = smul.addr %s134, 4
        %s136 = scalar_lea.vmem %s0, %s135
        %s137 = smul.u32 50, %s9
      $region28: #{cnn_forward.4} parent=23 // pred_fallthru
        _
    $region24: #{cnn_forward.4} parent=5 // pred_fallthru
      _
    %p138 = scmp.le.s32.totalorder 1, %s9
    %p139 = scmp.lt.s32.totalorder %s9, 3
    %p140 = pnand %p138, %p139
    %p141 = pneg %p140
    // Predicated region
    $region29: #{cnn_forward.4} parent=5 // pred_check
      _
    $region30: #{cnn_forward.4} parent=5 // pred_check_branch
      %143 = sbr.rel (%p140) target = $region32
    $region31: #{cnn_forward.4} parent=5 // pred_region
      %s144 = ssub.s32 %s9, 1
      %s145 = smul.u32 50, %s14
      %p146 = scmp.lt.s32.totalorder %s145, 99
      %s147 = scalar_select %p146, %s145, 99
      %s148 = smul.addr %s147, 2
      %s149 = smul.addr %s148, 4
      %s150 = scalar_lea.vmem %s0, %s149
      %p151 = pneg %p35
      %p152 = pneg %p32
      %p153 = pneg %p56
      %p154 = pneg %p53
      %p155 = pneg %p77
      %p156 = pneg %p74
      %p157 = pneg %p103
      %p158 = pneg %p100
      %s159 = smul.u32 50, %s14
      %p160 = scmp.lt.s32.totalorder %s159, 99
      %s161 = scalar_select %p160, %s159, 99
      %s162 = smul.addr %s161, 4
      %s163 = scalar_lea.vmem %s3, %s162
      %s164 = smul.u32 50, %s14
      %p165 = scmp.lt.s32.totalorder %s164, 99
      %s166 = scalar_select %p165, %s164, 99
      %s167 = smul.addr %s166, 2
      %s168 = smul.addr %s167, 4
      %s169 = scalar_lea.vmem %s0, %s168
      %s170 = smul.u32 50, %s14
      %s171 = smul.u32 50, %s14
      %p172 = scmp.lt.s32.totalorder %s171, 99
      %s173 = scalar_select %p172, %s171, 99
      %s174 = smul.addr %s173, 4
      %s175 = scalar_lea.vmem %s3, %s174
      %s176 = smul.u32 50, %s14
      %v178 = vld [vmem:[%s169] sm:$0xff]
      %v179 = vld [vmem:[%s169 + $0x8] sm:$0xff]
      %v180 = vld [vmem:[%s169 + $0x10] sm:$0xff]
      %v181 = vld [vmem:[%s169 + $0x18] sm:$0xff]
      %v182 = vld [vmem:[%s169 + $0x20] sm:$0xff]
      %v183 = vld [vmem:[%s169 + $0x28] sm:$0xff]
      %v184 = vld [vmem:[%s169 + $0x30] sm:$0xff]
      %v185 = vld [vmem:[%s169 + $0x38] sm:$0xff]
      %v186 = vld [vmem:[%s169 + $0x40] sm:$0xff]
      %v187 = vld [vmem:[%s169 + $0x48] sm:$0xff]
      %v188 = vld [vmem:[%s169 + $0x50] sm:$0xff]
      %v189 = vld [vmem:[%s169 + $0x58] sm:$0xff]
      %v190 = vld [vmem:[%s169 + $0x60] sm:$0xff]
      %v191 = vld [vmem:[%s169 + $0x68] sm:$0xff]
      %v192 = vld [vmem:[%s169 + $0x70] sm:$0xff]
      %v193 = vld [vmem:[%s169 + $0x78] sm:$0xff]
      %v194 = vld [vmem:[%s169 + $0x80] sm:$0xff]
      %v195 = vld [vmem:[%s169 + $0x88] sm:$0xff]
      %v196 = vld [vmem:[%s169 + $0x90] sm:$0xff]
      %v197 = vld [vmem:[%s169 + $0x98] sm:$0xff]
      %v198 = vld [vmem:[%s169 + $0xa0] sm:$0xff]
      %v199 = vld [vmem:[%s169 + $0xa8] sm:$0xff]
      %v200 = vld [vmem:[%s169 + $0xb0] sm:$0xff]
      %v201 = vld [vmem:[%s169 + $0xb8] sm:$0xff]
      %v202 = vld [vmem:[%s169 + $0xc0] sm:$0xff]
      %v203 = vld [vmem:[%s169 + $0xc8] sm:$0xff]
      %v204 = vld [vmem:[%s169 + $0xd0] sm:$0xff]
      %v205 = vld [vmem:[%s169 + $0xd8] sm:$0xff]
      %v206 = vld [vmem:[%s169 + $0xe0] sm:$0xff]
      %v207 = vld [vmem:[%s169 + $0xe8] sm:$0xff]
      %v208 = vld [vmem:[%s169 + $0xf0] sm:$0xff]
      %v209 = vld [vmem:[%s169 + $0xf8] sm:$0xff]
      %v210 = vld [vmem:[%s169 + $0x100] sm:$0xff]
      %v211 = vld [vmem:[%s169 + $0x108] sm:$0xff]
      %v212 = vld [vmem:[%s169 + $0x110] sm:$0xff]
      %v213 = vld [vmem:[%s169 + $0x118] sm:$0xff]
      %v214 = vld [vmem:[%s169 + $0x120] sm:$0xff]
      %v215 = vld [vmem:[%s169 + $0x128] sm:$0xff]
      %v216 = vld [vmem:[%s169 + $0x130] sm:$0xff]
      %v217 = vld [vmem:[%s169 + $0x138] sm:$0xff]
      %v218 = vld [vmem:[%s169 + $0x140] sm:$0xff]
      %v219 = vld [vmem:[%s169 + $0x148] sm:$0xff]
      %v220 = vld [vmem:[%s169 + $0x150] sm:$0xff]
      %v221 = vld [vmem:[%s169 + $0x158] sm:$0xff]
      %v222 = vld [vmem:[%s169 + $0x160] sm:$0xff]
      %v223 = vld [vmem:[%s169 + $0x168] sm:$0xff]
      %v224 = vld [vmem:[%s169 + $0x170] sm:$0xff]
      %v225 = vld [vmem:[%s169 + $0x178] sm:$0xff]
      %v226 = vld [vmem:[%s169 + $0x180] sm:$0xff]
      %v227 = vld [vmem:[%s169 + $0x188] sm:$0xff]
      %v228 = vld [vmem:[%s1] sm:$0xf]
      %v229 = vld [vmem:[%s1 + $0x4] sm:$0xf]
      %v230 = vld [vmem:[%s1 + $0x8] sm:$0xf]
      %v231 = vld [vmem:[%s1 + $0xc] sm:$0xf]
      %v232 = vld [vmem:[%s1 + $0x10] sm:$0xf]
      %v233 = vld [vmem:[%s1 + $0x14] sm:$0xf]
      %v234 = vld [vmem:[%s1 + $0x18] sm:$0xf]
      %v235 = vld [vmem:[%s1 + $0x1c] sm:$0xf]
      %v236 = vld [vmem:[%s1 + $0x20] sm:$0xf]
      %v237 = vld [vmem:[%s1 + $0x24] sm:$0xf]
      %v238 = vld [vmem:[%s1 + $0x28] sm:$0xf]
      %v239 = vld [vmem:[%s1 + $0x2c] sm:$0xf]
      %v240 = vld [vmem:[%s1 + $0x30] sm:$0xf]
      %v241 = vld [vmem:[%s1 + $0x34] sm:$0xf]
      %v242 = vld [vmem:[%s1 + $0x38] sm:$0xf]
      %v243 = vld [vmem:[%s1 + $0x3c] sm:$0xf]
      %v244 = vld [vmem:[%s1 + $0x40] sm:$0xf]
      %v245 = vld [vmem:[%s1 + $0x44] sm:$0xf]
      %v246 = vld [vmem:[%s1 + $0x48] sm:$0xf]
      %v247 = vld [vmem:[%s1 + $0x4c] sm:$0xf]
      %v248 = vld [vmem:[%s1 + $0x50] sm:$0xf]
      %v249 = vld [vmem:[%s1 + $0x54] sm:$0xf]
      %v250 = vld [vmem:[%s1 + $0x58] sm:$0xf]
      %v251 = vld [vmem:[%s1 + $0x5c] sm:$0xf]
      %v252 = vld [vmem:[%s1 + $0x60] sm:$0xf]
      %v253 = vld [vmem:[%s1 + $0x64] sm:$0xf]
      %v254 = vld [vmem:[%s1 + $0x68] sm:$0xf]
      %v255 = vld [vmem:[%s1 + $0x6c] sm:$0xf]
      %v256 = vld [vmem:[%s1 + $0x70] sm:$0xf]
      %v257 = vld [vmem:[%s1 + $0x74] sm:$0xf]
      %v258 = vld [vmem:[%s1 + $0x78] sm:$0xf]
      %v259 = vld [vmem:[%s1 + $0x7c] sm:$0xf]
      %v260 = vld [vmem:[%s2] sm:$0x1]
      %v262 = vlaneseq
      %v263 = vshrl.u32 %v262, 7
      %v264 = vsub.s32 0, %v263
      %v265 = vrot.slane %v260, %v264
      %v317 = vunpack.c.l.b16 %v178
      %v318 = vunpack.c.h.b16 %v178
      %v319 = vunpack.c.l.b16 %v179
      %v320 = vunpack.c.h.b16 %v179
      %v321 = vunpack.c.l.b16 %v180
      %v322 = vunpack.c.h.b16 %v180
      %v323 = vunpack.c.l.b16 %v181
      %v324 = vunpack.c.h.b16 %v181
      %v325 = vunpack.c.l.b16 %v182
      %v326 = vunpack.c.h.b16 %v182
      %v327 = vunpack.c.l.b16 %v183
      %v328 = vunpack.c.h.b16 %v183
      %v329 = vunpack.c.l.b16 %v184
      %v330 = vunpack.c.h.b16 %v184
      %v331 = vunpack.c.l.b16 %v185
      %v332 = vunpack.c.h.b16 %v185
      %v333 = vunpack.c.l.b16 %v186
      %v334 = vunpack.c.h.b16 %v186
      %v335 = vunpack.c.l.b16 %v187
      %v336 = vunpack.c.h.b16 %v187
      %v337 = vunpack.c.l.b16 %v188
      %v338 = vunpack.c.h.b16 %v188
      %v339 = vunpack.c.l.b16 %v189
      %v340 = vunpack.c.h.b16 %v189
      %v341 = vunpack.c.l.b16 %v190
      %v342 = vunpack.c.h.b16 %v190
      %v343 = vunpack.c.l.b16 %v191
      %v344 = vunpack.c.h.b16 %v191
      %v345 = vunpack.c.l.b16 %v192
      %v346 = vunpack.c.h.b16 %v192
      %v347 = vunpack.c.l.b16 %v193
      %v348 = vunpack.c.h.b16 %v193
      %v349 = vunpack.c.l.b16 %v194
      %v350 = vunpack.c.h.b16 %v194
      %v351 = vunpack.c.l.b16 %v195
      %v352 = vunpack.c.h.b16 %v195
      %v353 = vunpack.c.l.b16 %v196
      %v354 = vunpack.c.h.b16 %v196
      %v355 = vunpack.c.l.b16 %v197
      %v356 = vunpack.c.h.b16 %v197
      %v357 = vunpack.c.l.b16 %v198
      %v358 = vunpack.c.h.b16 %v198
      %v359 = vunpack.c.l.b16 %v199
      %v360 = vunpack.c.h.b16 %v199
      %v361 = vunpack.c.l.b16 %v200
      %v362 = vunpack.c.h.b16 %v200
      %v363 = vunpack.c.l.b16 %v201
      %v364 = vunpack.c.h.b16 %v201
      %v365 = vunpack.c.l.b16 %v202
      %v366 = vunpack.c.h.b16 %v202
      %v367 = vunpack.c.l.b16 %v203
      %v368 = vunpack.c.h.b16 %v203
      %v369 = vunpack.c.l.b16 %v204
      %v370 = vunpack.c.h.b16 %v204
      %v371 = vunpack.c.l.b16 %v205
      %v372 = vunpack.c.h.b16 %v205
      %v373 = vunpack.c.l.b16 %v206
      %v374 = vunpack.c.h.b16 %v206
      %v375 = vunpack.c.l.b16 %v207
      %v376 = vunpack.c.h.b16 %v207
      %v377 = vunpack.c.l.b16 %v208
      %v378 = vunpack.c.h.b16 %v208
      %v379 = vunpack.c.l.b16 %v209
      %v380 = vunpack.c.h.b16 %v209
      %v381 = vunpack.c.l.b16 %v210
      %v382 = vunpack.c.h.b16 %v210
      %v383 = vunpack.c.l.b16 %v211
      %v384 = vunpack.c.h.b16 %v211
      %v385 = vunpack.c.l.b16 %v212
      %v386 = vunpack.c.h.b16 %v212
      %v387 = vunpack.c.l.b16 %v213
      %v388 = vunpack.c.h.b16 %v213
      %v389 = vunpack.c.l.b16 %v214
      %v390 = vunpack.c.h.b16 %v214
      %v391 = vunpack.c.l.b16 %v215
      %v392 = vunpack.c.h.b16 %v215
      %v393 = vunpack.c.l.b16 %v216
      %v394 = vunpack.c.h.b16 %v216
      %v395 = vunpack.c.l.b16 %v217
      %v396 = vunpack.c.h.b16 %v217
      %v397 = vunpack.c.l.b16 %v218
      %v398 = vunpack.c.h.b16 %v218
      %v399 = vunpack.c.l.b16 %v219
      %v400 = vunpack.c.h.b16 %v219
      %v401 = vunpack.c.l.b16 %v220
      %v402 = vunpack.c.h.b16 %v220
      %v403 = vunpack.c.l.b16 %v221
      %v404 = vunpack.c.h.b16 %v221
      %v405 = vunpack.c.l.b16 %v222
      %v406 = vunpack.c.h.b16 %v222
      %v407 = vunpack.c.l.b16 %v223
      %v408 = vunpack.c.h.b16 %v223
      %v409 = vunpack.c.l.b16 %v224
      %v410 = vunpack.c.h.b16 %v224
      %v411 = vunpack.c.l.b16 %v225
      %v412 = vunpack.c.h.b16 %v225
      %v413 = vunpack.c.l.b16 %v226
      %v414 = vunpack.c.h.b16 %v226
      %v415 = vunpack.c.l.b16 %v227
      %v416 = vunpack.c.h.b16 %v227
      %v417 = vpack.c.b16 %v319, %v317
      %v418 = vpack.c.b16 %v320, %v318
      %v419 = vpack.c.b16 %v323, %v321
      %v420 = vpack.c.b16 %v324, %v322
      %v421 = vpack.c.b16 %v327, %v325
      %v422 = vpack.c.b16 %v328, %v326
      %v423 = vpack.c.b16 %v331, %v329
      %v424 = vpack.c.b16 %v332, %v330
      %v425 = vpack.c.b16 %v335, %v333
      %v426 = vpack.c.b16 %v336, %v334
      %v427 = vpack.c.b16 %v339, %v337
      %v428 = vpack.c.b16 %v340, %v338
      %v429 = vpack.c.b16 %v343, %v341
      %v430 = vpack.c.b16 %v344, %v342
      %v431 = vpack.c.b16 %v347, %v345
      %v432 = vpack.c.b16 %v348, %v346
      %v433 = vpack.c.b16 %v351, %v349
      %v434 = vpack.c.b16 %v352, %v350
      %v435 = vpack.c.b16 %v355, %v353
      %v436 = vpack.c.b16 %v356, %v354
      %v437 = vpack.c.b16 %v359, %v357
      %v438 = vpack.c.b16 %v360, %v358
      %v439 = vpack.c.b16 %v363, %v361
      %v440 = vpack.c.b16 %v364, %v362
      %v441 = vpack.c.b16 %v367, %v365
      %v442 = vpack.c.b16 %v368, %v366
      %v443 = vpack.c.b16 %v371, %v369
      %v444 = vpack.c.b16 %v372, %v370
      %v445 = vpack.c.b16 %v375, %v373
      %v446 = vpack.c.b16 %v376, %v374
      %v447 = vpack.c.b16 %v379, %v377
      %v448 = vpack.c.b16 %v380, %v378
      %v449 = vpack.c.b16 %v383, %v381
      %v450 = vpack.c.b16 %v384, %v382
      %v451 = vpack.c.b16 %v387, %v385
      %v452 = vpack.c.b16 %v388, %v386
      %v453 = vpack.c.b16 %v391, %v389
      %v454 = vpack.c.b16 %v392, %v390
      %v455 = vpack.c.b16 %v395, %v393
      %v456 = vpack.c.b16 %v396, %v394
      %v457 = vpack.c.b16 %v399, %v397
      %v458 = vpack.c.b16 %v400, %v398
      %v459 = vpack.c.b16 %v403, %v401
      %v460 = vpack.c.b16 %v404, %v402
      %v461 = vpack.c.b16 %v407, %v405
      %v462 = vpack.c.b16 %v408, %v406
      %v463 = vpack.c.b16 %v411, %v409
      %v464 = vpack.c.b16 %v412, %v410
      %v465 = vpack.c.b16 %v415, %v413
      %v466 = vpack.c.b16 %v416, %v414
      %v549 = vunpack.c.l.b16 %v228
      %v550 = vunpack.c.l.b16 %v229
      %v551 = vunpack.c.l.b16 %v230
      %v552 = vunpack.c.l.b16 %v231
      %v553 = vunpack.c.l.b16 %v232
      %v554 = vunpack.c.l.b16 %v233
      %v555 = vunpack.c.l.b16 %v234
      %v556 = vunpack.c.l.b16 %v235
      %v557 = vunpack.c.l.b16 %v236
      %v558 = vunpack.c.l.b16 %v237
      %v559 = vunpack.c.l.b16 %v238
      %v560 = vunpack.c.l.b16 %v239
      %v561 = vunpack.c.l.b16 %v240
      %v562 = vunpack.c.l.b16 %v241
      %v563 = vunpack.c.l.b16 %v242
      %v564 = vunpack.c.l.b16 %v243
      %v565 = vunpack.c.l.b16 %v244
      %v566 = vunpack.c.l.b16 %v245
      %v567 = vunpack.c.l.b16 %v246
      %v568 = vunpack.c.l.b16 %v247
      %v569 = vunpack.c.l.b16 %v248
      %v570 = vunpack.c.l.b16 %v249
      %v571 = vunpack.c.l.b16 %v250
      %v572 = vunpack.c.l.b16 %v251
      %v573 = vunpack.c.l.b16 %v252
      %v574 = vunpack.c.l.b16 %v253
      %v575 = vunpack.c.l.b16 %v254
      %v576 = vunpack.c.l.b16 %v255
      %v577 = vunpack.c.l.b16 %v256
      %v578 = vunpack.c.l.b16 %v257
      %v579 = vunpack.c.l.b16 %v258
      %v580 = vunpack.c.l.b16 %v259
      %v581 = vpack.c.b16 %v550, %v549
      %v582 = vpack.c.b16 %v552, %v551
      %v583 = vpack.c.b16 %v554, %v553
      %v584 = vpack.c.b16 %v556, %v555
      %v585 = vpack.c.b16 %v558, %v557
      %v586 = vpack.c.b16 %v560, %v559
      %v587 = vpack.c.b16 %v562, %v561
      %v588 = vpack.c.b16 %v564, %v563
      %v589 = vpack.c.b16 %v566, %v565
      %v590 = vpack.c.b16 %v568, %v567
      %v591 = vpack.c.b16 %v570, %v569
      %v592 = vpack.c.b16 %v572, %v571
      %v593 = vpack.c.b16 %v574, %v573
      %v594 = vpack.c.b16 %v576, %v575
      %v595 = vpack.c.b16 %v578, %v577
      %v596 = vpack.c.b16 %v580, %v579
      %613 = vmatprep.subr.bf16.mxu0 0
      %614 = vmatpush1.bf16.msra.mxu0 %v588
      %615 = vmatprep.subr.bf16.mxu0 0
      %616 = vmatpush1.bf16.msra.mxu0 %v587
      %617 = vmatprep.subr.bf16.mxu0 0
      %618 = vmatpush1.bf16.msra.mxu0 %v586
      %619 = vmatprep.subr.bf16.mxu0 0
      %620 = vmatpush1.bf16.msra.mxu0 %v585
      %621 = vmatprep.subr.bf16.mxu0 0
      %622 = vmatpush1.bf16.msra.mxu0 %v584
      %623 = vmatprep.subr.bf16.mxu0 0
      %624 = vmatpush1.bf16.msra.mxu0 %v583
      %625 = vmatprep.subr.bf16.mxu0 0
      %626 = vmatpush1.bf16.msra.mxu0 %v582
      %627 = vmatprep.subr.bf16.mxu0 0
      %628 = vmatpush1.bf16.msra.mxu0 %v581
      %629 = vmatprep.subr.bf16.mxu0 0
      %630 = vmatpush2.bf16.msra.mxu0 %v596
      %631 = vmatprep.subr.bf16.mxu0 0
      %632 = vmatpush2.bf16.msra.mxu0 %v595
      %633 = vmatprep.subr.bf16.mxu0 0
      %634 = vmatpush2.bf16.msra.mxu0 %v594
      %635 = vmatprep.subr.bf16.mxu0 0
      %636 = vmatpush2.bf16.msra.mxu0 %v593
      %637 = vmatprep.subr.bf16.mxu0 0
      %638 = vmatpush2.bf16.msra.mxu0 %v592
      %639 = vmatprep.subr.bf16.mxu0 0
      %640 = vmatpush2.bf16.msra.mxu0 %v591
      %641 = vmatprep.subr.bf16.mxu0 0
      %642 = vmatpush2.bf16.msra.mxu0 %v590
      %643 = vmatprep.subr.bf16.mxu0 0
      %644 = vmatpush2.bf16.msra.mxu0 %v589
      %645 = vmatprep.mubr.bf16.mxu0 %v418
      %646 = vmatmul.mubr.bf16.gmra.mxu0 %v417
      %v647 = vpop.f32.mrf.mxu0
      %v648 = vadd.f32 %v265, %v647
      %v649 = vpop.f32.mrf.mxu0
      %v650 = vpop.f32.mrf.mxu0
      %v651 = vadd.f32 %v265, %v650
      %v652 = vpop.f32.mrf.mxu0
      %653 = vmatprep.mubr.bf16.mxu0 %v420
      %654 = vmatmul.mubr.bf16.gmra.mxu0 %v419
      %v655 = vpop.f32.mrf.mxu0
      %v656 = vadd.f32 %v265, %v655
      %v657 = vpop.f32.mrf.mxu0
      %v658 = vpop.f32.mrf.mxu0
      %v659 = vadd.f32 %v265, %v658
      %v660 = vpop.f32.mrf.mxu0
      %661 = vmatprep.mubr.bf16.mxu0 %v422
      %662 = vmatmul.mubr.bf16.gmra.mxu0 %v421
      %v663 = vpop.f32.mrf.mxu0
      %v664 = vadd.f32 %v265, %v663
      %v665 = vpop.f32.mrf.mxu0
      %v666 = vpop.f32.mrf.mxu0
      %v667 = vadd.f32 %v265, %v666
      %v668 = vpop.f32.mrf.mxu0
      %669 = vmatprep.mubr.bf16.mxu0 %v424
      %670 = vmatmul.mubr.bf16.gmra.mxu0 %v423
      %v671 = vpop.f32.mrf.mxu0
      %v672 = vadd.f32 %v265, %v671
      %v673 = vpop.f32.mrf.mxu0
      %v674 = vpop.f32.mrf.mxu0
      %v675 = vadd.f32 %v265, %v674
      %v676 = vpop.f32.mrf.mxu0
      %677 = vmatprep.mubr.bf16.mxu0 %v426
      %678 = vmatmul.mubr.bf16.gmra.mxu0 %v425
      %v679 = vpop.f32.mrf.mxu0
      %v680 = vadd.f32 %v265, %v679
      %v681 = vpop.f32.mrf.mxu0
      %v682 = vpop.f32.mrf.mxu0
      %v683 = vadd.f32 %v265, %v682
      %v684 = vpop.f32.mrf.mxu0
      %685 = vmatprep.mubr.bf16.mxu0 %v428
      %686 = vmatmul.mubr.bf16.gmra.mxu0 %v427
      %v687 = vpop.f32.mrf.mxu0
      %v688 = vadd.f32 %v265, %v687
      %v689 = vpop.f32.mrf.mxu0
      %v690 = vpop.f32.mrf.mxu0
      %v691 = vadd.f32 %v265, %v690
      %v692 = vpop.f32.mrf.mxu0
      %693 = vmatprep.mubr.bf16.mxu0 %v430
      %694 = vmatmul.mubr.bf16.gmra.mxu0 %v429
      %v695 = vpop.f32.mrf.mxu0
      %v696 = vadd.f32 %v265, %v695
      %v697 = vpop.f32.mrf.mxu0
      %v698 = vpop.f32.mrf.mxu0
      %v699 = vadd.f32 %v265, %v698
      %v700 = vpop.f32.mrf.mxu0
      %701 = vmatprep.mubr.bf16.mxu0 %v432
      %702 = vmatmul.mubr.bf16.gmra.mxu0 %v431
      %v703 = vpop.f32.mrf.mxu0
      %v704 = vadd.f32 %v265, %v703
      %v705 = vpop.f32.mrf.mxu0
      %v706 = vpop.f32.mrf.mxu0
      %v707 = vadd.f32 %v265, %v706
      %v708 = vpop.f32.mrf.mxu0
      %709 = vmatprep.mubr.bf16.mxu0 %v434
      %710 = vmatmul.mubr.bf16.gmra.mxu0 %v433
      %v711 = vpop.f32.mrf.mxu0
      %v712 = vadd.f32 %v265, %v711
      %v713 = vpop.f32.mrf.mxu0
      %v714 = vpop.f32.mrf.mxu0
      %v715 = vadd.f32 %v265, %v714
      %v716 = vpop.f32.mrf.mxu0
      %717 = vmatprep.mubr.bf16.mxu0 %v436
      %718 = vmatmul.mubr.bf16.gmra.mxu0 %v435
      %v719 = vpop.f32.mrf.mxu0
      %v720 = vadd.f32 %v265, %v719
      %v721 = vpop.f32.mrf.mxu0
      %v722 = vpop.f32.mrf.mxu0
      %v723 = vadd.f32 %v265, %v722
      %v724 = vpop.f32.mrf.mxu0
      %725 = vmatprep.mubr.bf16.mxu0 %v438
      %726 = vmatmul.mubr.bf16.gmra.mxu0 %v437
      %v727 = vpop.f32.mrf.mxu0
      %v728 = vadd.f32 %v265, %v727
      %v729 = vpop.f32.mrf.mxu0
      %v730 = vpop.f32.mrf.mxu0
      %v731 = vadd.f32 %v265, %v730
      %v732 = vpop.f32.mrf.mxu0
      %733 = vmatprep.mubr.bf16.mxu0 %v440
      %734 = vmatmul.mubr.bf16.gmra.mxu0 %v439
      %v735 = vpop.f32.mrf.mxu0
      %v736 = vadd.f32 %v265, %v735
      %v737 = vpop.f32.mrf.mxu0
      %v738 = vpop.f32.mrf.mxu0
      %v739 = vadd.f32 %v265, %v738
      %v740 = vpop.f32.mrf.mxu0
      %741 = vmatprep.mubr.bf16.mxu0 %v442
      %742 = vmatmul.mubr.bf16.gmra.mxu0 %v441
      %v743 = vpop.f32.mrf.mxu0
      %v744 = vadd.f32 %v265, %v743
      %v745 = vpop.f32.mrf.mxu0
      %v746 = vpop.f32.mrf.mxu0
      %v747 = vadd.f32 %v265, %v746
      %v748 = vpop.f32.mrf.mxu0
      %749 = vmatprep.mubr.bf16.mxu0 %v444
      %750 = vmatmul.mubr.bf16.gmra.mxu0 %v443
      %v751 = vpop.f32.mrf.mxu0
      %v752 = vadd.f32 %v265, %v751
      %v753 = vpop.f32.mrf.mxu0
      %v754 = vpop.f32.mrf.mxu0
      %v755 = vadd.f32 %v265, %v754
      %v756 = vpop.f32.mrf.mxu0
      %757 = vmatprep.mubr.bf16.mxu0 %v446
      %758 = vmatmul.mubr.bf16.gmra.mxu0 %v445
      %v759 = vpop.f32.mrf.mxu0
      %v760 = vadd.f32 %v265, %v759
      %v761 = vpop.f32.mrf.mxu0
      %v762 = vpop.f32.mrf.mxu0
      %v763 = vadd.f32 %v265, %v762
      %v764 = vpop.f32.mrf.mxu0
      %765 = vmatprep.mubr.bf16.mxu0 %v448
      %766 = vmatmul.mubr.bf16.gmra.mxu0 %v447
      %v767 = vpop.f32.mrf.mxu0
      %v768 = vadd.f32 %v265, %v767
      %v769 = vpop.f32.mrf.mxu0
      %v770 = vpop.f32.mrf.mxu0
      %v771 = vadd.f32 %v265, %v770
      %v772 = vpop.f32.mrf.mxu0
      %773 = vmatprep.mubr.bf16.mxu0 %v450
      %774 = vmatmul.mubr.bf16.gmra.mxu0 %v449
      %v775 = vpop.f32.mrf.mxu0
      %v776 = vadd.f32 %v265, %v775
      %v777 = vpop.f32.mrf.mxu0
      %v778 = vpop.f32.mrf.mxu0
      %v779 = vadd.f32 %v265, %v778
      %v780 = vpop.f32.mrf.mxu0
      %781 = vmatprep.mubr.bf16.mxu0 %v452
      %782 = vmatmul.mubr.bf16.gmra.mxu0 %v451
      %v783 = vpop.f32.mrf.mxu0
      %v784 = vadd.f32 %v265, %v783
      %v785 = vpop.f32.mrf.mxu0
      %v786 = vpop.f32.mrf.mxu0
      %v787 = vadd.f32 %v265, %v786
      %v788 = vpop.f32.mrf.mxu0
      %789 = vmatprep.mubr.bf16.mxu0 %v454
      %790 = vmatmul.mubr.bf16.gmra.mxu0 %v453
      %v791 = vpop.f32.mrf.mxu0
      %v792 = vadd.f32 %v265, %v791
      %v793 = vpop.f32.mrf.mxu0
      %v794 = vpop.f32.mrf.mxu0
      %v795 = vadd.f32 %v265, %v794
      %v796 = vpop.f32.mrf.mxu0
      %797 = vmatprep.mubr.bf16.mxu0 %v456
      %798 = vmatmul.mubr.bf16.gmra.mxu0 %v455
      %v799 = vpop.f32.mrf.mxu0
      %v800 = vadd.f32 %v265, %v799
      %v801 = vpop.f32.mrf.mxu0
      %v802 = vpop.f32.mrf.mxu0
      %v803 = vadd.f32 %v265, %v802
      %v804 = vpop.f32.mrf.mxu0
      %805 = vmatprep.mubr.bf16.mxu0 %v458
      %806 = vmatmul.mubr.bf16.gmra.mxu0 %v457
      %v807 = vpop.f32.mrf.mxu0
      %v808 = vadd.f32 %v265, %v807
      %v809 = vpop.f32.mrf.mxu0
      %v810 = vpop.f32.mrf.mxu0
      %v811 = vadd.f32 %v265, %v810
      %v812 = vpop.f32.mrf.mxu0
      %813 = vmatprep.mubr.bf16.mxu0 %v460
      %814 = vmatmul.mubr.bf16.gmra.mxu0 %v459
      %v815 = vpop.f32.mrf.mxu0
      %v816 = vadd.f32 %v265, %v815
      %v817 = vpop.f32.mrf.mxu0
      %v818 = vpop.f32.mrf.mxu0
      %v819 = vadd.f32 %v265, %v818
      %v820 = vpop.f32.mrf.mxu0
      %821 = vmatprep.mubr.bf16.mxu0 %v462
      %822 = vmatmul.mubr.bf16.gmra.mxu0 %v461
      %v823 = vpop.f32.mrf.mxu0
      %v824 = vadd.f32 %v265, %v823
      %v825 = vpop.f32.mrf.mxu0
      %v826 = vpop.f32.mrf.mxu0
      %v827 = vadd.f32 %v265, %v826
      %v828 = vpop.f32.mrf.mxu0
      %829 = vmatprep.mubr.bf16.mxu0 %v464
      %830 = vmatmul.mubr.bf16.gmra.mxu0 %v463
      %v831 = vpop.f32.mrf.mxu0
      %v832 = vadd.f32 %v265, %v831
      %v833 = vpop.f32.mrf.mxu0
      %v834 = vpop.f32.mrf.mxu0
      %v835 = vadd.f32 %v265, %v834
      %v836 = vpop.f32.mrf.mxu0
      %837 = vmatprep.mubr.bf16.mxu0 %v466
      %838 = vmatmul.mubr.bf16.gmra.mxu0 %v465
      %v839 = vpop.f32.mrf.mxu0
      %v840 = vadd.f32 %v265, %v839
      %v841 = vpop.f32.mrf.mxu0
      %v842 = vpop.f32.mrf.mxu0
      %v843 = vadd.f32 %v265, %v842
      %v844 = vpop.f32.mrf.mxu0
      %845 = vdwg.mxu0
      %v846 = vmax.f32 %v648, 0.0
      %v847 = vmax.f32 %v651, 0.0
      %v848 = vmax.f32 %v656, 0.0
      %v849 = vmax.f32 %v659, 0.0
      %v850 = vmax.f32 %v664, 0.0
      %v851 = vmax.f32 %v667, 0.0
      %v852 = vmax.f32 %v672, 0.0
      %v853 = vmax.f32 %v675, 0.0
      %v854 = vmax.f32 %v680, 0.0
      %v855 = vmax.f32 %v683, 0.0
      %v856 = vmax.f32 %v688, 0.0
      %v857 = vmax.f32 %v691, 0.0
      %v858 = vmax.f32 %v696, 0.0
      %v859 = vmax.f32 %v699, 0.0
      %v860 = vmax.f32 %v704, 0.0
      %v861 = vmax.f32 %v707, 0.0
      %v862 = vmax.f32 %v712, 0.0
      %v863 = vmax.f32 %v715, 0.0
      %v864 = vmax.f32 %v720, 0.0
      %v865 = vmax.f32 %v723, 0.0
      %v866 = vmax.f32 %v728, 0.0
      %v867 = vmax.f32 %v731, 0.0
      %v868 = vmax.f32 %v736, 0.0
      %v869 = vmax.f32 %v739, 0.0
      %v870 = vmax.f32 %v744, 0.0
      %v871 = vmax.f32 %v747, 0.0
      %v872 = vmax.f32 %v752, 0.0
      %v873 = vmax.f32 %v755, 0.0
      %v874 = vmax.f32 %v760, 0.0
      %v875 = vmax.f32 %v763, 0.0
      %v876 = vmax.f32 %v768, 0.0
      %v877 = vmax.f32 %v771, 0.0
      %v878 = vmax.f32 %v776, 0.0
      %v879 = vmax.f32 %v779, 0.0
      %v880 = vmax.f32 %v784, 0.0
      %v881 = vmax.f32 %v787, 0.0
      %v882 = vmax.f32 %v792, 0.0
      %v883 = vmax.f32 %v795, 0.0
      %v884 = vmax.f32 %v800, 0.0
      %v885 = vmax.f32 %v803, 0.0
      %v886 = vmax.f32 %v808, 0.0
      %v887 = vmax.f32 %v811, 0.0
      %v888 = vmax.f32 %v816, 0.0
      %v889 = vmax.f32 %v819, 0.0
      %v890 = vmax.f32 %v824, 0.0
      %v891 = vmax.f32 %v827, 0.0
      %v892 = vmax.f32 %v832, 0.0
      %v893 = vmax.f32 %v835, 0.0
      %v894 = vmax.f32 %v840, 0.0
      %v895 = vmax.f32 %v843, 0.0
      %v896 = vpack.c.bf16 %v847, %v846
      %v897 = vpack.c.bf16 %v849, %v848
      %v898 = vpack.c.bf16 %v851, %v850
      %v899 = vpack.c.bf16 %v853, %v852
      %v900 = vpack.c.bf16 %v855, %v854
      %v901 = vpack.c.bf16 %v857, %v856
      %v902 = vpack.c.bf16 %v859, %v858
      %v903 = vpack.c.bf16 %v861, %v860
      %v904 = vpack.c.bf16 %v863, %v862
      %v905 = vpack.c.bf16 %v865, %v864
      %v906 = vpack.c.bf16 %v867, %v866
      %v907 = vpack.c.bf16 %v869, %v868
      %v908 = vpack.c.bf16 %v871, %v870
      %v909 = vpack.c.bf16 %v873, %v872
      %v910 = vpack.c.bf16 %v875, %v874
      %v911 = vpack.c.bf16 %v877, %v876
      %v912 = vpack.c.bf16 %v879, %v878
      %v913 = vpack.c.bf16 %v881, %v880
      %v914 = vpack.c.bf16 %v883, %v882
      %v915 = vpack.c.bf16 %v885, %v884
      %v916 = vpack.c.bf16 %v887, %v886
      %v917 = vpack.c.bf16 %v889, %v888
      %v918 = vpack.c.bf16 %v891, %v890
      %v919 = vpack.c.bf16 %v893, %v892
      %v920 = vpack.c.bf16 %v895, %v894
      %v946 = vunpack.c.l.b16 %v896
      %v947 = vunpack.c.h.b16 %v896
      %v948 = vunpack.c.l.b16 %v897
      %v949 = vunpack.c.h.b16 %v897
      %v950 = vunpack.c.l.b16 %v898
      %v951 = vunpack.c.h.b16 %v898
      %v952 = vunpack.c.l.b16 %v899
      %v953 = vunpack.c.h.b16 %v899
      %v954 = vunpack.c.l.b16 %v900
      %v955 = vunpack.c.h.b16 %v900
      %v956 = vunpack.c.l.b16 %v901
      %v957 = vunpack.c.h.b16 %v901
      %v958 = vunpack.c.l.b16 %v902
      %v959 = vunpack.c.h.b16 %v902
      %v960 = vunpack.c.l.b16 %v903
      %v961 = vunpack.c.h.b16 %v903
      %v962 = vunpack.c.l.b16 %v904
      %v963 = vunpack.c.h.b16 %v904
      %v964 = vunpack.c.l.b16 %v905
      %v965 = vunpack.c.h.b16 %v905
      %v966 = vunpack.c.l.b16 %v906
      %v967 = vunpack.c.h.b16 %v906
      %v968 = vunpack.c.l.b16 %v907
      %v969 = vunpack.c.h.b16 %v907
      %v970 = vunpack.c.l.b16 %v908
      %v971 = vunpack.c.h.b16 %v908
      %v972 = vunpack.c.l.b16 %v909
      %v973 = vunpack.c.h.b16 %v909
      %v974 = vunpack.c.l.b16 %v910
      %v975 = vunpack.c.h.b16 %v910
      %v976 = vunpack.c.l.b16 %v911
      %v977 = vunpack.c.h.b16 %v911
      %v978 = vunpack.c.l.b16 %v912
      %v979 = vunpack.c.h.b16 %v912
      %v980 = vunpack.c.l.b16 %v913
      %v981 = vunpack.c.h.b16 %v913
      %v982 = vunpack.c.l.b16 %v914
      %v983 = vunpack.c.h.b16 %v914
      %v984 = vunpack.c.l.b16 %v915
      %v985 = vunpack.c.h.b16 %v915
      %v986 = vunpack.c.l.b16 %v916
      %v987 = vunpack.c.h.b16 %v916
      %v988 = vunpack.c.l.b16 %v917
      %v989 = vunpack.c.h.b16 %v917
      %v990 = vunpack.c.l.b16 %v918
      %v991 = vunpack.c.h.b16 %v918
      %v992 = vunpack.c.l.b16 %v919
      %v993 = vunpack.c.h.b16 %v919
      %v994 = vunpack.c.l.b16 %v920
      %v995 = vunpack.c.h.b16 %v920
      %v996 = vpack.c.b16 %v946, %v946
      %v997 = vpack.c.b16 %v947, %v947
      %v998 = vpack.c.b16 %v948, %v948
      %v999 = vpack.c.b16 %v949, %v949
      %v1000 = vpack.c.b16 %v950, %v950
      %v1001 = vpack.c.b16 %v951, %v951
      %v1002 = vpack.c.b16 %v952, %v952
      %v1003 = vpack.c.b16 %v953, %v953
      %v1004 = vpack.c.b16 %v954, %v954
      %v1005 = vpack.c.b16 %v955, %v955
      %v1006 = vpack.c.b16 %v956, %v956
      %v1007 = vpack.c.b16 %v957, %v957
      %v1008 = vpack.c.b16 %v958, %v958
      %v1009 = vpack.c.b16 %v959, %v959
      %v1010 = vpack.c.b16 %v960, %v960
      %v1011 = vpack.c.b16 %v961, %v961
      %v1012 = vpack.c.b16 %v962, %v962
      %v1013 = vpack.c.b16 %v963, %v963
      %v1014 = vpack.c.b16 %v964, %v964
      %v1015 = vpack.c.b16 %v965, %v965
      %v1016 = vpack.c.b16 %v966, %v966
      %v1017 = vpack.c.b16 %v967, %v967
      %v1018 = vpack.c.b16 %v968, %v968
      %v1019 = vpack.c.b16 %v969, %v969
      %v1020 = vpack.c.b16 %v970, %v970
      %v1021 = vpack.c.b16 %v971, %v971
      %v1022 = vpack.c.b16 %v972, %v972
      %v1023 = vpack.c.b16 %v973, %v973
      %v1024 = vpack.c.b16 %v974, %v974
      %v1025 = vpack.c.b16 %v975, %v975
      %v1026 = vpack.c.b16 %v976, %v976
      %v1027 = vpack.c.b16 %v977, %v977
      %v1028 = vpack.c.b16 %v978, %v978
      %v1029 = vpack.c.b16 %v979, %v979
      %v1030 = vpack.c.b16 %v980, %v980
      %v1031 = vpack.c.b16 %v981, %v981
      %v1032 = vpack.c.b16 %v982, %v982
      %v1033 = vpack.c.b16 %v983, %v983
      %v1034 = vpack.c.b16 %v984, %v984
      %v1035 = vpack.c.b16 %v985, %v985
      %v1036 = vpack.c.b16 %v986, %v986
      %v1037 = vpack.c.b16 %v987, %v987
      %v1038 = vpack.c.b16 %v988, %v988
      %v1039 = vpack.c.b16 %v989, %v989
      %v1040 = vpack.c.b16 %v990, %v990
      %v1041 = vpack.c.b16 %v991, %v991
      %v1042 = vpack.c.b16 %v992, %v992
      %v1043 = vpack.c.b16 %v993, %v993
      %v1044 = vpack.c.b16 %v994, %v994
      %v1045 = vpack.c.b16 %v995, %v995
      %vm1096 = vcmask 257024
      %1097 = vst.msk [vmem:[%s175] sm:$0xf] %vm1096, %v996
      %1098 = vst.msk [vmem:[%s175 + $0x4] sm:$0xf] %vm1096, %v997
      %1099 = vst.msk [vmem:[%s175 + $0x8] sm:$0xf] %vm1096, %v998
      %1100 = vst.msk [vmem:[%s175 + $0xc] sm:$0xf] %vm1096, %v999
      %1101 = vst.msk [vmem:[%s175 + $0x10] sm:$0xf] %vm1096, %v1000
      %1102 = vst.msk [vmem:[%s175 + $0x14] sm:$0xf] %vm1096, %v1001
      %1103 = vst.msk [vmem:[%s175 + $0x18] sm:$0xf] %vm1096, %v1002
      %1104 = vst.msk [vmem:[%s175 + $0x1c] sm:$0xf] %vm1096, %v1003
      %1105 = vst.msk [vmem:[%s175 + $0x20] sm:$0xf] %vm1096, %v1004
      %1106 = vst.msk [vmem:[%s175 + $0x24] sm:$0xf] %vm1096, %v1005
      %1107 = vst.msk [vmem:[%s175 + $0x28] sm:$0xf] %vm1096, %v1006
      %1108 = vst.msk [vmem:[%s175 + $0x2c] sm:$0xf] %vm1096, %v1007
      %1109 = vst.msk [vmem:[%s175 + $0x30] sm:$0xf] %vm1096, %v1008
      %1110 = vst.msk [vmem:[%s175 + $0x34] sm:$0xf] %vm1096, %v1009
      %1111 = vst.msk [vmem:[%s175 + $0x38] sm:$0xf] %vm1096, %v1010
      %1112 = vst.msk [vmem:[%s175 + $0x3c] sm:$0xf] %vm1096, %v1011
      %1113 = vst.msk [vmem:[%s175 + $0x40] sm:$0xf] %vm1096, %v1012
      %1114 = vst.msk [vmem:[%s175 + $0x44] sm:$0xf] %vm1096, %v1013
      %1115 = vst.msk [vmem:[%s175 + $0x48] sm:$0xf] %vm1096, %v1014
      %1116 = vst.msk [vmem:[%s175 + $0x4c] sm:$0xf] %vm1096, %v1015
      %1117 = vst.msk [vmem:[%s175 + $0x50] sm:$0xf] %vm1096, %v1016
      %1118 = vst.msk [vmem:[%s175 + $0x54] sm:$0xf] %vm1096, %v1017
      %1119 = vst.msk [vmem:[%s175 + $0x58] sm:$0xf] %vm1096, %v1018
      %1120 = vst.msk [vmem:[%s175 + $0x5c] sm:$0xf] %vm1096, %v1019
      %1121 = vst.msk [vmem:[%s175 + $0x60] sm:$0xf] %vm1096, %v1020
      %1122 = vst.msk [vmem:[%s175 + $0x64] sm:$0xf] %vm1096, %v1021
      %1123 = vst.msk [vmem:[%s175 + $0x68] sm:$0xf] %vm1096, %v1022
      %1124 = vst.msk [vmem:[%s175 + $0x6c] sm:$0xf] %vm1096, %v1023
      %1125 = vst.msk [vmem:[%s175 + $0x70] sm:$0xf] %vm1096, %v1024
      %1126 = vst.msk [vmem:[%s175 + $0x74] sm:$0xf] %vm1096, %v1025
      %1127 = vst.msk [vmem:[%s175 + $0x78] sm:$0xf] %vm1096, %v1026
      %1128 = vst.msk [vmem:[%s175 + $0x7c] sm:$0xf] %vm1096, %v1027
      %1129 = vst.msk [vmem:[%s175 + $0x80] sm:$0xf] %vm1096, %v1028
      %1130 = vst.msk [vmem:[%s175 + $0x84] sm:$0xf] %vm1096, %v1029
      %1131 = vst.msk [vmem:[%s175 + $0x88] sm:$0xf] %vm1096, %v1030
      %1132 = vst.msk [vmem:[%s175 + $0x8c] sm:$0xf] %vm1096, %v1031
      %1133 = vst.msk [vmem:[%s175 + $0x90] sm:$0xf] %vm1096, %v1032
      %1134 = vst.msk [vmem:[%s175 + $0x94] sm:$0xf] %vm1096, %v1033
      %1135 = vst.msk [vmem:[%s175 + $0x98] sm:$0xf] %vm1096, %v1034
      %1136 = vst.msk [vmem:[%s175 + $0x9c] sm:$0xf] %vm1096, %v1035
      %1137 = vst.msk [vmem:[%s175 + $0xa0] sm:$0xf] %vm1096, %v1036
      %1138 = vst.msk [vmem:[%s175 + $0xa4] sm:$0xf] %vm1096, %v1037
      %1139 = vst.msk [vmem:[%s175 + $0xa8] sm:$0xf] %vm1096, %v1038
      %1140 = vst.msk [vmem:[%s175 + $0xac] sm:$0xf] %vm1096, %v1039
      %1141 = vst.msk [vmem:[%s175 + $0xb0] sm:$0xf] %vm1096, %v1040
      %1142 = vst.msk [vmem:[%s175 + $0xb4] sm:$0xf] %vm1096, %v1041
      %1143 = vst.msk [vmem:[%s175 + $0xb8] sm:$0xf] %vm1096, %v1042
      %1144 = vst.msk [vmem:[%s175 + $0xbc] sm:$0xf] %vm1096, %v1043
      %1145 = vst.msk [vmem:[%s175 + $0xc0] sm:$0xf] %vm1096, %v1044
      %1146 = vst.msk [vmem:[%s175 + $0xc4] sm:$0xf] %vm1096, %v1045
      %s1147 = smul.u32 50, %s14
      %p1148 = scmp.lt.s32.totalorder %s1147, 99
      %s1149 = scalar_select %p1148, %s1147, 99
      %s1150 = smul.addr %s1149, 4
      %s1151 = scalar_lea.vmem %s3, %s1150
      // Predicated region
      $region33: #{cnn_forward.4} parent=31 // pred_check
        %p1152 = pneg %p100
      $region34: #{cnn_forward.4} parent=31 // pred_check_branch
        %1154 = sbr.rel (%p1152) target = $region36
      $region35: #{cnn_forward.4} parent=31 // pred_region
        %s1155 = smul.u32 50, %s14
      $region36: #{cnn_forward.4} parent=31 // pred_fallthru
        _
    $region32: #{cnn_forward.4} parent=5 // pred_fallthru
      _
    %p1156 = scmp.le.s32.totalorder 2, %s9
    // Predicated region
    $region37: #{cnn_forward.4} parent=5 // pred_check
      %p1157 = pneg %p1156
    $region38: #{cnn_forward.4} parent=5 // pred_check_branch
      %1159 = sbr.rel (%p1157) target = $region40
    $region39: #{cnn_forward.4} parent=5 // pred_region
      %s1160 = ssub.s32 %s9, 2
      // Predicated region
      $region41: #{cnn_forward.4} parent=39 // pred_check
        %p1161 = pneg %p106
      $region42: #{cnn_forward.4} parent=39 // pred_check_branch
        %1163 = sbr.rel (%p1161) target = $region44
      $region43: #{cnn_forward.4} parent=39 // pred_region
        %s1164 = smul.u32 50, %s15
        %p1165 = scmp.lt.s32.totalorder %s1164, 99
        %s1166 = scalar_select %p1165, %s1164, 99
        %s1167 = smul.addr %s1166, 4
        %s1168 = scalar_lea.vmem %s3, %s1167
      $region44: #{cnn_forward.4} parent=39 // pred_fallthru
        _
    $region40: #{cnn_forward.4} parent=5 // pred_fallthru
      _
  $region6: #{cnn_forward.4} parent=0 // loop_footer
    %s13 = sadd.s32 1, %s9
  $region7: #{cnn_forward.4} parent=0 // loop_footer_branch
    %8 = sbr.rel target = $region3
  $region8: #{cnn_forward.4} parent=0 // loop_exit
    _

// kernel: cnn_forward.5
$region0: #{cnn_forward.5}
  #allocation0 [shape = 'u32[]', space=smem, size = 0x4, offset = 0x4, fixed_abs, tag = 'smem constant byte address 0x4 - core index']
  #allocation1 [shape = 'u32[144,128]{1,0:T(1,128)}', space=vmem, size = 0x12000, scoped, tag = 'internal scratch']
  %s0 = inlined_call_operand.vmem [shape: bf16[162,512], index: 0, kind: input, shape index: {}]
  %s1 = inlined_call_operand.vmem [shape: bf16[512,64], index: 1, kind: input, shape index: {}]
  %s2 = inlined_call_operand.vmem [shape: f32[1,64], index: 2, kind: input, shape index: {}]
  %s3 = inlined_call_operand.vmem [shape: bf16[162,64], index: 3, kind: output, shape index: {}]
  %s4 = sld [smem:[#allocation0]]
  $region89: #{cnn_forward.5} parent=0
    _
  %s6 = ssub.s32 1, %s4
  %s7 = scalar_select 0, %s6, %s4
  $region1: #{cnn_forward.5} parent=0
    #allocation2 [shape = 'u8[49152]{0}', space=vmem, size = 0xc000, scoped, tag = 'output window, operand 0']
    loop: start=0, step=1, limit=4
    $region2: #{cnn_forward.5} parent=1 // loop_pre_header
      _
    $region3: #{cnn_forward.5} parent=1 // loop_header
      %s9 = sphi 0, %s13
      %p10 = scmp.ge.s32.totalorder %s9, 4
      %s19 = sphi 0, %s21
      %s22 = sphi 0, %s19
      %s23 = sphi 0, %s22
      %s39 = sphi 0, %s23
      %s43 = sphi 0, %s43
      %s45 = sphi 0, %s43
      %s46 = sphi 0, %s45
      %s60 = sphi 0, %s46
      %s64 = sphi 0, %s64
      %s66 = sphi 0, %s64
      %s67 = sphi 0, %s66
      %s81 = sphi 0, %s67
      %s87 = sphi 0, %s89
      %s90 = sphi 0, %s87
      %s91 = sphi 0, %s90
      %s107 = sphi 0, %s91
    $region4: #{cnn_forward.5} parent=1 // loop_header_branch
      %12 = sbr.rel (%p10) target = $region8
    $region5: #{cnn_forward.5} parent=1 // loop_body
      %s14 = ssub.s32 %s9, 1
      %s15 = ssub.s32 %s9, 2
      %s16 = sadd.s32 %s9, 1
      %s17 = ssub.s32 %s9, %s16
      %p18 = scmp.eq.s32.totalorder %s17, 0
      %s20 = sadd.s32 %s19, 1
      %s21 = scalar_select %p18, %s19, %s20
      %p24 = pneg %p18
      %p25 = scmp.eq.s32.totalorder %s9, 1
      %p26 = por %p24, %p25
      %p27 = scmp.ne.s32.totalorder %s19, %s22
      %p28 = scmp.eq.s32.totalorder %s9, 0
      %p29 = por %p27, %p28
      %p30 = scmp.ne.s32.totalorder %s19, %s22
      %p31 = scmp.eq.s32.totalorder %s14, 1
      %p32 = por %p30, %p31
      %p33 = scmp.ne.s32.totalorder %s22, %s23
      %p34 = scmp.eq.s32.totalorder %s14, 0
      %p35 = por %p33, %p34
      %p36 = scmp.ne.s32.totalorder %s22, %s23
      %p37 = scmp.eq.s32.totalorder %s15, 1
      %p38 = por %p36, %p37
      %p40 = scmp.ne.s32.totalorder %s23, %s39
      %p41 = scmp.eq.s32.totalorder %s15, 0
      %p42 = por %p40, %p41
      %s44 = sadd.s32 %s43, 1
      %p47 = scmp.eq.s32.totalorder %s9, 1
      %p48 = scmp.ne.s32.totalorder %s43, %s45
      %p49 = scmp.eq.s32.totalorder %s9, 0
      %p50 = por %p48, %p49
      %p51 = scmp.ne.s32.totalorder %s43, %s45
      %p52 = scmp.eq.s32.totalorder %s14, 1
      %p53 = por %p51, %p52
      %p54 = scmp.ne.s32.totalorder %s45, %s46
      %p55 = scmp.eq.s32.totalorder %s14, 0
      %p56 = por %p54, %p55
      %p57 = scmp.ne.s32.totalorder %s45, %s46
      %p58 = scmp.eq.s32.totalorder %s15, 1
      %p59 = por %p57, %p58
      %p61 = scmp.ne.s32.totalorder %s46, %s60
      %p62 = scmp.eq.s32.totalorder %s15, 0
      %p63 = por %p61, %p62
      %s65 = sadd.s32 %s64, 1
      %p68 = scmp.eq.s32.totalorder %s9, 1
      %p69 = scmp.ne.s32.totalorder %s64, %s66
      %p70 = scmp.eq.s32.totalorder %s9, 0
      %p71 = por %p69, %p70
      %p72 = scmp.ne.s32.totalorder %s64, %s66
      %p73 = scmp.eq.s32.totalorder %s14, 1
      %p74 = por %p72, %p73
      %p75 = scmp.ne.s32.totalorder %s66, %s67
      %p76 = scmp.eq.s32.totalorder %s14, 0
      %p77 = por %p75, %p76
      %p78 = scmp.ne.s32.totalorder %s66, %s67
      %p79 = scmp.eq.s32.totalorder %s15, 1
      %p80 = por %p78, %p79
      %p82 = scmp.ne.s32.totalorder %s67, %s81
      %p83 = scmp.eq.s32.totalorder %s15, 0
      %p84 = por %p82, %p83
      %s85 = ssub.s32 %s9, %s16
      %p86 = scmp.eq.s32.totalorder %s85, 0
      %s88 = sadd.s32 %s87, 1
      %s89 = scalar_select %p86, %s87, %s88
      %p92 = pneg %p86
      %p93 = scmp.eq.s32.totalorder %s9, 1
      %p94 = por %p92, %p93
      %p95 = scmp.ne.s32.totalorder %s87, %s90
      %p96 = scmp.eq.s32.totalorder %s9, 0
      %p97 = por %p95, %p96
      %p98 = scmp.ne.s32.totalorder %s87, %s90
      %p99 = scmp.eq.s32.totalorder %s14, 1
      %p100 = por %p98, %p99
      %p101 = scmp.ne.s32.totalorder %s90, %s91
      %p102 = scmp.eq.s32.totalorder %s14, 0
      %p103 = por %p101, %p102
      %p104 = scmp.ne.s32.totalorder %s90, %s91
      %p105 = scmp.eq.s32.totalorder %s15, 1
      %p106 = por %p104, %p105
      %p108 = scmp.ne.s32.totalorder %s91, %s107
      %p109 = scmp.eq.s32.totalorder %s15, 0
      %p110 = por %p108, %p109
      %p111 = scmp.le.s32.totalorder 1, %s9
      %p112 = scmp.lt.s32.totalorder %s9, 3
      %p113 = pnand %p111, %p112
      %p114 = pneg %p113
      // Predicated region
      $region9: #{cnn_forward.5} parent=5 // pred_check
        _
      $region10: #{cnn_forward.5} parent=5 // pred_check_branch
        %116 = sbr.rel (%p113) target = $region12
      $region11: #{cnn_forward.5} parent=5 // pred_region
        %s117 = ssub.s32 %s9, 1
        // Predicated region
        $region13: #{cnn_forward.5} parent=11 // pred_check
          %p118 = pneg %p56
        $region14: #{cnn_forward.5} parent=11 // pred_check_branch
          %120 = sbr.rel (%p118) target = $region16
        $region15: #{cnn_forward.5} parent=11 // pred_region
          _
        $region16: #{cnn_forward.5} parent=11 // pred_fallthru
          _
        // Predicated region
        $region17: #{cnn_forward.5} parent=11 // pred_check
          %p121 = pneg %p77
        $region18: #{cnn_forward.5} parent=11 // pred_check_branch
          %123 = sbr.rel (%p121) target = $region20
        $region19: #{cnn_forward.5} parent=11 // pred_region
          _
        $region20: #{cnn_forward.5} parent=11 // pred_fallthru
          _
      $region12: #{cnn_forward.5} parent=5 // pred_fallthru
        _
      %p124 = scmp.lt.s32.totalorder %s9, 2
      // Predicated region
      $region21: #{cnn_forward.5} parent=5 // pred_check
        %p125 = pneg %p124
      $region22: #{cnn_forward.5} parent=5 // pred_check_branch
        %127 = sbr.rel (%p125) target = $region24
      $region23: #{cnn_forward.5} parent=5 // pred_region
        // Predicated region
        $region25: #{cnn_forward.5} parent=23 // pred_check
          %p128 = pneg %p29
        $region26: #{cnn_forward.5} parent=23 // pred_check_branch
          %130 = sbr.rel (%p128) target = $region28
        $region27: #{cnn_forward.5} parent=23 // pred_region
          %s131 = smul.u32 12, %s9
          %s132 = ssub.s32 21, %s131
          %p133 = scmp.lt.s32.totalorder %s132, 12
          %s134 = scalar_select %p133, %s132, 12
          %s135 = smul.u32 64, %s134
          %s136 = smul.u32 %s135, 4
          %p137 = scmp.lt.s32.totalorder %s131, 20
          %s138 = scalar_select %p137, %s131, 20
          %s139 = smul.addr %s138, 4
          %s140 = smul.addr %s139, 4
          %s141 = scalar_lea.vmem %s0, %s140
          %s142 = smul.u32 12, %s9
          %s143 = ssub.s32 21, %s142
          %p144 = scmp.lt.s32.totalorder %s143, 12
          %s145 = scalar_select %p144, %s143, 12
          %s146 = smul.u32 64, %s145
          %s147 = smul.u32 %s146, 4
        $region28: #{cnn_forward.5} parent=23 // pred_fallthru
          _
      $region24: #{cnn_forward.5} parent=5 // pred_fallthru
        _
      %p148 = scmp.le.s32.totalorder 1, %s9
      %p149 = scmp.lt.s32.totalorder %s9, 3
      %p150 = pnand %p148, %p149
      %p151 = pneg %p150
      // Predicated region
      $region29: #{cnn_forward.5} parent=5 // pred_check
        _
      $region30: #{cnn_forward.5} parent=5 // pred_check_branch
        %153 = sbr.rel (%p150) target = $region32
      $region31: #{cnn_forward.5} parent=5 // pred_region
        %s154 = ssub.s32 %s9, 1
        %s155 = smul.u32 12, %s14
        %s156 = ssub.s32 21, %s155
        %p157 = scmp.lt.s32.totalorder %s156, 12
        %s158 = scalar_select %p157, %s156, 12
        %s159 = smul.u32 64, %s158
        %s160 = smul.u32 %s159, 4
        %p161 = scmp.lt.s32.totalorder %s155, 20
        %s162 = scalar_select %p161, %s155, 20
        %s163 = smul.addr %s162, 4
        %s164 = smul.addr %s163, 4
        %s165 = scalar_lea.vmem %s0, %s164
        %p166 = pneg %p35
        %p167 = pneg %p32
        %p168 = pneg %p56
        %p169 = pneg %p53
        %p170 = pneg %p77
        %p171 = pneg %p74
        %p172 = pneg %p103
        %p173 = pneg %p100
        %s174 = sand.u32 %s90, 1
        %s175 = sand.u32 %s90, 1
        %s176 = smul.addr %s175, 48
        %s177 = scalar_lea.vmem [#allocation2], %s176
        %s178 = smul.u32 12, %s14
        %s179 = ssub.s32 21, %s178
        %p180 = scmp.lt.s32.totalorder %s179, 12
        %s181 = scalar_select %p180, %s179, 12
        %s182 = smul.u32 64, %s181
        %s183 = smul.u32 %s182, 4
        %p184 = scmp.lt.s32.totalorder %s178, 20
        %s185 = scalar_select %p184, %s178, 20
        %s186 = smul.addr %s185, 4
        %s187 = smul.addr %s186, 4
        %s188 = scalar_lea.vmem %s0, %s187
        %s189 = smul.u32 12, %s14
        %s190 = ssub.s32 21, %s189
        %p191 = scmp.lt.s32.totalorder %s190, 12
        %s192 = scalar_select %p191, %s190, 12
        %s193 = smul.u32 64, %s192
        %s194 = smul.u32 %s193, 4
        %s195 = smul.u32 12, %s14
        %s196 = ssub.s32 21, %s195
        %p197 = scmp.lt.s32.totalorder %s196, 12
        %s198 = scalar_select %p197, %s196, 12
        %s199 = smul.u32 64, %s198
        %v201 = vld [vmem:[%s188] sm:$0xff]
        %v202 = vld [vmem:[%s188 + $0x8] sm:$0xff]
        %v203 = vld [vmem:[%s188 + $0x10] sm:$0xff]
        %v204 = vld [vmem:[%s188 + $0x18] sm:$0xff]
        %v205 = vld [vmem:[%s188 + $0x20] sm:$0xff]
        %v206 = vld [vmem:[%s188 + $0x28] sm:$0xff]
        %v207 = vld [vmem:[%s188 + $0x30] sm:$0xff]
        %v208 = vld [vmem:[%s188 + $0x38] sm:$0xff]
        %v209 = vld [vmem:[%s188 + $0x40] sm:$0xff]
        %v210 = vld [vmem:[%s188 + $0x48] sm:$0xff]
        %v211 = vld [vmem:[%s188 + $0x50] sm:$0xff]
        %v212 = vld [vmem:[%s188 + $0x58] sm:$0xff]
        %v213 = vld [vmem:[%s188 + $0x60] sm:$0xff]
        %v214 = vld [vmem:[%s188 + $0x68] sm:$0xff]
        %v215 = vld [vmem:[%s188 + $0x70] sm:$0xff]
        %v216 = vld [vmem:[%s188 + $0x78] sm:$0xff]
        %v217 = vld [vmem:[%s188 + $0x80] sm:$0xff]
        %v218 = vld [vmem:[%s188 + $0x88] sm:$0xff]
        %v219 = vld [vmem:[%s188 + $0x90] sm:$0xff]
        %v220 = vld [vmem:[%s188 + $0x98] sm:$0xff]
        %v221 = vld [vmem:[%s188 + $0xa0] sm:$0xff]
        %v222 = vld [vmem:[%s188 + $0xa8] sm:$0xff]
        %v223 = vld [vmem:[%s188 + $0xb0] sm:$0xff]
        %v224 = vld [vmem:[%s188 + $0xb8] sm:$0xff]
        %v225 = vld [vmem:[%s1] sm:$0xf]
        %v226 = vld [vmem:[%s1 + $0x4] sm:$0xf]
        %v227 = vld [vmem:[%s1 + $0x8] sm:$0xf]
        %v228 = vld [vmem:[%s1 + $0xc] sm:$0xf]
        %v229 = vld [vmem:[%s1 + $0x10] sm:$0xf]
        %v230 = vld [vmem:[%s1 + $0x14] sm:$0xf]
        %v231 = vld [vmem:[%s1 + $0x18] sm:$0xf]
        %v232 = vld [vmem:[%s1 + $0x1c] sm:$0xf]
        %v233 = vld [vmem:[%s1 + $0x20] sm:$0xf]
        %v234 = vld [vmem:[%s1 + $0x24] sm:$0xf]
        %v235 = vld [vmem:[%s1 + $0x28] sm:$0xf]
        %v236 = vld [vmem:[%s1 + $0x2c] sm:$0xf]
        %v237 = vld [vmem:[%s1 + $0x30] sm:$0xf]
        %v238 = vld [vmem:[%s1 + $0x34] sm:$0xf]
        %v239 = vld [vmem:[%s1 + $0x38] sm:$0xf]
        %v240 = vld [vmem:[%s1 + $0x3c] sm:$0xf]
        %v241 = vld [vmem:[%s1 + $0x40] sm:$0xf]
        %v242 = vld [vmem:[%s1 + $0x44] sm:$0xf]
        %v243 = vld [vmem:[%s1 + $0x48] sm:$0xf]
        %v244 = vld [vmem:[%s1 + $0x4c] sm:$0xf]
        %v245 = vld [vmem:[%s1 + $0x50] sm:$0xf]
        %v246 = vld [vmem:[%s1 + $0x54] sm:$0xf]
        %v247 = vld [vmem:[%s1 + $0x58] sm:$0xf]
        %v248 = vld [vmem:[%s1 + $0x5c] sm:$0xf]
        %v249 = vld [vmem:[%s1 + $0x60] sm:$0xf]
        %v250 = vld [vmem:[%s1 + $0x64] sm:$0xf]
        %v251 = vld [vmem:[%s1 + $0x68] sm:$0xf]
        %v252 = vld [vmem:[%s1 + $0x6c] sm:$0xf]
        %v253 = vld [vmem:[%s1 + $0x70] sm:$0xf]
        %v254 = vld [vmem:[%s1 + $0x74] sm:$0xf]
        %v255 = vld [vmem:[%s1 + $0x78] sm:$0xf]
        %v256 = vld [vmem:[%s1 + $0x7c] sm:$0xf]
        %v257 = vld [vmem:[%s1 + $0x80] sm:$0xf]
        %v258 = vld [vmem:[%s1 + $0x84] sm:$0xf]
        %v259 = vld [vmem:[%s1 + $0x88] sm:$0xf]
        %v260 = vld [vmem:[%s1 + $0x8c] sm:$0xf]
        %v261 = vld [vmem:[%s1 + $0x90] sm:$0xf]
        %v262 = vld [vmem:[%s1 + $0x94] sm:$0xf]
        %v263 = vld [vmem:[%s1 + $0x98] sm:$0xf]
        %v264 = vld [vmem:[%s1 + $0x9c] sm:$0xf]
        %v265 = vld [vmem:[%s1 + $0xa0] sm:$0xf]
        %v266 = vld [vmem:[%s1 + $0xa4] sm:$0xf]
        %v267 = vld [vmem:[%s1 + $0xa8] sm:$0xf]
        %v268 = vld [vmem:[%s1 + $0xac] sm:$0xf]
        %v269 = vld [vmem:[%s1 + $0xb0] sm:$0xf]
        %v270 = vld [vmem:[%s1 + $0xb4] sm:$0xf]
        %v271 = vld [vmem:[%s1 + $0xb8] sm:$0xf]
        %v272 = vld [vmem:[%s1 + $0xbc] sm:$0xf]
        %v273 = vld [vmem:[%s1 + $0xc0] sm:$0xf]
        %v274 = vld [vmem:[%s1 + $0xc4] sm:$0xf]
        %v275 = vld [vmem:[%s1 + $0xc8] sm:$0xf]
        %v276 = vld [vmem:[%s1 + $0xcc] sm:$0xf]
        %v277 = vld [vmem:[%s1 + $0xd0] sm:$0xf]
        %v278 = vld [vmem:[%s1 + $0xd4] sm:$0xf]
        %v279 = vld [vmem:[%s1 + $0xd8] sm:$0xf]
        %v280 = vld [vmem:[%s1 + $0xdc] sm:$0xf]
        %v281 = vld [vmem:[%s1 + $0xe0] sm:$0xf]
        %v282 = vld [vmem:[%s1 + $0xe4] sm:$0xf]
        %v283 = vld [vmem:[%s1 + $0xe8] sm:$0xf]
        %v284 = vld [vmem:[%s1 + $0xec] sm:$0xf]
        %v285 = vld [vmem:[%s1 + $0xf0] sm:$0xf]
        %v286 = vld [vmem:[%s1 + $0xf4] sm:$0xf]
        %v287 = vld [vmem:[%s1 + $0xf8] sm:$0xf]
        %v288 = vld [vmem:[%s1 + $0xfc] sm:$0xf]
        %v289 = vld [vmem:[%s2] sm:$0x1]
        %v291 = vlaneseq
        %v292 = vshrl.u32 %v291, 7
        %v293 = vsub.s32 0, %v292
        %v294 = vrot.slane %v289, %v293
        %v320 = vunpack.c.l.b16 %v201
        %v321 = vunpack.c.h.b16 %v201
        %v322 = vunpack.c.l.b16 %v202
        %v323 = vunpack.c.h.b16 %v202
        %v324 = vunpack.c.l.b16 %v203
        %v325 = vunpack.c.h.b16 %v203
        %v326 = vunpack.c.l.b16 %v204
        %v327 = vunpack.c.h.b16 %v204
        %v328 = vunpack.c.l.b16 %v205
        %v329 = vunpack.c.h.b16 %v205
        %v330 = vunpack.c.l.b16 %v206
        %v331 = vunpack.c.h.b16 %v206
        %v332 = vunpack.c.l.b16 %v207
        %v333 = vunpack.c.h.b16 %v207
        %v334 = vunpack.c.l.b16 %v208
        %v335 = vunpack.c.h.b16 %v208
        %v336 = vunpack.c.l.b16 %v209
        %v337 = vunpack.c.h.b16 %v209
        %v338 = vunpack.c.l.b16 %v210
        %v339 = vunpack.c.h.b16 %v210
        %v340 = vunpack.c.l.b16 %v211
        %v341 = vunpack.c.h.b16 %v211
        %v342 = vunpack.c.l.b16 %v212
        %v343 = vunpack.c.h.b16 %v212
        %v344 = vunpack.c.l.b16 %v213
        %v345 = vunpack.c.h.b16 %v213
        %v346 = vunpack.c.l.b16 %v214
        %v347 = vunpack.c.h.b16 %v214
        %v348 = vunpack.c.l.b16 %v215
        %v349 = vunpack.c.h.b16 %v215
        %v350 = vunpack.c.l.b16 %v216
        %v351 = vunpack.c.h.b16 %v216
        %v352 = vunpack.c.l.b16 %v217
        %v353 = vunpack.c.h.b16 %v217
        %v354 = vunpack.c.l.b16 %v218
        %v355 = vunpack.c.h.b16 %v218
        %v356 = vunpack.c.l.b16 %v219
        %v357 = vunpack.c.h.b16 %v219
        %v358 = vunpack.c.l.b16 %v220
        %v359 = vunpack.c.h.b16 %v220
        %v360 = vunpack.c.l.b16 %v221
        %v361 = vunpack.c.h.b16 %v221
        %v362 = vunpack.c.l.b16 %v222
        %v363 = vunpack.c.h.b16 %v222
        %v364 = vunpack.c.l.b16 %v223
        %v365 = vunpack.c.h.b16 %v223
        %v366 = vunpack.c.l.b16 %v224
        %v367 = vunpack.c.h.b16 %v224
        %v368 = vpack.c.b16 %v324, %v320
        %v369 = vpack.c.b16 %v325, %v321
        %v370 = vpack.c.b16 %v326, %v322
        %v371 = vpack.c.b16 %v327, %v323
        %v372 = vpack.c.b16 %v332, %v328
        %v373 = vpack.c.b16 %v333, %v329
        %v374 = vpack.c.b16 %v334, %v330
        %v375 = vpack.c.b16 %v335, %v331
        %v376 = vpack.c.b16 %v340, %v336
        %v377 = vpack.c.b16 %v341, %v337
        %v378 = vpack.c.b16 %v342, %v338
        %v379 = vpack.c.b16 %v343, %v339
        %v380 = vpack.c.b16 %v348, %v344
        %v381 = vpack.c.b16 %v349, %v345
        %v382 = vpack.c.b16 %v350, %v346
        %v383 = vpack.c.b16 %v351, %v347
        %v384 = vpack.c.b16 %v356, %v352
        %v385 = vpack.c.b16 %v357, %v353
        %v386 = vpack.c.b16 %v358, %v354
        %v387 = vpack.c.b16 %v359, %v355
        %v388 = vpack.c.b16 %v364, %v360
        %v389 = vpack.c.b16 %v365, %v361
        %v390 = vpack.c.b16 %v366, %v362
        %v391 = vpack.c.b16 %v367, %v363
        %v480 = vunpack.c.l.b16 %v225
        %v481 = vunpack.c.l.b16 %v226
        %v482 = vunpack.c.l.b16 %v227
        %v483 = vunpack.c.l.b16 %v228
        %v484 = vunpack.c.l.b16 %v229
        %v485 = vunpack.c.l.b16 %v230
        %v486 = vunpack.c.l.b16 %v231
        %v487 = vunpack.c.l.b16 %v232
        %v488 = vunpack.c.l.b16 %v233
        %v489 = vunpack.c.l.b16 %v234
        %v490 = vunpack.c.l.b16 %v235
        %v491 = vunpack.c.l.b16 %v236
        %v492 = vunpack.c.l.b16 %v237
        %v493 = vunpack.c.l.b16 %v238
        %v494 = vunpack.c.l.b16 %v239
        %v495 = vunpack.c.l.b16 %v240
        %v496 = vunpack.c.l.b16 %v241
        %v497 = vunpack.c.l.b16 %v242
        %v498 = vunpack.c.l.b16 %v243
        %v499 = vunpack.c.l.b16 %v244
        %v500 = vunpack.c.l.b16 %v245
        %v501 = vunpack.c.l.b16 %v246
        %v502 = vunpack.c.l.b16 %v247
        %v503 = vunpack.c.l.b16 %v248
        %v504 = vunpack.c.l.b16 %v249
        %v505 = vunpack.c.l.b16 %v250
        %v506 = vunpack.c.l.b16 %v251
        %v507 = vunpack.c.l.b16 %v252
        %v508 = vunpack.c.l.b16 %v253
        %v509 = vunpack.c.l.b16 %v254
        %v510 = vunpack.c.l.b16 %v255
        %v511 = vunpack.c.l.b16 %v256
        %v512 = vunpack.c.l.b16 %v257
        %v513 = vunpack.c.l.b16 %v258
        %v514 = vunpack.c.l.b16 %v259
        %v515 = vunpack.c.l.b16 %v260
        %v516 = vunpack.c.l.b16 %v261
        %v517 = vunpack.c.l.b16 %v262
        %v518 = vunpack.c.l.b16 %v263
        %v519 = vunpack.c.l.b16 %v264
        %v520 = vunpack.c.l.b16 %v265
        %v521 = vunpack.c.l.b16 %v266
        %v522 = vunpack.c.l.b16 %v267
        %v523 = vunpack.c.l.b16 %v268
        %v524 = vunpack.c.l.b16 %v269
        %v525 = vunpack.c.l.b16 %v270
        %v526 = vunpack.c.l.b16 %v271
        %v527 = vunpack.c.l.b16 %v272
        %v528 = vunpack.c.l.b16 %v273
        %v529 = vunpack.c.l.b16 %v274
        %v530 = vunpack.c.l.b16 %v275
        %v531 = vunpack.c.l.b16 %v276
        %v532 = vunpack.c.l.b16 %v277
        %v533 = vunpack.c.l.b16 %v278
        %v534 = vunpack.c.l.b16 %v279
        %v535 = vunpack.c.l.b16 %v280
        %v536 = vunpack.c.l.b16 %v281
        %v537 = vunpack.c.l.b16 %v282
        %v538 = vunpack.c.l.b16 %v283
        %v539 = vunpack.c.l.b16 %v284
        %v540 = vunpack.c.l.b16 %v285
        %v541 = vunpack.c.l.b16 %v286
        %v542 = vunpack.c.l.b16 %v287
        %v543 = vunpack.c.l.b16 %v288
        %v544 = vpack.c.b16 %v481, %v480
        %v545 = vpack.c.b16 %v483, %v482
        %v546 = vpack.c.b16 %v485, %v484
        %v547 = vpack.c.b16 %v487, %v486
        %v548 = vpack.c.b16 %v489, %v488
        %v549 = vpack.c.b16 %v491, %v490
        %v550 = vpack.c.b16 %v493, %v492
        %v551 = vpack.c.b16 %v495, %v494
        %v552 = vpack.c.b16 %v497, %v496
        %v553 = vpack.c.b16 %v499, %v498
        %v554 = vpack.c.b16 %v501, %v500
        %v555 = vpack.c.b16 %v503, %v502
        %v556 = vpack.c.b16 %v505, %v504
        %v557 = vpack.c.b16 %v507, %v506
        %v558 = vpack.c.b16 %v509, %v508
        %v559 = vpack.c.b16 %v511, %v510
        %v560 = vpack.c.b16 %v513, %v512
        %v561 = vpack.c.b16 %v515, %v514
        %v562 = vpack.c.b16 %v517, %v516
        %v563 = vpack.c.b16 %v519, %v518
        %v564 = vpack.c.b16 %v521, %v520
        %v565 = vpack.c.b16 %v523, %v522
        %v566 = vpack.c.b16 %v525, %v524
        %v567 = vpack.c.b16 %v527, %v526
        %v568 = vpack.c.b16 %v529, %v528
        %v569 = vpack.c.b16 %v531, %v530
        %v570 = vpack.c.b16 %v533, %v532
        %v571 = vpack.c.b16 %v535, %v534
        %v572 = vpack.c.b16 %v537, %v536
        %v573 = vpack.c.b16 %v539, %v538
        %v574 = vpack.c.b16 %v541, %v540
        %v575 = vpack.c.b16 %v543, %v542
        %608 = vmatprep.subr.bf16.mxu0 0
        %609 = vmatpush1.bf16.msra.mxu0 %v551
        %610 = vmatprep.subr.bf16.mxu0 0
        %611 = vmatpush1.bf16.msra.mxu0 %v550
        %612 = vmatprep.subr.bf16.mxu0 0
        %613 = vmatpush1.bf16.msra.mxu0 %v549
        %614 = vmatprep.subr.bf16.mxu0 0
        %615 = vmatpush1.bf16.msra.mxu0 %v548
        %616 = vmatprep.subr.bf16.mxu0 0
        %617 = vmatpush1.bf16.msra.mxu0 %v547
        %618 = vmatprep.subr.bf16.mxu0 0
        %619 = vmatpush1.bf16.msra.mxu0 %v546
        %620 = vmatprep.subr.bf16.mxu0 0
        %621 = vmatpush1.bf16.msra.mxu0 %v545
        %622 = vmatprep.subr.bf16.mxu0 0
        %623 = vmatpush1.bf16.msra.mxu0 %v544
        %624 = vmatprep.subr.bf16.mxu0 0
        %625 = vmatpush2.bf16.msra.mxu0 %v559
        %626 = vmatprep.subr.bf16.mxu0 0
        %627 = vmatpush2.bf16.msra.mxu0 %v558
        %628 = vmatprep.subr.bf16.mxu0 0
        %629 = vmatpush2.bf16.msra.mxu0 %v557
        %630 = vmatprep.subr.bf16.mxu0 0
        %631 = vmatpush2.bf16.msra.mxu0 %v556
        %632 = vmatprep.subr.bf16.mxu0 0
        %633 = vmatpush2.bf16.msra.mxu0 %v555
        %634 = vmatprep.subr.bf16.mxu0 0
        %635 = vmatpush2.bf16.msra.mxu0 %v554
        %636 = vmatprep.subr.bf16.mxu0 0
        %637 = vmatpush2.bf16.msra.mxu0 %v553
        %638 = vmatprep.subr.bf16.mxu0 0
        %639 = vmatpush2.bf16.msra.mxu0 %v552
        %640 = vmatprep.mubr.bf16.mxu0 %v369
        %641 = vmatmul.mubr.bf16.gmra.mxu0 %v368
        %v642 = vpop.f32.mrf.mxu0
        %v643 = vadd.f32 %v294, %v642
        %v644 = vpop.f32.mrf.mxu0
        %v645 = vpop.f32.mrf.mxu0
        %v646 = vadd.f32 %v294, %v645
        %v647 = vpop.f32.mrf.mxu0
        %648 = vmatprep.mubr.bf16.mxu0 %v373
        %649 = vmatmul.mubr.bf16.gmra.mxu0 %v372
        %v650 = vpop.f32.mrf.mxu0
        %v651 = vadd.f32 %v294, %v650
        %v652 = vpop.f32.mrf.mxu0
        %v653 = vpop.f32.mrf.mxu0
        %v654 = vadd.f32 %v294, %v653
        %v655 = vpop.f32.mrf.mxu0
        %656 = vmatprep.mubr.bf16.mxu0 %v377
        %657 = vmatmul.mubr.bf16.gmra.mxu0 %v376
        %v658 = vpop.f32.mrf.mxu0
        %v659 = vadd.f32 %v294, %v658
        %v660 = vpop.f32.mrf.mxu0
        %v661 = vpop.f32.mrf.mxu0
        %v662 = vadd.f32 %v294, %v661
        %v663 = vpop.f32.mrf.mxu0
        %664 = vmatprep.mubr.bf16.mxu0 %v381
        %665 = vmatmul.mubr.bf16.gmra.mxu0 %v380
        %v666 = vpop.f32.mrf.mxu0
        %v667 = vadd.f32 %v294, %v666
        %v668 = vpop.f32.mrf.mxu0
        %v669 = vpop.f32.mrf.mxu0
        %v670 = vadd.f32 %v294, %v669
        %v671 = vpop.f32.mrf.mxu0
        %672 = vmatprep.mubr.bf16.mxu0 %v385
        %673 = vmatmul.mubr.bf16.gmra.mxu0 %v384
        %v674 = vpop.f32.mrf.mxu0
        %v675 = vadd.f32 %v294, %v674
        %v676 = vpop.f32.mrf.mxu0
        %v677 = vpop.f32.mrf.mxu0
        %v678 = vadd.f32 %v294, %v677
        %v679 = vpop.f32.mrf.mxu0
        %680 = vmatprep.mubr.bf16.mxu0 %v389
        %681 = vmatmul.mubr.bf16.gmra.mxu0 %v388
        %v682 = vpop.f32.mrf.mxu0
        %v683 = vadd.f32 %v294, %v682
        %v684 = vpop.f32.mrf.mxu0
        %v685 = vpop.f32.mrf.mxu0
        %v686 = vadd.f32 %v294, %v685
        %v687 = vpop.f32.mrf.mxu0
        %688 = vdwg.mxu0
        %689 = vmatprep.subr.bf16.mxu0 0
        %690 = vmatpush1.bf16.msra.mxu0 %v567
        %691 = vmatprep.subr.bf16.mxu0 0
        %692 = vmatpush1.bf16.msra.mxu0 %v566
        %693 = vmatprep.subr.bf16.mxu0 0
        %694 = vmatpush1.bf16.msra.mxu0 %v565
        %695 = vmatprep.subr.bf16.mxu0 0
        %696 = vmatpush1.bf16.msra.mxu0 %v564
        %697 = vmatprep.subr.bf16.mxu0 0
        %698 = vmatpush1.bf16.msra.mxu0 %v563
        %699 = vmatprep.subr.bf16.mxu0 0
        %700 = vmatpush1.bf16.msra.mxu0 %v562
        %701 = vmatprep.subr.bf16.mxu0 0
        %702 = vmatpush1.bf16.msra.mxu0 %v561
        %703 = vmatprep.subr.bf16.mxu0 0
        %704 = vmatpush1.bf16.msra.mxu0 %v560
        %705 = vmatprep.subr.bf16.mxu0 0
        %706 = vmatpush2.bf16.msra.mxu0 %v575
        %707 = vmatprep.subr.bf16.mxu0 0
        %708 = vmatpush2.bf16.msra.mxu0 %v574
        %709 = vmatprep.subr.bf16.mxu0 0
        %710 = vmatpush2.bf16.msra.mxu0 %v573
        %711 = vmatprep.subr.bf16.mxu0 0
        %712 = vmatpush2.bf16.msra.mxu0 %v572
        %713 = vmatprep.subr.bf16.mxu0 0
        %714 = vmatpush2.bf16.msra.mxu0 %v571
        %715 = vmatprep.subr.bf16.mxu0 0
        %716 = vmatpush2.bf16.msra.mxu0 %v570
        %717 = vmatprep.subr.bf16.mxu0 0
        %718 = vmatpush2.bf16.msra.mxu0 %v569
        %719 = vmatprep.subr.bf16.mxu0 0
        %720 = vmatpush2.bf16.msra.mxu0 %v568
        %721 = vmatprep.mubr.bf16.mxu0 %v371
        %722 = vmatmul.mubr.bf16.gmra.mxu0 %v370
        %v723 = vpop.f32.mrf.mxu0
        %v724 = vadd.f32 %v643, %v723
        %v725 = vpop.f32.mrf.mxu0
        %v726 = vpop.f32.mrf.mxu0
        %v727 = vadd.f32 %v646, %v726
        %v728 = vpop.f32.mrf.mxu0
        %729 = vmatprep.mubr.bf16.mxu0 %v375
        %730 = vmatmul.mubr.bf16.gmra.mxu0 %v374
        %v731 = vpop.f32.mrf.mxu0
        %v732 = vadd.f32 %v651, %v731
        %v733 = vpop.f32.mrf.mxu0
        %v734 = vpop.f32.mrf.mxu0
        %v735 = vadd.f32 %v654, %v734
        %v736 = vpop.f32.mrf.mxu0
        %737 = vmatprep.mubr.bf16.mxu0 %v379
        %738 = vmatmul.mubr.bf16.gmra.mxu0 %v378
        %v739 = vpop.f32.mrf.mxu0
        %v740 = vadd.f32 %v659, %v739
        %v741 = vpop.f32.mrf.mxu0
        %v742 = vpop.f32.mrf.mxu0
        %v743 = vadd.f32 %v662, %v742
        %v744 = vpop.f32.mrf.mxu0
        %745 = vmatprep.mubr.bf16.mxu0 %v383
        %746 = vmatmul.mubr.bf16.gmra.mxu0 %v382
        %v747 = vpop.f32.mrf.mxu0
        %v748 = vadd.f32 %v667, %v747
        %v749 = vpop.f32.mrf.mxu0
        %v750 = vpop.f32.mrf.mxu0
        %v751 = vadd.f32 %v670, %v750
        %v752 = vpop.f32.mrf.mxu0
        %753 = vmatprep.mubr.bf16.mxu0 %v387
        %754 = vmatmul.mubr.bf16.gmra.mxu0 %v386
        %v755 = vpop.f32.mrf.mxu0
        %v756 = vadd.f32 %v675, %v755
        %v757 = vpop.f32.mrf.mxu0
        %v758 = vpop.f32.mrf.mxu0
        %v759 = vadd.f32 %v678, %v758
        %v760 = vpop.f32.mrf.mxu0
        %761 = vmatprep.mubr.bf16.mxu0 %v391
        %762 = vmatmul.mubr.bf16.gmra.mxu0 %v390
        %v763 = vpop.f32.mrf.mxu0
        %v764 = vadd.f32 %v683, %v763
        %v765 = vpop.f32.mrf.mxu0
        %v766 = vpop.f32.mrf.mxu0
        %v767 = vadd.f32 %v686, %v766
        %v768 = vpop.f32.mrf.mxu0
        %769 = vdwg.mxu0
        %v770 = vmax.f32 %v724, 0.0
        %v771 = vmax.f32 %v727, 0.0
        %v772 = vmax.f32 %v732, 0.0
        %v773 = vmax.f32 %v735, 0.0
        %v774 = vmax.f32 %v740, 0.0
        %v775 = vmax.f32 %v743, 0.0
        %v776 = vmax.f32 %v748, 0.0
        %v777 = vmax.f32 %v751, 0.0
        %v778 = vmax.f32 %v756, 0.0
        %v779 = vmax.f32 %v759, 0.0
        %v780 = vmax.f32 %v764, 0.0
        %v781 = vmax.f32 %v767, 0.0
        %v782 = vpack.c.bf16 %v771, %v770
        %v783 = vpack.c.bf16 %v773, %v772
        %v784 = vpack.c.bf16 %v775, %v774
        %v785 = vpack.c.bf16 %v777, %v776
        %v786 = vpack.c.bf16 %v779, %v778
        %v787 = vpack.c.bf16 %v781, %v780
        %v794 = vunpack.c.l.b16 %v782
        %v795 = vunpack.c.h.b16 %v782
        %v796 = vunpack.c.l.b16 %v783
        %v797 = vunpack.c.h.b16 %v783
        %v798 = vunpack.c.l.b16 %v784
        %v799 = vunpack.c.h.b16 %v784
        %v800 = vunpack.c.l.b16 %v785
        %v801 = vunpack.c.h.b16 %v785
        %v802 = vunpack.c.l.b16 %v786
        %v803 = vunpack.c.h.b16 %v786
        %v804 = vunpack.c.l.b16 %v787
        %v805 = vunpack.c.h.b16 %v787
        %v806 = vpack.c.b16 %v794, %v794
        %v807 = vpack.c.b16 %v795, %v795
        %v808 = vpack.c.b16 %v796, %v796
        %v809 = vpack.c.b16 %v797, %v797
        %v810 = vpack.c.b16 %v798, %v798
        %v811 = vpack.c.b16 %v799, %v799
        %v812 = vpack.c.b16 %v800, %v800
        %v813 = vpack.c.b16 %v801, %v801
        %v814 = vpack.c.b16 %v802, %v802
        %v815 = vpack.c.b16 %v803, %v803
        %v816 = vpack.c.b16 %v804, %v804
        %v817 = vpack.c.b16 %v805, %v805
        %vm830 = vcmask 519168
        %831 = vst.msk [vmem:[%s177] sm:$0xf] %vm830, %v806
        %832 = vst.msk [vmem:[%s177 + $0x4] sm:$0xf] %vm830, %v807
        %833 = vst.msk [vmem:[%s177 + $0x8] sm:$0xf] %vm830, %v808
        %834 = vst.msk [vmem:[%s177 + $0xc] sm:$0xf] %vm830, %v809
        %835 = vst.msk [vmem:[%s177 + $0x10] sm:$0xf] %vm830, %v810
        %836 = vst.msk [vmem:[%s177 + $0x14] sm:$0xf] %vm830, %v811
        %837 = vst.msk [vmem:[%s177 + $0x18] sm:$0xf] %vm830, %v812
        %838 = vst.msk [vmem:[%s177 + $0x1c] sm:$0xf] %vm830, %v813
        %839 = vst.msk [vmem:[%s177 + $0x20] sm:$0xf] %vm830, %v814
        %840 = vst.msk [vmem:[%s177 + $0x24] sm:$0xf] %vm830, %v815
        %841 = vst.msk [vmem:[%s177 + $0x28] sm:$0xf] %vm830, %v816
        %842 = vst.msk [vmem:[%s177 + $0x2c] sm:$0xf] %vm830, %v817
        %s843 = sand.u32 %s90, 1
        %s844 = sand.u32 %s90, 1
        %s845 = smul.addr %s844, 48
        %s846 = scalar_lea.vmem [#allocation2], %s845
        // Predicated region
        $region33: #{cnn_forward.5} parent=31 // pred_check
          %p847 = pneg %p100
        $region34: #{cnn_forward.5} parent=31 // pred_check_branch
          %849 = sbr.rel (%p847) target = $region36
        $region35: #{cnn_forward.5} parent=31 // pred_region
          %s850 = smul.u32 12, %s14
          %s851 = ssub.s32 21, %s850
          %p852 = scmp.lt.s32.totalorder %s851, 12
          %s853 = scalar_select %p852, %s851, 12
          %s854 = smul.u32 64, %s853
          %p855 = scmp.ne.s32.totalorder 0, %s854
          %s856 = smul.addr %s850, 4
          %s857 = scalar_lea.vmem %s3, %s856
          // Predicated region
          $region37: #{cnn_forward.5} parent=35 // pred_check
            %p858 = pneg %p855
          $region38: #{cnn_forward.5} parent=35 // pred_check_branch
            %860 = sbr.rel (%p858) target = $region40
          $region39: #{cnn_forward.5} parent=35 // pred_region
            // Predicated region
            $region41: #{cnn_forward.5} parent=39 // pred_check
              _
            $region42: #{cnn_forward.5} parent=39 // pred_check_branch
              %862 = sbr.rel target = $region44
            $region43: #{cnn_forward.5} parent=39 // pred_region
              // Predicated region
              $region63: #{cnn_forward.5} parent=43 // pred_check
                _
              $region64: #{cnn_forward.5} parent=43 // pred_check_branch
                %935 = sbr.rel (0) target = $region66
              $region65: #{cnn_forward.5} parent=43 // pred_region
                %s937 = ssub.s32 16, 1
                %s938 = sdiv.u32.pop %s853, 12
                %s939 = srem.u32.pop %s853, 12
                // While loop
                $region67: #{cnn_forward.5} parent=65 // loop_pre_header
                  _
                $region68: #{cnn_forward.5} parent=65 // loop_header
                  %s941 = sphi 0, %s943
                  %p942 = scmp.ge.s32.totalorder %s941, %s938
                  %s946 = sphi 0, %s975
                  %s947 = sphi %s846, %s978
                  %s948 = sphi %s857, %s979
                $region69: #{cnn_forward.5} parent=65 // loop_header_branch
                  %945 = sbr.rel (%p942) target = $region73
                $region70: #{cnn_forward.5} parent=65 // loop_body
                  %v949 = vld [vmem:[%s947] sm:%s937]
                  %950 = vst [vmem:[%s948] sm:%s937] %v949
                  %v951 = vld [vmem:[%s947 + $0x4] sm:%s937]
                  %952 = vst [vmem:[%s948 + $0x4] sm:%s937] %v951
                  %v953 = vld [vmem:[%s947 + $0x8] sm:%s937]
                  %954 = vst [vmem:[%s948 + $0x8] sm:%s937] %v953
                  %v955 = vld [vmem:[%s947 + $0xc] sm:%s937]
                  %956 = vst [vmem:[%s948 + $0xc] sm:%s937] %v955
                  %v957 = vld [vmem:[%s947 + $0x10] sm:%s937]
                  %958 = vst [vmem:[%s948 + $0x10] sm:%s937] %v957
                  %v959 = vld [vmem:[%s947 + $0x14] sm:%s937]
                  %960 = vst [vmem:[%s948 + $0x14] sm:%s937] %v959
                  %v961 = vld [vmem:[%s947 + $0x18] sm:%s937]
                  %962 = vst [vmem:[%s948 + $0x18] sm:%s937] %v961
                  %v963 = vld [vmem:[%s947 + $0x1c] sm:%s937]
                  %964 = vst [vmem:[%s948 + $0x1c] sm:%s937] %v963
                  %v965 = vld [vmem:[%s947 + $0x20] sm:%s937]
                  %966 = vst [vmem:[%s948 + $0x20] sm:%s937] %v965
                  %v967 = vld [vmem:[%s947 + $0x24] sm:%s937]
                  %968 = vst [vmem:[%s948 + $0x24] sm:%s937] %v967
                  %v969 = vld [vmem:[%s947 + $0x28] sm:%s937]
                  %970 = vst [vmem:[%s948 + $0x28] sm:%s937] %v969
                  %v971 = vld [vmem:[%s947 + $0x2c] sm:%s937]
                  %972 = vst [vmem:[%s948 + $0x2c] sm:%s937] %v971
                  %s973 = sadd.s32 1, %s946
                  %p974 = scmp.ge.s32.totalorder %s973, %s938
                  %s975 = scalar_select %p974, 0, %s973
                  %s976 = smul.u32 %s975, 48
                  %s977 = smul.u32 %s975, 48
                  %s978 = scalar_lea.vmem %s846, %s976 [#allocation2]
                  %s979 = scalar_lea.vmem %s857, %s977
                $region71: #{cnn_forward.5} parent=65 // loop_footer
                  %s943 = sadd.s32 %s941, 1
                $region72: #{cnn_forward.5} parent=65 // loop_footer_branch
                  %940 = sbr.rel target = $region68
                $region73: #{cnn_forward.5} parent=65 // loop_exit
                  _
                %s980 = sdiv.u32.pop %s853, 12
                %s981 = srem.u32.pop %s853, 12
                %s982 = smul.u32 %s980, 12
                %s983 = smul.u32 4, %s982
                %s984 = scalar_lea.vmem %s846, %s983 [#allocation2]
                %s985 = smul.u32 4, %s982
                %s986 = scalar_lea.vmem %s857, %s985
                // While loop
                $region74: #{cnn_forward.5} parent=65 // loop_pre_header
                  _
                $region75: #{cnn_forward.5} parent=65 // loop_header
                  %s988 = sphi 0, %s990
                  %p989 = scmp.ge.s32.totalorder %s988, %s981
                  %s993 = sphi 0, %s1000
                  %s994 = sphi %s984, %s1003
                  %s995 = sphi %s986, %s1004
                $region76: #{cnn_forward.5} parent=65 // loop_header_branch
                  %992 = sbr.rel (%p989) target = $region80
                $region77: #{cnn_forward.5} parent=65 // loop_body
                  %v996 = vld [vmem:[%s994] sm:%s937]
                  %997 = vst [vmem:[%s995] sm:%s937] %v996
                  %s998 = sadd.s32 1, %s993
                  %p999 = scmp.ge.s32.totalorder %s998, %s981
                  %s1000 = scalar_select %p999, 0, %s998
                  %s1001 = smul.u32 %s1000, 4
                  %s1002 = smul.u32 %s1000, 4
                  %s1003 = scalar_lea.vmem %s984, %s1001 [#allocation2]
                  %s1004 = scalar_lea.vmem %s986, %s1002
                $region78: #{cnn_forward.5} parent=65 // loop_footer
                  %s990 = sadd.s32 %s988, 1
                $region79: #{cnn_forward.5} parent=65 // loop_footer_branch
                  %987 = sbr.rel target = $region75
                $region80: #{cnn_forward.5} parent=65 // loop_exit
                  _
              $region66: #{cnn_forward.5} parent=43 // pred_fallthru
                _
            $region44: #{cnn_forward.5} parent=39 // pred_fallthru
              _
            // Predicated region
            $region45: #{cnn_forward.5} parent=39 // pred_check
              _
            $region46: #{cnn_forward.5} parent=39 // pred_check_branch
              %864 = sbr.rel (0) target = $region48
            $region47: #{cnn_forward.5} parent=39 // pred_region
              %s866 = ssub.s32 16, 1
              %s867 = sdiv.u32.pop %s853, 12
              %s868 = srem.u32.pop %s853, 12
              // While loop
              $region49: #{cnn_forward.5} parent=47 // loop_pre_header
                _
              $region50: #{cnn_forward.5} parent=47 // loop_header
                %s870 = sphi 0, %s872
                %p871 = scmp.ge.s32.totalorder %s870, %s867
                %s875 = sphi 0, %s904
                %s876 = sphi %s846, %s907
                %s877 = sphi %s857, %s908
              $region51: #{cnn_forward.5} parent=47 // loop_header_branch
                %874 = sbr.rel (%p871) target = $region55
              $region52: #{cnn_forward.5} parent=47 // loop_body
                %v878 = vld [vmem:[%s876] sm:%s866]
                %879 = vst [vmem:[%s877] sm:%s866] %v878
                %v880 = vld [vmem:[%s876 + $0x4] sm:%s866]
                %881 = vst [vmem:[%s877 + $0x4] sm:%s866] %v880
                %v882 = vld [vmem:[%s876 + $0x8] sm:%s866]
                %883 = vst [vmem:[%s877 + $0x8] sm:%s866] %v882
                %v884 = vld [vmem:[%s876 + $0xc] sm:%s866]
                %885 = vst [vmem:[%s877 + $0xc] sm:%s866] %v884
                %v886 = vld [vmem:[%s876 + $0x10] sm:%s866]
                %887 = vst [vmem:[%s877 + $0x10] sm:%s866] %v886
                %v888 = vld [vmem:[%s876 + $0x14] sm:%s866]
                %889 = vst [vmem:[%s877 + $0x14] sm:%s866] %v888
                %v890 = vld [vmem:[%s876 + $0x18] sm:%s866]
                %891 = vst [vmem:[%s877 + $0x18] sm:%s866] %v890
                %v892 = vld [vmem:[%s876 + $0x1c] sm:%s866]
                %893 = vst [vmem:[%s877 + $0x1c] sm:%s866] %v892
                %v894 = vld [vmem:[%s876 + $0x20] sm:%s866]
                %895 = vst [vmem:[%s877 + $0x20] sm:%s866] %v894
                %v896 = vld [vmem:[%s876 + $0x24] sm:%s866]
                %897 = vst [vmem:[%s877 + $0x24] sm:%s866] %v896
                %v898 = vld [vmem:[%s876 + $0x28] sm:%s866]
                %899 = vst [vmem:[%s877 + $0x28] sm:%s866] %v898
                %v900 = vld [vmem:[%s876 + $0x2c] sm:%s866]
                %901 = vst [vmem:[%s877 + $0x2c] sm:%s866] %v900
                %s902 = sadd.s32 1, %s875
                %p903 = scmp.ge.s32.totalorder %s902, %s867
                %s904 = scalar_select %p903, 0, %s902
                %s905 = smul.u32 %s904, 48
                %s906 = smul.u32 %s904, 48
                %s907 = scalar_lea.vmem %s846, %s905 [#allocation2]
                %s908 = scalar_lea.vmem %s857, %s906
              $region53: #{cnn_forward.5} parent=47 // loop_footer
                %s872 = sadd.s32 %s870, 1
              $region54: #{cnn_forward.5} parent=47 // loop_footer_branch
                %869 = sbr.rel target = $region50
              $region55: #{cnn_forward.5} parent=47 // loop_exit
                _
              %s909 = sdiv.u32.pop %s853, 12
              %s910 = srem.u32.pop %s853, 12
              %s911 = smul.u32 %s909, 12
              %s912 = smul.u32 4, %s911
              %s913 = scalar_lea.vmem %s846, %s912 [#allocation2]
              %s914 = smul.u32 4, %s911
              %s915 = scalar_lea.vmem %s857, %s914
              // While loop
              $region56: #{cnn_forward.5} parent=47 // loop_pre_header
                _
              $region57: #{cnn_forward.5} parent=47 // loop_header
                %s917 = sphi 0, %s919
                %p918 = scmp.ge.s32.totalorder %s917, %s910
                %s922 = sphi 0, %s929
                %s923 = sphi %s913, %s932
                %s924 = sphi %s915, %s933
              $region58: #{cnn_forward.5} parent=47 // loop_header_branch
                %921 = sbr.rel (%p918) target = $region62
              $region59: #{cnn_forward.5} parent=47 // loop_body
                %v925 = vld [vmem:[%s923] sm:%s866]
                %926 = vst [vmem:[%s924] sm:%s866] %v925
                %s927 = sadd.s32 1, %s922
                %p928 = scmp.ge.s32.totalorder %s927, %s910
                %s929 = scalar_select %p928, 0, %s927
                %s930 = smul.u32 %s929, 4
                %s931 = smul.u32 %s929, 4
                %s932 = scalar_lea.vmem %s913, %s930 [#allocation2]
                %s933 = scalar_lea.vmem %s915, %s931
              $region60: #{cnn_forward.5} parent=47 // loop_footer
                %s919 = sadd.s32 %s917, 1
              $region61: #{cnn_forward.5} parent=47 // loop_footer_branch
                %916 = sbr.rel target = $region57
              $region62: #{cnn_forward.5} parent=47 // loop_exit
                _
            $region48: #{cnn_forward.5} parent=39 // pred_fallthru
              _
          $region40: #{cnn_forward.5} parent=35 // pred_fallthru
            _
          %1005 = vnop
        $region36: #{cnn_forward.5} parent=31 // pred_fallthru
          _
      $region32: #{cnn_forward.5} parent=5 // pred_fallthru
        _
      %p1006 = scmp.le.s32.totalorder 2, %s9
      // Predicated region
      $region81: #{cnn_forward.5} parent=5 // pred_check
        %p1007 = pneg %p1006
      $region82: #{cnn_forward.5} parent=5 // pred_check_branch
        %1009 = sbr.rel (%p1007) target = $region84
      $region83: #{cnn_forward.5} parent=5 // pred_region
        %s1010 = ssub.s32 %s9, 2
        // Predicated region
        $region85: #{cnn_forward.5} parent=83 // pred_check
          %p1011 = pneg %p106
        $region86: #{cnn_forward.5} parent=83 // pred_check_branch
          %1013 = sbr.rel (%p1011) target = $region88
        $region87: #{cnn_forward.5} parent=83 // pred_region
          %s1014 = sand.u32 %s91, 1
          %s1015 = sand.u32 %s91, 1
          %s1016 = smul.addr %s1015, 48
          %s1017 = scalar_lea.vmem [#allocation2], %s1016
        $region88: #{cnn_forward.5} parent=83 // pred_fallthru
          _
      $region84: #{cnn_forward.5} parent=5 // pred_fallthru
        _
    $region6: #{cnn_forward.5} parent=1 // loop_footer
      %s13 = sadd.s32 1, %s9
    $region7: #{cnn_forward.5} parent=1 // loop_footer_branch
      %8 = sbr.rel target = $region3
    $region8: #{cnn_forward.5} parent=1 // loop_exit
      _

// kernel: cnn_forward.6
$region0: #{cnn_forward.6}
  #allocation0 [shape = 'u32[]', space=smem, size = 0x4, offset = 0x4, fixed_abs, tag = 'smem constant byte address 0x4 - core index']
  #allocation1 [shape = 'u32[144,128]{1,0:T(1,128)}', space=vmem, size = 0x12000, scoped, tag = 'internal scratch']
  %s0 = inlined_call_operand.vmem [shape: bf16[98,576], index: 0, kind: input, shape index: {}]
  %s1 = inlined_call_operand.vmem [shape: bf16[576,64], index: 1, kind: input, shape index: {}]
  %s2 = inlined_call_operand.vmem [shape: f32[1,64], index: 2, kind: input, shape index: {}]
  %s3 = inlined_call_operand.vmem [shape: bf16[98,64], index: 3, kind: output, shape index: {}]
  %s4 = sld [smem:[#allocation0]]
  $region89: #{cnn_forward.6} parent=0
    _
  %s6 = ssub.s32 1, %s4
  %s7 = scalar_select 0, %s6, %s4
  $region1: #{cnn_forward.6} parent=0
    #allocation2 [shape = 'u8[32768]{0}', space=vmem, size = 0x8000, scoped, tag = 'output window, operand 0']
    loop: start=0, step=1, limit=4
    $region2: #{cnn_forward.6} parent=1 // loop_pre_header
      _
    $region3: #{cnn_forward.6} parent=1 // loop_header
      %s9 = sphi 0, %s13
      %p10 = scmp.ge.s32.totalorder %s9, 4
      %s19 = sphi 0, %s21
      %s22 = sphi 0, %s19
      %s23 = sphi 0, %s22
      %s39 = sphi 0, %s23
      %s43 = sphi 0, %s43
      %s45 = sphi 0, %s43
      %s46 = sphi 0, %s45
      %s60 = sphi 0, %s46
      %s64 = sphi 0, %s64
      %s66 = sphi 0, %s64
      %s67 = sphi 0, %s66
      %s81 = sphi 0, %s67
      %s87 = sphi 0, %s89
      %s90 = sphi 0, %s87
      %s91 = sphi 0, %s90
      %s107 = sphi 0, %s91
    $region4: #{cnn_forward.6} parent=1 // loop_header_branch
      %12 = sbr.rel (%p10) target = $region8
    $region5: #{cnn_forward.6} parent=1 // loop_body
      %s14 = ssub.s32 %s9, 1
      %s15 = ssub.s32 %s9, 2
      %s16 = sadd.s32 %s9, 1
      %s17 = ssub.s32 %s9, %s16
      %p18 = scmp.eq.s32.totalorder %s17, 0
      %s20 = sadd.s32 %s19, 1
      %s21 = scalar_select %p18, %s19, %s20
      %p24 = pneg %p18
      %p25 = scmp.eq.s32.totalorder %s9, 1
      %p26 = por %p24, %p25
      %p27 = scmp.ne.s32.totalorder %s19, %s22
      %p28 = scmp.eq.s32.totalorder %s9, 0
      %p29 = por %p27, %p28
      %p30 = scmp.ne.s32.totalorder %s19, %s22
      %p31 = scmp.eq.s32.totalorder %s14, 1
      %p32 = por %p30, %p31
      %p33 = scmp.ne.s32.totalorder %s22, %s23
      %p34 = scmp.eq.s32.totalorder %s14, 0
      %p35 = por %p33, %p34
      %p36 = scmp.ne.s32.totalorder %s22, %s23
      %p37 = scmp.eq.s32.totalorder %s15, 1
      %p38 = por %p36, %p37
      %p40 = scmp.ne.s32.totalorder %s23, %s39
      %p41 = scmp.eq.s32.totalorder %s15, 0
      %p42 = por %p40, %p41
      %s44 = sadd.s32 %s43, 1
      %p47 = scmp.eq.s32.totalorder %s9, 1
      %p48 = scmp.ne.s32.totalorder %s43, %s45
      %p49 = scmp.eq.s32.totalorder %s9, 0
      %p50 = por %p48, %p49
      %p51 = scmp.ne.s32.totalorder %s43, %s45
      %p52 = scmp.eq.s32.totalorder %s14, 1
      %p53 = por %p51, %p52
      %p54 = scmp.ne.s32.totalorder %s45, %s46
      %p55 = scmp.eq.s32.totalorder %s14, 0
      %p56 = por %p54, %p55
      %p57 = scmp.ne.s32.totalorder %s45, %s46
      %p58 = scmp.eq.s32.totalorder %s15, 1
      %p59 = por %p57, %p58
      %p61 = scmp.ne.s32.totalorder %s46, %s60
      %p62 = scmp.eq.s32.totalorder %s15, 0
      %p63 = por %p61, %p62
      %s65 = sadd.s32 %s64, 1
      %p68 = scmp.eq.s32.totalorder %s9, 1
      %p69 = scmp.ne.s32.totalorder %s64, %s66
      %p70 = scmp.eq.s32.totalorder %s9, 0
      %p71 = por %p69, %p70
      %p72 = scmp.ne.s32.totalorder %s64, %s66
      %p73 = scmp.eq.s32.totalorder %s14, 1
      %p74 = por %p72, %p73
      %p75 = scmp.ne.s32.totalorder %s66, %s67
      %p76 = scmp.eq.s32.totalorder %s14, 0
      %p77 = por %p75, %p76
      %p78 = scmp.ne.s32.totalorder %s66, %s67
      %p79 = scmp.eq.s32.totalorder %s15, 1
      %p80 = por %p78, %p79
      %p82 = scmp.ne.s32.totalorder %s67, %s81
      %p83 = scmp.eq.s32.totalorder %s15, 0
      %p84 = por %p82, %p83
      %s85 = ssub.s32 %s9, %s16
      %p86 = scmp.eq.s32.totalorder %s85, 0
      %s88 = sadd.s32 %s87, 1
      %s89 = scalar_select %p86, %s87, %s88
      %p92 = pneg %p86
      %p93 = scmp.eq.s32.totalorder %s9, 1
      %p94 = por %p92, %p93
      %p95 = scmp.ne.s32.totalorder %s87, %s90
      %p96 = scmp.eq.s32.totalorder %s9, 0
      %p97 = por %p95, %p96
      %p98 = scmp.ne.s32.totalorder %s87, %s90
      %p99 = scmp.eq.s32.totalorder %s14, 1
      %p100 = por %p98, %p99
      %p101 = scmp.ne.s32.totalorder %s90, %s91
      %p102 = scmp.eq.s32.totalorder %s14, 0
      %p103 = por %p101, %p102
      %p104 = scmp.ne.s32.totalorder %s90, %s91
      %p105 = scmp.eq.s32.totalorder %s15, 1
      %p106 = por %p104, %p105
      %p108 = scmp.ne.s32.totalorder %s91, %s107
      %p109 = scmp.eq.s32.totalorder %s15, 0
      %p110 = por %p108, %p109
      %p111 = scmp.le.s32.totalorder 1, %s9
      %p112 = scmp.lt.s32.totalorder %s9, 3
      %p113 = pnand %p111, %p112
      %p114 = pneg %p113
      // Predicated region
      $region9: #{cnn_forward.6} parent=5 // pred_check
        _
      $region10: #{cnn_forward.6} parent=5 // pred_check_branch
        %116 = sbr.rel (%p113) target = $region12
      $region11: #{cnn_forward.6} parent=5 // pred_region
        %s117 = ssub.s32 %s9, 1
        // Predicated region
        $region13: #{cnn_forward.6} parent=11 // pred_check
          %p118 = pneg %p56
        $region14: #{cnn_forward.6} parent=11 // pred_check_branch
          %120 = sbr.rel (%p118) target = $region16
        $region15: #{cnn_forward.6} parent=11 // pred_region
          _
        $region16: #{cnn_forward.6} parent=11 // pred_fallthru
          _
        // Predicated region
        $region17: #{cnn_forward.6} parent=11 // pred_check
          %p121 = pneg %p77
        $region18: #{cnn_forward.6} parent=11 // pred_check_branch
          %123 = sbr.rel (%p121) target = $region20
        $region19: #{cnn_forward.6} parent=11 // pred_region
          _
        $region20: #{cnn_forward.6} parent=11 // pred_fallthru
          _
      $region12: #{cnn_forward.6} parent=5 // pred_fallthru
        _
      %p124 = scmp.lt.s32.totalorder %s9, 2
      // Predicated region
      $region21: #{cnn_forward.6} parent=5 // pred_check
        %p125 = pneg %p124
      $region22: #{cnn_forward.6} parent=5 // pred_check_branch
        %127 = sbr.rel (%p125) target = $region24
      $region23: #{cnn_forward.6} parent=5 // pred_region
        // Predicated region
        $region25: #{cnn_forward.6} parent=23 // pred_check
          %p128 = pneg %p29
        $region26: #{cnn_forward.6} parent=23 // pred_check_branch
          %130 = sbr.rel (%p128) target = $region28
        $region27: #{cnn_forward.6} parent=23 // pred_region
          %s131 = smul.u32 8, %s9
          %s132 = ssub.s32 13, %s131
          %p133 = scmp.lt.s32.totalorder %s132, 8
          %s134 = scalar_select %p133, %s132, 8
          %s135 = smul.u32 64, %s134
          %s136 = smul.u32 %s135, 5
          %p137 = scmp.lt.s32.totalorder %s131, 12
          %s138 = scalar_select %p137, %s131, 12
          %s139 = smul.addr %s138, 5
          %s140 = smul.addr %s139, 4
          %s141 = scalar_lea.vmem %s0, %s140
          %s142 = smul.u32 8, %s9
          %s143 = ssub.s32 13, %s142
          %p144 = scmp.lt.s32.totalorder %s143, 8
          %s145 = scalar_select %p144, %s143, 8
          %s146 = smul.u32 64, %s145
          %s147 = smul.u32 %s146, 5
        $region28: #{cnn_forward.6} parent=23 // pred_fallthru
          _
      $region24: #{cnn_forward.6} parent=5 // pred_fallthru
        _
      %p148 = scmp.le.s32.totalorder 1, %s9
      %p149 = scmp.lt.s32.totalorder %s9, 3
      %p150 = pnand %p148, %p149
      %p151 = pneg %p150
      // Predicated region
      $region29: #{cnn_forward.6} parent=5 // pred_check
        _
      $region30: #{cnn_forward.6} parent=5 // pred_check_branch
        %153 = sbr.rel (%p150) target = $region32
      $region31: #{cnn_forward.6} parent=5 // pred_region
        %s154 = ssub.s32 %s9, 1
        %s155 = smul.u32 8, %s14
        %s156 = ssub.s32 13, %s155
        %p157 = scmp.lt.s32.totalorder %s156, 8
        %s158 = scalar_select %p157, %s156, 8
        %s159 = smul.u32 64, %s158
        %s160 = smul.u32 %s159, 5
        %p161 = scmp.lt.s32.totalorder %s155, 12
        %s162 = scalar_select %p161, %s155, 12
        %s163 = smul.addr %s162, 5
        %s164 = smul.addr %s163, 4
        %s165 = scalar_lea.vmem %s0, %s164
        %p166 = pneg %p35
        %p167 = pneg %p32
        %p168 = pneg %p56
        %p169 = pneg %p53
        %p170 = pneg %p77
        %p171 = pneg %p74
        %p172 = pneg %p103
        %p173 = pneg %p100
        %s174 = sand.u32 %s90, 1
        %s175 = sand.u32 %s90, 1
        %s176 = smul.addr %s175, 32
        %s177 = scalar_lea.vmem [#allocation2], %s176
        %s178 = smul.u32 8, %s14
        %s179 = ssub.s32 13, %s178
        %p180 = scmp.lt.s32.totalorder %s179, 8
        %s181 = scalar_select %p180, %s179, 8
        %s182 = smul.u32 64, %s181
        %s183 = smul.u32 %s182, 5
        %p184 = scmp.lt.s32.totalorder %s178, 12
        %s185 = scalar_select %p184, %s178, 12
        %s186 = smul.addr %s185, 5
        %s187 = smul.addr %s186, 4
        %s188 = scalar_lea.vmem %s0, %s187
        %s189 = smul.u32 8, %s14
        %s190 = ssub.s32 13, %s189
        %p191 = scmp.lt.s32.totalorder %s190, 8
        %s192 = scalar_select %p191, %s190, 8
        %s193 = smul.u32 64, %s192
        %s194 = smul.u32 %s193, 5
        %s195 = smul.u32 8, %s14
        %s196 = ssub.s32 13, %s195
        %p197 = scmp.lt.s32.totalorder %s196, 8
        %s198 = scalar_select %p197, %s196, 8
        %s199 = smul.u32 64, %s198
        %v201 = vld [vmem:[%s188] sm:$0xff]
        %v202 = vld [vmem:[%s188 + $0x8] sm:$0xff]
        %v203 = vld [vmem:[%s188 + $0x10] sm:$0xf]
        %v204 = vld [vmem:[%s188 + $0x14] sm:$0xff]
        %v205 = vld [vmem:[%s188 + $0x1c] sm:$0xff]
        %v206 = vld [vmem:[%s188 + $0x24] sm:$0xf]
        %v207 = vld [vmem:[%s188 + $0x28] sm:$0xff]
        %v208 = vld [vmem:[%s188 + $0x30] sm:$0xff]
        %v209 = vld [vmem:[%s188 + $0x38] sm:$0xf]
        %v210 = vld [vmem:[%s188 + $0x3c] sm:$0xff]
        %v211 = vld [vmem:[%s188 + $0x44] sm:$0xff]
        %v212 = vld [vmem:[%s188 + $0x4c] sm:$0xf]
        %v213 = vld [vmem:[%s188 + $0x50] sm:$0xff]
        %v214 = vld [vmem:[%s188 + $0x58] sm:$0xff]
        %v215 = vld [vmem:[%s188 + $0x60] sm:$0xf]
        %v216 = vld [vmem:[%s188 + $0x64] sm:$0xff]
        %v217 = vld [vmem:[%s188 + $0x6c] sm:$0xff]
        %v218 = vld [vmem:[%s188 + $0x74] sm:$0xf]
        %v219 = vld [vmem:[%s188 + $0x78] sm:$0xff]
        %v220 = vld [vmem:[%s188 + $0x80] sm:$0xff]
        %v221 = vld [vmem:[%s188 + $0x88] sm:$0xf]
        %v222 = vld [vmem:[%s188 + $0x8c] sm:$0xff]
        %v223 = vld [vmem:[%s188 + $0x94] sm:$0xff]
        %v224 = vld [vmem:[%s188 + $0x9c] sm:$0xf]
        %v225 = vld [vmem:[%s1] sm:$0xf]
        %v226 = vld [vmem:[%s1 + $0x4] sm:$0xf]
        %v227 = vld [vmem:[%s1 + $0x8] sm:$0xf]
        %v228 = vld [vmem:[%s1 + $0xc] sm:$0xf]
        %v229 = vld [vmem:[%s1 + $0x10] sm:$0xf]
        %v230 = vld [vmem:[%s1 + $0x14] sm:$0xf]
        %v231 = vld [vmem:[%s1 + $0x18] sm:$0xf]
        %v232 = vld [vmem:[%s1 + $0x1c] sm:$0xf]
        %v233 = vld [vmem:[%s1 + $0x20] sm:$0xf]
        %v234 = vld [vmem:[%s1 + $0x24] sm:$0xf]
        %v235 = vld [vmem:[%s1 + $0x28] sm:$0xf]
        %v236 = vld [vmem:[%s1 + $0x2c] sm:$0xf]
        %v237 = vld [vmem:[%s1 + $0x30] sm:$0xf]
        %v238 = vld [vmem:[%s1 + $0x34] sm:$0xf]
        %v239 = vld [vmem:[%s1 + $0x38] sm:$0xf]
        %v240 = vld [vmem:[%s1 + $0x3c] sm:$0xf]
        %v241 = vld [vmem:[%s1 + $0x40] sm:$0xf]
        %v242 = vld [vmem:[%s1 + $0x44] sm:$0xf]
        %v243 = vld [vmem:[%s1 + $0x48] sm:$0xf]
        %v244 = vld [vmem:[%s1 + $0x4c] sm:$0xf]
        %v245 = vld [vmem:[%s1 + $0x50] sm:$0xf]
        %v246 = vld [vmem:[%s1 + $0x54] sm:$0xf]
        %v247 = vld [vmem:[%s1 + $0x58] sm:$0xf]
        %v248 = vld [vmem:[%s1 + $0x5c] sm:$0xf]
        %v249 = vld [vmem:[%s1 + $0x60] sm:$0xf]
        %v250 = vld [vmem:[%s1 + $0x64] sm:$0xf]
        %v251 = vld [vmem:[%s1 + $0x68] sm:$0xf]
        %v252 = vld [vmem:[%s1 + $0x6c] sm:$0xf]
        %v253 = vld [vmem:[%s1 + $0x70] sm:$0xf]
        %v254 = vld [vmem:[%s1 + $0x74] sm:$0xf]
        %v255 = vld [vmem:[%s1 + $0x78] sm:$0xf]
        %v256 = vld [vmem:[%s1 + $0x7c] sm:$0xf]
        %v257 = vld [vmem:[%s1 + $0x80] sm:$0xf]
        %v258 = vld [vmem:[%s1 + $0x84] sm:$0xf]
        %v259 = vld [vmem:[%s1 + $0x88] sm:$0xf]
        %v260 = vld [vmem:[%s1 + $0x8c] sm:$0xf]
        %v261 = vld [vmem:[%s1 + $0x90] sm:$0xf]
        %v262 = vld [vmem:[%s1 + $0x94] sm:$0xf]
        %v263 = vld [vmem:[%s1 + $0x98] sm:$0xf]
        %v264 = vld [vmem:[%s1 + $0x9c] sm:$0xf]
        %v265 = vld [vmem:[%s1 + $0xa0] sm:$0xf]
        %v266 = vld [vmem:[%s1 + $0xa4] sm:$0xf]
        %v267 = vld [vmem:[%s1 + $0xa8] sm:$0xf]
        %v268 = vld [vmem:[%s1 + $0xac] sm:$0xf]
        %v269 = vld [vmem:[%s1 + $0xb0] sm:$0xf]
        %v270 = vld [vmem:[%s1 + $0xb4] sm:$0xf]
        %v271 = vld [vmem:[%s1 + $0xb8] sm:$0xf]
        %v272 = vld [vmem:[%s1 + $0xbc] sm:$0xf]
        %v273 = vld [vmem:[%s1 + $0xc0] sm:$0xf]
        %v274 = vld [vmem:[%s1 + $0xc4] sm:$0xf]
        %v275 = vld [vmem:[%s1 + $0xc8] sm:$0xf]
        %v276 = vld [vmem:[%s1 + $0xcc] sm:$0xf]
        %v277 = vld [vmem:[%s1 + $0xd0] sm:$0xf]
        %v278 = vld [vmem:[%s1 + $0xd4] sm:$0xf]
        %v279 = vld [vmem:[%s1 + $0xd8] sm:$0xf]
        %v280 = vld [vmem:[%s1 + $0xdc] sm:$0xf]
        %v281 = vld [vmem:[%s1 + $0xe0] sm:$0xf]
        %v282 = vld [vmem:[%s1 + $0xe4] sm:$0xf]
        %v283 = vld [vmem:[%s1 + $0xe8] sm:$0xf]
        %v284 = vld [vmem:[%s1 + $0xec] sm:$0xf]
        %v285 = vld [vmem:[%s1 + $0xf0] sm:$0xf]
        %v286 = vld [vmem:[%s1 + $0xf4] sm:$0xf]
        %v287 = vld [vmem:[%s1 + $0xf8] sm:$0xf]
        %v288 = vld [vmem:[%s1 + $0xfc] sm:$0xf]
        %v289 = vld [vmem:[%s1 + $0x100] sm:$0xf]
        %v290 = vld [vmem:[%s1 + $0x104] sm:$0xf]
        %v291 = vld [vmem:[%s1 + $0x108] sm:$0xf]
        %v292 = vld [vmem:[%s1 + $0x10c] sm:$0xf]
        %v293 = vld [vmem:[%s1 + $0x110] sm:$0xf]
        %v294 = vld [vmem:[%s1 + $0x114] sm:$0xf]
        %v295 = vld [vmem:[%s1 + $0x118] sm:$0xf]
        %v296 = vld [vmem:[%s1 + $0x11c] sm:$0xf]
        %v297 = vld [vmem:[%s2] sm:$0x1]
        %v299 = vlaneseq
        %v300 = vshrl.u32 %v299, 7
        %v301 = vsub.s32 0, %v300
        %v302 = vrot.slane %v297, %v301
        %v328 = vunpack.c.l.b16 %v201
        %v329 = vunpack.c.h.b16 %v201
        %v330 = vunpack.c.l.b16 %v202
        %v331 = vunpack.c.h.b16 %v202
        %v332 = vunpack.c.l.b16 %v203
        %v333 = vunpack.c.l.b16 %v204
        %v334 = vunpack.c.h.b16 %v204
        %v335 = vunpack.c.l.b16 %v205
        %v336 = vunpack.c.h.b16 %v205
        %v337 = vunpack.c.l.b16 %v206
        %v338 = vunpack.c.l.b16 %v207
        %v339 = vunpack.c.h.b16 %v207
        %v340 = vunpack.c.l.b16 %v208
        %v341 = vunpack.c.h.b16 %v208
        %v342 = vunpack.c.l.b16 %v209
        %v343 = vunpack.c.l.b16 %v210
        %v344 = vunpack.c.h.b16 %v210
        %v345 = vunpack.c.l.b16 %v211
        %v346 = vunpack.c.h.b16 %v211
        %v347 = vunpack.c.l.b16 %v212
        %v348 = vunpack.c.l.b16 %v213
        %v349 = vunpack.c.h.b16 %v213
        %v350 = vunpack.c.l.b16 %v214
        %v351 = vunpack.c.h.b16 %v214
        %v352 = vunpack.c.l.b16 %v215
        %v353 = vunpack.c.l.b16 %v216
        %v354 = vunpack.c.h.b16 %v216
        %v355 = vunpack.c.l.b16 %v217
        %v356 = vunpack.c.h.b16 %v217
        %v357 = vunpack.c.l.b16 %v218
        %v358 = vunpack.c.l.b16 %v219
        %v359 = vunpack.c.h.b16 %v219
        %v360 = vunpack.c.l.b16 %v220
        %v361 = vunpack.c.h.b16 %v220
        %v362 = vunpack.c.l.b16 %v221
        %v363 = vunpack.c.l.b16 %v222
        %v364 = vunpack.c.h.b16 %v222
        %v365 = vunpack.c.l.b16 %v223
        %v366 = vunpack.c.h.b16 %v223
        %v367 = vunpack.c.l.b16 %v224
        %v368 = vpack.c.b16 %v333, %v328
        %v369 = vpack.c.b16 %v334, %v329
        %v370 = vpack.c.b16 %v335, %v330
        %v371 = vpack.c.b16 %v336, %v331
        %v372 = vpack.c.b16 %v337, %v332
        %v373 = vpack.c.b16 %v343, %v338
        %v374 = vpack.c.b16 %v344, %v339
        %v375 = vpack.c.b16 %v345, %v340
        %v376 = vpack.c.b16 %v346, %v341
        %v377 = vpack.c.b16 %v347, %v342
        %v378 = vpack.c.b16 %v353, %v348
        %v379 = vpack.c.b16 %v354, %v349
        %v380 = vpack.c.b16 %v355, %v350
        %v381 = vpack.c.b16 %v356, %v351
        %v382 = vpack.c.b16 %v357, %v352
        %v383 = vpack.c.b16 %v363, %v358
        %v384 = vpack.c.b16 %v364, %v359
        %v385 = vpack.c.b16 %v365, %v360
        %v386 = vpack.c.b16 %v366, %v361
        %v387 = vpack.c.b16 %v367, %v362
        %v476 = vunpack.c.l.b16 %v225
        %v477 = vunpack.c.l.b16 %v226
        %v478 = vunpack.c.l.b16 %v227
        %v479 = vunpack.c.l.b16 %v228
        %v480 = vunpack.c.l.b16 %v229
        %v481 = vunpack.c.l.b16 %v230
        %v482 = vunpack.c.l.b16 %v231
        %v483 = vunpack.c.l.b16 %v232
        %v484 = vunpack.c.l.b16 %v233
        %v485 = vunpack.c.l.b16 %v234
        %v486 = vunpack.c.l.b16 %v235
        %v487 = vunpack.c.l.b16 %v236
        %v488 = vunpack.c.l.b16 %v237
        %v489 = vunpack.c.l.b16 %v238
        %v490 = vunpack.c.l.b16 %v239
        %v491 = vunpack.c.l.b16 %v240
        %v492 = vunpack.c.l.b16 %v241
        %v493 = vunpack.c.l.b16 %v242
        %v494 = vunpack.c.l.b16 %v243
        %v495 = vunpack.c.l.b16 %v244
        %v496 = vunpack.c.l.b16 %v245
        %v497 = vunpack.c.l.b16 %v246
        %v498 = vunpack.c.l.b16 %v247
        %v499 = vunpack.c.l.b16 %v248
        %v500 = vunpack.c.l.b16 %v249
        %v501 = vunpack.c.l.b16 %v250
        %v502 = vunpack.c.l.b16 %v251
        %v503 = vunpack.c.l.b16 %v252
        %v504 = vunpack.c.l.b16 %v253
        %v505 = vunpack.c.l.b16 %v254
        %v506 = vunpack.c.l.b16 %v255
        %v507 = vunpack.c.l.b16 %v256
        %v508 = vunpack.c.l.b16 %v257
        %v509 = vunpack.c.l.b16 %v258
        %v510 = vunpack.c.l.b16 %v259
        %v511 = vunpack.c.l.b16 %v260
        %v512 = vunpack.c.l.b16 %v261
        %v513 = vunpack.c.l.b16 %v262
        %v514 = vunpack.c.l.b16 %v263
        %v515 = vunpack.c.l.b16 %v264
        %v516 = vunpack.c.l.b16 %v265
        %v517 = vunpack.c.l.b16 %v266
        %v518 = vunpack.c.l.b16 %v267
        %v519 = vunpack.c.l.b16 %v268
        %v520 = vunpack.c.l.b16 %v269
        %v521 = vunpack.c.l.b16 %v270
        %v522 = vunpack.c.l.b16 %v271
        %v523 = vunpack.c.l.b16 %v272
        %v524 = vunpack.c.l.b16 %v273
        %v525 = vunpack.c.l.b16 %v274
        %v526 = vunpack.c.l.b16 %v275
        %v527 = vunpack.c.l.b16 %v276
        %v528 = vunpack.c.l.b16 %v277
        %v529 = vunpack.c.l.b16 %v278
        %v530 = vunpack.c.l.b16 %v279
        %v531 = vunpack.c.l.b16 %v280
        %v532 = vunpack.c.l.b16 %v281
        %v533 = vunpack.c.l.b16 %v282
        %v534 = vunpack.c.l.b16 %v283
        %v535 = vunpack.c.l.b16 %v284
        %v536 = vunpack.c.l.b16 %v285
        %v537 = vunpack.c.l.b16 %v286
        %v538 = vunpack.c.l.b16 %v287
        %v539 = vunpack.c.l.b16 %v288
        %v540 = vunpack.c.l.b16 %v289
        %v541 = vunpack.c.l.b16 %v290
        %v542 = vunpack.c.l.b16 %v291
        %v543 = vunpack.c.l.b16 %v292
        %v544 = vunpack.c.l.b16 %v293
        %v545 = vunpack.c.l.b16 %v294
        %v546 = vunpack.c.l.b16 %v295
        %v547 = vunpack.c.l.b16 %v296
        %v548 = vpack.c.b16 %v477, %v476
        %v549 = vpack.c.b16 %v479, %v478
        %v550 = vpack.c.b16 %v481, %v480
        %v551 = vpack.c.b16 %v483, %v482
        %v552 = vpack.c.b16 %v485, %v484
        %v553 = vpack.c.b16 %v487, %v486
        %v554 = vpack.c.b16 %v489, %v488
        %v555 = vpack.c.b16 %v491, %v490
        %v556 = vpack.c.b16 %v493, %v492
        %v557 = vpack.c.b16 %v495, %v494
        %v558 = vpack.c.b16 %v497, %v496
        %v559 = vpack.c.b16 %v499, %v498
        %v560 = vpack.c.b16 %v501, %v500
        %v561 = vpack.c.b16 %v503, %v502
        %v562 = vpack.c.b16 %v505, %v504
        %v563 = vpack.c.b16 %v507, %v506
        %v564 = vpack.c.b16 %v509, %v508
        %v565 = vpack.c.b16 %v511, %v510
        %v566 = vpack.c.b16 %v513, %v512
        %v567 = vpack.c.b16 %v515, %v514
        %v568 = vpack.c.b16 %v517, %v516
        %v569 = vpack.c.b16 %v519, %v518
        %v570 = vpack.c.b16 %v521, %v520
        %v571 = vpack.c.b16 %v523, %v522
        %v572 = vpack.c.b16 %v525, %v524
        %v573 = vpack.c.b16 %v527, %v526
        %v574 = vpack.c.b16 %v529, %v528
        %v575 = vpack.c.b16 %v531, %v530
        %v576 = vpack.c.b16 %v533, %v532
        %v577 = vpack.c.b16 %v535, %v534
        %v578 = vpack.c.b16 %v537, %v536
        %v579 = vpack.c.b16 %v539, %v538
        %v580 = vpack.c.b16 %v541, %v540
        %v581 = vpack.c.b16 %v543, %v542
        %v582 = vpack.c.b16 %v545, %v544
        %v583 = vpack.c.b16 %v547, %v546
        %vm620 = vcmask 523264
        %v622 = vsel %vm620, %v372, 0
        %v625 = vsel %vm620, %v377, 0
        %v628 = vsel %vm620, %v382, 0
        %v631 = vsel %vm620, %v387, 0
        %633 = vmatprep.subr.bf16.mxu0 0
        %634 = vmatpush1.bf16.msra.mxu0 %v555
        %635 = vmatprep.subr.bf16.mxu0 0
        %636 = vmatpush1.bf16.msra.mxu0 %v554
        %637 = vmatprep.subr.bf16.mxu0 0
        %638 = vmatpush1.bf16.msra.mxu0 %v553
        %639 = vmatprep.subr.bf16.mxu0 0
        %640 = vmatpush1.bf16.msra.mxu0 %v552
        %641 = vmatprep.subr.bf16.mxu0 0
        %642 = vmatpush1.bf16.msra.mxu0 %v551
        %643 = vmatprep.subr.bf16.mxu0 0
        %644 = vmatpush1.bf16.msra.mxu0 %v550
        %645 = vmatprep.subr.bf16.mxu0 0
        %646 = vmatpush1.bf16.msra.mxu0 %v549
        %647 = vmatprep.subr.bf16.mxu0 0
        %648 = vmatpush1.bf16.msra.mxu0 %v548
        %649 = vmatprep.subr.bf16.mxu0 0
        %650 = vmatpush2.bf16.msra.mxu0 %v563
        %651 = vmatprep.subr.bf16.mxu0 0
        %652 = vmatpush2.bf16.msra.mxu0 %v562
        %653 = vmatprep.subr.bf16.mxu0 0
        %654 = vmatpush2.bf16.msra.mxu0 %v561
        %655 = vmatprep.subr.bf16.mxu0 0
        %656 = vmatpush2.bf16.msra.mxu0 %v560
        %657 = vmatprep.subr.bf16.mxu0 0
        %658 = vmatpush2.bf16.msra.mxu0 %v559
        %659 = vmatprep.subr.bf16.mxu0 0
        %660 = vmatpush2.bf16.msra.mxu0 %v558
        %661 = vmatprep.subr.bf16.mxu0 0
        %662 = vmatpush2.bf16.msra.mxu0 %v557
        %663 = vmatprep.subr.bf16.mxu0 0
        %664 = vmatpush2.bf16.msra.mxu0 %v556
        %665 = vmatprep.mubr.bf16.mxu0 %v369
        %666 = vmatmul.mubr.bf16.gmra.mxu0 %v368
        %v667 = vpop.f32.mrf.mxu0
        %v668 = vadd.f32 %v302, %v667
        %v669 = vpop.f32.mrf.mxu0
        %v670 = vpop.f32.mrf.mxu0
        %v671 = vadd.f32 %v302, %v670
        %v672 = vpop.f32.mrf.mxu0
        %673 = vmatprep.mubr.bf16.mxu0 %v374
        %674 = vmatmul.mubr.bf16.gmra.mxu0 %v373
        %v675 = vpop.f32.mrf.mxu0
        %v676 = vadd.f32 %v302, %v675
        %v677 = vpop.f32.mrf.mxu0
        %v678 = vpop.f32.mrf.mxu0
        %v679 = vadd.f32 %v302, %v678
        %v680 = vpop.f32.mrf.mxu0
        %681 = vmatprep.mubr.bf16.mxu0 %v379
        %682 = vmatmul.mubr.bf16.gmra.mxu0 %v378
        %v683 = vpop.f32.mrf.mxu0
        %v684 = vadd.f32 %v302, %v683
        %v685 = vpop.f32.mrf.mxu0
        %v686 = vpop.f32.mrf.mxu0
        %v687 = vadd.f32 %v302, %v686
        %v688 = vpop.f32.mrf.mxu0
        %689 = vmatprep.mubr.bf16.mxu0 %v384
        %690 = vmatmul.mubr.bf16.gmra.mxu0 %v383
        %v691 = vpop.f32.mrf.mxu0
        %v692 = vadd.f32 %v302, %v691
        %v693 = vpop.f32.mrf.mxu0
        %v694 = vpop.f32.mrf.mxu0
        %v695 = vadd.f32 %v302, %v694
        %v696 = vpop.f32.mrf.mxu0
        %697 = vdwg.mxu0
        %698 = vmatprep.subr.bf16.mxu0 0
        %699 = vmatpush1.bf16.msra.mxu0 %v571
        %700 = vmatprep.subr.bf16.mxu0 0
        %701 = vmatpush1.bf16.msra.mxu0 %v570
        %702 = vmatprep.subr.bf16.mxu0 0
        %703 = vmatpush1.bf16.msra.mxu0 %v569
        %704 = vmatprep.subr.bf16.mxu0 0
        %705 = vmatpush1.bf16.msra.mxu0 %v568
        %706 = vmatprep.subr.bf16.mxu0 0
        %707 = vmatpush1.bf16.msra.mxu0 %v567
        %708 = vmatprep.subr.bf16.mxu0 0
        %709 = vmatpush1.bf16.msra.mxu0 %v566
        %710 = vmatprep.subr.bf16.mxu0 0
        %711 = vmatpush1.bf16.msra.mxu0 %v565
        %712 = vmatprep.subr.bf16.mxu0 0
        %713 = vmatpush1.bf16.msra.mxu0 %v564
        %714 = vmatprep.subr.bf16.mxu0 0
        %715 = vmatpush2.bf16.msra.mxu0 %v579
        %716 = vmatprep.subr.bf16.mxu0 0
        %717 = vmatpush2.bf16.msra.mxu0 %v578
        %718 = vmatprep.subr.bf16.mxu0 0
        %719 = vmatpush2.bf16.msra.mxu0 %v577
        %720 = vmatprep.subr.bf16.mxu0 0
        %721 = vmatpush2.bf16.msra.mxu0 %v576
        %722 = vmatprep.subr.bf16.mxu0 0
        %723 = vmatpush2.bf16.msra.mxu0 %v575
        %724 = vmatprep.subr.bf16.mxu0 0
        %725 = vmatpush2.bf16.msra.mxu0 %v574
        %726 = vmatprep.subr.bf16.mxu0 0
        %727 = vmatpush2.bf16.msra.mxu0 %v573
        %728 = vmatprep.subr.bf16.mxu0 0
        %729 = vmatpush2.bf16.msra.mxu0 %v572
        %730 = vmatprep.mubr.bf16.mxu0 %v371
        %731 = vmatmul.mubr.bf16.gmra.mxu0 %v370
        %v732 = vpop.f32.mrf.mxu0
        %v733 = vadd.f32 %v668, %v732
        %v734 = vpop.f32.mrf.mxu0
        %v735 = vpop.f32.mrf.mxu0
        %v736 = vadd.f32 %v671, %v735
        %v737 = vpop.f32.mrf.mxu0
        %738 = vmatprep.mubr.bf16.mxu0 %v376
        %739 = vmatmul.mubr.bf16.gmra.mxu0 %v375
        %v740 = vpop.f32.mrf.mxu0
        %v741 = vadd.f32 %v676, %v740
        %v742 = vpop.f32.mrf.mxu0
        %v743 = vpop.f32.mrf.mxu0
        %v744 = vadd.f32 %v679, %v743
        %v745 = vpop.f32.mrf.mxu0
        %746 = vmatprep.mubr.bf16.mxu0 %v381
        %747 = vmatmul.mubr.bf16.gmra.mxu0 %v380
        %v748 = vpop.f32.mrf.mxu0
        %v749 = vadd.f32 %v684, %v748
        %v750 = vpop.f32.mrf.mxu0
        %v751 = vpop.f32.mrf.mxu0
        %v752 = vadd.f32 %v687, %v751
        %v753 = vpop.f32.mrf.mxu0
        %754 = vmatprep.mubr.bf16.mxu0 %v386
        %755 = vmatmul.mubr.bf16.gmra.mxu0 %v385
        %v756 = vpop.f32.mrf.mxu0
        %v757 = vadd.f32 %v692, %v756
        %v758 = vpop.f32.mrf.mxu0
        %v759 = vpop.f32.mrf.mxu0
        %v760 = vadd.f32 %v695, %v759
        %v761 = vpop.f32.mrf.mxu0
        %762 = vdwg.mxu0
        %763 = vmatprep.subr.bf16.mxu0 0
        %764 = vmatpush1.bf16.msra.mxu0 0
        %765 = vmatprep.subr.bf16.mxu0 0
        %766 = vmatpush1.bf16.msra.mxu0 0
        %767 = vmatprep.subr.bf16.mxu0 0
        %768 = vmatpush1.bf16.msra.mxu0 0
        %769 = vmatprep.subr.bf16.mxu0 0
        %770 = vmatpush1.bf16.msra.mxu0 0
        %771 = vmatprep.subr.bf16.mxu0 0
        %772 = vmatpush1.bf16.msra.mxu0 %v583
        %773 = vmatprep.subr.bf16.mxu0 0
        %774 = vmatpush1.bf16.msra.mxu0 %v582
        %775 = vmatprep.subr.bf16.mxu0 0
        %776 = vmatpush1.bf16.msra.mxu0 %v581
        %777 = vmatprep.subr.bf16.mxu0 0
        %778 = vmatpush1.bf16.msra.mxu0 %v580
        %779 = vmatprep.subr.bf16.mxu0 0
        %780 = vmatpush2.bf16.msra.mxu0 0
        %781 = vmatprep.subr.bf16.mxu0 0
        %782 = vmatpush2.bf16.msra.mxu0 0
        %783 = vmatprep.subr.bf16.mxu0 0
        %784 = vmatpush2.bf16.msra.mxu0 0
        %785 = vmatprep.subr.bf16.mxu0 0
        %786 = vmatpush2.bf16.msra.mxu0 0
        %787 = vmatprep.subr.bf16.mxu0 0
        %788 = vmatpush2.bf16.msra.mxu0 0
        %789 = vmatprep.subr.bf16.mxu0 0
        %790 = vmatpush2.bf16.msra.mxu0 0
        %791 = vmatprep.subr.bf16.mxu0 0
        %792 = vmatpush2.bf16.msra.mxu0 0
        %793 = vmatprep.subr.bf16.mxu0 0
        %794 = vmatpush2.bf16.msra.mxu0 0
        %795 = vmatprep.mubr.bf16.mxu0 0
        %796 = vmatmul.mubr.bf16.gmra.mxu0 %v622
        %v797 = vpop.f32.mrf.mxu0
        %v798 = vadd.f32 %v733, %v797
        %v799 = vpop.f32.mrf.mxu0
        %v800 = vpop.f32.mrf.mxu0
        %v801 = vadd.f32 %v736, %v800
        %v802 = vpop.f32.mrf.mxu0
        %803 = vmatprep.mubr.bf16.mxu0 0
        %804 = vmatmul.mubr.bf16.gmra.mxu0 %v625
        %v805 = vpop.f32.mrf.mxu0
        %v806 = vadd.f32 %v741, %v805
        %v807 = vpop.f32.mrf.mxu0
        %v808 = vpop.f32.mrf.mxu0
        %v809 = vadd.f32 %v744, %v808
        %v810 = vpop.f32.mrf.mxu0
        %811 = vmatprep.mubr.bf16.mxu0 0
        %812 = vmatmul.mubr.bf16.gmra.mxu0 %v628
        %v813 = vpop.f32.mrf.mxu0
        %v814 = vadd.f32 %v749, %v813
        %v815 = vpop.f32.mrf.mxu0
        %v816 = vpop.f32.mrf.mxu0
        %v817 = vadd.f32 %v752, %v816
        %v818 = vpop.f32.mrf.mxu0
        %819 = vmatprep.mubr.bf16.mxu0 0
        %820 = vmatmul.mubr.bf16.gmra.mxu0 %v631
        %v821 = vpop.f32.mrf.mxu0
        %v822 = vadd.f32 %v757, %v821
        %v823 = vpop.f32.mrf.mxu0
        %v824 = vpop.f32.mrf.mxu0
        %v825 = vadd.f32 %v760, %v824
        %v826 = vpop.f32.mrf.mxu0
        %827 = vdwg.mxu0
        %v828 = vmax.f32 %v798, 0.0
        %v829 = vmax.f32 %v801, 0.0
        %v830 = vmax.f32 %v806, 0.0
        %v831 = vmax.f32 %v809, 0.0
        %v832 = vmax.f32 %v814, 0.0
        %v833 = vmax.f32 %v817, 0.0
        %v834 = vmax.f32 %v822, 0.0
        %v835 = vmax.f32 %v825, 0.0
        %v836 = vpack.c.bf16 %v829, %v828
        %v837 = vpack.c.bf16 %v831, %v830
        %v838 = vpack.c.bf16 %v833, %v832
        %v839 = vpack.c.bf16 %v835, %v834
        %v844 = vunpack.c.l.b16 %v836
        %v845 = vunpack.c.h.b16 %v836
        %v846 = vunpack.c.l.b16 %v837
        %v847 = vunpack.c.h.b16 %v837
        %v848 = vunpack.c.l.b16 %v838
        %v849 = vunpack.c.h.b16 %v838
        %v850 = vunpack.c.l.b16 %v839
        %v851 = vunpack.c.h.b16 %v839
        %v852 = vpack.c.b16 %v844, %v844
        %v853 = vpack.c.b16 %v845, %v845
        %v854 = vpack.c.b16 %v846, %v846
        %v855 = vpack.c.b16 %v847, %v847
        %v856 = vpack.c.b16 %v848, %v848
        %v857 = vpack.c.b16 %v849, %v849
        %v858 = vpack.c.b16 %v850, %v850
        %v859 = vpack.c.b16 %v851, %v851
        %vm868 = vcmask 519168
        %869 = vst.msk [vmem:[%s177] sm:$0xf] %vm868, %v852
        %870 = vst.msk [vmem:[%s177 + $0x4] sm:$0xf] %vm868, %v853
        %871 = vst.msk [vmem:[%s177 + $0x8] sm:$0xf] %vm868, %v854
        %872 = vst.msk [vmem:[%s177 + $0xc] sm:$0xf] %vm868, %v855
        %873 = vst.msk [vmem:[%s177 + $0x10] sm:$0xf] %vm868, %v856
        %874 = vst.msk [vmem:[%s177 + $0x14] sm:$0xf] %vm868, %v857
        %875 = vst.msk [vmem:[%s177 + $0x18] sm:$0xf] %vm868, %v858
        %876 = vst.msk [vmem:[%s177 + $0x1c] sm:$0xf] %vm868, %v859
        %s877 = sand.u32 %s90, 1
        %s878 = sand.u32 %s90, 1
        %s879 = smul.addr %s878, 32
        %s880 = scalar_lea.vmem [#allocation2], %s879
        // Predicated region
        $region33: #{cnn_forward.6} parent=31 // pred_check
          %p881 = pneg %p100
        $region34: #{cnn_forward.6} parent=31 // pred_check_branch
          %883 = sbr.rel (%p881) target = $region36
        $region35: #{cnn_forward.6} parent=31 // pred_region
          %s884 = smul.u32 8, %s14
          %s885 = ssub.s32 13, %s884
          %p886 = scmp.lt.s32.totalorder %s885, 8
          %s887 = scalar_select %p886, %s885, 8
          %s888 = smul.u32 64, %s887
          %p889 = scmp.ne.s32.totalorder 0, %s888
          %s890 = smul.addr %s884, 4
          %s891 = scalar_lea.vmem %s3, %s890
          // Predicated region
          $region37: #{cnn_forward.6} parent=35 // pred_check
            %p892 = pneg %p889
          $region38: #{cnn_forward.6} parent=35 // pred_check_branch
            %894 = sbr.rel (%p892) target = $region40
          $region39: #{cnn_forward.6} parent=35 // pred_region
            // Predicated region
            $region41: #{cnn_forward.6} parent=39 // pred_check
              _
            $region42: #{cnn_forward.6} parent=39 // pred_check_branch
              %896 = sbr.rel target = $region44
            $region43: #{cnn_forward.6} parent=39 // pred_region
              // Predicated region
              $region63: #{cnn_forward.6} parent=43 // pred_check
                _
              $region64: #{cnn_forward.6} parent=43 // pred_check_branch
                %960 = sbr.rel (0) target = $region66
              $region65: #{cnn_forward.6} parent=43 // pred_region
                %s962 = ssub.s32 16, 1
                %s963 = sshrl.u32 %s887, 3
                // While loop
                $region67: #{cnn_forward.6} parent=65 // loop_pre_header
                  _
                $region68: #{cnn_forward.6} parent=65 // loop_header
                  %s965 = sphi 0, %s967
                  %p966 = scmp.ge.s32.totalorder %s965, %s963
                  %s970 = sphi 0, %s991
                  %s971 = sphi %s880, %s994
                  %s972 = sphi %s891, %s995
                $region69: #{cnn_forward.6} parent=65 // loop_header_branch
                  %969 = sbr.rel (%p966) target = $region73
                $region70: #{cnn_forward.6} parent=65 // loop_body
                  %v973 = vld [vmem:[%s971] sm:%s962]
                  %974 = vst [vmem:[%s972] sm:%s962] %v973
                  %v975 = vld [vmem:[%s971 + $0x4] sm:%s962]
                  %976 = vst [vmem:[%s972 + $0x4] sm:%s962] %v975
                  %v977 = vld [vmem:[%s971 + $0x8] sm:%s962]
                  %978 = vst [vmem:[%s972 + $0x8] sm:%s962] %v977
                  %v979 = vld [vmem:[%s971 + $0xc] sm:%s962]
                  %980 = vst [vmem:[%s972 + $0xc] sm:%s962] %v979
                  %v981 = vld [vmem:[%s971 + $0x10] sm:%s962]
                  %982 = vst [vmem:[%s972 + $0x10] sm:%s962] %v981
                  %v983 = vld [vmem:[%s971 + $0x14] sm:%s962]
                  %984 = vst [vmem:[%s972 + $0x14] sm:%s962] %v983
                  %v985 = vld [vmem:[%s971 + $0x18] sm:%s962]
                  %986 = vst [vmem:[%s972 + $0x18] sm:%s962] %v985
                  %v987 = vld [vmem:[%s971 + $0x1c] sm:%s962]
                  %988 = vst [vmem:[%s972 + $0x1c] sm:%s962] %v987
                  %s989 = sadd.s32 1, %s970
                  %p990 = scmp.ge.s32.totalorder %s989, %s963
                  %s991 = scalar_select %p990, 0, %s989
                  %s992 = smul.u32 %s991, 32
                  %s993 = smul.u32 %s991, 32
                  %s994 = scalar_lea.vmem %s880, %s992 [#allocation2]
                  %s995 = scalar_lea.vmem %s891, %s993
                $region71: #{cnn_forward.6} parent=65 // loop_footer
                  %s967 = sadd.s32 %s965, 1
                $region72: #{cnn_forward.6} parent=65 // loop_footer_branch
                  %964 = sbr.rel target = $region68
                $region73: #{cnn_forward.6} parent=65 // loop_exit
                  _
                %s996 = sshrl.u32 %s887, 3
                %s997 = sand.u32 %s887, 7
                %s998 = smul.u32 %s996, 8
                %s999 = smul.u32 4, %s998
                %s1000 = scalar_lea.vmem %s880, %s999 [#allocation2]
                %s1001 = smul.u32 4, %s998
                %s1002 = scalar_lea.vmem %s891, %s1001
                // While loop
                $region74: #{cnn_forward.6} parent=65 // loop_pre_header
                  _
                $region75: #{cnn_forward.6} parent=65 // loop_header
                  %s1004 = sphi 0, %s1006
                  %p1005 = scmp.ge.s32.totalorder %s1004, %s997
                  %s1009 = sphi 0, %s1016
                  %s1010 = sphi %s1000, %s1019
                  %s1011 = sphi %s1002, %s1020
                $region76: #{cnn_forward.6} parent=65 // loop_header_branch
                  %1008 = sbr.rel (%p1005) target = $region80
                $region77: #{cnn_forward.6} parent=65 // loop_body
                  %v1012 = vld [vmem:[%s1010] sm:%s962]
                  %1013 = vst [vmem:[%s1011] sm:%s962] %v1012
                  %s1014 = sadd.s32 1, %s1009
                  %p1015 = scmp.ge.s32.totalorder %s1014, %s997
                  %s1016 = scalar_select %p1015, 0, %s1014
                  %s1017 = smul.u32 %s1016, 4
                  %s1018 = smul.u32 %s1016, 4
                  %s1019 = scalar_lea.vmem %s1000, %s1017 [#allocation2]
                  %s1020 = scalar_lea.vmem %s1002, %s1018
                $region78: #{cnn_forward.6} parent=65 // loop_footer
                  %s1006 = sadd.s32 %s1004, 1
                $region79: #{cnn_forward.6} parent=65 // loop_footer_branch
                  %1003 = sbr.rel target = $region75
                $region80: #{cnn_forward.6} parent=65 // loop_exit
                  _
              $region66: #{cnn_forward.6} parent=43 // pred_fallthru
                _
            $region44: #{cnn_forward.6} parent=39 // pred_fallthru
              _
            // Predicated region
            $region45: #{cnn_forward.6} parent=39 // pred_check
              _
            $region46: #{cnn_forward.6} parent=39 // pred_check_branch
              %898 = sbr.rel (0) target = $region48
            $region47: #{cnn_forward.6} parent=39 // pred_region
              %s900 = ssub.s32 16, 1
              %s901 = sshrl.u32 %s887, 3
              // While loop
              $region49: #{cnn_forward.6} parent=47 // loop_pre_header
                _
              $region50: #{cnn_forward.6} parent=47 // loop_header
                %s903 = sphi 0, %s905
                %p904 = scmp.ge.s32.totalorder %s903, %s901
                %s908 = sphi 0, %s929
                %s909 = sphi %s880, %s932
                %s910 = sphi %s891, %s933
              $region51: #{cnn_forward.6} parent=47 // loop_header_branch
                %907 = sbr.rel (%p904) target = $region55
              $region52: #{cnn_forward.6} parent=47 // loop_body
                %v911 = vld [vmem:[%s909] sm:%s900]
                %912 = vst [vmem:[%s910] sm:%s900] %v911
                %v913 = vld [vmem:[%s909 + $0x4] sm:%s900]
                %914 = vst [vmem:[%s910 + $0x4] sm:%s900] %v913
                %v915 = vld [vmem:[%s909 + $0x8] sm:%s900]
                %916 = vst [vmem:[%s910 + $0x8] sm:%s900] %v915
                %v917 = vld [vmem:[%s909 + $0xc] sm:%s900]
                %918 = vst [vmem:[%s910 + $0xc] sm:%s900] %v917
                %v919 = vld [vmem:[%s909 + $0x10] sm:%s900]
                %920 = vst [vmem:[%s910 + $0x10] sm:%s900] %v919
                %v921 = vld [vmem:[%s909 + $0x14] sm:%s900]
                %922 = vst [vmem:[%s910 + $0x14] sm:%s900] %v921
                %v923 = vld [vmem:[%s909 + $0x18] sm:%s900]
                %924 = vst [vmem:[%s910 + $0x18] sm:%s900] %v923
                %v925 = vld [vmem:[%s909 + $0x1c] sm:%s900]
                %926 = vst [vmem:[%s910 + $0x1c] sm:%s900] %v925
                %s927 = sadd.s32 1, %s908
                %p928 = scmp.ge.s32.totalorder %s927, %s901
                %s929 = scalar_select %p928, 0, %s927
                %s930 = smul.u32 %s929, 32
                %s931 = smul.u32 %s929, 32
                %s932 = scalar_lea.vmem %s880, %s930 [#allocation2]
                %s933 = scalar_lea.vmem %s891, %s931
              $region53: #{cnn_forward.6} parent=47 // loop_footer
                %s905 = sadd.s32 %s903, 1
              $region54: #{cnn_forward.6} parent=47 // loop_footer_branch
                %902 = sbr.rel target = $region50
              $region55: #{cnn_forward.6} parent=47 // loop_exit
                _
              %s934 = sshrl.u32 %s887, 3
              %s935 = sand.u32 %s887, 7
              %s936 = smul.u32 %s934, 8
              %s937 = smul.u32 4, %s936
              %s938 = scalar_lea.vmem %s880, %s937 [#allocation2]
              %s939 = smul.u32 4, %s936
              %s940 = scalar_lea.vmem %s891, %s939
              // While loop
              $region56: #{cnn_forward.6} parent=47 // loop_pre_header
                _
              $region57: #{cnn_forward.6} parent=47 // loop_header
                %s942 = sphi 0, %s944
                %p943 = scmp.ge.s32.totalorder %s942, %s935
                %s947 = sphi 0, %s954
                %s948 = sphi %s938, %s957
                %s949 = sphi %s940, %s958
              $region58: #{cnn_forward.6} parent=47 // loop_header_branch
                %946 = sbr.rel (%p943) target = $region62
              $region59: #{cnn_forward.6} parent=47 // loop_body
                %v950 = vld [vmem:[%s948] sm:%s900]
                %951 = vst [vmem:[%s949] sm:%s900] %v950
                %s952 = sadd.s32 1, %s947
                %p953 = scmp.ge.s32.totalorder %s952, %s935
                %s954 = scalar_select %p953, 0, %s952
                %s955 = smul.u32 %s954, 4
                %s956 = smul.u32 %s954, 4
                %s957 = scalar_lea.vmem %s938, %s955 [#allocation2]
                %s958 = scalar_lea.vmem %s940, %s956
              $region60: #{cnn_forward.6} parent=47 // loop_footer
                %s944 = sadd.s32 %s942, 1
              $region61: #{cnn_forward.6} parent=47 // loop_footer_branch
                %941 = sbr.rel target = $region57
              $region62: #{cnn_forward.6} parent=47 // loop_exit
                _
            $region48: #{cnn_forward.6} parent=39 // pred_fallthru
              _
          $region40: #{cnn_forward.6} parent=35 // pred_fallthru
            _
          %1021 = vnop
        $region36: #{cnn_forward.6} parent=31 // pred_fallthru
          _
      $region32: #{cnn_forward.6} parent=5 // pred_fallthru
        _
      %p1022 = scmp.le.s32.totalorder 2, %s9
      // Predicated region
      $region81: #{cnn_forward.6} parent=5 // pred_check
        %p1023 = pneg %p1022
      $region82: #{cnn_forward.6} parent=5 // pred_check_branch
        %1025 = sbr.rel (%p1023) target = $region84
      $region83: #{cnn_forward.6} parent=5 // pred_region
        %s1026 = ssub.s32 %s9, 2
        // Predicated region
        $region85: #{cnn_forward.6} parent=83 // pred_check
          %p1027 = pneg %p106
        $region86: #{cnn_forward.6} parent=83 // pred_check_branch
          %1029 = sbr.rel (%p1027) target = $region88
        $region87: #{cnn_forward.6} parent=83 // pred_region
          %s1030 = sand.u32 %s91, 1
          %s1031 = sand.u32 %s91, 1
          %s1032 = smul.addr %s1031, 32
          %s1033 = scalar_lea.vmem [#allocation2], %s1032
        $region88: #{cnn_forward.6} parent=83 // pred_fallthru
          _
      $region84: #{cnn_forward.6} parent=5 // pred_fallthru
        _
    $region6: #{cnn_forward.6} parent=1 // loop_footer
      %s13 = sadd.s32 1, %s9
    $region7: #{cnn_forward.6} parent=1 // loop_footer_branch
      %8 = sbr.rel target = $region3
    $region8: #{cnn_forward.6} parent=1 // loop_exit
      _

// kernel: cnn_forward.7
$region0: #{cnn_forward.7}
  #allocation0 [shape = 'u32[]', space=smem, size = 0x4, offset = 0x4, fixed_abs, tag = 'smem constant byte address 0x4 - core index']
  #allocation1 [shape = 'u32[144,128]{1,0:T(1,128)}', space=vmem, size = 0x12000, scoped, tag = 'internal scratch']
  %s0 = inlined_call_operand.vmem [shape: bf16[2,3136], index: 0, kind: input, shape index: {}]
  %s1 = inlined_call_operand.vmem [shape: bf16[3136,1024], index: 1, kind: input, shape index: {}]
  %s2 = inlined_call_operand.vmem [shape: f32[2,1,512], index: 2, kind: input, shape index: {}]
  %s3 = inlined_call_operand.vmem [shape: bf16[2,512,128], index: 3, kind: input, shape index: {}]
  %s4 = inlined_call_operand.vmem [shape: f32[2,1,128], index: 4, kind: input, shape index: {}]
  %s5 = inlined_call_operand.vmem [shape: f32[2,2,128], index: 5, kind: output, shape index: {}]
  %s6 = sld [smem:[#allocation0]]
  $region76: #{cnn_forward.7} parent=0
    _
  %s8 = ssub.s32 1, %s6
  %s9 = scalar_select 0, %s8, %s6
  $region1: #{cnn_forward.7} parent=0
    #allocation2 [shape = 'u8[6422528]{0}', space=vmem, size = 0x620000, scoped, tag = 'input window, operand 1']
    loop: start=0, step=1, limit=4
    $region2: #{cnn_forward.7} parent=1 // loop_pre_header
      _
    $region3: #{cnn_forward.7} parent=1 // loop_header
      %s11 = sphi 0, %s15
      %p12 = scmp.ge.s32.totalorder %s11, 4
      %s19 = sphi 0, %s19
      %s21 = sphi 0, %s19
      %s22 = sphi 0, %s21
      %s36 = sphi 0, %s22
      %s42 = sphi 0, %s44
      %s45 = sphi 0, %s42
      %s46 = sphi 0, %s45
      %s62 = sphi 0, %s46
      %s68 = sphi 0, %s70
      %s71 = sphi 0, %s68
      %s72 = sphi 0, %s71
      %s88 = sphi 0, %s72
      %s94 = sphi 0, %s96
      %s97 = sphi 0, %s94
      %s98 = sphi 0, %s97
      %s114 = sphi 0, %s98
      %s120 = sphi 0, %s122
      %s123 = sphi 0, %s120
      %s124 = sphi 0, %s123
      %s140 = sphi 0, %s124
      %s146 = sphi 0, %s148
      %s149 = sphi 0, %s146
      %s150 = sphi 0, %s149
      %s166 = sphi 0, %s150
    $region4: #{cnn_forward.7} parent=1 // loop_header_branch
      %14 = sbr.rel (%p12) target = $region8
    $region5: #{cnn_forward.7} parent=1 // loop_body
      %s16 = ssub.s32 %s11, 1
      %s17 = ssub.s32 %s11, 2
      %s18 = sadd.s32 %s11, 1
      %s20 = sadd.s32 %s19, 1
      %p23 = scmp.eq.s32.totalorder %s11, 1
      %p24 = scmp.ne.s32.totalorder %s19, %s21
      %p25 = scmp.eq.s32.totalorder %s11, 0
      %p26 = por %p24, %p25
      %p27 = scmp.ne.s32.totalorder %s19, %s21
      %p28 = scmp.eq.s32.totalorder %s16, 1
      %p29 = por %p27, %p28
      %p30 = scmp.ne.s32.totalorder %s21, %s22
      %p31 = scmp.eq.s32.totalorder %s16, 0
      %p32 = por %p30, %p31
      %p33 = scmp.ne.s32.totalorder %s21, %s22
      %p34 = scmp.eq.s32.totalorder %s17, 1
      %p35 = por %p33, %p34
      %p37 = scmp.ne.s32.totalorder %s22, %s36
      %p38 = scmp.eq.s32.totalorder %s17, 0
      %p39 = por %p37, %p38
      %s40 = ssub.s32 %s11, %s18
      %p41 = scmp.eq.s32.totalorder %s40, 0
      %s43 = sadd.s32 %s42, 1
      %s44 = scalar_select %p41, %s42, %s43
      %p47 = pneg %p41
      %p48 = scmp.eq.s32.totalorder %s11, 1
      %p49 = por %p47, %p48
      %p50 = scmp.ne.s32.totalorder %s42, %s45
      %p51 = scmp.eq.s32.totalorder %s11, 0
      %p52 = por %p50, %p51
      %p53 = scmp.ne.s32.totalorder %s42, %s45
      %p54 = scmp.eq.s32.totalorder %s16, 1
      %p55 = por %p53, %p54
      %p56 = scmp.ne.s32.totalorder %s45, %s46
      %p57 = scmp.eq.s32.totalorder %s16, 0
      %p58 = por %p56, %p57
      %p59 = scmp.ne.s32.totalorder %s45, %s46
      %p60 = scmp.eq.s32.totalorder %s17, 1
      %p61 = por %p59, %p60
      %p63 = scmp.ne.s32.totalorder %s46, %s62
      %p64 = scmp.eq.s32.totalorder %s17, 0
      %p65 = por %p63, %p64
      %s66 = ssub.s32 %s11, %s18
      %p67 = scmp.eq.s32.totalorder %s66, 0
      %s69 = sadd.s32 %s68, 1
      %s70 = scalar_select %p67, %s68, %s69
      %p73 = pneg %p67
      %p74 = scmp.eq.s32.totalorder %s11, 1
      %p75 = por %p73, %p74
      %p76 = scmp.ne.s32.totalorder %s68, %s71
      %p77 = scmp.eq.s32.totalorder %s11, 0
      %p78 = por %p76, %p77
      %p79 = scmp.ne.s32.totalorder %s68, %s71
      %p80 = scmp.eq.s32.totalorder %s16, 1
      %p81 = por %p79, %p80
      %p82 = scmp.ne.s32.totalorder %s71, %s72
      %p83 = scmp.eq.s32.totalorder %s16, 0
      %p84 = por %p82, %p83
      %p85 = scmp.ne.s32.totalorder %s71, %s72
      %p86 = scmp.eq.s32.totalorder %s17, 1
      %p87 = por %p85, %p86
      %p89 = scmp.ne.s32.totalorder %s72, %s88
      %p90 = scmp.eq.s32.totalorder %s17, 0
      %p91 = por %p89, %p90
      %s92 = ssub.s32 %s11, %s18
      %p93 = scmp.eq.s32.totalorder %s92, 0
      %s95 = sadd.s32 %s94, 1
      %s96 = scalar_select %p93, %s94, %s95
      %p99 = pneg %p93
      %p100 = scmp.eq.s32.totalorder %s11, 1
      %p101 = por %p99, %p100
      %p102 = scmp.ne.s32.totalorder %s94, %s97
      %p103 = scmp.eq.s32.totalorder %s11, 0
      %p104 = por %p102, %p103
      %p105 = scmp.ne.s32.totalorder %s94, %s97
      %p106 = scmp.eq.s32.totalorder %s16, 1
      %p107 = por %p105, %p106
      %p108 = scmp.ne.s32.totalorder %s97, %s98
      %p109 = scmp.eq.s32.totalorder %s16, 0
      %p110 = por %p108, %p109
      %p111 = scmp.ne.s32.totalorder %s97, %s98
      %p112 = scmp.eq.s32.totalorder %s17, 1
      %p113 = por %p111, %p112
      %p115 = scmp.ne.s32.totalorder %s98, %s114
      %p116 = scmp.eq.s32.totalorder %s17, 0
      %p117 = por %p115, %p116
      %s118 = ssub.s32 %s11, %s18
      %p119 = scmp.eq.s32.totalorder %s118, 0
      %s121 = sadd.s32 %s120, 1
      %s122 = scalar_select %p119, %s120, %s121
      %p125 = pneg %p119
      %p126 = scmp.eq.s32.totalorder %s11, 1
      %p127 = por %p125, %p126
      %p128 = scmp.ne.s32.totalorder %s120, %s123
      %p129 = scmp.eq.s32.totalorder %s11, 0
      %p130 = por %p128, %p129
      %p131 = scmp.ne.s32.totalorder %s120, %s123
      %p132 = scmp.eq.s32.totalorder %s16, 1
      %p133 = por %p131, %p132
      %p134 = scmp.ne.s32.totalorder %s123, %s124
      %p135 = scmp.eq.s32.totalorder %s16, 0
      %p136 = por %p134, %p135
      %p137 = scmp.ne.s32.totalorder %s123, %s124
      %p138 = scmp.eq.s32.totalorder %s17, 1
      %p139 = por %p137, %p138
      %p141 = scmp.ne.s32.totalorder %s124, %s140
      %p142 = scmp.eq.s32.totalorder %s17, 0
      %p143 = por %p141, %p142
      %s144 = ssub.s32 %s11, %s18
      %p145 = scmp.eq.s32.totalorder %s144, 0
      %s147 = sadd.s32 %s146, 1
      %s148 = scalar_select %p145, %s146, %s147
      %p151 = pneg %p145
      %p152 = scmp.eq.s32.totalorder %s11, 1
      %p153 = por %p151, %p152
      %p154 = scmp.ne.s32.totalorder %s146, %s149
      %p155 = scmp.eq.s32.totalorder %s11, 0
      %p156 = por %p154, %p155
      %p157 = scmp.ne.s32.totalorder %s146, %s149
      %p158 = scmp.eq.s32.totalorder %s16, 1
      %p159 = por %p157, %p158
      %p160 = scmp.ne.s32.totalorder %s149, %s150
      %p161 = scmp.eq.s32.totalorder %s16, 0
      %p162 = por %p160, %p161
      %p163 = scmp.ne.s32.totalorder %s149, %s150
      %p164 = scmp.eq.s32.totalorder %s17, 1
      %p165 = por %p163, %p164
      %p167 = scmp.ne.s32.totalorder %s150, %s166
      %p168 = scmp.eq.s32.totalorder %s17, 0
      %p169 = por %p167, %p168
      %p170 = scmp.le.s32.totalorder 1, %s11
      %p171 = scmp.lt.s32.totalorder %s11, 3
      %p172 = pnand %p170, %p171
      %p173 = pneg %p172
      // Predicated region
      $region9: #{cnn_forward.7} parent=5 // pred_check
        _
      $region10: #{cnn_forward.7} parent=5 // pred_check_branch
        %175 = sbr.rel (%p172) target = $region12
      $region11: #{cnn_forward.7} parent=5 // pred_region
        %s176 = ssub.s32 %s11, 1
        // Predicated region
        $region13: #{cnn_forward.7} parent=11 // pred_check
          %p177 = pneg %p32
        $region14: #{cnn_forward.7} parent=11 // pred_check_branch
          %179 = sbr.rel (%p177) target = $region16
        $region15: #{cnn_forward.7} parent=11 // pred_region
          _
        $region16: #{cnn_forward.7} parent=11 // pred_fallthru
          _
      $region12: #{cnn_forward.7} parent=5 // pred_fallthru
        _
      %p180 = scmp.lt.s32.totalorder %s11, 2
      // Predicated region
      $region17: #{cnn_forward.7} parent=5 // pred_check
        %p181 = pneg %p180
      $region18: #{cnn_forward.7} parent=5 // pred_check_branch
        %183 = sbr.rel (%p181) target = $region20
      $region19: #{cnn_forward.7} parent=5 // pred_region
        // Predicated region
        $region21: #{cnn_forward.7} parent=19 // pred_check
          %p184 = pneg %p52
        $region22: #{cnn_forward.7} parent=19 // pred_check_branch
          %186 = sbr.rel (%p184) target = $region24
        $region23: #{cnn_forward.7} parent=19 // pred_region
          %s187 = sand.u32 %s42, 1
          %s188 = sand.u32 %s42, 1
          %s189 = smul.addr %s188, 6272
          %s190 = scalar_lea.vmem [#allocation2], %s189
          %s191 = smul.u32 4, %s11
          %s192 = smul.addr %s191, 4
          %s193 = scalar_lea.vmem %s1, %s192
          // Predicated region
          $region25: #{cnn_forward.7} parent=23 // pred_check
            _
          $region26: #{cnn_forward.7} parent=23 // pred_check_branch
            %195 = sbr.rel (0) target = $region28
          $region27: #{cnn_forward.7} parent=23 // pred_region
            // Predicated region
            $region29: #{cnn_forward.7} parent=27 // pred_check
              _
            $region30: #{cnn_forward.7} parent=27 // pred_check_branch
              %197 = sbr.rel (0) target = $region32
            $region31: #{cnn_forward.7} parent=27 // pred_region
              loop: start=0, step=1, limit=1
              $region33: #{cnn_forward.7} parent=31 // loop_pre_header
                _
              $region34: #{cnn_forward.7} parent=31 // loop_header
                %s199 = sphi 0, %s203
                %p200 = scmp.ge.s32.totalorder %s199, 1
                %s204 = sphi %s193, %s193
                %s205 = sphi %s190, %s190
              $region35: #{cnn_forward.7} parent=31 // loop_header_branch
                %202 = sbr.rel (%p200) target = $region39
              $region36: #{cnn_forward.7} parent=31 // loop_body
                %v206 = vld [vmem:[%s204] sm:$0xff]
                %207 = vst [vmem:[%s205] sm:$0xff] %v206
                %v208 = vld [vmem:[%s204 + $0x8] sm:$0xff]
                %209 = vst [vmem:[%s205 + $0x8] sm:$0xff] %v208
                %v210 = vld [vmem:[%s204 + $0x20] sm:$0xff]
                %211 = vst [vmem:[%s205 + $0x10] sm:$0xff] %v210
                %v212 = vld [vmem:[%s204 + $0x28] sm:$0xff]
                %213 = vst [vmem:[%s205 + $0x18] sm:$0xff] %v212
                %v214 = vld [vmem:[%s204 + $0x40] sm:$0xff]
                %215 = vst [vmem:[%s205 + $0x20] sm:$0xff] %v214
                %v216 = vld [vmem:[%s204 + $0x48] sm:$0xff]
                %217 = vst [vmem:[%s205 + $0x28] sm:$0xff] %v216
                %v218 = vld [vmem:[%s204 + $0x60] sm:$0xff]
                %219 = vst [vmem:[%s205 + $0x30] sm:$0xff] %v218
                %v220 = vld [vmem:[%s204 + $0x68] sm:$0xff]
                %221 = vst [vmem:[%s205 + $0x38] sm:$0xff] %v220
                %v222 = vld [vmem:[%s204 + $0x80] sm:$0xff]
                %223 = vst [vmem:[%s205 + $0x40] sm:$0xff] %v222
                %v224 = vld [vmem:[%s204 + $0x88] sm:$0xff]
                %225 = vst [vmem:[%s205 + $0x48] sm:$0xff] %v224
                %v226 = vld [vmem:[%s204 + $0xa0] sm:$0xff]
                %227 = vst [vmem:[%s205 + $0x50] sm:$0xff] %v226
                %v228 = vld [vmem:[%s204 + $0xa8] sm:$0xff]
                %229 = vst [vmem:[%s205 + $0x58] sm:$0xff] %v228
                %v230 = vld [vmem:[%s204 + $0xc0] sm:$0xff]
                %231 = vst [vmem:[%s205 + $0x60] sm:$0xff] %v230
                %v232 = vld [vmem:[%s204 + $0xc8] sm:$0xff]
                %233 = vst [vmem:[%s205 + $0x68] sm:$0xff] %v232
                %v234 = vld [vmem:[%s204 + $0xe0] sm:$0xff]
                %235 = vst [vmem:[%s205 + $0x70] sm:$0xff] %v234
                %v236 = vld [vmem:[%s204 + $0xe8] sm:$0xff]
                %237 = vst [vmem:[%s205 + $0x78] sm:$0xff] %v236
                %v238 = vld [vmem:[%s204 + $0x100] sm:$0xff]
                %239 = vst [vmem:[%s205 + $0x80] sm:$0xff] %v238
                %v240 = vld [vmem:[%s204 + $0x108] sm:$0xff]
                %241 = vst [vmem:[%s205 + $0x88] sm:$0xff] %v240
                %v242 = vld [vmem:[%s204 + $0x120] sm:$0xff]
                %243 = vst [vmem:[%s205 + $0x90] sm:$0xff] %v242
                %v244 = vld [vmem:[%s204 + $0x128] sm:$0xff]
                %245 = vst [vmem:[%s205 + $0x98] sm:$0xff] %v244
                %v246 = vld [vmem:[%s204 + $0x140] sm:$0xff]
                %247 = vst [vmem:[%s205 + $0xa0] sm:$0xff] %v246
                %v248 = vld [vmem:[%s204 + $0x148] sm:$0xff]
                %249 = vst [vmem:[%s205 + $0xa8] sm:$0xff] %v248
                %v250 = vld [vmem:[%s204 + $0x160] sm:$0xff]
                %251 = vst [vmem:[%s205 + $0xb0] sm:$0xff] %v250
                %v252 = vld [vmem:[%s204 + $0x168] sm:$0xff]
                %253 = vst [vmem:[%s205 + $0xb8] sm:$0xff] %v252
                %v254 = vld [vmem:[%s204 + $0x180] sm:$0xff]
                %255 = vst [vmem:[%s205 + $0xc0] sm:$0xff] %v254
                %v256 = vld [vmem:[%s204 + $0x188] sm:$0xff]
                %257 = vst [vmem:[%s205 + $0xc8] sm:$0xff] %v256
                %v258 = vld [vmem:[%s204 + $0x1a0] sm:$0xff]
                %259 = vst [vmem:[%s205 + $0xd0] sm:$0xff] %v258
                %v260 = vld [vmem:[%s204 + $0x1a8] sm:$0xff]
                %261 = vst [vmem:[%s205 + $0xd8] sm:$0xff] %v260
                %v262 = vld [vmem:[%s204 + $0x1c0] sm:$0xff]
                %263 = vst [vmem:[%s205 + $0xe0] sm:$0xff] %v262
                %v264 = vld [vmem:[%s204 + $0x1c8] sm:$0xff]
                %265 = vst [vmem:[%s205 + $0xe8] sm:$0xff] %v264
                %v266 = vld [vmem:[%s204 + $0x1e0] sm:$0xff]
                %267 = vst [vmem:[%s205 + $0xf0] sm:$0xff] %v266
                %v268 = vld [vmem:[%s204 + $0x1e8] sm:$0xff]
                %269 = vst [vmem:[%s205 + $0xf8] sm:$0xff] %v268
                %v270 = vld [vmem:[%s204 + $0x200] sm:$0xff]
                %271 = vst [vmem:[%s205 + $0x100] sm:$0xff] %v270
                %v272 = vld [vmem:[%s204 + $0x208] sm:$0xff]
                %273 = vst [vmem:[%s205 + $0x108] sm:$0xff] %v272
                %v274 = vld [vmem:[%s204 + $0x220] sm:$0xff]
                %275 = vst [vmem:[%s205 + $0x110] sm:$0xff] %v274
                %v276 = vld [vmem:[%s204 + $0x228] sm:$0xff]
                %277 = vst [vmem:[%s205 + $0x118] sm:$0xff] %v276
                %v278 = vld [vmem:[%s204 + $0x240] sm:$0xff]
                %279 = vst [vmem:[%s205 + $0x120] sm:$0xff] %v278
                %v280 = vld [vmem:[%s204 + $0x248] sm:$0xff]
                %281 = vst [vmem:[%s205 + $0x128] sm:$0xff] %v280
                %v282 = vld [vmem:[%s204 + $0x260] sm:$0xff]
                %283 = vst [vmem:[%s205 + $0x130] sm:$0xff] %v282
                %v284 = vld [vmem:[%s204 + $0x268] sm:$0xff]
                %285 = vst [vmem:[%s205 + $0x138] sm:$0xff] %v284
                %v286 = vld [vmem:[%s204 + $0x280] sm:$0xff]
                %287 = vst [vmem:[%s205 + $0x140] sm:$0xff] %v286
                %v288 = vld [vmem:[%s204 + $0x288] sm:$0xff]
                %289 = vst [vmem:[%s205 + $0x148] sm:$0xff] %v288
                %v290 = vld [vmem:[%s204 + $0x2a0] sm:$0xff]
                %291 = vst [vmem:[%s205 + $0x150] sm:$0xff] %v290
                %v292 = vld [vmem:[%s204 + $0x2a8] sm:$0xff]
                %293 = vst [vmem:[%s205 + $0x158] sm:$0xff] %v292
                %v294 = vld [vmem:[%s204 + $0x2c0] sm:$0xff]
                %295 = vst [vmem:[%s205 + $0x160] sm:$0xff] %v294
                %v296 = vld [vmem:[%s204 + $0x2c8] sm:$0xff]
                %297 = vst [vmem:[%s205 + $0x168] sm:$0xff] %v296
                %v298 = vld [vmem:[%s204 + $0x2e0] sm:$0xff]
                %299 = vst [vmem:[%s205 + $0x170] sm:$0xff] %v298
                %v300 = vld [vmem:[%s204 + $0x2e8] sm:$0xff]
                %301 = vst [vmem:[%s205 + $0x178] sm:$0xff] %v300
                %v302 = vld [vmem:[%s204 + $0x300] sm:$0xff]
                %303 = vst [vmem:[%s205 + $0x180] sm:$0xff] %v302
                %v304 = vld [vmem:[%s204 + $0x308] sm:$0xff]
                %305 = vst [vmem:[%s205 + $0x188] sm:$0xff] %v304
                %v306 = vld [vmem:[%s204 + $0x320] sm:$0xff]
                %307 = vst [vmem:[%s205 + $0x190] sm:$0xff] %v306
                %v308 = vld [vmem:[%s204 + $0x328] sm:$0xff]
                %309 = vst [vmem:[%s205 + $0x198] sm:$0xff] %v308
                %v310 = vld [vmem:[%s204 + $0x340] sm:$0xff]
                %311 = vst [vmem:[%s205 + $0x1a0] sm:$0xff] %v310
                %v312 = vld [vmem:[%s204 + $0x348] sm:$0xff]
                %313 = vst [vmem:[%s205 + $0x1a8] sm:$0xff] %v312
                %v314 = vld [vmem:[%s204 + $0x360] sm:$0xff]
                %315 = vst [vmem:[%s205 + $0x1b0] sm:$0xff] %v314
                %v316 = vld [vmem:[%s204 + $0x368] sm:$0xff]
                %317 = vst [vmem:[%s205 + $0x1b8] sm:$0xff] %v316
                %v318 = vld [vmem:[%s204 + $0x380] sm:$0xff]
                %319 = vst [vmem:[%s205 + $0x1c0] sm:$0xff] %v318
                %v320 = vld [vmem:[%s204 + $0x388] sm:$0xff]
                %321 = vst [vmem:[%s205 + $0x1c8] sm:$0xff] %v320
                %v322 = vld [vmem:[%s204 + $0x3a0] sm:$0xff]
                %323 = vst [vmem:[%s205 + $0x1d0] sm:$0xff] %v322
                %v324 = vld [vmem:[%s204 + $0x3a8] sm:$0xff]
                %325 = vst [vmem:[%s205 + $0x1d8] sm:$0xff] %v324
                %v326 = vld [vmem:[%s204 + $0x3c0] sm:$0xff]
                %327 = vst [vmem:[%s205 + $0x1e0] sm:$0xff] %v326
                %v328 = vld [vmem:[%s204 + $0x3c8] sm:$0xff]
                %329 = vst [vmem:[%s205 + $0x1e8] sm:$0xff] %v328
                %v330 = vld [vmem:[%s204 + $0x3e0] sm:$0xff]
                %331 = vst [vmem:[%s205 + $0x1f0] sm:$0xff] %v330
                %v332 = vld [vmem:[%s204 + $0x3e8] sm:$0xff]
                %333 = vst [vmem:[%s205 + $0x1f8] sm:$0xff] %v332
                %v334 = vld [vmem:[%s204 + $0x400] sm:$0xff]
                %335 = vst [vmem:[%s205 + $0x200] sm:$0xff] %v334
                %v336 = vld [vmem:[%s204 + $0x408] sm:$0xff]
                %337 = vst [vmem:[%s205 + $0x208] sm:$0xff] %v336
                %v338 = vld [vmem:[%s204 + $0x420] sm:$0xff]
                %339 = vst [vmem:[%s205 + $0x210] sm:$0xff] %v338
                %v340 = vld [vmem:[%s204 + $0x428] sm:$0xff]
                %341 = vst [vmem:[%s205 + $0x218] sm:$0xff] %v340
                %v342 = vld [vmem:[%s204 + $0x440] sm:$0xff]
                %343 = vst [vmem:[%s205 + $0x220] sm:$0xff] %v342
                %v344 = vld [vmem:[%s204 + $0x448] sm:$0xff]
                %345 = vst [vmem:[%s205 + $0x228] sm:$0xff] %v344
                %v346 = vld [vmem:[%s204 + $0x460] sm:$0xff]
                %347 = vst [vmem:[%s205 + $0x230] sm:$0xff] %v346
                %v348 = vld [vmem:[%s204 + $0x468] sm:$0xff]
                %349 = vst [vmem:[%s205 + $0x238] sm:$0xff] %v348
                %v350 = vld [vmem:[%s204 + $0x480] sm:$0xff]
                %351 = vst [vmem:[%s205 + $0x240] sm:$0xff] %v350
                %v352 = vld [vmem:[%s204 + $0x488] sm:$0xff]
                %353 = vst [vmem:[%s205 + $0x248] sm:$0xff] %v352
                %v354 = vld [vmem:[%s204 + $0x4a0] sm:$0xff]
                %355 = vst [vmem:[%s205 + $0x250] sm:$0xff] %v354
                %v356 = vld [vmem:[%s204 + $0x4a8] sm:$0xff]
                %357 = vst [vmem:[%s205 + $0x258] sm:$0xff] %v356
                %v358 = vld [vmem:[%s204 + $0x4c0] sm:$0xff]
                %359 = vst [vmem:[%s205 + $0x260] sm:$0xff] %v358
                %v360 = vld [vmem:[%s204 + $0x4c8] sm:$0xff]
                %361 = vst [vmem:[%s205 + $0x268] sm:$0xff] %v360
                %v362 = vld [vmem:[%s204 + $0x4e0] sm:$0xff]
                %363 = vst [vmem:[%s205 + $0x270] sm:$0xff] %v362
                %v364 = vld [vmem:[%s204 + $0x4e8] sm:$0xff]
                %365 = vst [vmem:[%s205 + $0x278] sm:$0xff] %v364
                %v366 = vld [vmem:[%s204 + $0x500] sm:$0xff]
                %367 = vst [vmem:[%s205 + $0x280] sm:$0xff] %v366
                %v368 = vld [vmem:[%s204 + $0x508] sm:$0xff]
                %369 = vst [vmem:[%s205 + $0x288] sm:$0xff] %v368
                %v370 = vld [vmem:[%s204 + $0x520] sm:$0xff]
                %371 = vst [vmem:[%s205 + $0x290] sm:$0xff] %v370
                %v372 = vld [vmem:[%s204 + $0x528] sm:$0xff]
                %373 = vst [vmem:[%s205 + $0x298] sm:$0xff] %v372
                %v374 = vld [vmem:[%s204 + $0x540] sm:$0xff]
                %375 = vst [vmem:[%s205 + $0x2a0] sm:$0xff] %v374
                %v376 = vld [vmem:[%s204 + $0x548] sm:$0xff]
                %377 = vst [vmem:[%s205 + $0x2a8] sm:$0xff] %v376
                %v378 = vld [vmem:[%s204 + $0x560] sm:$0xff]
                %379 = vst [vmem:[%s205 + $0x2b0] sm:$0xff] %v378
                %v380 = vld [vmem:[%s204 + $0x568] sm:$0xff]
                %381 = vst [vmem:[%s205 + $0x2b8] sm:$0xff] %v380
                %v382 = vld [vmem:[%s204 + $0x580] sm:$0xff]
                %383 = vst [vmem:[%s205 + $0x2c0] sm:$0xff] %v382
                %v384 = vld [vmem:[%s204 + $0x588] sm:$0xff]
                %385 = vst [vmem:[%s205 + $0x2c8] sm:$0xff] %v384
                %v386 = vld [vmem:[%s204 + $0x5a0] sm:$0xff]
                %387 = vst [vmem:[%s205 + $0x2d0] sm:$0xff] %v386
                %v388 = vld [vmem:[%s204 + $0x5a8] sm:$0xff]
                %389 = vst [vmem:[%s205 + $0x2d8] sm:$0xff] %v388
                %v390 = vld [vmem:[%s204 + $0x5c0] sm:$0xff]
                %391 = vst [vmem:[%s205 + $0x2e0] sm:$0xff] %v390
                %v392 = vld [vmem:[%s204 + $0x5c8] sm:$0xff]
                %393 = vst [vmem:[%s205 + $0x2e8] sm:$0xff] %v392
                %v394 = vld [vmem:[%s204 + $0x5e0] sm:$0xff]
                %395 = vst [vmem:[%s205 + $0x2f0] sm:$0xff] %v394
                %v396 = vld [vmem:[%s204 + $0x5e8] sm:$0xff]
                %397 = vst [vmem:[%s205 + $0x2f8] sm:$0xff] %v396
                %v398 = vld [vmem:[%s204 + $0x600] sm:$0xff]
                %399 = vst [vmem:[%s205 + $0x300] sm:$0xff] %v398
                %v400 = vld [vmem:[%s204 + $0x608] sm:$0xff]
                %401 = vst [vmem:[%s205 + $0x308] sm:$0xff] %v400
                %v402 = vld [vmem:[%s204 + $0x620] sm:$0xff]
                %403 = vst [vmem:[%s205 + $0x310] sm:$0xff] %v402
                %v404 = vld [vmem:[%s204 + $0x628] sm:$0xff]
                %405 = vst [vmem:[%s205 + $0x318] sm:$0xff] %v404
                %v406 = vld [vmem:[%s204 + $0x640] sm:$0xff]
                %407 = vst [vmem:[%s205 + $0x320] sm:$0xff] %v406
                %v408 = vld [vmem:[%s204 + $0x648] sm:$0xff]
                %409 = vst [vmem:[%s205 + $0x328] sm:$0xff] %v408
                %v410 = vld [vmem:[%s204 + $0x660] sm:$0xff]
                %411 = vst [vmem:[%s205 + $0x330] sm:$0xff] %v410
                %v412 = vld [vmem:[%s204 + $0x668] sm:$0xff]
                %413 = vst [vmem:[%s205 + $0x338] sm:$0xff] %v412
                %v414 = vld [vmem:[%s204 + $0x680] sm:$0xff]
                %415 = vst [vmem:[%s205 + $0x340] sm:$0xff] %v414
                %v416 = vld [vmem:[%s204 + $0x688] sm:$0xff]
                %417 = vst [vmem:[%s205 + $0x348] sm:$0xff] %v416
                %v418 = vld [vmem:[%s204 + $0x6a0] sm:$0xff]
                %419 = vst [vmem:[%s205 + $0x350] sm:$0xff] %v418
                %v420 = vld [vmem:[%s204 + $0x6a8] sm:$0xff]
                %421 = vst [vmem:[%s205 + $0x358] sm:$0xff] %v420
                %v422 = vld [vmem:[%s204 + $0x6c0] sm:$0xff]
                %423 = vst [vmem:[%s205 + $0x360] sm:$0xff] %v422
                %v424 = vld [vmem:[%s204 + $0x6c8] sm:$0xff]
                %425 = vst [vmem:[%s205 + $0x368] sm:$0xff] %v424
                %v426 = vld [vmem:[%s204 + $0x6e0] sm:$0xff]
                %427 = vst [vmem:[%s205 + $0x370] sm:$0xff] %v426
                %v428 = vld [vmem:[%s204 + $0x6e8] sm:$0xff]
                %429 = vst [vmem:[%s205 + $0x378] sm:$0xff] %v428
                %v430 = vld [vmem:[%s204 + $0x700] sm:$0xff]
                %431 = vst [vmem:[%s205 + $0x380] sm:$0xff] %v430
                %v432 = vld [vmem:[%s204 + $0x708] sm:$0xff]
                %433 = vst [vmem:[%s205 + $0x388] sm:$0xff] %v432
                %v434 = vld [vmem:[%s204 + $0x720] sm:$0xff]
                %435 = vst [vmem:[%s205 + $0x390] sm:$0xff] %v434
                %v436 = vld [vmem:[%s204 + $0x728] sm:$0xff]
                %437 = vst [vmem:[%s205 + $0x398] sm:$0xff] %v436
                %v438 = vld [vmem:[%s204 + $0x740] sm:$0xff]
                %439 = vst [vmem:[%s205 + $0x3a0] sm:$0xff] %v438
                %v440 = vld [vmem:[%s204 + $0x748] sm:$0xff]
                %441 = vst [vmem:[%s205 + $0x3a8] sm:$0xff] %v440
                %v442 = vld [vmem:[%s204 + $0x760] sm:$0xff]
                %443 = vst [vmem:[%s205 + $0x3b0] sm:$0xff] %v442
                %v444 = vld [vmem:[%s204 + $0x768] sm:$0xff]
                %445 = vst [vmem:[%s205 + $0x3b8] sm:$0xff] %v444
                %v446 = vld [vmem:[%s204 + $0x780] sm:$0xff]
                %447 = vst [vmem:[%s205 + $0x3c0] sm:$0xff] %v446
                %v448 = vld [vmem:[%s204 + $0x788] sm:$0xff]
                %449 = vst [vmem:[%s205 + $0x3c8] sm:$0xff] %v448
                %v450 = vld [vmem:[%s204 + $0x7a0] sm:$0xff]
                %451 = vst [vmem:[%s205 + $0x3d0] sm:$0xff] %v450
                %v452 = vld [vmem:[%s204 + $0x7a8] sm:$0xff]
                %453 = vst [vmem:[%s205 + $0x3d8] sm:$0xff] %v452
                %v454 = vld [vmem:[%s204 + $0x7c0] sm:$0xff]
                %455 = vst [vmem:[%s205 + $0x3e0] sm:$0xff] %v454
                %v456 = vld [vmem:[%s204 + $0x7c8] sm:$0xff]
                %457 = vst [vmem:[%s205 + $0x3e8] sm:$0xff] %v456
                %v458 = vld [vmem:[%s204 + $0x7e0] sm:$0xff]
                %459 = vst [vmem:[%s205 + $0x3f0] sm:$0xff] %v458
                %v460 = vld [vmem:[%s204 + $0x7e8] sm:$0xff]
                %461 = vst [vmem:[%s205 + $0x3f8] sm:$0xff] %v460
                %v462 = vld [vmem:[%s204 + $0x800] sm:$0xff]
                %463 = vst [vmem:[%s205 + $0x400] sm:$0xff] %v462
                %v464 = vld [vmem:[%s204 + $0x808] sm:$0xff]
                %465 = vst [vmem:[%s205 + $0x408] sm:$0xff] %v464
                %v466 = vld [vmem:[%s204 + $0x820] sm:$0xff]
                %467 = vst [vmem:[%s205 + $0x410] sm:$0xff] %v466
                %v468 = vld [vmem:[%s204 + $0x828] sm:$0xff]
                %469 = vst [vmem:[%s205 + $0x418] sm:$0xff] %v468
                %v470 = vld [vmem:[%s204 + $0x840] sm:$0xff]
                %471 = vst [vmem:[%s205 + $0x420] sm:$0xff] %v470
                %v472 = vld [vmem:[%s204 + $0x848] sm:$0xff]
                %473 = vst [vmem:[%s205 + $0x428] sm:$0xff] %v472
                %v474 = vld [vmem:[%s204 + $0x860] sm:$0xff]
                %475 = vst [vmem:[%s205 + $0x430] sm:$0xff] %v474
                %v476 = vld [vmem:[%s204 + $0x868] sm:$0xff]
                %477 = vst [vmem:[%s205 + $0x438] sm:$0xff] %v476
                %v478 = vld [vmem:[%s204 + $0x880] sm:$0xff]
                %479 = vst [vmem:[%s205 + $0x440] sm:$0xff] %v478
                %v480 = vld [vmem:[%s204 + $0x888] sm:$0xff]
                %481 = vst [vmem:[%s205 + $0x448] sm:$0xff] %v480
                %v482 = vld [vmem:[%s204 + $0x8a0] sm:$0xff]
                %483 = vst [vmem:[%s205 + $0x450] sm:$0xff] %v482
                %v484 = vld [vmem:[%s204 + $0x8a8] sm:$0xff]
                %485 = vst [vmem:[%s205 + $0x458] sm:$0xff] %v484
                %v486 = vld [vmem:[%s204 + $0x8c0] sm:$0xff]
                %487 = vst [vmem:[%s205 + $0x460] sm:$0xff] %v486
                %v488 = vld [vmem:[%s204 + $0x8c8] sm:$0xff]
                %489 = vst [vmem:[%s205 + $0x468] sm:$0xff] %v488
                %v490 = vld [vmem:[%s204 + $0x8e0] sm:$0xff]
                %491 = vst [vmem:[%s205 + $0x470] sm:$0xff] %v490
                %v492 = vld [vmem:[%s204 + $0x8e8] sm:$0xff]
                %493 = vst [vmem:[%s205 + $0x478] sm:$0xff] %v492
                %v494 = vld [vmem:[%s204 + $0x900] sm:$0xff]
                %495 = vst [vmem:[%s205 + $0x480] sm:$0xff] %v494
                %v496 = vld [vmem:[%s204 + $0x908] sm:$0xff]
                %497 = vst [vmem:[%s205 + $0x488] sm:$0xff] %v496
                %v498 = vld [vmem:[%s204 + $0x920] sm:$0xff]
                %499 = vst [vmem:[%s205 + $0x490] sm:$0xff] %v498
                %v500 = vld [vmem:[%s204 + $0x928] sm:$0xff]
                %501 = vst [vmem:[%s205 + $0x498] sm:$0xff] %v500
                %v502 = vld [vmem:[%s204 + $0x940] sm:$0xff]
                %503 = vst [vmem:[%s205 + $0x4a0] sm:$0xff] %v502
                %v504 = vld [vmem:[%s204 + $0x948] sm:$0xff]
                %505 = vst [vmem:[%s205 + $0x4a8] sm:$0xff] %v504
                %v506 = vld [vmem:[%s204 + $0x960] sm:$0xff]
                %507 = vst [vmem:[%s205 + $0x4b0] sm:$0xff] %v506
                %v508 = vld [vmem:[%s204 + $0x968] sm:$0xff]
                %509 = vst [vmem:[%s205 + $0x4b8] sm:$0xff] %v508
                %v510 = vld [vmem:[%s204 + $0x980] sm:$0xff]
                %511 = vst [vmem:[%s205 + $0x4c0] sm:$0xff] %v510
                %v512 = vld [vmem:[%s204 + $0x988] sm:$0xff]
                %513 = vst [vmem:[%s205 + $0x4c8] sm:$0xff] %v512
                %v514 = vld [vmem:[%s204 + $0x9a0] sm:$0xff]
                %515 = vst [vmem:[%s205 + $0x4d0] sm:$0xff] %v514
                %v516 = vld [vmem:[%s204 + $0x9a8] sm:$0xff]
                %517 = vst [vmem:[%s205 + $0x4d8] sm:$0xff] %v516
                %v518 = vld [vmem:[%s204 + $0x9c0] sm:$0xff]
                %519 = vst [vmem:[%s205 + $0x4e0] sm:$0xff] %v518
                %v520 = vld [vmem:[%s204 + $0x9c8] sm:$0xff]
                %521 = vst [vmem:[%s205 + $0x4e8] sm:$0xff] %v520
                %v522 = vld [vmem:[%s204 + $0x9e0] sm:$0xff]
                %523 = vst [vmem:[%s205 + $0x4f0] sm:$0xff] %v522
                %v524 = vld [vmem:[%s204 + $0x9e8] sm:$0xff]
                %525 = vst [vmem:[%s205 + $0x4f8] sm:$0xff] %v524
                %v526 = vld [vmem:[%s204 + $0xa00] sm:$0xff]
                %527 = vst [vmem:[%s205 + $0x500] sm:$0xff] %v526
                %v528 = vld [vmem:[%s204 + $0xa08] sm:$0xff]
                %529 = vst [vmem:[%s205 + $0x508] sm:$0xff] %v528
                %v530 = vld [vmem:[%s204 + $0xa20] sm:$0xff]
                %531 = vst [vmem:[%s205 + $0x510] sm:$0xff] %v530
                %v532 = vld [vmem:[%s204 + $0xa28] sm:$0xff]
                %533 = vst [vmem:[%s205 + $0x518] sm:$0xff] %v532
                %v534 = vld [vmem:[%s204 + $0xa40] sm:$0xff]
                %535 = vst [vmem:[%s205 + $0x520] sm:$0xff] %v534
                %v536 = vld [vmem:[%s204 + $0xa48] sm:$0xff]
                %537 = vst [vmem:[%s205 + $0x528] sm:$0xff] %v536
                %v538 = vld [vmem:[%s204 + $0xa60] sm:$0xff]
                %539 = vst [vmem:[%s205 + $0x530] sm:$0xff] %v538
                %v540 = vld [vmem:[%s204 + $0xa68] sm:$0xff]
                %541 = vst [vmem:[%s205 + $0x538] sm:$0xff] %v540
                %v542 = vld [vmem:[%s204 + $0xa80] sm:$0xff]
                %543 = vst [vmem:[%s205 + $0x540] sm:$0xff] %v542
                %v544 = vld [vmem:[%s204 + $0xa88] sm:$0xff]
                %545 = vst [vmem:[%s205 + $0x548] sm:$0xff] %v544
                %v546 = vld [vmem:[%s204 + $0xaa0] sm:$0xff]
                %547 = vst [vmem:[%s205 + $0x550] sm:$0xff] %v546
                %v548 = vld [vmem:[%s204 + $0xaa8] sm:$0xff]
                %549 = vst [vmem:[%s205 + $0x558] sm:$0xff] %v548
                %v550 = vld [vmem:[%s204 + $0xac0] sm:$0xff]
                %551 = vst [vmem:[%s205 + $0x560] sm:$0xff] %v550
                %v552 = vld [vmem:[%s204 + $0xac8] sm:$0xff]
                %553 = vst [vmem:[%s205 + $0x568] sm:$0xff] %v552
                %v554 = vld [vmem:[%s204 + $0xae0] sm:$0xff]
                %555 = vst [vmem:[%s205 + $0x570] sm:$0xff] %v554
                %v556 = vld [vmem:[%s204 + $0xae8] sm:$0xff]
                %557 = vst [vmem:[%s205 + $0x578] sm:$0xff] %v556
                %v558 = vld [vmem:[%s204 + $0xb00] sm:$0xff]
                %559 = vst [vmem:[%s205 + $0x580] sm:$0xff] %v558
                %v560 = vld [vmem:[%s204 + $0xb08] sm:$0xff]
                %561 = vst [vmem:[%s205 + $0x588] sm:$0xff] %v560
                %v562 = vld [vmem:[%s204 + $0xb20] sm:$0xff]
                %563 = vst [vmem:[%s205 + $0x590] sm:$0xff] %v562
                %v564 = vld [vmem:[%s204 + $0xb28] sm:$0xff]
                %565 = vst [vmem:[%s205 + $0x598] sm:$0xff] %v564
                %v566 = vld [vmem:[%s204 + $0xb40] sm:$0xff]
                %567 = vst [vmem:[%s205 + $0x5a0] sm:$0xff] %v566
                %v568 = vld [vmem:[%s204 + $0xb48] sm:$0xff]
                %569 = vst [vmem:[%s205 + $0x5a8] sm:$0xff] %v568
                %v570 = vld [vmem:[%s204 + $0xb60] sm:$0xff]
                %571 = vst [vmem:[%s205 + $0x5b0] sm:$0xff] %v570
                %v572 = vld [vmem:[%s204 + $0xb68] sm:$0xff]
                %573 = vst [vmem:[%s205 + $0x5b8] sm:$0xff] %v572
                %v574 = vld [vmem:[%s204 + $0xb80] sm:$0xff]
                %575 = vst [vmem:[%s205 + $0x5c0] sm:$0xff] %v574
                %v576 = vld [vmem:[%s204 + $0xb88] sm:$0xff]
                %577 = vst [vmem:[%s205 + $0x5c8] sm:$0xff] %v576
                %v578 = vld [vmem:[%s204 + $0xba0] sm:$0xff]
                %579 = vst [vmem:[%s205 + $0x5d0] sm:$0xff] %v578
                %v580 = vld [vmem:[%s204 + $0xba8] sm:$0xff]
                %581 = vst [vmem:[%s205 + $0x5d8] sm:$0xff] %v580
                %v582 = vld [vmem:[%s204 + $0xbc0] sm:$0xff]
                %583 = vst [vmem:[%s205 + $0x5e0] sm:$0xff] %v582
                %v584 = vld [vmem:[%s204 + $0xbc8] sm:$0xff]
                %585 = vst [vmem:[%s205 + $0x5e8] sm:$0xff] %v584
                %v586 = vld [vmem:[%s204 + $0xbe0] sm:$0xff]
                %587 = vst [vmem:[%s205 + $0x5f0] sm:$0xff] %v586
                %v588 = vld [vmem:[%s204 + $0xbe8] sm:$0xff]
                %589 = vst [vmem:[%s205 + $0x5f8] sm:$0xff] %v588
                %v590 = vld [vmem:[%s204 + $0xc00] sm:$0xff]
                %591 = vst [vmem:[%s205 + $0x600] sm:$0xff] %v590
                %v592 = vld [vmem:[%s204 + $0xc08] sm:$0xff]
                %593 = vst [vmem:[%s205 + $0x608] sm:$0xff] %v592
                %v594 = vld [vmem:[%s204 + $0xc20] sm:$0xff]
                %595 = vst [vmem:[%s205 + $0x610] sm:$0xff] %v594
                %v596 = vld [vmem:[%s204 + $0xc28] sm:$0xff]
                %597 = vst [vmem:[%s205 + $0x618] sm:$0xff] %v596
                %v598 = vld [vmem:[%s204 + $0xc40] sm:$0xff]
                %599 = vst [vmem:[%s205 + $0x620] sm:$0xff] %v598
                %v600 = vld [vmem:[%s204 + $0xc48] sm:$0xff]
                %601 = vst [vmem:[%s205 + $0x628] sm:$0xff] %v600
                %v602 = vld [vmem:[%s204 + $0xc60] sm:$0xff]
                %603 = vst [vmem:[%s205 + $0x630] sm:$0xff] %v602
                %v604 = vld [vmem:[%s204 + $0xc68] sm:$0xff]
                %605 = vst [vmem:[%s205 + $0x638] sm:$0xff] %v604
                %v606 = vld [vmem:[%s204 + $0xc80] sm:$0xff]
                %607 = vst [vmem:[%s205 + $0x640] sm:$0xff] %v606
                %v608 = vld [vmem:[%s204 + $0xc88] sm:$0xff]
                %609 = vst [vmem:[%s205 + $0x648] sm:$0xff] %v608
                %v610 = vld [vmem:[%s204 + $0xca0] sm:$0xff]
                %611 = vst [vmem:[%s205 + $0x650] sm:$0xff] %v610
                %v612 = vld [vmem:[%s204 + $0xca8] sm:$0xff]
                %613 = vst [vmem:[%s205 + $0x658] sm:$0xff] %v612
                %v614 = vld [vmem:[%s204 + $0xcc0] sm:$0xff]
                %615 = vst [vmem:[%s205 + $0x660] sm:$0xff] %v614
                %v616 = vld [vmem:[%s204 + $0xcc8] sm:$0xff]
                %617 = vst [vmem:[%s205 + $0x668] sm:$0xff] %v616
                %v618 = vld [vmem:[%s204 + $0xce0] sm:$0xff]
                %619 = vst [vmem:[%s205 + $0x670] sm:$0xff] %v618
                %v620 = vld [vmem:[%s204 + $0xce8] sm:$0xff]
                %621 = vst [vmem:[%s205 + $0x678] sm:$0xff] %v620
                %v622 = vld [vmem:[%s204 + $0xd00] sm:$0xff]
                %623 = vst [vmem:[%s205 + $0x680] sm:$0xff] %v622
                %v624 = vld [vmem:[%s204 + $0xd08] sm:$0xff]
                %625 = vst [vmem:[%s205 + $0x688] sm:$0xff] %v624
                %v626 = vld [vmem:[%s204 + $0xd20] sm:$0xff]
                %627 = vst [vmem:[%s205 + $0x690] sm:$0xff] %v626
                %v628 = vld [vmem:[%s204 + $0xd28] sm:$0xff]
                %629 = vst [vmem:[%s205 + $0x698] sm:$0xff] %v628
                %v630 = vld [vmem:[%s204 + $0xd40] sm:$0xff]
                %631 = vst [vmem:[%s205 + $0x6a0] sm:$0xff] %v630
                %v632 = vld [vmem:[%s204 + $0xd48] sm:$0xff]
                %633 = vst [vmem:[%s205 + $0x6a8] sm:$0xff] %v632
                %v634 = vld [vmem:[%s204 + $0xd60] sm:$0xff]
                %635 = vst [vmem:[%s205 + $0x6b0] sm:$0xff] %v634
                %v636 = vld [vmem:[%s204 + $0xd68] sm:$0xff]
                %637 = vst [vmem:[%s205 + $0x6b8] sm:$0xff] %v636
                %v638 = vld [vmem:[%s204 + $0xd80] sm:$0xff]
                %639 = vst [vmem:[%s205 + $0x6c0] sm:$0xff] %v638
                %v640 = vld [vmem:[%s204 + $0xd88] sm:$0xff]
                %641 = vst [vmem:[%s205 + $0x6c8] sm:$0xff] %v640
                %v642 = vld [vmem:[%s204 + $0xda0] sm:$0xff]
                %643 = vst [vmem:[%s205 + $0x6d0] sm:$0xff] %v642
                %v644 = vld [vmem:[%s204 + $0xda8] sm:$0xff]
                %645 = vst [vmem:[%s205 + $0x6d8] sm:$0xff] %v644
                %v646 = vld [vmem:[%s204 + $0xdc0] sm:$0xff]
                %647 = vst [vmem:[%s205 + $0x6e0] sm:$0xff] %v646
                %v648 = vld [vmem:[%s204 + $0xdc8] sm:$0xff]
                %649 = vst [vmem:[%s205 + $0x6e8] sm:$0xff] %v648
                %v650 = vld [vmem:[%s204 + $0xde0] sm:$0xff]
                %651 = vst [vmem:[%s205 + $0x6f0] sm:$0xff] %v650
                %v652 = vld [vmem:[%s204 + $0xde8] sm:$0xff]
                %653 = vst [vmem:[%s205 + $0x6f8] sm:$0xff] %v652
                %v654 = vld [vmem:[%s204 + $0xe00] sm:$0xff]
                %655 = vst [vmem:[%s205 + $0x700] sm:$0xff] %v654
                %v656 = vld [vmem:[%s204 + $0xe08] sm:$0xff]
                %657 = vst [vmem:[%s205 + $0x708] sm:$0xff] %v656
                %v658 = vld [vmem:[%s204 + $0xe20] sm:$0xff]
                %659 = vst [vmem:[%s205 + $0x710] sm:$0xff] %v658
                %v660 = vld [vmem:[%s204 + $0xe28] sm:$0xff]
                %661 = vst [vmem:[%s205 + $0x718] sm:$0xff] %v660
                %v662 = vld [vmem:[%s204 + $0xe40] sm:$0xff]
                %663 = vst [vmem:[%s205 + $0x720] sm:$0xff] %v662
                %v664 = vld [vmem:[%s204 + $0xe48] sm:$0xff]
                %665 = vst [vmem:[%s205 + $0x728] sm:$0xff] %v664
                %v666 = vld [vmem:[%s204 + $0xe60] sm:$0xff]
                %667 = vst [vmem:[%s205 + $0x730] sm:$0xff] %v666
                %v668 = vld [vmem:[%s204 + $0xe68] sm:$0xff]
                %669 = vst [vmem:[%s205 + $0x738] sm:$0xff] %v668
                %v670 = vld [vmem:[%s204 + $0xe80] sm:$0xff]
                %671 = vst [vmem:[%s205 + $0x740] sm:$0xff] %v670
                %v672 = vld [vmem:[%s204 + $0xe88] sm:$0xff]
                %673 = vst [vmem:[%s205 + $0x748] sm:$0xff] %v672
                %v674 = vld [vmem:[%s204 + $0xea0] sm:$0xff]
                %675 = vst [vmem:[%s205 + $0x750] sm:$0xff] %v674
                %v676 = vld [vmem:[%s204 + $0xea8] sm:$0xff]
                %677 = vst [vmem:[%s205 + $0x758] sm:$0xff] %v676
                %v678 = vld [vmem:[%s204 + $0xec0] sm:$0xff]
                %679 = vst [vmem:[%s205 + $0x760] sm:$0xff] %v678
                %v680 = vld [vmem:[%s204 + $0xec8] sm:$0xff]
                %681 = vst [vmem:[%s205 + $0x768] sm:$0xff] %v680
                %v682 = vld [vmem:[%s204 + $0xee0] sm:$0xff]
                %683 = vst [vmem:[%s205 + $0x770] sm:$0xff] %v682
                %v684 = vld [vmem:[%s204 + $0xee8] sm:$0xff]
                %685 = vst [vmem:[%s205 + $0x778] sm:$0xff] %v684
                %v686 = vld [vmem:[%s204 + $0xf00] sm:$0xff]
                %687 = vst [vmem:[%s205 + $0x780] sm:$0xff] %v686
                %v688 = vld [vmem:[%s204 + $0xf08] sm:$0xff]
                %689 = vst [vmem:[%s205 + $0x788] sm:$0xff] %v688
                %v690 = vld [vmem:[%s204 + $0xf20] sm:$0xff]
                %691 = vst [vmem:[%s205 + $0x790] sm:$0xff] %v690
                %v692 = vld [vmem:[%s204 + $0xf28] sm:$0xff]
                %693 = vst [vmem:[%s205 + $0x798] sm:$0xff] %v692
                %v694 = vld [vmem:[%s204 + $0xf40] sm:$0xff]
                %695 = vst [vmem:[%s205 + $0x7a0] sm:$0xff] %v694
                %v696 = vld [vmem:[%s204 + $0xf48] sm:$0xff]
                %697 = vst [vmem:[%s205 + $0x7a8] sm:$0xff] %v696
                %v698 = vld [vmem:[%s204 + $0xf60] sm:$0xff]
                %699 = vst [vmem:[%s205 + $0x7b0] sm:$0xff] %v698
                %v700 = vld [vmem:[%s204 + $0xf68] sm:$0xff]
                %701 = vst [vmem:[%s205 + $0x7b8] sm:$0xff] %v700
                %v702 = vld [vmem:[%s204 + $0xf80] sm:$0xff]
                %703 = vst [vmem:[%s205 + $0x7c0] sm:$0xff] %v702
                %v704 = vld [vmem:[%s204 + $0xf88] sm:$0xff]
                %705 = vst [vmem:[%s205 + $0x7c8] sm:$0xff] %v704
                %v706 = vld [vmem:[%s204 + $0xfa0] sm:$0xff]
                %707 = vst [vmem:[%s205 + $0x7d0] sm:$0xff] %v706
                %v708 = vld [vmem:[%s204 + $0xfa8] sm:$0xff]
                %709 = vst [vmem:[%s205 + $0x7d8] sm:$0xff] %v708
                %v710 = vld [vmem:[%s204 + $0xfc0] sm:$0xff]
                %711 = vst [vmem:[%s205 + $0x7e0] sm:$0xff] %v710
                %v712 = vld [vmem:[%s204 + $0xfc8] sm:$0xff]
                %713 = vst [vmem:[%s205 + $0x7e8] sm:$0xff] %v712
                %v714 = vld [vmem:[%s204 + $0xfe0] sm:$0xff]
                %715 = vst [vmem:[%s205 + $0x7f0] sm:$0xff] %v714
                %v716 = vld [vmem:[%s204 + $0xfe8] sm:$0xff]
                %717 = vst [vmem:[%s205 + $0x7f8] sm:$0xff] %v716
                %v718 = vld [vmem:[%s204 + $0x1000] sm:$0xff]
                %719 = vst [vmem:[%s205 + $0x800] sm:$0xff] %v718
                %v720 = vld [vmem:[%s204 + $0x1008] sm:$0xff]
                %721 = vst [vmem:[%s205 + $0x808] sm:$0xff] %v720
                %v722 = vld [vmem:[%s204 + $0x1020] sm:$0xff]
                %723 = vst [vmem:[%s205 + $0x810] sm:$0xff] %v722
                %v724 = vld [vmem:[%s204 + $0x1028] sm:$0xff]
                %725 = vst [vmem:[%s205 + $0x818] sm:$0xff] %v724
                %v726 = vld [vmem:[%s204 + $0x1040] sm:$0xff]
                %727 = vst [vmem:[%s205 + $0x820] sm:$0xff] %v726
                %v728 = vld [vmem:[%s204 + $0x1048] sm:$0xff]
                %729 = vst [vmem:[%s205 + $0x828] sm:$0xff] %v728
                %v730 = vld [vmem:[%s204 + $0x1060] sm:$0xff]
                %731 = vst [vmem:[%s205 + $0x830] sm:$0xff] %v730
                %v732 = vld [vmem:[%s204 + $0x1068] sm:$0xff]
                %733 = vst [vmem:[%s205 + $0x838] sm:$0xff] %v732
                %v734 = vld [vmem:[%s204 + $0x1080] sm:$0xff]
                %735 = vst [vmem:[%s205 + $0x840] sm:$0xff] %v734
                %v736 = vld [vmem:[%s204 + $0x1088] sm:$0xff]
                %737 = vst [vmem:[%s205 + $0x848] sm:$0xff] %v736
                %v738 = vld [vmem:[%s204 + $0x10a0] sm:$0xff]
                %739 = vst [vmem:[%s205 + $0x850] sm:$0xff] %v738
                %v740 = vld [vmem:[%s204 + $0x10a8] sm:$0xff]
                %741 = vst [vmem:[%s205 + $0x858] sm:$0xff] %v740
                %v742 = vld [vmem:[%s204 + $0x10c0] sm:$0xff]
                %743 = vst [vmem:[%s205 + $0x860] sm:$0xff] %v742
                %v744 = vld [vmem:[%s204 + $0x10c8] sm:$0xff]
                %745 = vst [vmem:[%s205 + $0x868] sm:$0xff] %v744
                %v746 = vld [vmem:[%s204 + $0x10e0] sm:$0xff]
                %747 = vst [vmem:[%s205 + $0x870] sm:$0xff] %v746
                %v748 = vld [vmem:[%s204 + $0x10e8] sm:$0xff]
                %749 = vst [vmem:[%s205 + $0x878] sm:$0xff] %v748
                %v750 = vld [vmem:[%s204 + $0x1100] sm:$0xff]
                %751 = vst [vmem:[%s205 + $0x880] sm:$0xff] %v750
                %v752 = vld [vmem:[%s204 + $0x1108] sm:$0xff]
                %753 = vst [vmem:[%s205 + $0x888] sm:$0xff] %v752
                %v754 = vld [vmem:[%s204 + $0x1120] sm:$0xff]
                %755 = vst [vmem:[%s205 + $0x890] sm:$0xff] %v754
                %v756 = vld [vmem:[%s204 + $0x1128] sm:$0xff]
                %757 = vst [vmem:[%s205 + $0x898] sm:$0xff] %v756
                %v758 = vld [vmem:[%s204 + $0x1140] sm:$0xff]
                %759 = vst [vmem:[%s205 + $0x8a0] sm:$0xff] %v758
                %v760 = vld [vmem:[%s204 + $0x1148] sm:$0xff]
                %761 = vst [vmem:[%s205 + $0x8a8] sm:$0xff] %v760
                %v762 = vld [vmem:[%s204 + $0x1160] sm:$0xff]
                %763 = vst [vmem:[%s205 + $0x8b0] sm:$0xff] %v762
                %v764 = vld [vmem:[%s204 + $0x1168] sm:$0xff]
                %765 = vst [vmem:[%s205 + $0x8b8] sm:$0xff] %v764
                %v766 = vld [vmem:[%s204 + $0x1180] sm:$0xff]
                %767 = vst [vmem:[%s205 + $0x8c0] sm:$0xff] %v766
                %v768 = vld [vmem:[%s204 + $0x1188] sm:$0xff]
                %769 = vst [vmem:[%s205 + $0x8c8] sm:$0xff] %v768
                %v770 = vld [vmem:[%s204 + $0x11a0] sm:$0xff]
                %771 = vst [vmem:[%s205 + $0x8d0] sm:$0xff] %v770
                %v772 = vld [vmem:[%s204 + $0x11a8] sm:$0xff]
                %773 = vst [vmem:[%s205 + $0x8d8] sm:$0xff] %v772
                %v774 = vld [vmem:[%s204 + $0x11c0] sm:$0xff]
                %775 = vst [vmem:[%s205 + $0x8e0] sm:$0xff] %v774
                %v776 = vld [vmem:[%s204 + $0x11c8] sm:$0xff]
                %777 = vst [vmem:[%s205 + $0x8e8] sm:$0xff] %v776
                %v778 = vld [vmem:[%s204 + $0x11e0] sm:$0xff]
                %779 = vst [vmem:[%s205 + $0x8f0] sm:$0xff] %v778
                %v780 = vld [vmem:[%s204 + $0x11e8] sm:$0xff]
                %781 = vst [vmem:[%s205 + $0x8f8] sm:$0xff] %v780
                %v782 = vld [vmem:[%s204 + $0x1200] sm:$0xff]
                %783 = vst [vmem:[%s205 + $0x900] sm:$0xff] %v782
                %v784 = vld [vmem:[%s204 + $0x1208] sm:$0xff]
                %785 = vst [vmem:[%s205 + $0x908] sm:$0xff] %v784
                %v786 = vld [vmem:[%s204 + $0x1220] sm:$0xff]
                %787 = vst [vmem:[%s205 + $0x910] sm:$0xff] %v786
                %v788 = vld [vmem:[%s204 + $0x1228] sm:$0xff]
                %789 = vst [vmem:[%s205 + $0x918] sm:$0xff] %v788
                %v790 = vld [vmem:[%s204 + $0x1240] sm:$0xff]
                %791 = vst [vmem:[%s205 + $0x920] sm:$0xff] %v790
                %v792 = vld [vmem:[%s204 + $0x1248] sm:$0xff]
                %793 = vst [vmem:[%s205 + $0x928] sm:$0xff] %v792
                %v794 = vld [vmem:[%s204 + $0x1260] sm:$0xff]
                %795 = vst [vmem:[%s205 + $0x930] sm:$0xff] %v794
                %v796 = vld [vmem:[%s204 + $0x1268] sm:$0xff]
                %797 = vst [vmem:[%s205 + $0x938] sm:$0xff] %v796
                %v798 = vld [vmem:[%s204 + $0x1280] sm:$0xff]
                %799 = vst [vmem:[%s205 + $0x940] sm:$0xff] %v798
                %v800 = vld [vmem:[%s204 + $0x1288] sm:$0xff]
                %801 = vst [vmem:[%s205 + $0x948] sm:$0xff] %v800
                %v802 = vld [vmem:[%s204 + $0x12a0] sm:$0xff]
                %803 = vst [vmem:[%s205 + $0x950] sm:$0xff] %v802
                %v804 = vld [vmem:[%s204 + $0x12a8] sm:$0xff]
                %805 = vst [vmem:[%s205 + $0x958] sm:$0xff] %v804
                %v806 = vld [vmem:[%s204 + $0x12c0] sm:$0xff]
                %807 = vst [vmem:[%s205 + $0x960] sm:$0xff] %v806
                %v808 = vld [vmem:[%s204 + $0x12c8] sm:$0xff]
                %809 = vst [vmem:[%s205 + $0x968] sm:$0xff] %v808
                %v810 = vld [vmem:[%s204 + $0x12e0] sm:$0xff]
                %811 = vst [vmem:[%s205 + $0x970] sm:$0xff] %v810
                %v812 = vld [vmem:[%s204 + $0x12e8] sm:$0xff]
                %813 = vst [vmem:[%s205 + $0x978] sm:$0xff] %v812
                %v814 = vld [vmem:[%s204 + $0x1300] sm:$0xff]
                %815 = vst [vmem:[%s205 + $0x980] sm:$0xff] %v814
                %v816 = vld [vmem:[%s204 + $0x1308] sm:$0xff]
                %817 = vst [vmem:[%s205 + $0x988] sm:$0xff] %v816
                %v818 = vld [vmem:[%s204 + $0x1320] sm:$0xff]
                %819 = vst [vmem:[%s205 + $0x990] sm:$0xff] %v818
                %v820 = vld [vmem:[%s204 + $0x1328] sm:$0xff]
                %821 = vst [vmem:[%s205 + $0x998] sm:$0xff] %v820
                %v822 = vld [vmem:[%s204 + $0x1340] sm:$0xff]
                %823 = vst [vmem:[%s205 + $0x9a0] sm:$0xff] %v822
                %v824 = vld [vmem:[%s204 + $0x1348] sm:$0xff]
                %825 = vst [vmem:[%s205 + $0x9a8] sm:$0xff] %v824
                %v826 = vld [vmem:[%s204 + $0x1360] sm:$0xff]
                %827 = vst [vmem:[%s205 + $0x9b0] sm:$0xff] %v826
                %v828 = vld [vmem:[%s204 + $0x1368] sm:$0xff]
                %829 = vst [vmem:[%s205 + $0x9b8] sm:$0xff] %v828
                %v830 = vld [vmem:[%s204 + $0x1380] sm:$0xff]
                %831 = vst [vmem:[%s205 + $0x9c0] sm:$0xff] %v830
                %v832 = vld [vmem:[%s204 + $0x1388] sm:$0xff]
                %833 = vst [vmem:[%s205 + $0x9c8] sm:$0xff] %v832
                %v834 = vld [vmem:[%s204 + $0x13a0] sm:$0xff]
                %835 = vst [vmem:[%s205 + $0x9d0] sm:$0xff] %v834
                %v836 = vld [vmem:[%s204 + $0x13a8] sm:$0xff]
                %837 = vst [vmem:[%s205 + $0x9d8] sm:$0xff] %v836
                %v838 = vld [vmem:[%s204 + $0x13c0] sm:$0xff]
                %839 = vst [vmem:[%s205 + $0x9e0] sm:$0xff] %v838
                %v840 = vld [vmem:[%s204 + $0x13c8] sm:$0xff]
                %841 = vst [vmem:[%s205 + $0x9e8] sm:$0xff] %v840
                %v842 = vld [vmem:[%s204 + $0x13e0] sm:$0xff]
                %843 = vst [vmem:[%s205 + $0x9f0] sm:$0xff] %v842
                %v844 = vld [vmem:[%s204 + $0x13e8] sm:$0xff]
                %845 = vst [vmem:[%s205 + $0x9f8] sm:$0xff] %v844
                %v846 = vld [vmem:[%s204 + $0x1400] sm:$0xff]
                %847 = vst [vmem:[%s205 + $0xa00] sm:$0xff] %v846
                %v848 = vld [vmem:[%s204 + $0x1408] sm:$0xff]
                %849 = vst [vmem:[%s205 + $0xa08] sm:$0xff] %v848
                %v850 = vld [vmem:[%s204 + $0x1420] sm:$0xff]
                %851 = vst [vmem:[%s205 + $0xa10] sm:$0xff] %v850
                %v852 = vld [vmem:[%s204 + $0x1428] sm:$0xff]
                %853 = vst [vmem:[%s205 + $0xa18] sm:$0xff] %v852
                %v854 = vld [vmem:[%s204 + $0x1440] sm:$0xff]
                %855 = vst [vmem:[%s205 + $0xa20] sm:$0xff] %v854
                %v856 = vld [vmem:[%s204 + $0x1448] sm:$0xff]
                %857 = vst [vmem:[%s205 + $0xa28] sm:$0xff] %v856
                %v858 = vld [vmem:[%s204 + $0x1460] sm:$0xff]
                %859 = vst [vmem:[%s205 + $0xa30] sm:$0xff] %v858
                %v860 = vld [vmem:[%s204 + $0x1468] sm:$0xff]
                %861 = vst [vmem:[%s205 + $0xa38] sm:$0xff] %v860
                %v862 = vld [vmem:[%s204 + $0x1480] sm:$0xff]
                %863 = vst [vmem:[%s205 + $0xa40] sm:$0xff] %v862
                %v864 = vld [vmem:[%s204 + $0x1488] sm:$0xff]
                %865 = vst [vmem:[%s205 + $0xa48] sm:$0xff] %v864
                %v866 = vld [vmem:[%s204 + $0x14a0] sm:$0xff]
                %867 = vst [vmem:[%s205 + $0xa50] sm:$0xff] %v866
                %v868 = vld [vmem:[%s204 + $0x14a8] sm:$0xff]
                %869 = vst [vmem:[%s205 + $0xa58] sm:$0xff] %v868
                %v870 = vld [vmem:[%s204 + $0x14c0] sm:$0xff]
                %871 = vst [vmem:[%s205 + $0xa60] sm:$0xff] %v870
                %v872 = vld [vmem:[%s204 + $0x14c8] sm:$0xff]
                %873 = vst [vmem:[%s205 + $0xa68] sm:$0xff] %v872
                %v874 = vld [vmem:[%s204 + $0x14e0] sm:$0xff]
                %875 = vst [vmem:[%s205 + $0xa70] sm:$0xff] %v874
                %v876 = vld [vmem:[%s204 + $0x14e8] sm:$0xff]
                %877 = vst [vmem:[%s205 + $0xa78] sm:$0xff] %v876
                %v878 = vld [vmem:[%s204 + $0x1500] sm:$0xff]
                %879 = vst [vmem:[%s205 + $0xa80] sm:$0xff] %v878
                %v880 = vld [vmem:[%s204 + $0x1508] sm:$0xff]
                %881 = vst [vmem:[%s205 + $0xa88] sm:$0xff] %v880
                %v882 = vld [vmem:[%s204 + $0x1520] sm:$0xff]
                %883 = vst [vmem:[%s205 + $0xa90] sm:$0xff] %v882
                %v884 = vld [vmem:[%s204 + $0x1528] sm:$0xff]
                %885 = vst [vmem:[%s205 + $0xa98] sm:$0xff] %v884
                %v886 = vld [vmem:[%s204 + $0x1540] sm:$0xff]
                %887 = vst [vmem:[%s205 + $0xaa0] sm:$0xff] %v886
                %v888 = vld [vmem:[%s204 + $0x1548] sm:$0xff]
                %889 = vst [vmem:[%s205 + $0xaa8] sm:$0xff] %v888
                %v890 = vld [vmem:[%s204 + $0x1560] sm:$0xff]
                %891 = vst [vmem:[%s205 + $0xab0] sm:$0xff] %v890
                %v892 = vld [vmem:[%s204 + $0x1568] sm:$0xff]
                %893 = vst [vmem:[%s205 + $0xab8] sm:$0xff] %v892
                %v894 = vld [vmem:[%s204 + $0x1580] sm:$0xff]
                %895 = vst [vmem:[%s205 + $0xac0] sm:$0xff] %v894
                %v896 = vld [vmem:[%s204 + $0x1588] sm:$0xff]
                %897 = vst [vmem:[%s205 + $0xac8] sm:$0xff] %v896
                %v898 = vld [vmem:[%s204 + $0x15a0] sm:$0xff]
                %899 = vst [vmem:[%s205 + $0xad0] sm:$0xff] %v898
                %v900 = vld [vmem:[%s204 + $0x15a8] sm:$0xff]
                %901 = vst [vmem:[%s205 + $0xad8] sm:$0xff] %v900
                %v902 = vld [vmem:[%s204 + $0x15c0] sm:$0xff]
                %903 = vst [vmem:[%s205 + $0xae0] sm:$0xff] %v902
                %v904 = vld [vmem:[%s204 + $0x15c8] sm:$0xff]
                %905 = vst [vmem:[%s205 + $0xae8] sm:$0xff] %v904
                %v906 = vld [vmem:[%s204 + $0x15e0] sm:$0xff]
                %907 = vst [vmem:[%s205 + $0xaf0] sm:$0xff] %v906
                %v908 = vld [vmem:[%s204 + $0x15e8] sm:$0xff]
                %909 = vst [vmem:[%s205 + $0xaf8] sm:$0xff] %v908
                %v910 = vld [vmem:[%s204 + $0x1600] sm:$0xff]
                %911 = vst [vmem:[%s205 + $0xb00] sm:$0xff] %v910
                %v912 = vld [vmem:[%s204 + $0x1608] sm:$0xff]
                %913 = vst [vmem:[%s205 + $0xb08] sm:$0xff] %v912
                %v914 = vld [vmem:[%s204 + $0x1620] sm:$0xff]
                %915 = vst [vmem:[%s205 + $0xb10] sm:$0xff] %v914
                %v916 = vld [vmem:[%s204 + $0x1628] sm:$0xff]
                %917 = vst [vmem:[%s205 + $0xb18] sm:$0xff] %v916
                %v918 = vld [vmem:[%s204 + $0x1640] sm:$0xff]
                %919 = vst [vmem:[%s205 + $0xb20] sm:$0xff] %v918
                %v920 = vld [vmem:[%s204 + $0x1648] sm:$0xff]
                %921 = vst [vmem:[%s205 + $0xb28] sm:$0xff] %v920
                %v922 = vld [vmem:[%s204 + $0x1660] sm:$0xff]
                %923 = vst [vmem:[%s205 + $0xb30] sm:$0xff] %v922
                %v924 = vld [vmem:[%s204 + $0x1668] sm:$0xff]
                %925 = vst [vmem:[%s205 + $0xb38] sm:$0xff] %v924
                %v926 = vld [vmem:[%s204 + $0x1680] sm:$0xff]
                %927 = vst [vmem:[%s205 + $0xb40] sm:$0xff] %v926
                %v928 = vld [vmem:[%s204 + $0x1688] sm:$0xff]
                %929 = vst [vmem:[%s205 + $0xb48] sm:$0xff] %v928
                %v930 = vld [vmem:[%s204 + $0x16a0] sm:$0xff]
                %931 = vst [vmem:[%s205 + $0xb50] sm:$0xff] %v930
                %v932 = vld [vmem:[%s204 + $0x16a8] sm:$0xff]
                %933 = vst [vmem:[%s205 + $0xb58] sm:$0xff] %v932
                %v934 = vld [vmem:[%s204 + $0x16c0] sm:$0xff]
                %935 = vst [vmem:[%s205 + $0xb60] sm:$0xff] %v934
                %v936 = vld [vmem:[%s204 + $0x16c8] sm:$0xff]
                %937 = vst [vmem:[%s205 + $0xb68] sm:$0xff] %v936
                %v938 = vld [vmem:[%s204 + $0x16e0] sm:$0xff]
                %939 = vst [vmem:[%s205 + $0xb70] sm:$0xff] %v938
                %v940 = vld [vmem:[%s204 + $0x16e8] sm:$0xff]
                %941 = vst [vmem:[%s205 + $0xb78] sm:$0xff] %v940
                %v942 = vld [vmem:[%s204 + $0x1700] sm:$0xff]
                %943 = vst [vmem:[%s205 + $0xb80] sm:$0xff] %v942
                %v944 = vld [vmem:[%s204 + $0x1708] sm:$0xff]
                %945 = vst [vmem:[%s205 + $0xb88] sm:$0xff] %v944
                %v946 = vld [vmem:[%s204 + $0x1720] sm:$0xff]
                %947 = vst [vmem:[%s205 + $0xb90] sm:$0xff] %v946
                %v948 = vld [vmem:[%s204 + $0x1728] sm:$0xff]
                %949 = vst [vmem:[%s205 + $0xb98] sm:$0xff] %v948
                %v950 = vld [vmem:[%s204 + $0x1740] sm:$0xff]
                %951 = vst [vmem:[%s205 + $0xba0] sm:$0xff] %v950
                %v952 = vld [vmem:[%s204 + $0x1748] sm:$0xff]
                %953 = vst [vmem:[%s205 + $0xba8] sm:$0xff] %v952
                %v954 = vld [vmem:[%s204 + $0x1760] sm:$0xff]
                %955 = vst [vmem:[%s205 + $0xbb0] sm:$0xff] %v954
                %v956 = vld [vmem:[%s204 + $0x1768] sm:$0xff]
                %957 = vst [vmem:[%s205 + $0xbb8] sm:$0xff] %v956
                %v958 = vld [vmem:[%s204 + $0x1780] sm:$0xff]
                %959 = vst [vmem:[%s205 + $0xbc0] sm:$0xff] %v958
                %v960 = vld [vmem:[%s204 + $0x1788] sm:$0xff]
                %961 = vst [vmem:[%s205 + $0xbc8] sm:$0xff] %v960
                %v962 = vld [vmem:[%s204 + $0x17a0] sm:$0xff]
                %963 = vst [vmem:[%s205 + $0xbd0] sm:$0xff] %v962
                %v964 = vld [vmem:[%s204 + $0x17a8] sm:$0xff]
                %965 = vst [vmem:[%s205 + $0xbd8] sm:$0xff] %v964
                %v966 = vld [vmem:[%s204 + $0x17c0] sm:$0xff]
                %967 = vst [vmem:[%s205 + $0xbe0] sm:$0xff] %v966
                %v968 = vld [vmem:[%s204 + $0x17c8] sm:$0xff]
                %969 = vst [vmem:[%s205 + $0xbe8] sm:$0xff] %v968
                %v970 = vld [vmem:[%s204 + $0x17e0] sm:$0xff]
                %971 = vst [vmem:[%s205 + $0xbf0] sm:$0xff] %v970
                %v972 = vld [vmem:[%s204 + $0x17e8] sm:$0xff]
                %973 = vst [vmem:[%s205 + $0xbf8] sm:$0xff] %v972
                %v974 = vld [vmem:[%s204 + $0x1800] sm:$0xff]
                %975 = vst [vmem:[%s205 + $0xc00] sm:$0xff] %v974
                %v976 = vld [vmem:[%s204 + $0x1808] sm:$0xff]
                %977 = vst [vmem:[%s205 + $0xc08] sm:$0xff] %v976
                %v978 = vld [vmem:[%s204 + $0x1820] sm:$0xff]
                %979 = vst [vmem:[%s205 + $0xc10] sm:$0xff] %v978
                %v980 = vld [vmem:[%s204 + $0x1828] sm:$0xff]
                %981 = vst [vmem:[%s205 + $0xc18] sm:$0xff] %v980
                %v982 = vld [vmem:[%s204 + $0x1840] sm:$0xff]
                %983 = vst [vmem:[%s205 + $0xc20] sm:$0xff] %v982
                %v984 = vld [vmem:[%s204 + $0x1848] sm:$0xff]
                %985 = vst [vmem:[%s205 + $0xc28] sm:$0xff] %v984
                %v986 = vld [vmem:[%s204 + $0x1860] sm:$0xff]
                %987 = vst [vmem:[%s205 + $0xc30] sm:$0xff] %v986
                %v988 = vld [vmem:[%s204 + $0x1868] sm:$0xff]
                %989 = vst [vmem:[%s205 + $0xc38] sm:$0xff] %v988
                %v990 = vld [vmem:[%s204 + $0x1880] sm:$0xff]
                %991 = vst [vmem:[%s205 + $0xc40] sm:$0xff] %v990
                %v992 = vld [vmem:[%s204 + $0x1888] sm:$0xff]
                %993 = vst [vmem:[%s205 + $0xc48] sm:$0xff] %v992
                %v994 = vld [vmem:[%s204 + $0x18a0] sm:$0xff]
                %995 = vst [vmem:[%s205 + $0xc50] sm:$0xff] %v994
                %v996 = vld [vmem:[%s204 + $0x18a8] sm:$0xff]
                %997 = vst [vmem:[%s205 + $0xc58] sm:$0xff] %v996
                %v998 = vld [vmem:[%s204 + $0x18c0] sm:$0xff]
                %999 = vst [vmem:[%s205 + $0xc60] sm:$0xff] %v998
                %v1000 = vld [vmem:[%s204 + $0x18c8] sm:$0xff]
                %1001 = vst [vmem:[%s205 + $0xc68] sm:$0xff] %v1000
                %v1002 = vld [vmem:[%s204 + $0x18e0] sm:$0xff]
                %1003 = vst [vmem:[%s205 + $0xc70] sm:$0xff] %v1002
                %v1004 = vld [vmem:[%s204 + $0x18e8] sm:$0xff]
                %1005 = vst [vmem:[%s205 + $0xc78] sm:$0xff] %v1004
                %v1006 = vld [vmem:[%s204 + $0x1900] sm:$0xff]
                %1007 = vst [vmem:[%s205 + $0xc80] sm:$0xff] %v1006
                %v1008 = vld [vmem:[%s204 + $0x1908] sm:$0xff]
                %1009 = vst [vmem:[%s205 + $0xc88] sm:$0xff] %v1008
                %v1010 = vld [vmem:[%s204 + $0x1920] sm:$0xff]
                %1011 = vst [vmem:[%s205 + $0xc90] sm:$0xff] %v1010
                %v1012 = vld [vmem:[%s204 + $0x1928] sm:$0xff]
                %1013 = vst [vmem:[%s205 + $0xc98] sm:$0xff] %v1012
                %v1014 = vld [vmem:[%s204 + $0x1940] sm:$0xff]
                %1015 = vst [vmem:[%s205 + $0xca0] sm:$0xff] %v1014
                %v1016 = vld [vmem:[%s204 + $0x1948] sm:$0xff]
                %1017 = vst [vmem:[%s205 + $0xca8] sm:$0xff] %v1016
                %v1018 = vld [vmem:[%s204 + $0x1960] sm:$0xff]
                %1019 = vst [vmem:[%s205 + $0xcb0] sm:$0xff] %v1018
                %v1020 = vld [vmem:[%s204 + $0x1968] sm:$0xff]
                %1021 = vst [vmem:[%s205 + $0xcb8] sm:$0xff] %v1020
                %v1022 = vld [vmem:[%s204 + $0x1980] sm:$0xff]
                %1023 = vst [vmem:[%s205 + $0xcc0] sm:$0xff] %v1022
                %v1024 = vld [vmem:[%s204 + $0x1988] sm:$0xff]
                %1025 = vst [vmem:[%s205 + $0xcc8] sm:$0xff] %v1024
                %v1026 = vld [vmem:[%s204 + $0x19a0] sm:$0xff]
                %1027 = vst [vmem:[%s205 + $0xcd0] sm:$0xff] %v1026
                %v1028 = vld [vmem:[%s204 + $0x19a8] sm:$0xff]
                %1029 = vst [vmem:[%s205 + $0xcd8] sm:$0xff] %v1028
                %v1030 = vld [vmem:[%s204 + $0x19c0] sm:$0xff]
                %1031 = vst [vmem:[%s205 + $0xce0] sm:$0xff] %v1030
                %v1032 = vld [vmem:[%s204 + $0x19c8] sm:$0xff]
                %1033 = vst [vmem:[%s205 + $0xce8] sm:$0xff] %v1032
                %v1034 = vld [vmem:[%s204 + $0x19e0] sm:$0xff]
                %1035 = vst [vmem:[%s205 + $0xcf0] sm:$0xff] %v1034
                %v1036 = vld [vmem:[%s204 + $0x19e8] sm:$0xff]
                %1037 = vst [vmem:[%s205 + $0xcf8] sm:$0xff] %v1036
                %v1038 = vld [vmem:[%s204 + $0x1a00] sm:$0xff]
                %1039 = vst [vmem:[%s205 + $0xd00] sm:$0xff] %v1038
                %v1040 = vld [vmem:[%s204 + $0x1a08] sm:$0xff]
                %1041 = vst [vmem:[%s205 + $0xd08] sm:$0xff] %v1040
                %v1042 = vld [vmem:[%s204 + $0x1a20] sm:$0xff]
                %1043 = vst [vmem:[%s205 + $0xd10] sm:$0xff] %v1042
                %v1044 = vld [vmem:[%s204 + $0x1a28] sm:$0xff]
                %1045 = vst [vmem:[%s205 + $0xd18] sm:$0xff] %v1044
                %v1046 = vld [vmem:[%s204 + $0x1a40] sm:$0xff]
                %1047 = vst [vmem:[%s205 + $0xd20] sm:$0xff] %v1046
                %v1048 = vld [vmem:[%s204 + $0x1a48] sm:$0xff]
                %1049 = vst [vmem:[%s205 + $0xd28] sm:$0xff] %v1048
                %v1050 = vld [vmem:[%s204 + $0x1a60] sm:$0xff]
                %1051 = vst [vmem:[%s205 + $0xd30] sm:$0xff] %v1050
                %v1052 = vld [vmem:[%s204 + $0x1a68] sm:$0xff]
                %1053 = vst [vmem:[%s205 + $0xd38] sm:$0xff] %v1052
                %v1054 = vld [vmem:[%s204 + $0x1a80] sm:$0xff]
                %1055 = vst [vmem:[%s205 + $0xd40] sm:$0xff] %v1054
                %v1056 = vld [vmem:[%s204 + $0x1a88] sm:$0xff]
                %1057 = vst [vmem:[%s205 + $0xd48] sm:$0xff] %v1056
                %v1058 = vld [vmem:[%s204 + $0x1aa0] sm:$0xff]
                %1059 = vst [vmem:[%s205 + $0xd50] sm:$0xff] %v1058
                %v1060 = vld [vmem:[%s204 + $0x1aa8] sm:$0xff]
                %1061 = vst [vmem:[%s205 + $0xd58] sm:$0xff] %v1060
                %v1062 = vld [vmem:[%s204 + $0x1ac0] sm:$0xff]
                %1063 = vst [vmem:[%s205 + $0xd60] sm:$0xff] %v1062
                %v1064 = vld [vmem:[%s204 + $0x1ac8] sm:$0xff]
                %1065 = vst [vmem:[%s205 + $0xd68] sm:$0xff] %v1064
                %v1066 = vld [vmem:[%s204 + $0x1ae0] sm:$0xff]
                %1067 = vst [vmem:[%s205 + $0xd70] sm:$0xff] %v1066
                %v1068 = vld [vmem:[%s204 + $0x1ae8] sm:$0xff]
                %1069 = vst [vmem:[%s205 + $0xd78] sm:$0xff] %v1068
                %v1070 = vld [vmem:[%s204 + $0x1b00] sm:$0xff]
                %1071 = vst [vmem:[%s205 + $0xd80] sm:$0xff] %v1070
                %v1072 = vld [vmem:[%s204 + $0x1b08] sm:$0xff]
                %1073 = vst [vmem:[%s205 + $0xd88] sm:$0xff] %v1072
                %v1074 = vld [vmem:[%s204 + $0x1b20] sm:$0xff]
                %1075 = vst [vmem:[%s205 + $0xd90] sm:$0xff] %v1074
                %v1076 = vld [vmem:[%s204 + $0x1b28] sm:$0xff]
                %1077 = vst [vmem:[%s205 + $0xd98] sm:$0xff] %v1076
                %v1078 = vld [vmem:[%s204 + $0x1b40] sm:$0xff]
                %1079 = vst [vmem:[%s205 + $0xda0] sm:$0xff] %v1078
                %v1080 = vld [vmem:[%s204 + $0x1b48] sm:$0xff]
                %1081 = vst [vmem:[%s205 + $0xda8] sm:$0xff] %v1080
                %v1082 = vld [vmem:[%s204 + $0x1b60] sm:$0xff]
                %1083 = vst [vmem:[%s205 + $0xdb0] sm:$0xff] %v1082
                %v1084 = vld [vmem:[%s204 + $0x1b68] sm:$0xff]
                %1085 = vst [vmem:[%s205 + $0xdb8] sm:$0xff] %v1084
                %v1086 = vld [vmem:[%s204 + $0x1b80] sm:$0xff]
                %1087 = vst [vmem:[%s205 + $0xdc0] sm:$0xff] %v1086
                %v1088 = vld [vmem:[%s204 + $0x1b88] sm:$0xff]
                %1089 = vst [vmem:[%s205 + $0xdc8] sm:$0xff] %v1088
                %v1090 = vld [vmem:[%s204 + $0x1ba0] sm:$0xff]
                %1091 = vst [vmem:[%s205 + $0xdd0] sm:$0xff] %v1090
                %v1092 = vld [vmem:[%s204 + $0x1ba8] sm:$0xff]
                %1093 = vst [vmem:[%s205 + $0xdd8] sm:$0xff] %v1092
                %v1094 = vld [vmem:[%s204 + $0x1bc0] sm:$0xff]
                %1095 = vst [vmem:[%s205 + $0xde0] sm:$0xff] %v1094
                %v1096 = vld [vmem:[%s204 + $0x1bc8] sm:$0xff]
                %1097 = vst [vmem:[%s205 + $0xde8] sm:$0xff] %v1096
                %v1098 = vld [vmem:[%s204 + $0x1be0] sm:$0xff]
                %1099 = vst [vmem:[%s205 + $0xdf0] sm:$0xff] %v1098
                %v1100 = vld [vmem:[%s204 + $0x1be8] sm:$0xff]
                %1101 = vst [vmem:[%s205 + $0xdf8] sm:$0xff] %v1100
                %v1102 = vld [vmem:[%s204 + $0x1c00] sm:$0xff]
                %1103 = vst [vmem:[%s205 + $0xe00] sm:$0xff] %v1102
                %v1104 = vld [vmem:[%s204 + $0x1c08] sm:$0xff]
                %1105 = vst [vmem:[%s205 + $0xe08] sm:$0xff] %v1104
                %v1106 = vld [vmem:[%s204 + $0x1c20] sm:$0xff]
                %1107 = vst [vmem:[%s205 + $0xe10] sm:$0xff] %v1106
                %v1108 = vld [vmem:[%s204 + $0x1c28] sm:$0xff]
                %1109 = vst [vmem:[%s205 + $0xe18] sm:$0xff] %v1108
                %v1110 = vld [vmem:[%s204 + $0x1c40] sm:$0xff]
                %1111 = vst [vmem:[%s205 + $0xe20] sm:$0xff] %v1110
                %v1112 = vld [vmem:[%s204 + $0x1c48] sm:$0xff]
                %1113 = vst [vmem:[%s205 + $0xe28] sm:$0xff] %v1112
                %v1114 = vld [vmem:[%s204 + $0x1c60] sm:$0xff]
                %1115 = vst [vmem:[%s205 + $0xe30] sm:$0xff] %v1114
                %v1116 = vld [vmem:[%s204 + $0x1c68] sm:$0xff]
                %1117 = vst [vmem:[%s205 + $0xe38] sm:$0xff] %v1116
                %v1118 = vld [vmem:[%s204 + $0x1c80] sm:$0xff]
                %1119 = vst [vmem:[%s205 + $0xe40] sm:$0xff] %v1118
                %v1120 = vld [vmem:[%s204 + $0x1c88] sm:$0xff]
                %1121 = vst [vmem:[%s205 + $0xe48] sm:$0xff] %v1120
                %v1122 = vld [vmem:[%s204 + $0x1ca0] sm:$0xff]
                %1123 = vst [vmem:[%s205 + $0xe50] sm:$0xff] %v1122
                %v1124 = vld [vmem:[%s204 + $0x1ca8] sm:$0xff]
                %1125 = vst [vmem:[%s205 + $0xe58] sm:$0xff] %v1124
                %v1126 = vld [vmem:[%s204 + $0x1cc0] sm:$0xff]
                %1127 = vst [vmem:[%s205 + $0xe60] sm:$0xff] %v1126
                %v1128 = vld [vmem:[%s204 + $0x1cc8] sm:$0xff]
                %1129 = vst [vmem:[%s205 + $0xe68] sm:$0xff] %v1128
                %v1130 = vld [vmem:[%s204 + $0x1ce0] sm:$0xff]
                %1131 = vst [vmem:[%s205 + $0xe70] sm:$0xff] %v1130
                %v1132 = vld [vmem:[%s204 + $0x1ce8] sm:$0xff]
                %1133 = vst [vmem:[%s205 + $0xe78] sm:$0xff] %v1132
                %v1134 = vld [vmem:[%s204 + $0x1d00] sm:$0xff]
                %1135 = vst [vmem:[%s205 + $0xe80] sm:$0xff] %v1134
                %v1136 = vld [vmem:[%s204 + $0x1d08] sm:$0xff]
                %1137 = vst [vmem:[%s205 + $0xe88] sm:$0xff] %v1136
                %v1138 = vld [vmem:[%s204 + $0x1d20] sm:$0xff]
                %1139 = vst [vmem:[%s205 + $0xe90] sm:$0xff] %v1138
                %v1140 = vld [vmem:[%s204 + $0x1d28] sm:$0xff]
                %1141 = vst [vmem:[%s205 + $0xe98] sm:$0xff] %v1140
                %v1142 = vld [vmem:[%s204 + $0x1d40] sm:$0xff]
                %1143 = vst [vmem:[%s205 + $0xea0] sm:$0xff] %v1142
                %v1144 = vld [vmem:[%s204 + $0x1d48] sm:$0xff]
                %1145 = vst [vmem:[%s205 + $0xea8] sm:$0xff] %v1144
                %v1146 = vld [vmem:[%s204 + $0x1d60] sm:$0xff]
                %1147 = vst [vmem:[%s205 + $0xeb0] sm:$0xff] %v1146
                %v1148 = vld [vmem:[%s204 + $0x1d68] sm:$0xff]
                %1149 = vst [vmem:[%s205 + $0xeb8] sm:$0xff] %v1148
                %v1150 = vld [vmem:[%s204 + $0x1d80] sm:$0xff]
                %1151 = vst [vmem:[%s205 + $0xec0] sm:$0xff] %v1150
                %v1152 = vld [vmem:[%s204 + $0x1d88] sm:$0xff]
                %1153 = vst [vmem:[%s205 + $0xec8] sm:$0xff] %v1152
                %v1154 = vld [vmem:[%s204 + $0x1da0] sm:$0xff]
                %1155 = vst [vmem:[%s205 + $0xed0] sm:$0xff] %v1154
                %v1156 = vld [vmem:[%s204 + $0x1da8] sm:$0xff]
                %1157 = vst [vmem:[%s205 + $0xed8] sm:$0xff] %v1156
                %v1158 = vld [vmem:[%s204 + $0x1dc0] sm:$0xff]
                %1159 = vst [vmem:[%s205 + $0xee0] sm:$0xff] %v1158
                %v1160 = vld [vmem:[%s204 + $0x1dc8] sm:$0xff]
                %1161 = vst [vmem:[%s205 + $0xee8] sm:$0xff] %v1160
                %v1162 = vld [vmem:[%s204 + $0x1de0] sm:$0xff]
                %1163 = vst [vmem:[%s205 + $0xef0] sm:$0xff] %v1162
                %v1164 = vld [vmem:[%s204 + $0x1de8] sm:$0xff]
                %1165 = vst [vmem:[%s205 + $0xef8] sm:$0xff] %v1164
                %v1166 = vld [vmem:[%s204 + $0x1e00] sm:$0xff]
                %1167 = vst [vmem:[%s205 + $0xf00] sm:$0xff] %v1166
                %v1168 = vld [vmem:[%s204 + $0x1e08] sm:$0xff]
                %1169 = vst [vmem:[%s205 + $0xf08] sm:$0xff] %v1168
                %v1170 = vld [vmem:[%s204 + $0x1e20] sm:$0xff]
                %1171 = vst [vmem:[%s205 + $0xf10] sm:$0xff] %v1170
                %v1172 = vld [vmem:[%s204 + $0x1e28] sm:$0xff]
                %1173 = vst [vmem:[%s205 + $0xf18] sm:$0xff] %v1172
                %v1174 = vld [vmem:[%s204 + $0x1e40] sm:$0xff]
                %1175 = vst [vmem:[%s205 + $0xf20] sm:$0xff] %v1174
                %v1176 = vld [vmem:[%s204 + $0x1e48] sm:$0xff]
                %1177 = vst [vmem:[%s205 + $0xf28] sm:$0xff] %v1176
                %v1178 = vld [vmem:[%s204 + $0x1e60] sm:$0xff]
                %1179 = vst [vmem:[%s205 + $0xf30] sm:$0xff] %v1178
                %v1180 = vld [vmem:[%s204 + $0x1e68] sm:$0xff]
                %1181 = vst [vmem:[%s205 + $0xf38] sm:$0xff] %v1180
                %v1182 = vld [vmem:[%s204 + $0x1e80] sm:$0xff]
                %1183 = vst [vmem:[%s205 + $0xf40] sm:$0xff] %v1182
                %v1184 = vld [vmem:[%s204 + $0x1e88] sm:$0xff]
                %1185 = vst [vmem:[%s205 + $0xf48] sm:$0xff] %v1184
                %v1186 = vld [vmem:[%s204 + $0x1ea0] sm:$0xff]
                %1187 = vst [vmem:[%s205 + $0xf50] sm:$0xff] %v1186
                %v1188 = vld [vmem:[%s204 + $0x1ea8] sm:$0xff]
                %1189 = vst [vmem:[%s205 + $0xf58] sm:$0xff] %v1188
                %v1190 = vld [vmem:[%s204 + $0x1ec0] sm:$0xff]
                %1191 = vst [vmem:[%s205 + $0xf60] sm:$0xff] %v1190
                %v1192 = vld [vmem:[%s204 + $0x1ec8] sm:$0xff]
                %1193 = vst [vmem:[%s205 + $0xf68] sm:$0xff] %v1192
                %v1194 = vld [vmem:[%s204 + $0x1ee0] sm:$0xff]
                %1195 = vst [vmem:[%s205 + $0xf70] sm:$0xff] %v1194
                %v1196 = vld [vmem:[%s204 + $0x1ee8] sm:$0xff]
                %1197 = vst [vmem:[%s205 + $0xf78] sm:$0xff] %v1196
                %v1198 = vld [vmem:[%s204 + $0x1f00] sm:$0xff]
                %1199 = vst [vmem:[%s205 + $0xf80] sm:$0xff] %v1198
                %v1200 = vld [vmem:[%s204 + $0x1f08] sm:$0xff]
                %1201 = vst [vmem:[%s205 + $0xf88] sm:$0xff] %v1200
                %v1202 = vld [vmem:[%s204 + $0x1f20] sm:$0xff]
                %1203 = vst [vmem:[%s205 + $0xf90] sm:$0xff] %v1202
                %v1204 = vld [vmem:[%s204 + $0x1f28] sm:$0xff]
                %1205 = vst [vmem:[%s205 + $0xf98] sm:$0xff] %v1204
                %v1206 = vld [vmem:[%s204 + $0x1f40] sm:$0xff]
                %1207 = vst [vmem:[%s205 + $0xfa0] sm:$0xff] %v1206
                %v1208 = vld [vmem:[%s204 + $0x1f48] sm:$0xff]
                %1209 = vst [vmem:[%s205 + $0xfa8] sm:$0xff] %v1208
                %v1210 = vld [vmem:[%s204 + $0x1f60] sm:$0xff]
                %1211 = vst [vmem:[%s205 + $0xfb0] sm:$0xff] %v1210
                %v1212 = vld [vmem:[%s204 + $0x1f68] sm:$0xff]
                %1213 = vst [vmem:[%s205 + $0xfb8] sm:$0xff] %v1212
                %v1214 = vld [vmem:[%s204 + $0x1f80] sm:$0xff]
                %1215 = vst [vmem:[%s205 + $0xfc0] sm:$0xff] %v1214
                %v1216 = vld [vmem:[%s204 + $0x1f88] sm:$0xff]
                %1217 = vst [vmem:[%s205 + $0xfc8] sm:$0xff] %v1216
                %v1218 = vld [vmem:[%s204 + $0x1fa0] sm:$0xff]
                %1219 = vst [vmem:[%s205 + $0xfd0] sm:$0xff] %v1218
                %v1220 = vld [vmem:[%s204 + $0x1fa8] sm:$0xff]
                %1221 = vst [vmem:[%s205 + $0xfd8] sm:$0xff] %v1220
                %v1222 = vld [vmem:[%s204 + $0x1fc0] sm:$0xff]
                %1223 = vst [vmem:[%s205 + $0xfe0] sm:$0xff] %v1222
                %v1224 = vld [vmem:[%s204 + $0x1fc8] sm:$0xff]
                %1225 = vst [vmem:[%s205 + $0xfe8] sm:$0xff] %v1224
                %v1226 = vld [vmem:[%s204 + $0x1fe0] sm:$0xff]
                %1227 = vst [vmem:[%s205 + $0xff0] sm:$0xff] %v1226
                %v1228 = vld [vmem:[%s204 + $0x1fe8] sm:$0xff]
                %1229 = vst [vmem:[%s205 + $0xff8] sm:$0xff] %v1228
                %v1230 = vld [vmem:[%s204 + $0x2000] sm:$0xff]
                %1231 = vst [vmem:[%s205 + $0x1000] sm:$0xff] %v1230
                %v1232 = vld [vmem:[%s204 + $0x2008] sm:$0xff]
                %1233 = vst [vmem:[%s205 + $0x1008] sm:$0xff] %v1232
                %v1234 = vld [vmem:[%s204 + $0x2020] sm:$0xff]
                %1235 = vst [vmem:[%s205 + $0x1010] sm:$0xff] %v1234
                %v1236 = vld [vmem:[%s204 + $0x2028] sm:$0xff]
                %1237 = vst [vmem:[%s205 + $0x1018] sm:$0xff] %v1236
                %v1238 = vld [vmem:[%s204 + $0x2040] sm:$0xff]
                %1239 = vst [vmem:[%s205 + $0x1020] sm:$0xff] %v1238
                %v1240 = vld [vmem:[%s204 + $0x2048] sm:$0xff]
                %1241 = vst [vmem:[%s205 + $0x1028] sm:$0xff] %v1240
                %v1242 = vld [vmem:[%s204 + $0x2060] sm:$0xff]
                %1243 = vst [vmem:[%s205 + $0x1030] sm:$0xff] %v1242
                %v1244 = vld [vmem:[%s204 + $0x2068] sm:$0xff]
                %1245 = vst [vmem:[%s205 + $0x1038] sm:$0xff] %v1244
                %v1246 = vld [vmem:[%s204 + $0x2080] sm:$0xff]
                %1247 = vst [vmem:[%s205 + $0x1040] sm:$0xff] %v1246
                %v1248 = vld [vmem:[%s204 + $0x2088] sm:$0xff]
                %1249 = vst [vmem:[%s205 + $0x1048] sm:$0xff] %v1248
                %v1250 = vld [vmem:[%s204 + $0x20a0] sm:$0xff]
                %1251 = vst [vmem:[%s205 + $0x1050] sm:$0xff] %v1250
                %v1252 = vld [vmem:[%s204 + $0x20a8] sm:$0xff]
                %1253 = vst [vmem:[%s205 + $0x1058] sm:$0xff] %v1252
                %v1254 = vld [vmem:[%s204 + $0x20c0] sm:$0xff]
                %1255 = vst [vmem:[%s205 + $0x1060] sm:$0xff] %v1254
                %v1256 = vld [vmem:[%s204 + $0x20c8] sm:$0xff]
                %1257 = vst [vmem:[%s205 + $0x1068] sm:$0xff] %v1256
                %v1258 = vld [vmem:[%s204 + $0x20e0] sm:$0xff]
                %1259 = vst [vmem:[%s205 + $0x1070] sm:$0xff] %v1258
                %v1260 = vld [vmem:[%s204 + $0x20e8] sm:$0xff]
                %1261 = vst [vmem:[%s205 + $0x1078] sm:$0xff] %v1260
                %v1262 = vld [vmem:[%s204 + $0x2100] sm:$0xff]
                %1263 = vst [vmem:[%s205 + $0x1080] sm:$0xff] %v1262
                %v1264 = vld [vmem:[%s204 + $0x2108] sm:$0xff]
                %1265 = vst [vmem:[%s205 + $0x1088] sm:$0xff] %v1264
                %v1266 = vld [vmem:[%s204 + $0x2120] sm:$0xff]
                %1267 = vst [vmem:[%s205 + $0x1090] sm:$0xff] %v1266
                %v1268 = vld [vmem:[%s204 + $0x2128] sm:$0xff]
                %1269 = vst [vmem:[%s205 + $0x1098] sm:$0xff] %v1268
                %v1270 = vld [vmem:[%s204 + $0x2140] sm:$0xff]
                %1271 = vst [vmem:[%s205 + $0x10a0] sm:$0xff] %v1270
                %v1272 = vld [vmem:[%s204 + $0x2148] sm:$0xff]
                %1273 = vst [vmem:[%s205 + $0x10a8] sm:$0xff] %v1272
                %v1274 = vld [vmem:[%s204 + $0x2160] sm:$0xff]
                %1275 = vst [vmem:[%s205 + $0x10b0] sm:$0xff] %v1274
                %v1276 = vld [vmem:[%s204 + $0x2168] sm:$0xff]
                %1277 = vst [vmem:[%s205 + $0x10b8] sm:$0xff] %v1276
                %v1278 = vld [vmem:[%s204 + $0x2180] sm:$0xff]
                %1279 = vst [vmem:[%s205 + $0x10c0] sm:$0xff] %v1278
                %v1280 = vld [vmem:[%s204 + $0x2188] sm:$0xff]
                %1281 = vst [vmem:[%s205 + $0x10c8] sm:$0xff] %v1280
                %v1282 = vld [vmem:[%s204 + $0x21a0] sm:$0xff]
                %1283 = vst [vmem:[%s205 + $0x10d0] sm:$0xff] %v1282
                %v1284 = vld [vmem:[%s204 + $0x21a8] sm:$0xff]
                %1285 = vst [vmem:[%s205 + $0x10d8] sm:$0xff] %v1284
                %v1286 = vld [vmem:[%s204 + $0x21c0] sm:$0xff]
                %1287 = vst [vmem:[%s205 + $0x10e0] sm:$0xff] %v1286
                %v1288 = vld [vmem:[%s204 + $0x21c8] sm:$0xff]
                %1289 = vst [vmem:[%s205 + $0x10e8] sm:$0xff] %v1288
                %v1290 = vld [vmem:[%s204 + $0x21e0] sm:$0xff]
                %1291 = vst [vmem:[%s205 + $0x10f0] sm:$0xff] %v1290
                %v1292 = vld [vmem:[%s204 + $0x21e8] sm:$0xff]
                %1293 = vst [vmem:[%s205 + $0x10f8] sm:$0xff] %v1292
                %v1294 = vld [vmem:[%s204 + $0x2200] sm:$0xff]
                %1295 = vst [vmem:[%s205 + $0x1100] sm:$0xff] %v1294
                %v1296 = vld [vmem:[%s204 + $0x2208] sm:$0xff]
                %1297 = vst [vmem:[%s205 + $0x1108] sm:$0xff] %v1296
                %v1298 = vld [vmem:[%s204 + $0x2220] sm:$0xff]
                %1299 = vst [vmem:[%s205 + $0x1110] sm:$0xff] %v1298
                %v1300 = vld [vmem:[%s204 + $0x2228] sm:$0xff]
                %1301 = vst [vmem:[%s205 + $0x1118] sm:$0xff] %v1300
                %v1302 = vld [vmem:[%s204 + $0x2240] sm:$0xff]
                %1303 = vst [vmem:[%s205 + $0x1120] sm:$0xff] %v1302
                %v1304 = vld [vmem:[%s204 + $0x2248] sm:$0xff]
                %1305 = vst [vmem:[%s205 + $0x1128] sm:$0xff] %v1304
                %v1306 = vld [vmem:[%s204 + $0x2260] sm:$0xff]
                %1307 = vst [vmem:[%s205 + $0x1130] sm:$0xff] %v1306
                %v1308 = vld [vmem:[%s204 + $0x2268] sm:$0xff]
                %1309 = vst [vmem:[%s205 + $0x1138] sm:$0xff] %v1308
                %v1310 = vld [vmem:[%s204 + $0x2280] sm:$0xff]
                %1311 = vst [vmem:[%s205 + $0x1140] sm:$0xff] %v1310
                %v1312 = vld [vmem:[%s204 + $0x2288] sm:$0xff]
                %1313 = vst [vmem:[%s205 + $0x1148] sm:$0xff] %v1312
                %v1314 = vld [vmem:[%s204 + $0x22a0] sm:$0xff]
                %1315 = vst [vmem:[%s205 + $0x1150] sm:$0xff] %v1314
                %v1316 = vld [vmem:[%s204 + $0x22a8] sm:$0xff]
                %1317 = vst [vmem:[%s205 + $0x1158] sm:$0xff] %v1316
                %v1318 = vld [vmem:[%s204 + $0x22c0] sm:$0xff]
                %1319 = vst [vmem:[%s205 + $0x1160] sm:$0xff] %v1318
                %v1320 = vld [vmem:[%s204 + $0x22c8] sm:$0xff]
                %1321 = vst [vmem:[%s205 + $0x1168] sm:$0xff] %v1320
                %v1322 = vld [vmem:[%s204 + $0x22e0] sm:$0xff]
                %1323 = vst [vmem:[%s205 + $0x1170] sm:$0xff] %v1322
                %v1324 = vld [vmem:[%s204 + $0x22e8] sm:$0xff]
                %1325 = vst [vmem:[%s205 + $0x1178] sm:$0xff] %v1324
                %v1326 = vld [vmem:[%s204 + $0x2300] sm:$0xff]
                %1327 = vst [vmem:[%s205 + $0x1180] sm:$0xff] %v1326
                %v1328 = vld [vmem:[%s204 + $0x2308] sm:$0xff]
                %1329 = vst [vmem:[%s205 + $0x1188] sm:$0xff] %v1328
                %v1330 = vld [vmem:[%s204 + $0x2320] sm:$0xff]
                %1331 = vst [vmem:[%s205 + $0x1190] sm:$0xff] %v1330
                %v1332 = vld [vmem:[%s204 + $0x2328] sm:$0xff]
                %1333 = vst [vmem:[%s205 + $0x1198] sm:$0xff] %v1332
                %v1334 = vld [vmem:[%s204 + $0x2340] sm:$0xff]
                %1335 = vst [vmem:[%s205 + $0x11a0] sm:$0xff] %v1334
                %v1336 = vld [vmem:[%s204 + $0x2348] sm:$0xff]
                %1337 = vst [vmem:[%s205 + $0x11a8] sm:$0xff] %v1336
                %v1338 = vld [vmem:[%s204 + $0x2360] sm:$0xff]
                %1339 = vst [vmem:[%s205 + $0x11b0] sm:$0xff] %v1338
                %v1340 = vld [vmem:[%s204 + $0x2368] sm:$0xff]
                %1341 = vst [vmem:[%s205 + $0x11b8] sm:$0xff] %v1340
                %v1342 = vld [vmem:[%s204 + $0x2380] sm:$0xff]
                %1343 = vst [vmem:[%s205 + $0x11c0] sm:$0xff] %v1342
                %v1344 = vld [vmem:[%s204 + $0x2388] sm:$0xff]
                %1345 = vst [vmem:[%s205 + $0x11c8] sm:$0xff] %v1344
                %v1346 = vld [vmem:[%s204 + $0x23a0] sm:$0xff]
                %1347 = vst [vmem:[%s205 + $0x11d0] sm:$0xff] %v1346
                %v1348 = vld [vmem:[%s204 + $0x23a8] sm:$0xff]
                %1349 = vst [vmem:[%s205 + $0x11d8] sm:$0xff] %v1348
                %v1350 = vld [vmem:[%s204 + $0x23c0] sm:$0xff]
                %1351 = vst [vmem:[%s205 + $0x11e0] sm:$0xff] %v1350
                %v1352 = vld [vmem:[%s204 + $0x23c8] sm:$0xff]
                %1353 = vst [vmem:[%s205 + $0x11e8] sm:$0xff] %v1352
                %v1354 = vld [vmem:[%s204 + $0x23e0] sm:$0xff]
                %1355 = vst [vmem:[%s205 + $0x11f0] sm:$0xff] %v1354
                %v1356 = vld [vmem:[%s204 + $0x23e8] sm:$0xff]
                %1357 = vst [vmem:[%s205 + $0x11f8] sm:$0xff] %v1356
                %v1358 = vld [vmem:[%s204 + $0x2400] sm:$0xff]
                %1359 = vst [vmem:[%s205 + $0x1200] sm:$0xff] %v1358
                %v1360 = vld [vmem:[%s204 + $0x2408] sm:$0xff]
                %1361 = vst [vmem:[%s205 + $0x1208] sm:$0xff] %v1360
                %v1362 = vld [vmem:[%s204 + $0x2420] sm:$0xff]
                %1363 = vst [vmem:[%s205 + $0x1210] sm:$0xff] %v1362
                %v1364 = vld [vmem:[%s204 + $0x2428] sm:$0xff]
                %1365 = vst [vmem:[%s205 + $0x1218] sm:$0xff] %v1364
                %v1366 = vld [vmem:[%s204 + $0x2440] sm:$0xff]
                %1367 = vst [vmem:[%s205 + $0x1220] sm:$0xff] %v1366
                %v1368 = vld [vmem:[%s204 + $0x2448] sm:$0xff]
                %1369 = vst [vmem:[%s205 + $0x1228] sm:$0xff] %v1368
                %v1370 = vld [vmem:[%s204 + $0x2460] sm:$0xff]
                %1371 = vst [vmem:[%s205 + $0x1230] sm:$0xff] %v1370
                %v1372 = vld [vmem:[%s204 + $0x2468] sm:$0xff]
                %1373 = vst [vmem:[%s205 + $0x1238] sm:$0xff] %v1372
                %v1374 = vld [vmem:[%s204 + $0x2480] sm:$0xff]
                %1375 = vst [vmem:[%s205 + $0x1240] sm:$0xff] %v1374
                %v1376 = vld [vmem:[%s204 + $0x2488] sm:$0xff]
                %1377 = vst [vmem:[%s205 + $0x1248] sm:$0xff] %v1376
                %v1378 = vld [vmem:[%s204 + $0x24a0] sm:$0xff]
                %1379 = vst [vmem:[%s205 + $0x1250] sm:$0xff] %v1378
                %v1380 = vld [vmem:[%s204 + $0x24a8] sm:$0xff]
                %1381 = vst [vmem:[%s205 + $0x1258] sm:$0xff] %v1380
                %v1382 = vld [vmem:[%s204 + $0x24c0] sm:$0xff]
                %1383 = vst [vmem:[%s205 + $0x1260] sm:$0xff] %v1382
                %v1384 = vld [vmem:[%s204 + $0x24c8] sm:$0xff]
                %1385 = vst [vmem:[%s205 + $0x1268] sm:$0xff] %v1384
                %v1386 = vld [vmem:[%s204 + $0x24e0] sm:$0xff]
                %1387 = vst [vmem:[%s205 + $0x1270] sm:$0xff] %v1386
                %v1388 = vld [vmem:[%s204 + $0x24e8] sm:$0xff]
                %1389 = vst [vmem:[%s205 + $0x1278] sm:$0xff] %v1388
                %v1390 = vld [vmem:[%s204 + $0x2500] sm:$0xff]
                %1391 = vst [vmem:[%s205 + $0x1280] sm:$0xff] %v1390
                %v1392 = vld [vmem:[%s204 + $0x2508] sm:$0xff]
                %1393 = vst [vmem:[%s205 + $0x1288] sm:$0xff] %v1392
                %v1394 = vld [vmem:[%s204 + $0x2520] sm:$0xff]
                %1395 = vst [vmem:[%s205 + $0x1290] sm:$0xff] %v1394
                %v1396 = vld [vmem:[%s204 + $0x2528] sm:$0xff]
                %1397 = vst [vmem:[%s205 + $0x1298] sm:$0xff] %v1396
                %v1398 = vld [vmem:[%s204 + $0x2540] sm:$0xff]
                %1399 = vst [vmem:[%s205 + $0x12a0] sm:$0xff] %v1398
                %v1400 = vld [vmem:[%s204 + $0x2548] sm:$0xff]
                %1401 = vst [vmem:[%s205 + $0x12a8] sm:$0xff] %v1400
                %v1402 = vld [vmem:[%s204 + $0x2560] sm:$0xff]
                %1403 = vst [vmem:[%s205 + $0x12b0] sm:$0xff] %v1402
                %v1404 = vld [vmem:[%s204 + $0x2568] sm:$0xff]
                %1405 = vst [vmem:[%s205 + $0x12b8] sm:$0xff] %v1404
                %v1406 = vld [vmem:[%s204 + $0x2580] sm:$0xff]
                %1407 = vst [vmem:[%s205 + $0x12c0] sm:$0xff] %v1406
                %v1408 = vld [vmem:[%s204 + $0x2588] sm:$0xff]
                %1409 = vst [vmem:[%s205 + $0x12c8] sm:$0xff] %v1408
                %v1410 = vld [vmem:[%s204 + $0x25a0] sm:$0xff]
                %1411 = vst [vmem:[%s205 + $0x12d0] sm:$0xff] %v1410
                %v1412 = vld [vmem:[%s204 + $0x25a8] sm:$0xff]
                %1413 = vst [vmem:[%s205 + $0x12d8] sm:$0xff] %v1412
                %v1414 = vld [vmem:[%s204 + $0x25c0] sm:$0xff]
                %1415 = vst [vmem:[%s205 + $0x12e0] sm:$0xff] %v1414
                %v1416 = vld [vmem:[%s204 + $0x25c8] sm:$0xff]
                %1417 = vst [vmem:[%s205 + $0x12e8] sm:$0xff] %v1416
                %v1418 = vld [vmem:[%s204 + $0x25e0] sm:$0xff]
                %1419 = vst [vmem:[%s205 + $0x12f0] sm:$0xff] %v1418
                %v1420 = vld [vmem:[%s204 + $0x25e8] sm:$0xff]
                %1421 = vst [vmem:[%s205 + $0x12f8] sm:$0xff] %v1420
                %v1422 = vld [vmem:[%s204 + $0x2600] sm:$0xff]
                %1423 = vst [vmem:[%s205 + $0x1300] sm:$0xff] %v1422
                %v1424 = vld [vmem:[%s204 + $0x2608] sm:$0xff]
                %1425 = vst [vmem:[%s205 + $0x1308] sm:$0xff] %v1424
                %v1426 = vld [vmem:[%s204 + $0x2620] sm:$0xff]
                %1427 = vst [vmem:[%s205 + $0x1310] sm:$0xff] %v1426
                %v1428 = vld [vmem:[%s204 + $0x2628] sm:$0xff]
                %1429 = vst [vmem:[%s205 + $0x1318] sm:$0xff] %v1428
                %v1430 = vld [vmem:[%s204 + $0x2640] sm:$0xff]
                %1431 = vst [vmem:[%s205 + $0x1320] sm:$0xff] %v1430
                %v1432 = vld [vmem:[%s204 + $0x2648] sm:$0xff]
                %1433 = vst [vmem:[%s205 + $0x1328] sm:$0xff] %v1432
                %v1434 = vld [vmem:[%s204 + $0x2660] sm:$0xff]
                %1435 = vst [vmem:[%s205 + $0x1330] sm:$0xff] %v1434
                %v1436 = vld [vmem:[%s204 + $0x2668] sm:$0xff]
                %1437 = vst [vmem:[%s205 + $0x1338] sm:$0xff] %v1436
                %v1438 = vld [vmem:[%s204 + $0x2680] sm:$0xff]
                %1439 = vst [vmem:[%s205 + $0x1340] sm:$0xff] %v1438
                %v1440 = vld [vmem:[%s204 + $0x2688] sm:$0xff]
                %1441 = vst [vmem:[%s205 + $0x1348] sm:$0xff] %v1440
                %v1442 = vld [vmem:[%s204 + $0x26a0] sm:$0xff]
                %1443 = vst [vmem:[%s205 + $0x1350] sm:$0xff] %v1442
                %v1444 = vld [vmem:[%s204 + $0x26a8] sm:$0xff]
                %1445 = vst [vmem:[%s205 + $0x1358] sm:$0xff] %v1444
                %v1446 = vld [vmem:[%s204 + $0x26c0] sm:$0xff]
                %1447 = vst [vmem:[%s205 + $0x1360] sm:$0xff] %v1446
                %v1448 = vld [vmem:[%s204 + $0x26c8] sm:$0xff]
                %1449 = vst [vmem:[%s205 + $0x1368] sm:$0xff] %v1448
                %v1450 = vld [vmem:[%s204 + $0x26e0] sm:$0xff]
                %1451 = vst [vmem:[%s205 + $0x1370] sm:$0xff] %v1450
                %v1452 = vld [vmem:[%s204 + $0x26e8] sm:$0xff]
                %1453 = vst [vmem:[%s205 + $0x1378] sm:$0xff] %v1452
                %v1454 = vld [vmem:[%s204 + $0x2700] sm:$0xff]
                %1455 = vst [vmem:[%s205 + $0x1380] sm:$0xff] %v1454
                %v1456 = vld [vmem:[%s204 + $0x2708] sm:$0xff]
                %1457 = vst [vmem:[%s205 + $0x1388] sm:$0xff] %v1456
                %v1458 = vld [vmem:[%s204 + $0x2720] sm:$0xff]
                %1459 = vst [vmem:[%s205 + $0x1390] sm:$0xff] %v1458
                %v1460 = vld [vmem:[%s204 + $0x2728] sm:$0xff]
                %1461 = vst [vmem:[%s205 + $0x1398] sm:$0xff] %v1460
                %v1462 = vld [vmem:[%s204 + $0x2740] sm:$0xff]
                %1463 = vst [vmem:[%s205 + $0x13a0] sm:$0xff] %v1462
                %v1464 = vld [vmem:[%s204 + $0x2748] sm:$0xff]
                %1465 = vst [vmem:[%s205 + $0x13a8] sm:$0xff] %v1464
                %v1466 = vld [vmem:[%s204 + $0x2760] sm:$0xff]
                %1467 = vst [vmem:[%s205 + $0x13b0] sm:$0xff] %v1466
                %v1468 = vld [vmem:[%s204 + $0x2768] sm:$0xff]
                %1469 = vst [vmem:[%s205 + $0x13b8] sm:$0xff] %v1468
                %v1470 = vld [vmem:[%s204 + $0x2780] sm:$0xff]
                %1471 = vst [vmem:[%s205 + $0x13c0] sm:$0xff] %v1470
                %v1472 = vld [vmem:[%s204 + $0x2788] sm:$0xff]
                %1473 = vst [vmem:[%s205 + $0x13c8] sm:$0xff] %v1472
                %v1474 = vld [vmem:[%s204 + $0x27a0] sm:$0xff]
                %1475 = vst [vmem:[%s205 + $0x13d0] sm:$0xff] %v1474
                %v1476 = vld [vmem:[%s204 + $0x27a8] sm:$0xff]
                %1477 = vst [vmem:[%s205 + $0x13d8] sm:$0xff] %v1476
                %v1478 = vld [vmem:[%s204 + $0x27c0] sm:$0xff]
                %1479 = vst [vmem:[%s205 + $0x13e0] sm:$0xff] %v1478
                %v1480 = vld [vmem:[%s204 + $0x27c8] sm:$0xff]
                %1481 = vst [vmem:[%s205 + $0x13e8] sm:$0xff] %v1480
                %v1482 = vld [vmem:[%s204 + $0x27e0] sm:$0xff]
                %1483 = vst [vmem:[%s205 + $0x13f0] sm:$0xff] %v1482
                %v1484 = vld [vmem:[%s204 + $0x27e8] sm:$0xff]
                %1485 = vst [vmem:[%s205 + $0x13f8] sm:$0xff] %v1484
                %v1486 = vld [vmem:[%s204 + $0x2800] sm:$0xff]
                %1487 = vst [vmem:[%s205 + $0x1400] sm:$0xff] %v1486
                %v1488 = vld [vmem:[%s204 + $0x2808] sm:$0xff]
                %1489 = vst [vmem:[%s205 + $0x1408] sm:$0xff] %v1488
                %v1490 = vld [vmem:[%s204 + $0x2820] sm:$0xff]
                %1491 = vst [vmem:[%s205 + $0x1410] sm:$0xff] %v1490
                %v1492 = vld [vmem:[%s204 + $0x2828] sm:$0xff]
                %1493 = vst [vmem:[%s205 + $0x1418] sm:$0xff] %v1492
                %v1494 = vld [vmem:[%s204 + $0x2840] sm:$0xff]
                %1495 = vst [vmem:[%s205 + $0x1420] sm:$0xff] %v1494
                %v1496 = vld [vmem:[%s204 + $0x2848] sm:$0xff]
                %1497 = vst [vmem:[%s205 + $0x1428] sm:$0xff] %v1496
                %v1498 = vld [vmem:[%s204 + $0x2860] sm:$0xff]
                %1499 = vst [vmem:[%s205 + $0x1430] sm:$0xff] %v1498
                %v1500 = vld [vmem:[%s204 + $0x2868] sm:$0xff]
                %1501 = vst [vmem:[%s205 + $0x1438] sm:$0xff] %v1500
                %v1502 = vld [vmem:[%s204 + $0x2880] sm:$0xff]
                %1503 = vst [vmem:[%s205 + $0x1440] sm:$0xff] %v1502
                %v1504 = vld [vmem:[%s204 + $0x2888] sm:$0xff]
                %1505 = vst [vmem:[%s205 + $0x1448] sm:$0xff] %v1504
                %v1506 = vld [vmem:[%s204 + $0x28a0] sm:$0xff]
                %1507 = vst [vmem:[%s205 + $0x1450] sm:$0xff] %v1506
                %v1508 = vld [vmem:[%s204 + $0x28a8] sm:$0xff]
                %1509 = vst [vmem:[%s205 + $0x1458] sm:$0xff] %v1508
                %v1510 = vld [vmem:[%s204 + $0x28c0] sm:$0xff]
                %1511 = vst [vmem:[%s205 + $0x1460] sm:$0xff] %v1510
                %v1512 = vld [vmem:[%s204 + $0x28c8] sm:$0xff]
                %1513 = vst [vmem:[%s205 + $0x1468] sm:$0xff] %v1512
                %v1514 = vld [vmem:[%s204 + $0x28e0] sm:$0xff]
                %1515 = vst [vmem:[%s205 + $0x1470] sm:$0xff] %v1514
                %v1516 = vld [vmem:[%s204 + $0x28e8] sm:$0xff]
                %1517 = vst [vmem:[%s205 + $0x1478] sm:$0xff] %v1516
                %v1518 = vld [vmem:[%s204 + $0x2900] sm:$0xff]
                %1519 = vst [vmem:[%s205 + $0x1480] sm:$0xff] %v1518
                %v1520 = vld [vmem:[%s204 + $0x2908] sm:$0xff]
                %1521 = vst [vmem:[%s205 + $0x1488] sm:$0xff] %v1520
                %v1522 = vld [vmem:[%s204 + $0x2920] sm:$0xff]
                %1523 = vst [vmem:[%s205 + $0x1490] sm:$0xff] %v1522
                %v1524 = vld [vmem:[%s204 + $0x2928] sm:$0xff]
                %1525 = vst [vmem:[%s205 + $0x1498] sm:$0xff] %v1524
                %v1526 = vld [vmem:[%s204 + $0x2940] sm:$0xff]
                %1527 = vst [vmem:[%s205 + $0x14a0] sm:$0xff] %v1526
                %v1528 = vld [vmem:[%s204 + $0x2948] sm:$0xff]
                %1529 = vst [vmem:[%s205 + $0x14a8] sm:$0xff] %v1528
                %v1530 = vld [vmem:[%s204 + $0x2960] sm:$0xff]
                %1531 = vst [vmem:[%s205 + $0x14b0] sm:$0xff] %v1530
                %v1532 = vld [vmem:[%s204 + $0x2968] sm:$0xff]
                %1533 = vst [vmem:[%s205 + $0x14b8] sm:$0xff] %v1532
                %v1534 = vld [vmem:[%s204 + $0x2980] sm:$0xff]
                %1535 = vst [vmem:[%s205 + $0x14c0] sm:$0xff] %v1534
                %v1536 = vld [vmem:[%s204 + $0x2988] sm:$0xff]
                %1537 = vst [vmem:[%s205 + $0x14c8] sm:$0xff] %v1536
                %v1538 = vld [vmem:[%s204 + $0x29a0] sm:$0xff]
                %1539 = vst [vmem:[%s205 + $0x14d0] sm:$0xff] %v1538
                %v1540 = vld [vmem:[%s204 + $0x29a8] sm:$0xff]
                %1541 = vst [vmem:[%s205 + $0x14d8] sm:$0xff] %v1540
                %v1542 = vld [vmem:[%s204 + $0x29c0] sm:$0xff]
                %1543 = vst [vmem:[%s205 + $0x14e0] sm:$0xff] %v1542
                %v1544 = vld [vmem:[%s204 + $0x29c8] sm:$0xff]
                %1545 = vst [vmem:[%s205 + $0x14e8] sm:$0xff] %v1544
                %v1546 = vld [vmem:[%s204 + $0x29e0] sm:$0xff]
                %1547 = vst [vmem:[%s205 + $0x14f0] sm:$0xff] %v1546
                %v1548 = vld [vmem:[%s204 + $0x29e8] sm:$0xff]
                %1549 = vst [vmem:[%s205 + $0x14f8] sm:$0xff] %v1548
                %v1550 = vld [vmem:[%s204 + $0x2a00] sm:$0xff]
                %1551 = vst [vmem:[%s205 + $0x1500] sm:$0xff] %v1550
                %v1552 = vld [vmem:[%s204 + $0x2a08] sm:$0xff]
                %1553 = vst [vmem:[%s205 + $0x1508] sm:$0xff] %v1552
                %v1554 = vld [vmem:[%s204 + $0x2a20] sm:$0xff]
                %1555 = vst [vmem:[%s205 + $0x1510] sm:$0xff] %v1554
                %v1556 = vld [vmem:[%s204 + $0x2a28] sm:$0xff]
                %1557 = vst [vmem:[%s205 + $0x1518] sm:$0xff] %v1556
                %v1558 = vld [vmem:[%s204 + $0x2a40] sm:$0xff]
                %1559 = vst [vmem:[%s205 + $0x1520] sm:$0xff] %v1558
                %v1560 = vld [vmem:[%s204 + $0x2a48] sm:$0xff]
                %1561 = vst [vmem:[%s205 + $0x1528] sm:$0xff] %v1560
                %v1562 = vld [vmem:[%s204 + $0x2a60] sm:$0xff]
                %1563 = vst [vmem:[%s205 + $0x1530] sm:$0xff] %v1562
                %v1564 = vld [vmem:[%s204 + $0x2a68] sm:$0xff]
                %1565 = vst [vmem:[%s205 + $0x1538] sm:$0xff] %v1564
                %v1566 = vld [vmem:[%s204 + $0x2a80] sm:$0xff]
                %1567 = vst [vmem:[%s205 + $0x1540] sm:$0xff] %v1566
                %v1568 = vld [vmem:[%s204 + $0x2a88] sm:$0xff]
                %1569 = vst [vmem:[%s205 + $0x1548] sm:$0xff] %v1568
                %v1570 = vld [vmem:[%s204 + $0x2aa0] sm:$0xff]
                %1571 = vst [vmem:[%s205 + $0x1550] sm:$0xff] %v1570
                %v1572 = vld [vmem:[%s204 + $0x2aa8] sm:$0xff]
                %1573 = vst [vmem:[%s205 + $0x1558] sm:$0xff] %v1572
                %v1574 = vld [vmem:[%s204 + $0x2ac0] sm:$0xff]
                %1575 = vst [vmem:[%s205 + $0x1560] sm:$0xff] %v1574
                %v1576 = vld [vmem:[%s204 + $0x2ac8] sm:$0xff]
                %1577 = vst [vmem:[%s205 + $0x1568] sm:$0xff] %v1576
                %v1578 = vld [vmem:[%s204 + $0x2ae0] sm:$0xff]
                %1579 = vst [vmem:[%s205 + $0x1570] sm:$0xff] %v1578
                %v1580 = vld [vmem:[%s204 + $0x2ae8] sm:$0xff]
                %1581 = vst [vmem:[%s205 + $0x1578] sm:$0xff] %v1580
                %v1582 = vld [vmem:[%s204 + $0x2b00] sm:$0xff]
                %1583 = vst [vmem:[%s205 + $0x1580] sm:$0xff] %v1582
                %v1584 = vld [vmem:[%s204 + $0x2b08] sm:$0xff]
                %1585 = vst [vmem:[%s205 + $0x1588] sm:$0xff] %v1584
                %v1586 = vld [vmem:[%s204 + $0x2b20] sm:$0xff]
                %1587 = vst [vmem:[%s205 + $0x1590] sm:$0xff] %v1586
                %v1588 = vld [vmem:[%s204 + $0x2b28] sm:$0xff]
                %1589 = vst [vmem:[%s205 + $0x1598] sm:$0xff] %v1588
                %v1590 = vld [vmem:[%s204 + $0x2b40] sm:$0xff]
                %1591 = vst [vmem:[%s205 + $0x15a0] sm:$0xff] %v1590
                %v1592 = vld [vmem:[%s204 + $0x2b48] sm:$0xff]
                %1593 = vst [vmem:[%s205 + $0x15a8] sm:$0xff] %v1592
                %v1594 = vld [vmem:[%s204 + $0x2b60] sm:$0xff]
                %1595 = vst [vmem:[%s205 + $0x15b0] sm:$0xff] %v1594
                %v1596 = vld [vmem:[%s204 + $0x2b68] sm:$0xff]
                %1597 = vst [vmem:[%s205 + $0x15b8] sm:$0xff] %v1596
                %v1598 = vld [vmem:[%s204 + $0x2b80] sm:$0xff]
                %1599 = vst [vmem:[%s205 + $0x15c0] sm:$0xff] %v1598
                %v1600 = vld [vmem:[%s204 + $0x2b88] sm:$0xff]
                %1601 = vst [vmem:[%s205 + $0x15c8] sm:$0xff] %v1600
                %v1602 = vld [vmem:[%s204 + $0x2ba0] sm:$0xff]
                %1603 = vst [vmem:[%s205 + $0x15d0] sm:$0xff] %v1602
                %v1604 = vld [vmem:[%s204 + $0x2ba8] sm:$0xff]
                %1605 = vst [vmem:[%s205 + $0x15d8] sm:$0xff] %v1604
                %v1606 = vld [vmem:[%s204 + $0x2bc0] sm:$0xff]
                %1607 = vst [vmem:[%s205 + $0x15e0] sm:$0xff] %v1606
                %v1608 = vld [vmem:[%s204 + $0x2bc8] sm:$0xff]
                %1609 = vst [vmem:[%s205 + $0x15e8] sm:$0xff] %v1608
                %v1610 = vld [vmem:[%s204 + $0x2be0] sm:$0xff]
                %1611 = vst [vmem:[%s205 + $0x15f0] sm:$0xff] %v1610
                %v1612 = vld [vmem:[%s204 + $0x2be8] sm:$0xff]
                %1613 = vst [vmem:[%s205 + $0x15f8] sm:$0xff] %v1612
                %v1614 = vld [vmem:[%s204 + $0x2c00] sm:$0xff]
                %1615 = vst [vmem:[%s205 + $0x1600] sm:$0xff] %v1614
                %v1616 = vld [vmem:[%s204 + $0x2c08] sm:$0xff]
                %1617 = vst [vmem:[%s205 + $0x1608] sm:$0xff] %v1616
                %v1618 = vld [vmem:[%s204 + $0x2c20] sm:$0xff]
                %1619 = vst [vmem:[%s205 + $0x1610] sm:$0xff] %v1618
                %v1620 = vld [vmem:[%s204 + $0x2c28] sm:$0xff]
                %1621 = vst [vmem:[%s205 + $0x1618] sm:$0xff] %v1620
                %v1622 = vld [vmem:[%s204 + $0x2c40] sm:$0xff]
                %1623 = vst [vmem:[%s205 + $0x1620] sm:$0xff] %v1622
                %v1624 = vld [vmem:[%s204 + $0x2c48] sm:$0xff]
                %1625 = vst [vmem:[%s205 + $0x1628] sm:$0xff] %v1624
                %v1626 = vld [vmem:[%s204 + $0x2c60] sm:$0xff]
                %1627 = vst [vmem:[%s205 + $0x1630] sm:$0xff] %v1626
                %v1628 = vld [vmem:[%s204 + $0x2c68] sm:$0xff]
                %1629 = vst [vmem:[%s205 + $0x1638] sm:$0xff] %v1628
                %v1630 = vld [vmem:[%s204 + $0x2c80] sm:$0xff]
                %1631 = vst [vmem:[%s205 + $0x1640] sm:$0xff] %v1630
                %v1632 = vld [vmem:[%s204 + $0x2c88] sm:$0xff]
                %1633 = vst [vmem:[%s205 + $0x1648] sm:$0xff] %v1632
                %v1634 = vld [vmem:[%s204 + $0x2ca0] sm:$0xff]
                %1635 = vst [vmem:[%s205 + $0x1650] sm:$0xff] %v1634
                %v1636 = vld [vmem:[%s204 + $0x2ca8] sm:$0xff]
                %1637 = vst [vmem:[%s205 + $0x1658] sm:$0xff] %v1636
                %v1638 = vld [vmem:[%s204 + $0x2cc0] sm:$0xff]
                %1639 = vst [vmem:[%s205 + $0x1660] sm:$0xff] %v1638
                %v1640 = vld [vmem:[%s204 + $0x2cc8] sm:$0xff]
                %1641 = vst [vmem:[%s205 + $0x1668] sm:$0xff] %v1640
                %v1642 = vld [vmem:[%s204 + $0x2ce0] sm:$0xff]
                %1643 = vst [vmem:[%s205 + $0x1670] sm:$0xff] %v1642
                %v1644 = vld [vmem:[%s204 + $0x2ce8] sm:$0xff]
                %1645 = vst [vmem:[%s205 + $0x1678] sm:$0xff] %v1644
                %v1646 = vld [vmem:[%s204 + $0x2d00] sm:$0xff]
                %1647 = vst [vmem:[%s205 + $0x1680] sm:$0xff] %v1646
                %v1648 = vld [vmem:[%s204 + $0x2d08] sm:$0xff]
                %1649 = vst [vmem:[%s205 + $0x1688] sm:$0xff] %v1648
                %v1650 = vld [vmem:[%s204 + $0x2d20] sm:$0xff]
                %1651 = vst [vmem:[%s205 + $0x1690] sm:$0xff] %v1650
                %v1652 = vld [vmem:[%s204 + $0x2d28] sm:$0xff]
                %1653 = vst [vmem:[%s205 + $0x1698] sm:$0xff] %v1652
                %v1654 = vld [vmem:[%s204 + $0x2d40] sm:$0xff]
                %1655 = vst [vmem:[%s205 + $0x16a0] sm:$0xff] %v1654
                %v1656 = vld [vmem:[%s204 + $0x2d48] sm:$0xff]
                %1657 = vst [vmem:[%s205 + $0x16a8] sm:$0xff] %v1656
                %v1658 = vld [vmem:[%s204 + $0x2d60] sm:$0xff]
                %1659 = vst [vmem:[%s205 + $0x16b0] sm:$0xff] %v1658
                %v1660 = vld [vmem:[%s204 + $0x2d68] sm:$0xff]
                %1661 = vst [vmem:[%s205 + $0x16b8] sm:$0xff] %v1660
                %v1662 = vld [vmem:[%s204 + $0x2d80] sm:$0xff]
                %1663 = vst [vmem:[%s205 + $0x16c0] sm:$0xff] %v1662
                %v1664 = vld [vmem:[%s204 + $0x2d88] sm:$0xff]
                %1665 = vst [vmem:[%s205 + $0x16c8] sm:$0xff] %v1664
                %v1666 = vld [vmem:[%s204 + $0x2da0] sm:$0xff]
                %1667 = vst [vmem:[%s205 + $0x16d0] sm:$0xff] %v1666
                %v1668 = vld [vmem:[%s204 + $0x2da8] sm:$0xff]
                %1669 = vst [vmem:[%s205 + $0x16d8] sm:$0xff] %v1668
                %v1670 = vld [vmem:[%s204 + $0x2dc0] sm:$0xff]
                %1671 = vst [vmem:[%s205 + $0x16e0] sm:$0xff] %v1670
                %v1672 = vld [vmem:[%s204 + $0x2dc8] sm:$0xff]
                %1673 = vst [vmem:[%s205 + $0x16e8] sm:$0xff] %v1672
                %v1674 = vld [vmem:[%s204 + $0x2de0] sm:$0xff]
                %1675 = vst [vmem:[%s205 + $0x16f0] sm:$0xff] %v1674
                %v1676 = vld [vmem:[%s204 + $0x2de8] sm:$0xff]
                %1677 = vst [vmem:[%s205 + $0x16f8] sm:$0xff] %v1676
                %v1678 = vld [vmem:[%s204 + $0x2e00] sm:$0xff]
                %1679 = vst [vmem:[%s205 + $0x1700] sm:$0xff] %v1678
                %v1680 = vld [vmem:[%s204 + $0x2e08] sm:$0xff]
                %1681 = vst [vmem:[%s205 + $0x1708] sm:$0xff] %v1680
                %v1682 = vld [vmem:[%s204 + $0x2e20] sm:$0xff]
                %1683 = vst [vmem:[%s205 + $0x1710] sm:$0xff] %v1682
                %v1684 = vld [vmem:[%s204 + $0x2e28] sm:$0xff]
                %1685 = vst [vmem:[%s205 + $0x1718] sm:$0xff] %v1684
                %v1686 = vld [vmem:[%s204 + $0x2e40] sm:$0xff]
                %1687 = vst [vmem:[%s205 + $0x1720] sm:$0xff] %v1686
                %v1688 = vld [vmem:[%s204 + $0x2e48] sm:$0xff]
                %1689 = vst [vmem:[%s205 + $0x1728] sm:$0xff] %v1688
                %v1690 = vld [vmem:[%s204 + $0x2e60] sm:$0xff]
                %1691 = vst [vmem:[%s205 + $0x1730] sm:$0xff] %v1690
                %v1692 = vld [vmem:[%s204 + $0x2e68] sm:$0xff]
                %1693 = vst [vmem:[%s205 + $0x1738] sm:$0xff] %v1692
                %v1694 = vld [vmem:[%s204 + $0x2e80] sm:$0xff]
                %1695 = vst [vmem:[%s205 + $0x1740] sm:$0xff] %v1694
                %v1696 = vld [vmem:[%s204 + $0x2e88] sm:$0xff]
                %1697 = vst [vmem:[%s205 + $0x1748] sm:$0xff] %v1696
                %v1698 = vld [vmem:[%s204 + $0x2ea0] sm:$0xff]
                %1699 = vst [vmem:[%s205 + $0x1750] sm:$0xff] %v1698
                %v1700 = vld [vmem:[%s204 + $0x2ea8] sm:$0xff]
                %1701 = vst [vmem:[%s205 + $0x1758] sm:$0xff] %v1700
                %v1702 = vld [vmem:[%s204 + $0x2ec0] sm:$0xff]
                %1703 = vst [vmem:[%s205 + $0x1760] sm:$0xff] %v1702
                %v1704 = vld [vmem:[%s204 + $0x2ec8] sm:$0xff]
                %1705 = vst [vmem:[%s205 + $0x1768] sm:$0xff] %v1704
                %v1706 = vld [vmem:[%s204 + $0x2ee0] sm:$0xff]
                %1707 = vst [vmem:[%s205 + $0x1770] sm:$0xff] %v1706
                %v1708 = vld [vmem:[%s204 + $0x2ee8] sm:$0xff]
                %1709 = vst [vmem:[%s205 + $0x1778] sm:$0xff] %v1708
                %v1710 = vld [vmem:[%s204 + $0x2f00] sm:$0xff]
                %1711 = vst [vmem:[%s205 + $0x1780] sm:$0xff] %v1710
                %v1712 = vld [vmem:[%s204 + $0x2f08] sm:$0xff]
                %1713 = vst [vmem:[%s205 + $0x1788] sm:$0xff] %v1712
                %v1714 = vld [vmem:[%s204 + $0x2f20] sm:$0xff]
                %1715 = vst [vmem:[%s205 + $0x1790] sm:$0xff] %v1714
                %v1716 = vld [vmem:[%s204 + $0x2f28] sm:$0xff]
                %1717 = vst [vmem:[%s205 + $0x1798] sm:$0xff] %v1716
                %v1718 = vld [vmem:[%s204 + $0x2f40] sm:$0xff]
                %1719 = vst [vmem:[%s205 + $0x17a0] sm:$0xff] %v1718
                %v1720 = vld [vmem:[%s204 + $0x2f48] sm:$0xff]
                %1721 = vst [vmem:[%s205 + $0x17a8] sm:$0xff] %v1720
                %v1722 = vld [vmem:[%s204 + $0x2f60] sm:$0xff]
                %1723 = vst [vmem:[%s205 + $0x17b0] sm:$0xff] %v1722
                %v1724 = vld [vmem:[%s204 + $0x2f68] sm:$0xff]
                %1725 = vst [vmem:[%s205 + $0x17b8] sm:$0xff] %v1724
                %v1726 = vld [vmem:[%s204 + $0x2f80] sm:$0xff]
                %1727 = vst [vmem:[%s205 + $0x17c0] sm:$0xff] %v1726
                %v1728 = vld [vmem:[%s204 + $0x2f88] sm:$0xff]
                %1729 = vst [vmem:[%s205 + $0x17c8] sm:$0xff] %v1728
                %v1730 = vld [vmem:[%s204 + $0x2fa0] sm:$0xff]
                %1731 = vst [vmem:[%s205 + $0x17d0] sm:$0xff] %v1730
                %v1732 = vld [vmem:[%s204 + $0x2fa8] sm:$0xff]
                %1733 = vst [vmem:[%s205 + $0x17d8] sm:$0xff] %v1732
                %v1734 = vld [vmem:[%s204 + $0x2fc0] sm:$0xff]
                %1735 = vst [vmem:[%s205 + $0x17e0] sm:$0xff] %v1734
                %v1736 = vld [vmem:[%s204 + $0x2fc8] sm:$0xff]
                %1737 = vst [vmem:[%s205 + $0x17e8] sm:$0xff] %v1736
                %v1738 = vld [vmem:[%s204 + $0x2fe0] sm:$0xff]
                %1739 = vst [vmem:[%s205 + $0x17f0] sm:$0xff] %v1738
                %v1740 = vld [vmem:[%s204 + $0x2fe8] sm:$0xff]
                %1741 = vst [vmem:[%s205 + $0x17f8] sm:$0xff] %v1740
                %v1742 = vld [vmem:[%s204 + $0x3000] sm:$0xff]
                %1743 = vst [vmem:[%s205 + $0x1800] sm:$0xff] %v1742
                %v1744 = vld [vmem:[%s204 + $0x3008] sm:$0xff]
                %1745 = vst [vmem:[%s205 + $0x1808] sm:$0xff] %v1744
                %v1746 = vld [vmem:[%s204 + $0x3020] sm:$0xff]
                %1747 = vst [vmem:[%s205 + $0x1810] sm:$0xff] %v1746
                %v1748 = vld [vmem:[%s204 + $0x3028] sm:$0xff]
                %1749 = vst [vmem:[%s205 + $0x1818] sm:$0xff] %v1748
                %v1750 = vld [vmem:[%s204 + $0x3040] sm:$0xff]
                %1751 = vst [vmem:[%s205 + $0x1820] sm:$0xff] %v1750
                %v1752 = vld [vmem:[%s204 + $0x3048] sm:$0xff]
                %1753 = vst [vmem:[%s205 + $0x1828] sm:$0xff] %v1752
                %v1754 = vld [vmem:[%s204 + $0x3060] sm:$0xff]
                %1755 = vst [vmem:[%s205 + $0x1830] sm:$0xff] %v1754
                %v1756 = vld [vmem:[%s204 + $0x3068] sm:$0xff]
                %1757 = vst [vmem:[%s205 + $0x1838] sm:$0xff] %v1756
                %v1758 = vld [vmem:[%s204 + $0x3080] sm:$0xff]
                %1759 = vst [vmem:[%s205 + $0x1840] sm:$0xff] %v1758
                %v1760 = vld [vmem:[%s204 + $0x3088] sm:$0xff]
                %1761 = vst [vmem:[%s205 + $0x1848] sm:$0xff] %v1760
                %v1762 = vld [vmem:[%s204 + $0x30a0] sm:$0xff]
                %1763 = vst [vmem:[%s205 + $0x1850] sm:$0xff] %v1762
                %v1764 = vld [vmem:[%s204 + $0x30a8] sm:$0xff]
                %1765 = vst [vmem:[%s205 + $0x1858] sm:$0xff] %v1764
                %v1766 = vld [vmem:[%s204 + $0x30c0] sm:$0xff]
                %1767 = vst [vmem:[%s205 + $0x1860] sm:$0xff] %v1766
                %v1768 = vld [vmem:[%s204 + $0x30c8] sm:$0xff]
                %1769 = vst [vmem:[%s205 + $0x1868] sm:$0xff] %v1768
                %v1770 = vld [vmem:[%s204 + $0x30e0] sm:$0xff]
                %1771 = vst [vmem:[%s205 + $0x1870] sm:$0xff] %v1770
                %v1772 = vld [vmem:[%s204 + $0x30e8] sm:$0xff]
                %1773 = vst [vmem:[%s205 + $0x1878] sm:$0xff] %v1772
              $region37: #{cnn_forward.7} parent=31 // loop_footer
                %s203 = sadd.s32 1, %s199
              $region38: #{cnn_forward.7} parent=31 // loop_footer_branch
                %198 = sbr.rel target = $region34
              $region39: #{cnn_forward.7} parent=31 // loop_exit
                _
            $region32: #{cnn_forward.7} parent=27 // pred_fallthru
              _
            // Predicated region
            $region40: #{cnn_forward.7} parent=27 // pred_check
              _
            $region41: #{cnn_forward.7} parent=27 // pred_check_branch
              %1775 = sbr.rel target = $region43
            $region42: #{cnn_forward.7} parent=27 // pred_region
              _
            $region43: #{cnn_forward.7} parent=27 // pred_fallthru
              _
          $region28: #{cnn_forward.7} parent=23 // pred_fallthru
            _
          %1776 = vnop
        $region24: #{cnn_forward.7} parent=19 // pred_fallthru
          _
        // Predicated region
        $region44: #{cnn_forward.7} parent=19 // pred_check
          %p1777 = pneg %p78
        $region45: #{cnn_forward.7} parent=19 // pred_check_branch
          %1779 = sbr.rel (%p1777) target = $region47
        $region46: #{cnn_forward.7} parent=19 // pred_region
          %p1780 = scmp.lt.s32.totalorder %s11, 1
          %s1781 = scalar_select %p1780, %s11, 1
          %s1782 = smul.addr %s1781, 4
          %s1783 = scalar_lea.vmem %s2, %s1782
        $region47: #{cnn_forward.7} parent=19 // pred_fallthru
          _
        // Predicated region
        $region48: #{cnn_forward.7} parent=19 // pred_check
          %p1784 = pneg %p104
        $region49: #{cnn_forward.7} parent=19 // pred_check_branch
          %1786 = sbr.rel (%p1784) target = $region51
        $region50: #{cnn_forward.7} parent=19 // pred_region
          %p1787 = scmp.lt.s32.totalorder %s11, 1
          %s1788 = scalar_select %p1787, %s11, 1
          %s1789 = smul.addr %s1788, 64
          %s1790 = smul.addr %s1789, 4
          %s1791 = scalar_lea.vmem %s3, %s1790
        $region51: #{cnn_forward.7} parent=19 // pred_fallthru
          _
        // Predicated region
        $region52: #{cnn_forward.7} parent=19 // pred_check
          %p1792 = pneg %p130
        $region53: #{cnn_forward.7} parent=19 // pred_check_branch
          %1794 = sbr.rel (%p1792) target = $region55
        $region54: #{cnn_forward.7} parent=19 // pred_region
          %p1795 = scmp.lt.s32.totalorder %s11, 1
          %s1796 = scalar_select %p1795, %s11, 1
          %s1797 = scalar_lea.vmem %s4, %s1796
        $region55: #{cnn_forward.7} parent=19 // pred_fallthru
          _
      $region20: #{cnn_forward.7} parent=5 // pred_fallthru
        _
      %p1798 = scmp.le.s32.totalorder 1, %s11
      %p1799 = scmp.lt.s32.totalorder %s11, 3
      %p1800 = pnand %p1798, %p1799
      %p1801 = pneg %p1800
      // Predicated region
      $region56: #{cnn_forward.7} parent=5 // pred_check
        _
      $region57: #{cnn_forward.7} parent=5 // pred_check_branch
        %1803 = sbr.rel (%p1800) target = $region59
      $region58: #{cnn_forward.7} parent=5 // pred_region
        %s1804 = ssub.s32 %s11, 1
        %s1805 = sand.u32 %s45, 1
        %s1806 = sand.u32 %s45, 1
        %s1807 = smul.addr %s1806, 6272
        %s1808 = scalar_lea.vmem [#allocation2], %s1807
        // Predicated region
        $region60: #{cnn_forward.7} parent=58 // pred_check
          %p1809 = pneg %p58
        $region61: #{cnn_forward.7} parent=58 // pred_check_branch
          %1811 = sbr.rel (%p1809) target = $region63
        $region62: #{cnn_forward.7} parent=58 // pred_region
          _
        $region63: #{cnn_forward.7} parent=58 // pred_fallthru
          _
        %p1812 = pneg %p32
        %p1813 = pneg %p29
        %s1814 = sand.u32 %s45, 1
        %s1815 = sand.u32 %s45, 1
        %s1816 = smul.addr %s1815, 6272
        %s1817 = scalar_lea.vmem [#allocation2], %s1816
        %p1818 = pneg %p58
        %p1819 = pneg %p55
        %p1820 = scmp.lt.s32.totalorder %s16, 1
        %s1821 = scalar_select %p1820, %s16, 1
        %s1822 = smul.addr %s1821, 4
        %s1823 = scalar_lea.vmem %s2, %s1822
        %p1824 = pneg %p84
        %p1825 = pneg %p81
        %p1826 = scmp.lt.s32.totalorder %s16, 1
        %s1827 = scalar_select %p1826, %s16, 1
        %s1828 = smul.addr %s1827, 64
        %s1829 = smul.addr %s1828, 4
        %s1830 = scalar_lea.vmem %s3, %s1829
        %p1831 = pneg %p110
        %p1832 = pneg %p107
        %p1833 = scmp.lt.s32.totalorder %s16, 1
        %s1834 = scalar_select %p1833, %s16, 1
        %s1835 = scalar_lea.vmem %s4, %s1834
        %p1836 = pneg %p136
        %p1837 = pneg %p133
        %p1838 = pneg %p162
        %p1839 = pneg %p159
        %p1840 = scmp.lt.s32.totalorder %s16, 1
        %s1841 = scalar_select %p1840, %s16, 1
        %s1842 = smul.addr %s1841, 2
        %s1843 = scalar_lea.vmem %s5, %s1842
        %s1844 = smul.u32 4, %s16
        %p1845 = scmp.lt.s32.totalorder %s16, 1
        %s1846 = scalar_select %p1845, %s16, 1
        %s1847 = smul.addr %s1846, 4
        %s1848 = scalar_lea.vmem %s2, %s1847
        %p1849 = scmp.lt.s32.totalorder %s16, 1
        %s1850 = scalar_select %p1849, %s16, 1
        %s1851 = smul.addr %s1850, 64
        %s1852 = smul.addr %s1851, 4
        %s1853 = scalar_lea.vmem %s3, %s1852
        %p1854 = scmp.lt.s32.totalorder %s16, 1
        %s1855 = scalar_select %p1854, %s16, 1
        %s1856 = scalar_lea.vmem %s4, %s1855
        %p1857 = scmp.lt.s32.totalorder %s16, 1
        %s1858 = scalar_select %p1857, %s16, 1
        %s1859 = smul.addr %s1858, 2
        %s1860 = scalar_lea.vmem %s5, %s1859
        %v1862 = vld [vmem:[%s0] sm:$0xff]
        %v1863 = vld [vmem:[%s0 + $0x8] sm:$0xff]
        %v1864 = vld [vmem:[%s0 + $0x10] sm:$0xff]
        %v1865 = vld [vmem:[%s0 + $0x18] sm:$0x1]
        %v1866 = vld [vmem:[%s1808] sm:$0xff]
        %v1867 = vld [vmem:[%s1808 + $0x8] sm:$0xff]
        %v1868 = vld [vmem:[%s1808 + $0x10] sm:$0xff]
        %v1869 = vld [vmem:[%s1808 + $0x18] sm:$0xff]
        %v1870 = vld [vmem:[%s1808 + $0x20] sm:$0xff]
        %v1871 = vld [vmem:[%s1808 + $0x28] sm:$0xff]
        %v1872 = vld [vmem:[%s1808 + $0x30] sm:$0xff]
        %v1873 = vld [vmem:[%s1808 + $0x38] sm:$0xff]
        %v1874 = vld [vmem:[%s1808 + $0x40] sm:$0xff]
        %v1875 = vld [vmem:[%s1808 + $0x48] sm:$0xff]
        %v1876 = vld [vmem:[%s1808 + $0x50] sm:$0xff]
        %v1877 = vld [vmem:[%s1808 + $0x58] sm:$0xff]
        %v1878 = vld [vmem:[%s1808 + $0x60] sm:$0xff]
        %v1879 = vld [vmem:[%s1808 + $0x68] sm:$0xff]
        %v1880 = vld [vmem:[%s1808 + $0x70] sm:$0xff]
        %v1881 = vld [vmem:[%s1808 + $0x78] sm:$0xff]
        %v1882 = vld [vmem:[%s1808 + $0x80] sm:$0xff]
        %v1883 = vld [vmem:[%s1808 + $0x88] sm:$0xff]
        %v1884 = vld [vmem:[%s1808 + $0x90] sm:$0xff]
        %v1885 = vld [vmem:[%s1808 + $0x98] sm:$0xff]
        %v1886 = vld [vmem:[%s1808 + $0xa0] sm:$0xff]
        %v1887 = vld [vmem:[%s1808 + $0xa8] sm:$0xff]
        %v1888 = vld [vmem:[%s1808 + $0xb0] sm:$0xff]
        %v1889 = vld [vmem:[%s1808 + $0xb8] sm:$0xff]
        %v1890 = vld [vmem:[%s1808 + $0xc0] sm:$0xff]
        %v1891 = vld [vmem:[%s1808 + $0xc8] sm:$0xff]
        %v1892 = vld [vmem:[%s1808 + $0xd0] sm:$0xff]
        %v1893 = vld [vmem:[%s1808 + $0xd8] sm:$0xff]
        %v1894 = vld [vmem:[%s1808 + $0xe0] sm:$0xff]
        %v1895 = vld [vmem:[%s1808 + $0xe8] sm:$0xff]
        %v1896 = vld [vmem:[%s1808 + $0xf0] sm:$0xff]
        %v1897 = vld [vmem:[%s1808 + $0xf8] sm:$0xff]
        %v1898 = vld [vmem:[%s1808 + $0x100] sm:$0xff]
        %v1899 = vld [vmem:[%s1808 + $0x108] sm:$0xff]
        %v1900 = vld [vmem:[%s1808 + $0x110] sm:$0xff]
        %v1901 = vld [vmem:[%s1808 + $0x118] sm:$0xff]
        %v1902 = vld [vmem:[%s1808 + $0x120] sm:$0xff]
        %v1903 = vld [vmem:[%s1808 + $0x128] sm:$0xff]
        %v1904 = vld [vmem:[%s1808 + $0x130] sm:$0xff]
        %v1905 = vld [vmem:[%s1808 + $0x138] sm:$0xff]
        %v1906 = vld [vmem:[%s1808 + $0x140] sm:$0xff]
        %v1907 = vld [vmem:[%s1808 + $0x148] sm:$0xff]
        %v1908 = vld [vmem:[%s1808 + $0x150] sm:$0xff]
        %v1909 = vld [vmem:[%s1808 + $0x158] sm:$0xff]
        %v1910 = vld [vmem:[%s1808 + $0x160] sm:$0xff]
        %v1911 = vld [vmem:[%s1808 + $0x168] sm:$0xff]
        %v1912 = vld [vmem:[%s1808 + $0x170] sm:$0xff]
        %v1913 = vld [vmem:[%s1808 + $0x178] sm:$0xff]
        %v1914 = vld [vmem:[%s1808 + $0x180] sm:$0xff]
        %v1915 = vld [vmem:[%s1808 + $0x188] sm:$0xff]
        %v1916 = vld [vmem:[%s1808 + $0x190] sm:$0xff]
        %v1917 = vld [vmem:[%s1808 + $0x198] sm:$0xff]
        %v1918 = vld [vmem:[%s1808 + $0x1a0] sm:$0xff]
        %v1919 = vld [vmem:[%s1808 + $0x1a8] sm:$0xff]
        %v1920 = vld [vmem:[%s1808 + $0x1b0] sm:$0xff]
        %v1921 = vld [vmem:[%s1808 + $0x1b8] sm:$0xff]
        %v1922 = vld [vmem:[%s1808 + $0x1c0] sm:$0xff]
        %v1923 = vld [vmem:[%s1808 + $0x1c8] sm:$0xff]
        %v1924 = vld [vmem:[%s1808 + $0x1d0] sm:$0xff]
        %v1925 = vld [vmem:[%s1808 + $0x1d8] sm:$0xff]
        %v1926 = vld [vmem:[%s1808 + $0x1e0] sm:$0xff]
        %v1927 = vld [vmem:[%s1808 + $0x1e8] sm:$0xff]
        %v1928 = vld [vmem:[%s1808 + $0x1f0] sm:$0xff]
        %v1929 = vld [vmem:[%s1808 + $0x1f8] sm:$0xff]
        %v1930 = vld [vmem:[%s1808 + $0x200] sm:$0xff]
        %v1931 = vld [vmem:[%s1808 + $0x208] sm:$0xff]
        %v1932 = vld [vmem:[%s1808 + $0x210] sm:$0xff]
        %v1933 = vld [vmem:[%s1808 + $0x218] sm:$0xff]
        %v1934 = vld [vmem:[%s1808 + $0x220] sm:$0xff]
        %v1935 = vld [vmem:[%s1808 + $0x228] sm:$0xff]
        %v1936 = vld [vmem:[%s1808 + $0x230] sm:$0xff]
        %v1937 = vld [vmem:[%s1808 + $0x238] sm:$0xff]
        %v1938 = vld [vmem:[%s1808 + $0x240] sm:$0xff]
        %v1939 = vld [vmem:[%s1808 + $0x248] sm:$0xff]
        %v1940 = vld [vmem:[%s1808 + $0x250] sm:$0xff]
        %v1941 = vld [vmem:[%s1808 + $0x258] sm:$0xff]
        %v1942 = vld [vmem:[%s1808 + $0x260] sm:$0xff]
        %v1943 = vld [vmem:[%s1808 + $0x268] sm:$0xff]
        %v1944 = vld [vmem:[%s1808 + $0x270] sm:$0xff]
        %v1945 = vld [vmem:[%s1808 + $0x278] sm:$0xff]
        %v1946 = vld [vmem:[%s1808 + $0x280] sm:$0xff]
        %v1947 = vld [vmem:[%s1808 + $0x288] sm:$0xff]
        %v1948 = vld [vmem:[%s1808 + $0x290] sm:$0xff]
        %v1949 = vld [vmem:[%s1808 + $0x298] sm:$0xff]
        %v1950 = vld [vmem:[%s1808 + $0x2a0] sm:$0xff]
        %v1951 = vld [vmem:[%s1808 + $0x2a8] sm:$0xff]
        %v1952 = vld [vmem:[%s1808 + $0x2b0] sm:$0xff]
        %v1953 = vld [vmem:[%s1808 + $0x2b8] sm:$0xff]
        %v1954 = vld [vmem:[%s1808 + $0x2c0] sm:$0xff]
        %v1955 = vld [vmem:[%s1808 + $0x2c8] sm:$0xff]
        %v1956 = vld [vmem:[%s1808 + $0x2d0] sm:$0xff]
        %v1957 = vld [vmem:[%s1808 + $0x2d8] sm:$0xff]
        %v1958 = vld [vmem:[%s1808 + $0x2e0] sm:$0xff]
        %v1959 = vld [vmem:[%s1808 + $0x2e8] sm:$0xff]
        %v1960 = vld [vmem:[%s1808 + $0x2f0] sm:$0xff]
        %v1961 = vld [vmem:[%s1808 + $0x2f8] sm:$0xff]
        %v1962 = vld [vmem:[%s1808 + $0x300] sm:$0xff]
        %v1963 = vld [vmem:[%s1808 + $0x308] sm:$0xff]
        %v1964 = vld [vmem:[%s1808 + $0x310] sm:$0xff]
        %v1965 = vld [vmem:[%s1808 + $0x318] sm:$0xff]
        %v1966 = vld [vmem:[%s1808 + $0x320] sm:$0xff]
        %v1967 = vld [vmem:[%s1808 + $0x328] sm:$0xff]
        %v1968 = vld [vmem:[%s1808 + $0x330] sm:$0xff]
        %v1969 = vld [vmem:[%s1808 + $0x338] sm:$0xff]
        %v1970 = vld [vmem:[%s1808 + $0x340] sm:$0xff]
        %v1971 = vld [vmem:[%s1808 + $0x348] sm:$0xff]
        %v1972 = vld [vmem:[%s1808 + $0x350] sm:$0xff]
        %v1973 = vld [vmem:[%s1808 + $0x358] sm:$0xff]
        %v1974 = vld [vmem:[%s1808 + $0x360] sm:$0xff]
        %v1975 = vld [vmem:[%s1808 + $0x368] sm:$0xff]
        %v1976 = vld [vmem:[%s1808 + $0x370] sm:$0xff]
        %v1977 = vld [vmem:[%s1808 + $0x378] sm:$0xff]
        %v1978 = vld [vmem:[%s1808 + $0x380] sm:$0xff]
        %v1979 = vld [vmem:[%s1808 + $0x388] sm:$0xff]
        %v1980 = vld [vmem:[%s1808 + $0x390] sm:$0xff]
        %v1981 = vld [vmem:[%s1808 + $0x398] sm:$0xff]
        %v1982 = vld [vmem:[%s1808 + $0x3a0] sm:$0xff]
        %v1983 = vld [vmem:[%s1808 + $0x3a8] sm:$0xff]
        %v1984 = vld [vmem:[%s1808 + $0x3b0] sm:$0xff]
        %v1985 = vld [vmem:[%s1808 + $0x3b8] sm:$0xff]
        %v1986 = vld [vmem:[%s1808 + $0x3c0] sm:$0xff]
        %v1987 = vld [vmem:[%s1808 + $0x3c8] sm:$0xff]
        %v1988 = vld [vmem:[%s1808 + $0x3d0] sm:$0xff]
        %v1989 = vld [vmem:[%s1808 + $0x3d8] sm:$0xff]
        %v1990 = vld [vmem:[%s1808 + $0x3e0] sm:$0xff]
        %v1991 = vld [vmem:[%s1808 + $0x3e8] sm:$0xff]
        %v1992 = vld [vmem:[%s1808 + $0x3f0] sm:$0xff]
        %v1993 = vld [vmem:[%s1808 + $0x3f8] sm:$0xff]
        %v1994 = vld [vmem:[%s1808 + $0x400] sm:$0xff]
        %v1995 = vld [vmem:[%s1808 + $0x408] sm:$0xff]
        %v1996 = vld [vmem:[%s1808 + $0x410] sm:$0xff]
        %v1997 = vld [vmem:[%s1808 + $0x418] sm:$0xff]
        %v1998 = vld [vmem:[%s1808 + $0x420] sm:$0xff]
        %v1999 = vld [vmem:[%s1808 + $0x428] sm:$0xff]
        %v2000 = vld [vmem:[%s1808 + $0x430] sm:$0xff]
        %v2001 = vld [vmem:[%s1808 + $0x438] sm:$0xff]
        %v2002 = vld [vmem:[%s1808 + $0x440] sm:$0xff]
        %v2003 = vld [vmem:[%s1808 + $0x448] sm:$0xff]
        %v2004 = vld [vmem:[%s1808 + $0x450] sm:$0xff]
        %v2005 = vld [vmem:[%s1808 + $0x458] sm:$0xff]
        %v2006 = vld [vmem:[%s1808 + $0x460] sm:$0xff]
        %v2007 = vld [vmem:[%s1808 + $0x468] sm:$0xff]
        %v2008 = vld [vmem:[%s1808 + $0x470] sm:$0xff]
        %v2009 = vld [vmem:[%s1808 + $0x478] sm:$0xff]
        %v2010 = vld [vmem:[%s1808 + $0x480] sm:$0xff]
        %v2011 = vld [vmem:[%s1808 + $0x488] sm:$0xff]
        %v2012 = vld [vmem:[%s1808 + $0x490] sm:$0xff]
        %v2013 = vld [vmem:[%s1808 + $0x498] sm:$0xff]
        %v2014 = vld [vmem:[%s1808 + $0x4a0] sm:$0xff]
        %v2015 = vld [vmem:[%s1808 + $0x4a8] sm:$0xff]
        %v2016 = vld [vmem:[%s1808 + $0x4b0] sm:$0xff]
        %v2017 = vld [vmem:[%s1808 + $0x4b8] sm:$0xff]
        %v2018 = vld [vmem:[%s1808 + $0x4c0] sm:$0xff]
        %v2019 = vld [vmem:[%s1808 + $0x4c8] sm:$0xff]
        %v2020 = vld [vmem:[%s1808 + $0x4d0] sm:$0xff]
        %v2021 = vld [vmem:[%s1808 + $0x4d8] sm:$0xff]
        %v2022 = vld [vmem:[%s1808 + $0x4e0] sm:$0xff]
        %v2023 = vld [vmem:[%s1808 + $0x4e8] sm:$0xff]
        %v2024 = vld [vmem:[%s1808 + $0x4f0] sm:$0xff]
        %v2025 = vld [vmem:[%s1808 + $0x4f8] sm:$0xff]
        %v2026 = vld [vmem:[%s1808 + $0x500] sm:$0xff]
        %v2027 = vld [vmem:[%s1808 + $0x508] sm:$0xff]
        %v2028 = vld [vmem:[%s1808 + $0x510] sm:$0xff]
        %v2029 = vld [vmem:[%s1808 + $0x518] sm:$0xff]
        %v2030 = vld [vmem:[%s1808 + $0x520] sm:$0xff]
        %v2031 = vld [vmem:[%s1808 + $0x528] sm:$0xff]
        %v2032 = vld [vmem:[%s1808 + $0x530] sm:$0xff]
        %v2033 = vld [vmem:[%s1808 + $0x538] sm:$0xff]
        %v2034 = vld [vmem:[%s1808 + $0x540] sm:$0xff]
        %v2035 = vld [vmem:[%s1808 + $0x548] sm:$0xff]
        %v2036 = vld [vmem:[%s1808 + $0x550] sm:$0xff]
        %v2037 = vld [vmem:[%s1808 + $0x558] sm:$0xff]
        %v2038 = vld [vmem:[%s1808 + $0x560] sm:$0xff]
        %v2039 = vld [vmem:[%s1808 + $0x568] sm:$0xff]
        %v2040 = vld [vmem:[%s1808 + $0x570] sm:$0xff]
        %v2041 = vld [vmem:[%s1808 + $0x578] sm:$0xff]
        %v2042 = vld [vmem:[%s1808 + $0x580] sm:$0xff]
        %v2043 = vld [vmem:[%s1808 + $0x588] sm:$0xff]
        %v2044 = vld [vmem:[%s1808 + $0x590] sm:$0xff]
        %v2045 = vld [vmem:[%s1808 + $0x598] sm:$0xff]
        %v2046 = vld [vmem:[%s1808 + $0x5a0] sm:$0xff]
        %v2047 = vld [vmem:[%s1808 + $0x5a8] sm:$0xff]
        %v2048 = vld [vmem:[%s1808 + $0x5b0] sm:$0xff]
        %v2049 = vld [vmem:[%s1808 + $0x5b8] sm:$0xff]
        %v2050 = vld [vmem:[%s1808 + $0x5c0] sm:$0xff]
        %v2051 = vld [vmem:[%s1808 + $0x5c8] sm:$0xff]
        %v2052 = vld [vmem:[%s1808 + $0x5d0] sm:$0xff]
        %v2053 = vld [vmem:[%s1808 + $0x5d8] sm:$0xff]
        %v2054 = vld [vmem:[%s1808 + $0x5e0] sm:$0xff]
        %v2055 = vld [vmem:[%s1808 + $0x5e8] sm:$0xff]
        %v2056 = vld [vmem:[%s1808 + $0x5f0] sm:$0xff]
        %v2057 = vld [vmem:[%s1808 + $0x5f8] sm:$0xff]
        %v2058 = vld [vmem:[%s1808 + $0x600] sm:$0xff]
        %v2059 = vld [vmem:[%s1808 + $0x608] sm:$0xff]
        %v2060 = vld [vmem:[%s1808 + $0x610] sm:$0xff]
        %v2061 = vld [vmem:[%s1808 + $0x618] sm:$0xff]
        %v2062 = vld [vmem:[%s1808 + $0x620] sm:$0xff]
        %v2063 = vld [vmem:[%s1808 + $0x628] sm:$0xff]
        %v2064 = vld [vmem:[%s1808 + $0x630] sm:$0xff]
        %v2065 = vld [vmem:[%s1808 + $0x638] sm:$0xff]
        %v2066 = vld [vmem:[%s1808 + $0x640] sm:$0xff]
        %v2067 = vld [vmem:[%s1808 + $0x648] sm:$0xff]
        %v2068 = vld [vmem:[%s1808 + $0x650] sm:$0xff]
        %v2069 = vld [vmem:[%s1808 + $0x658] sm:$0xff]
        %v2070 = vld [vmem:[%s1808 + $0x660] sm:$0xff]
        %v2071 = vld [vmem:[%s1808 + $0x668] sm:$0xff]
        %v2072 = vld [vmem:[%s1808 + $0x670] sm:$0xff]
        %v2073 = vld [vmem:[%s1808 + $0x678] sm:$0xff]
        %v2074 = vld [vmem:[%s1808 + $0x680] sm:$0xff]
        %v2075 = vld [vmem:[%s1808 + $0x688] sm:$0xff]
        %v2076 = vld [vmem:[%s1808 + $0x690] sm:$0xff]
        %v2077 = vld [vmem:[%s1808 + $0x698] sm:$0xff]
        %v2078 = vld [vmem:[%s1808 + $0x6a0] sm:$0xff]
        %v2079 = vld [vmem:[%s1808 + $0x6a8] sm:$0xff]
        %v2080 = vld [vmem:[%s1808 + $0x6b0] sm:$0xff]
        %v2081 = vld [vmem:[%s1808 + $0x6b8] sm:$0xff]
        %v2082 = vld [vmem:[%s1808 + $0x6c0] sm:$0xff]
        %v2083 = vld [vmem:[%s1808 + $0x6c8] sm:$0xff]
        %v2084 = vld [vmem:[%s1808 + $0x6d0] sm:$0xff]
        %v2085 = vld [vmem:[%s1808 + $0x6d8] sm:$0xff]
        %v2086 = vld [vmem:[%s1808 + $0x6e0] sm:$0xff]
        %v2087 = vld [vmem:[%s1808 + $0x6e8] sm:$0xff]
        %v2088 = vld [vmem:[%s1808 + $0x6f0] sm:$0xff]
        %v2089 = vld [vmem:[%s1808 + $0x6f8] sm:$0xff]
        %v2090 = vld [vmem:[%s1808 + $0x700] sm:$0xff]
        %v2091 = vld [vmem:[%s1808 + $0x708] sm:$0xff]
        %v2092 = vld [vmem:[%s1808 + $0x710] sm:$0xff]
        %v2093 = vld [vmem:[%s1808 + $0x718] sm:$0xff]
        %v2094 = vld [vmem:[%s1808 + $0x720] sm:$0xff]
        %v2095 = vld [vmem:[%s1808 + $0x728] sm:$0xff]
        %v2096 = vld [vmem:[%s1808 + $0x730] sm:$0xff]
        %v2097 = vld [vmem:[%s1808 + $0x738] sm:$0xff]
        %v2098 = vld [vmem:[%s1808 + $0x740] sm:$0xff]
        %v2099 = vld [vmem:[%s1808 + $0x748] sm:$0xff]
        %v2100 = vld [vmem:[%s1808 + $0x750] sm:$0xff]
        %v2101 = vld [vmem:[%s1808 + $0x758] sm:$0xff]
        %v2102 = vld [vmem:[%s1808 + $0x760] sm:$0xff]
        %v2103 = vld [vmem:[%s1808 + $0x768] sm:$0xff]
        %v2104 = vld [vmem:[%s1808 + $0x770] sm:$0xff]
        %v2105 = vld [vmem:[%s1808 + $0x778] sm:$0xff]
        %v2106 = vld [vmem:[%s1808 + $0x780] sm:$0xff]
        %v2107 = vld [vmem:[%s1808 + $0x788] sm:$0xff]
        %v2108 = vld [vmem:[%s1808 + $0x790] sm:$0xff]
        %v2109 = vld [vmem:[%s1808 + $0x798] sm:$0xff]
        %v2110 = vld [vmem:[%s1808 + $0x7a0] sm:$0xff]
        %v2111 = vld [vmem:[%s1808 + $0x7a8] sm:$0xff]
        %v2112 = vld [vmem:[%s1808 + $0x7b0] sm:$0xff]
        %v2113 = vld [vmem:[%s1808 + $0x7b8] sm:$0xff]
        %v2114 = vld [vmem:[%s1808 + $0x7c0] sm:$0xff]
        %v2115 = vld [vmem:[%s1808 + $0x7c8] sm:$0xff]
        %v2116 = vld [vmem:[%s1808 + $0x7d0] sm:$0xff]
        %v2117 = vld [vmem:[%s1808 + $0x7d8] sm:$0xff]
        %v2118 = vld [vmem:[%s1808 + $0x7e0] sm:$0xff]
        %v2119 = vld [vmem:[%s1808 + $0x7e8] sm:$0xff]
        %v2120 = vld [vmem:[%s1808 + $0x7f0] sm:$0xff]
        %v2121 = vld [vmem:[%s1808 + $0x7f8] sm:$0xff]
        %v2122 = vld [vmem:[%s1808 + $0x800] sm:$0xff]
        %v2123 = vld [vmem:[%s1808 + $0x808] sm:$0xff]
        %v2124 = vld [vmem:[%s1808 + $0x810] sm:$0xff]
        %v2125 = vld [vmem:[%s1808 + $0x818] sm:$0xff]
        %v2126 = vld [vmem:[%s1808 + $0x820] sm:$0xff]
        %v2127 = vld [vmem:[%s1808 + $0x828] sm:$0xff]
        %v2128 = vld [vmem:[%s1808 + $0x830] sm:$0xff]
        %v2129 = vld [vmem:[%s1808 + $0x838] sm:$0xff]
        %v2130 = vld [vmem:[%s1808 + $0x840] sm:$0xff]
        %v2131 = vld [vmem:[%s1808 + $0x848] sm:$0xff]
        %v2132 = vld [vmem:[%s1808 + $0x850] sm:$0xff]
        %v2133 = vld [vmem:[%s1808 + $0x858] sm:$0xff]
        %v2134 = vld [vmem:[%s1808 + $0x860] sm:$0xff]
        %v2135 = vld [vmem:[%s1808 + $0x868] sm:$0xff]
        %v2136 = vld [vmem:[%s1808 + $0x870] sm:$0xff]
        %v2137 = vld [vmem:[%s1808 + $0x878] sm:$0xff]
        %v2138 = vld [vmem:[%s1808 + $0x880] sm:$0xff]
        %v2139 = vld [vmem:[%s1808 + $0x888] sm:$0xff]
        %v2140 = vld [vmem:[%s1808 + $0x890] sm:$0xff]
        %v2141 = vld [vmem:[%s1808 + $0x898] sm:$0xff]
        %v2142 = vld [vmem:[%s1808 + $0x8a0] sm:$0xff]
        %v2143 = vld [vmem:[%s1808 + $0x8a8] sm:$0xff]
        %v2144 = vld [vmem:[%s1808 + $0x8b0] sm:$0xff]
        %v2145 = vld [vmem:[%s1808 + $0x8b8] sm:$0xff]
        %v2146 = vld [vmem:[%s1808 + $0x8c0] sm:$0xff]
        %v2147 = vld [vmem:[%s1808 + $0x8c8] sm:$0xff]
        %v2148 = vld [vmem:[%s1808 + $0x8d0] sm:$0xff]
        %v2149 = vld [vmem:[%s1808 + $0x8d8] sm:$0xff]
        %v2150 = vld [vmem:[%s1808 + $0x8e0] sm:$0xff]
        %v2151 = vld [vmem:[%s1808 + $0x8e8] sm:$0xff]
        %v2152 = vld [vmem:[%s1808 + $0x8f0] sm:$0xff]
        %v2153 = vld [vmem:[%s1808 + $0x8f8] sm:$0xff]
        %v2154 = vld [vmem:[%s1808 + $0x900] sm:$0xff]
        %v2155 = vld [vmem:[%s1808 + $0x908] sm:$0xff]
        %v2156 = vld [vmem:[%s1808 + $0x910] sm:$0xff]
        %v2157 = vld [vmem:[%s1808 + $0x918] sm:$0xff]
        %v2158 = vld [vmem:[%s1808 + $0x920] sm:$0xff]
        %v2159 = vld [vmem:[%s1808 + $0x928] sm:$0xff]
        %v2160 = vld [vmem:[%s1808 + $0x930] sm:$0xff]
        %v2161 = vld [vmem:[%s1808 + $0x938] sm:$0xff]
        %v2162 = vld [vmem:[%s1808 + $0x940] sm:$0xff]
        %v2163 = vld [vmem:[%s1808 + $0x948] sm:$0xff]
        %v2164 = vld [vmem:[%s1808 + $0x950] sm:$0xff]
        %v2165 = vld [vmem:[%s1808 + $0x958] sm:$0xff]
        %v2166 = vld [vmem:[%s1808 + $0x960] sm:$0xff]
        %v2167 = vld [vmem:[%s1808 + $0x968] sm:$0xff]
        %v2168 = vld [vmem:[%s1808 + $0x970] sm:$0xff]
        %v2169 = vld [vmem:[%s1808 + $0x978] sm:$0xff]
        %v2170 = vld [vmem:[%s1808 + $0x980] sm:$0xff]
        %v2171 = vld [vmem:[%s1808 + $0x988] sm:$0xff]
        %v2172 = vld [vmem:[%s1808 + $0x990] sm:$0xff]
        %v2173 = vld [vmem:[%s1808 + $0x998] sm:$0xff]
        %v2174 = vld [vmem:[%s1808 + $0x9a0] sm:$0xff]
        %v2175 = vld [vmem:[%s1808 + $0x9a8] sm:$0xff]
        %v2176 = vld [vmem:[%s1808 + $0x9b0] sm:$0xff]
        %v2177 = vld [vmem:[%s1808 + $0x9b8] sm:$0xff]
        %v2178 = vld [vmem:[%s1808 + $0x9c0] sm:$0xff]
        %v2179 = vld [vmem:[%s1808 + $0x9c8] sm:$0xff]
        %v2180 = vld [vmem:[%s1808 + $0x9d0] sm:$0xff]
        %v2181 = vld [vmem:[%s1808 + $0x9d8] sm:$0xff]
        %v2182 = vld [vmem:[%s1808 + $0x9e0] sm:$0xff]
        %v2183 = vld [vmem:[%s1808 + $0x9e8] sm:$0xff]
        %v2184 = vld [vmem:[%s1808 + $0x9f0] sm:$0xff]
        %v2185 = vld [vmem:[%s1808 + $0x9f8] sm:$0xff]
        %v2186 = vld [vmem:[%s1808 + $0xa00] sm:$0xff]
        %v2187 = vld [vmem:[%s1808 + $0xa08] sm:$0xff]
        %v2188 = vld [vmem:[%s1808 + $0xa10] sm:$0xff]
        %v2189 = vld [vmem:[%s1808 + $0xa18] sm:$0xff]
        %v2190 = vld [vmem:[%s1808 + $0xa20] sm:$0xff]
        %v2191 = vld [vmem:[%s1808 + $0xa28] sm:$0xff]
        %v2192 = vld [vmem:[%s1808 + $0xa30] sm:$0xff]
        %v2193 = vld [vmem:[%s1808 + $0xa38] sm:$0xff]
        %v2194 = vld [vmem:[%s1808 + $0xa40] sm:$0xff]
        %v2195 = vld [vmem:[%s1808 + $0xa48] sm:$0xff]
        %v2196 = vld [vmem:[%s1808 + $0xa50] sm:$0xff]
        %v2197 = vld [vmem:[%s1808 + $0xa58] sm:$0xff]
        %v2198 = vld [vmem:[%s1808 + $0xa60] sm:$0xff]
        %v2199 = vld [vmem:[%s1808 + $0xa68] sm:$0xff]
        %v2200 = vld [vmem:[%s1808 + $0xa70] sm:$0xff]
        %v2201 = vld [vmem:[%s1808 + $0xa78] sm:$0xff]
        %v2202 = vld [vmem:[%s1808 + $0xa80] sm:$0xff]
        %v2203 = vld [vmem:[%s1808 + $0xa88] sm:$0xff]
        %v2204 = vld [vmem:[%s1808 + $0xa90] sm:$0xff]
        %v2205 = vld [vmem:[%s1808 + $0xa98] sm:$0xff]
        %v2206 = vld [vmem:[%s1808 + $0xaa0] sm:$0xff]
        %v2207 = vld [vmem:[%s1808 + $0xaa8] sm:$0xff]
        %v2208 = vld [vmem:[%s1808 + $0xab0] sm:$0xff]
        %v2209 = vld [vmem:[%s1808 + $0xab8] sm:$0xff]
        %v2210 = vld [vmem:[%s1808 + $0xac0] sm:$0xff]
        %v2211 = vld [vmem:[%s1808 + $0xac8] sm:$0xff]
        %v2212 = vld [vmem:[%s1808 + $0xad0] sm:$0xff]
        %v2213 = vld [vmem:[%s1808 + $0xad8] sm:$0xff]
        %v2214 = vld [vmem:[%s1808 + $0xae0] sm:$0xff]
        %v2215 = vld [vmem:[%s1808 + $0xae8] sm:$0xff]
        %v2216 = vld [vmem:[%s1808 + $0xaf0] sm:$0xff]
        %v2217 = vld [vmem:[%s1808 + $0xaf8] sm:$0xff]
        %v2218 = vld [vmem:[%s1808 + $0xb00] sm:$0xff]
        %v2219 = vld [vmem:[%s1808 + $0xb08] sm:$0xff]
        %v2220 = vld [vmem:[%s1808 + $0xb10] sm:$0xff]
        %v2221 = vld [vmem:[%s1808 + $0xb18] sm:$0xff]
        %v2222 = vld [vmem:[%s1808 + $0xb20] sm:$0xff]
        %v2223 = vld [vmem:[%s1808 + $0xb28] sm:$0xff]
        %v2224 = vld [vmem:[%s1808 + $0xb30] sm:$0xff]
        %v2225 = vld [vmem:[%s1808 + $0xb38] sm:$0xff]
        %v2226 = vld [vmem:[%s1808 + $0xb40] sm:$0xff]
        %v2227 = vld [vmem:[%s1808 + $0xb48] sm:$0xff]
        %v2228 = vld [vmem:[%s1808 + $0xb50] sm:$0xff]
        %v2229 = vld [vmem:[%s1808 + $0xb58] sm:$0xff]
        %v2230 = vld [vmem:[%s1808 + $0xb60] sm:$0xff]
        %v2231 = vld [vmem:[%s1808 + $0xb68] sm:$0xff]
        %v2232 = vld [vmem:[%s1808 + $0xb70] sm:$0xff]
        %v2233 = vld [vmem:[%s1808 + $0xb78] sm:$0xff]
        %v2234 = vld [vmem:[%s1808 + $0xb80] sm:$0xff]
        %v2235 = vld [vmem:[%s1808 + $0xb88] sm:$0xff]
        %v2236 = vld [vmem:[%s1808 + $0xb90] sm:$0xff]
        %v2237 = vld [vmem:[%s1808 + $0xb98] sm:$0xff]
        %v2238 = vld [vmem:[%s1808 + $0xba0] sm:$0xff]
        %v2239 = vld [vmem:[%s1808 + $0xba8] sm:$0xff]
        %v2240 = vld [vmem:[%s1808 + $0xbb0] sm:$0xff]
        %v2241 = vld [vmem:[%s1808 + $0xbb8] sm:$0xff]
        %v2242 = vld [vmem:[%s1808 + $0xbc0] sm:$0xff]
        %v2243 = vld [vmem:[%s1808 + $0xbc8] sm:$0xff]
        %v2244 = vld [vmem:[%s1808 + $0xbd0] sm:$0xff]
        %v2245 = vld [vmem:[%s1808 + $0xbd8] sm:$0xff]
        %v2246 = vld [vmem:[%s1808 + $0xbe0] sm:$0xff]
        %v2247 = vld [vmem:[%s1808 + $0xbe8] sm:$0xff]
        %v2248 = vld [vmem:[%s1808 + $0xbf0] sm:$0xff]
        %v2249 = vld [vmem:[%s1808 + $0xbf8] sm:$0xff]
        %v2250 = vld [vmem:[%s1808 + $0xc00] sm:$0xff]
        %v2251 = vld [vmem:[%s1808 + $0xc08] sm:$0xff]
        %v2252 = vld [vmem:[%s1808 + $0xc10] sm:$0xff]
        %v2253 = vld [vmem:[%s1808 + $0xc18] sm:$0xff]
        %v2254 = vld [vmem:[%s1808 + $0xc20] sm:$0xff]
        %v2255 = vld [vmem:[%s1808 + $0xc28] sm:$0xff]
        %v2256 = vld [vmem:[%s1808 + $0xc30] sm:$0xff]
        %v2257 = vld [vmem:[%s1808 + $0xc38] sm:$0xff]
        %v2258 = vld [vmem:[%s1808 + $0xc40] sm:$0xff]
        %v2259 = vld [vmem:[%s1808 + $0xc48] sm:$0xff]
        %v2260 = vld [vmem:[%s1808 + $0xc50] sm:$0xff]
        %v2261 = vld [vmem:[%s1808 + $0xc58] sm:$0xff]
        %v2262 = vld [vmem:[%s1808 + $0xc60] sm:$0xff]
        %v2263 = vld [vmem:[%s1808 + $0xc68] sm:$0xff]
        %v2264 = vld [vmem:[%s1808 + $0xc70] sm:$0xff]
        %v2265 = vld [vmem:[%s1808 + $0xc78] sm:$0xff]
        %v2266 = vld [vmem:[%s1808 + $0xc80] sm:$0xff]
        %v2267 = vld [vmem:[%s1808 + $0xc88] sm:$0xff]
        %v2268 = vld [vmem:[%s1808 + $0xc90] sm:$0xff]
        %v2269 = vld [vmem:[%s1808 + $0xc98] sm:$0xff]
        %v2270 = vld [vmem:[%s1808 + $0xca0] sm:$0xff]
        %v2271 = vld [vmem:[%s1808 + $0xca8] sm:$0xff]
        %v2272 = vld [vmem:[%s1808 + $0xcb0] sm:$0xff]
        %v2273 = vld [vmem:[%s1808 + $0xcb8] sm:$0xff]
        %v2274 = vld [vmem:[%s1808 + $0xcc0] sm:$0xff]
        %v2275 = vld [vmem:[%s1808 + $0xcc8] sm:$0xff]
        %v2276 = vld [vmem:[%s1808 + $0xcd0] sm:$0xff]
        %v2277 = vld [vmem:[%s1808 + $0xcd8] sm:$0xff]
        %v2278 = vld [vmem:[%s1808 + $0xce0] sm:$0xff]
        %v2279 = vld [vmem:[%s1808 + $0xce8] sm:$0xff]
        %v2280 = vld [vmem:[%s1808 + $0xcf0] sm:$0xff]
        %v2281 = vld [vmem:[%s1808 + $0xcf8] sm:$0xff]
        %v2282 = vld [vmem:[%s1808 + $0xd00] sm:$0xff]
        %v2283 = vld [vmem:[%s1808 + $0xd08] sm:$0xff]
        %v2284 = vld [vmem:[%s1808 + $0xd10] sm:$0xff]
        %v2285 = vld [vmem:[%s1808 + $0xd18] sm:$0xff]
        %v2286 = vld [vmem:[%s1808 + $0xd20] sm:$0xff]
        %v2287 = vld [vmem:[%s1808 + $0xd28] sm:$0xff]
        %v2288 = vld [vmem:[%s1808 + $0xd30] sm:$0xff]
        %v2289 = vld [vmem:[%s1808 + $0xd38] sm:$0xff]
        %v2290 = vld [vmem:[%s1808 + $0xd40] sm:$0xff]
        %v2291 = vld [vmem:[%s1808 + $0xd48] sm:$0xff]
        %v2292 = vld [vmem:[%s1808 + $0xd50] sm:$0xff]
        %v2293 = vld [vmem:[%s1808 + $0xd58] sm:$0xff]
        %v2294 = vld [vmem:[%s1808 + $0xd60] sm:$0xff]
        %v2295 = vld [vmem:[%s1808 + $0xd68] sm:$0xff]
        %v2296 = vld [vmem:[%s1808 + $0xd70] sm:$0xff]
        %v2297 = vld [vmem:[%s1808 + $0xd78] sm:$0xff]
        %v2298 = vld [vmem:[%s1808 + $0xd80] sm:$0xff]
        %v2299 = vld [vmem:[%s1808 + $0xd88] sm:$0xff]
        %v2300 = vld [vmem:[%s1808 + $0xd90] sm:$0xff]
        %v2301 = vld [vmem:[%s1808 + $0xd98] sm:$0xff]
        %v2302 = vld [vmem:[%s1808 + $0xda0] sm:$0xff]
        %v2303 = vld [vmem:[%s1808 + $0xda8] sm:$0xff]
        %v2304 = vld [vmem:[%s1808 + $0xdb0] sm:$0xff]
        %v2305 = vld [vmem:[%s1808 + $0xdb8] sm:$0xff]
        %v2306 = vld [vmem:[%s1808 + $0xdc0] sm:$0xff]
        %v2307 = vld [vmem:[%s1808 + $0xdc8] sm:$0xff]
        %v2308 = vld [vmem:[%s1808 + $0xdd0] sm:$0xff]
        %v2309 = vld [vmem:[%s1808 + $0xdd8] sm:$0xff]
        %v2310 = vld [vmem:[%s1808 + $0xde0] sm:$0xff]
        %v2311 = vld [vmem:[%s1808 + $0xde8] sm:$0xff]
        %v2312 = vld [vmem:[%s1808 + $0xdf0] sm:$0xff]
        %v2313 = vld [vmem:[%s1808 + $0xdf8] sm:$0xff]
        %v2314 = vld [vmem:[%s1808 + $0xe00] sm:$0xff]
        %v2315 = vld [vmem:[%s1808 + $0xe08] sm:$0xff]
        %v2316 = vld [vmem:[%s1808 + $0xe10] sm:$0xff]
        %v2317 = vld [vmem:[%s1808 + $0xe18] sm:$0xff]
        %v2318 = vld [vmem:[%s1808 + $0xe20] sm:$0xff]
        %v2319 = vld [vmem:[%s1808 + $0xe28] sm:$0xff]
        %v2320 = vld [vmem:[%s1808 + $0xe30] sm:$0xff]
        %v2321 = vld [vmem:[%s1808 + $0xe38] sm:$0xff]
        %v2322 = vld [vmem:[%s1808 + $0xe40] sm:$0xff]
        %v2323 = vld [vmem:[%s1808 + $0xe48] sm:$0xff]
        %v2324 = vld [vmem:[%s1808 + $0xe50] sm:$0xff]
        %v2325 = vld [vmem:[%s1808 + $0xe58] sm:$0xff]
        %v2326 = vld [vmem:[%s1808 + $0xe60] sm:$0xff]
        %v2327 = vld [vmem:[%s1808 + $0xe68] sm:$0xff]
        %v2328 = vld [vmem:[%s1808 + $0xe70] sm:$0xff]
        %v2329 = vld [vmem:[%s1808 + $0xe78] sm:$0xff]
        %v2330 = vld [vmem:[%s1808 + $0xe80] sm:$0xff]
        %v2331 = vld [vmem:[%s1808 + $0xe88] sm:$0xff]
        %v2332 = vld [vmem:[%s1808 + $0xe90] sm:$0xff]
        %v2333 = vld [vmem:[%s1808 + $0xe98] sm:$0xff]
        %v2334 = vld [vmem:[%s1808 + $0xea0] sm:$0xff]
        %v2335 = vld [vmem:[%s1808 + $0xea8] sm:$0xff]
        %v2336 = vld [vmem:[%s1808 + $0xeb0] sm:$0xff]
        %v2337 = vld [vmem:[%s1808 + $0xeb8] sm:$0xff]
        %v2338 = vld [vmem:[%s1808 + $0xec0] sm:$0xff]
        %v2339 = vld [vmem:[%s1808 + $0xec8] sm:$0xff]
        %v2340 = vld [vmem:[%s1808 + $0xed0] sm:$0xff]
        %v2341 = vld [vmem:[%s1808 + $0xed8] sm:$0xff]
        %v2342 = vld [vmem:[%s1808 + $0xee0] sm:$0xff]
        %v2343 = vld [vmem:[%s1808 + $0xee8] sm:$0xff]
        %v2344 = vld [vmem:[%s1808 + $0xef0] sm:$0xff]
        %v2345 = vld [vmem:[%s1808 + $0xef8] sm:$0xff]
        %v2346 = vld [vmem:[%s1808 + $0xf00] sm:$0xff]
        %v2347 = vld [vmem:[%s1808 + $0xf08] sm:$0xff]
        %v2348 = vld [vmem:[%s1808 + $0xf10] sm:$0xff]
        %v2349 = vld [vmem:[%s1808 + $0xf18] sm:$0xff]
        %v2350 = vld [vmem:[%s1808 + $0xf20] sm:$0xff]
        %v2351 = vld [vmem:[%s1808 + $0xf28] sm:$0xff]
        %v2352 = vld [vmem:[%s1808 + $0xf30] sm:$0xff]
        %v2353 = vld [vmem:[%s1808 + $0xf38] sm:$0xff]
        %v2354 = vld [vmem:[%s1808 + $0xf40] sm:$0xff]
        %v2355 = vld [vmem:[%s1808 + $0xf48] sm:$0xff]
        %v2356 = vld [vmem:[%s1808 + $0xf50] sm:$0xff]
        %v2357 = vld [vmem:[%s1808 + $0xf58] sm:$0xff]
        %v2358 = vld [vmem:[%s1808 + $0xf60] sm:$0xff]
        %v2359 = vld [vmem:[%s1808 + $0xf68] sm:$0xff]
        %v2360 = vld [vmem:[%s1808 + $0xf70] sm:$0xff]
        %v2361 = vld [vmem:[%s1808 + $0xf78] sm:$0xff]
        %v2362 = vld [vmem:[%s1808 + $0xf80] sm:$0xff]
        %v2363 = vld [vmem:[%s1808 + $0xf88] sm:$0xff]
        %v2364 = vld [vmem:[%s1808 + $0xf90] sm:$0xff]
        %v2365 = vld [vmem:[%s1808 + $0xf98] sm:$0xff]
        %v2366 = vld [vmem:[%s1808 + $0xfa0] sm:$0xff]
        %v2367 = vld [vmem:[%s1808 + $0xfa8] sm:$0xff]
        %v2368 = vld [vmem:[%s1808 + $0xfb0] sm:$0xff]
        %v2369 = vld [vmem:[%s1808 + $0xfb8] sm:$0xff]
        %v2370 = vld [vmem:[%s1808 + $0xfc0] sm:$0xff]
        %v2371 = vld [vmem:[%s1808 + $0xfc8] sm:$0xff]
        %v2372 = vld [vmem:[%s1808 + $0xfd0] sm:$0xff]
        %v2373 = vld [vmem:[%s1808 + $0xfd8] sm:$0xff]
        %v2374 = vld [vmem:[%s1808 + $0xfe0] sm:$0xff]
        %v2375 = vld [vmem:[%s1808 + $0xfe8] sm:$0xff]
        %v2376 = vld [vmem:[%s1808 + $0xff0] sm:$0xff]
        %v2377 = vld [vmem:[%s1808 + $0xff8] sm:$0xff]
        %v2378 = vld [vmem:[%s1808 + $0x1000] sm:$0xff]
        %v2379 = vld [vmem:[%s1808 + $0x1008] sm:$0xff]
        %v2380 = vld [vmem:[%s1808 + $0x1010] sm:$0xff]
        %v2381 = vld [vmem:[%s1808 + $0x1018] sm:$0xff]
        %v2382 = vld [vmem:[%s1808 + $0x1020] sm:$0xff]
        %v2383 = vld [vmem:[%s1808 + $0x1028] sm:$0xff]
        %v2384 = vld [vmem:[%s1808 + $0x1030] sm:$0xff]
        %v2385 = vld [vmem:[%s1808 + $0x1038] sm:$0xff]
        %v2386 = vld [vmem:[%s1808 + $0x1040] sm:$0xff]
        %v2387 = vld [vmem:[%s1808 + $0x1048] sm:$0xff]
        %v2388 = vld [vmem:[%s1808 + $0x1050] sm:$0xff]
        %v2389 = vld [vmem:[%s1808 + $0x1058] sm:$0xff]
        %v2390 = vld [vmem:[%s1808 + $0x1060] sm:$0xff]
        %v2391 = vld [vmem:[%s1808 + $0x1068] sm:$0xff]
        %v2392 = vld [vmem:[%s1808 + $0x1070] sm:$0xff]
        %v2393 = vld [vmem:[%s1808 + $0x1078] sm:$0xff]
        %v2394 = vld [vmem:[%s1808 + $0x1080] sm:$0xff]
        %v2395 = vld [vmem:[%s1808 + $0x1088] sm:$0xff]
        %v2396 = vld [vmem:[%s1808 + $0x1090] sm:$0xff]
        %v2397 = vld [vmem:[%s1808 + $0x1098] sm:$0xff]
        %v2398 = vld [vmem:[%s1808 + $0x10a0] sm:$0xff]
        %v2399 = vld [vmem:[%s1808 + $0x10a8] sm:$0xff]
        %v2400 = vld [vmem:[%s1808 + $0x10b0] sm:$0xff]
        %v2401 = vld [vmem:[%s1808 + $0x10b8] sm:$0xff]
        %v2402 = vld [vmem:[%s1808 + $0x10c0] sm:$0xff]
        %v2403 = vld [vmem:[%s1808 + $0x10c8] sm:$0xff]
        %v2404 = vld [vmem:[%s1808 + $0x10d0] sm:$0xff]
        %v2405 = vld [vmem:[%s1808 + $0x10d8] sm:$0xff]
        %v2406 = vld [vmem:[%s1808 + $0x10e0] sm:$0xff]
        %v2407 = vld [vmem:[%s1808 + $0x10e8] sm:$0xff]
        %v2408 = vld [vmem:[%s1808 + $0x10f0] sm:$0xff]
        %v2409 = vld [vmem:[%s1808 + $0x10f8] sm:$0xff]
        %v2410 = vld [vmem:[%s1808 + $0x1100] sm:$0xff]
        %v2411 = vld [vmem:[%s1808 + $0x1108] sm:$0xff]
        %v2412 = vld [vmem:[%s1808 + $0x1110] sm:$0xff]
        %v2413 = vld [vmem:[%s1808 + $0x1118] sm:$0xff]
        %v2414 = vld [vmem:[%s1808 + $0x1120] sm:$0xff]
        %v2415 = vld [vmem:[%s1808 + $0x1128] sm:$0xff]
        %v2416 = vld [vmem:[%s1808 + $0x1130] sm:$0xff]
        %v2417 = vld [vmem:[%s1808 + $0x1138] sm:$0xff]
        %v2418 = vld [vmem:[%s1808 + $0x1140] sm:$0xff]
        %v2419 = vld [vmem:[%s1808 + $0x1148] sm:$0xff]
        %v2420 = vld [vmem:[%s1808 + $0x1150] sm:$0xff]
        %v2421 = vld [vmem:[%s1808 + $0x1158] sm:$0xff]
        %v2422 = vld [vmem:[%s1808 + $0x1160] sm:$0xff]
        %v2423 = vld [vmem:[%s1808 + $0x1168] sm:$0xff]
        %v2424 = vld [vmem:[%s1808 + $0x1170] sm:$0xff]
        %v2425 = vld [vmem:[%s1808 + $0x1178] sm:$0xff]
        %v2426 = vld [vmem:[%s1808 + $0x1180] sm:$0xff]
        %v2427 = vld [vmem:[%s1808 + $0x1188] sm:$0xff]
        %v2428 = vld [vmem:[%s1808 + $0x1190] sm:$0xff]
        %v2429 = vld [vmem:[%s1808 + $0x1198] sm:$0xff]
        %v2430 = vld [vmem:[%s1808 + $0x11a0] sm:$0xff]
        %v2431 = vld [vmem:[%s1808 + $0x11a8] sm:$0xff]
        %v2432 = vld [vmem:[%s1808 + $0x11b0] sm:$0xff]
        %v2433 = vld [vmem:[%s1808 + $0x11b8] sm:$0xff]
        %v2434 = vld [vmem:[%s1808 + $0x11c0] sm:$0xff]
        %v2435 = vld [vmem:[%s1808 + $0x11c8] sm:$0xff]
        %v2436 = vld [vmem:[%s1808 + $0x11d0] sm:$0xff]
        %v2437 = vld [vmem:[%s1808 + $0x11d8] sm:$0xff]
        %v2438 = vld [vmem:[%s1808 + $0x11e0] sm:$0xff]
        %v2439 = vld [vmem:[%s1808 + $0x11e8] sm:$0xff]
        %v2440 = vld [vmem:[%s1808 + $0x11f0] sm:$0xff]
        %v2441 = vld [vmem:[%s1808 + $0x11f8] sm:$0xff]
        %v2442 = vld [vmem:[%s1808 + $0x1200] sm:$0xff]
        %v2443 = vld [vmem:[%s1808 + $0x1208] sm:$0xff]
        %v2444 = vld [vmem:[%s1808 + $0x1210] sm:$0xff]
        %v2445 = vld [vmem:[%s1808 + $0x1218] sm:$0xff]
        %v2446 = vld [vmem:[%s1808 + $0x1220] sm:$0xff]
        %v2447 = vld [vmem:[%s1808 + $0x1228] sm:$0xff]
        %v2448 = vld [vmem:[%s1808 + $0x1230] sm:$0xff]
        %v2449 = vld [vmem:[%s1808 + $0x1238] sm:$0xff]
        %v2450 = vld [vmem:[%s1808 + $0x1240] sm:$0xff]
        %v2451 = vld [vmem:[%s1808 + $0x1248] sm:$0xff]
        %v2452 = vld [vmem:[%s1808 + $0x1250] sm:$0xff]
        %v2453 = vld [vmem:[%s1808 + $0x1258] sm:$0xff]
        %v2454 = vld [vmem:[%s1808 + $0x1260] sm:$0xff]
        %v2455 = vld [vmem:[%s1808 + $0x1268] sm:$0xff]
        %v2456 = vld [vmem:[%s1808 + $0x1270] sm:$0xff]
        %v2457 = vld [vmem:[%s1808 + $0x1278] sm:$0xff]
        %v2458 = vld [vmem:[%s1808 + $0x1280] sm:$0xff]
        %v2459 = vld [vmem:[%s1808 + $0x1288] sm:$0xff]
        %v2460 = vld [vmem:[%s1808 + $0x1290] sm:$0xff]
        %v2461 = vld [vmem:[%s1808 + $0x1298] sm:$0xff]
        %v2462 = vld [vmem:[%s1808 + $0x12a0] sm:$0xff]
        %v2463 = vld [vmem:[%s1808 + $0x12a8] sm:$0xff]
        %v2464 = vld [vmem:[%s1808 + $0x12b0] sm:$0xff]
        %v2465 = vld [vmem:[%s1808 + $0x12b8] sm:$0xff]
        %v2466 = vld [vmem:[%s1808 + $0x12c0] sm:$0xff]
        %v2467 = vld [vmem:[%s1808 + $0x12c8] sm:$0xff]
        %v2468 = vld [vmem:[%s1808 + $0x12d0] sm:$0xff]
        %v2469 = vld [vmem:[%s1808 + $0x12d8] sm:$0xff]
        %v2470 = vld [vmem:[%s1808 + $0x12e0] sm:$0xff]
        %v2471 = vld [vmem:[%s1808 + $0x12e8] sm:$0xff]
        %v2472 = vld [vmem:[%s1808 + $0x12f0] sm:$0xff]
        %v2473 = vld [vmem:[%s1808 + $0x12f8] sm:$0xff]
        %v2474 = vld [vmem:[%s1808 + $0x1300] sm:$0xff]
        %v2475 = vld [vmem:[%s1808 + $0x1308] sm:$0xff]
        %v2476 = vld [vmem:[%s1808 + $0x1310] sm:$0xff]
        %v2477 = vld [vmem:[%s1808 + $0x1318] sm:$0xff]
        %v2478 = vld [vmem:[%s1808 + $0x1320] sm:$0xff]
        %v2479 = vld [vmem:[%s1808 + $0x1328] sm:$0xff]
        %v2480 = vld [vmem:[%s1808 + $0x1330] sm:$0xff]
        %v2481 = vld [vmem:[%s1808 + $0x1338] sm:$0xff]
        %v2482 = vld [vmem:[%s1808 + $0x1340] sm:$0xff]
        %v2483 = vld [vmem:[%s1808 + $0x1348] sm:$0xff]
        %v2484 = vld [vmem:[%s1808 + $0x1350] sm:$0xff]
        %v2485 = vld [vmem:[%s1808 + $0x1358] sm:$0xff]
        %v2486 = vld [vmem:[%s1808 + $0x1360] sm:$0xff]
        %v2487 = vld [vmem:[%s1808 + $0x1368] sm:$0xff]
        %v2488 = vld [vmem:[%s1808 + $0x1370] sm:$0xff]
        %v2489 = vld [vmem:[%s1808 + $0x1378] sm:$0xff]
        %v2490 = vld [vmem:[%s1808 + $0x1380] sm:$0xff]
        %v2491 = vld [vmem:[%s1808 + $0x1388] sm:$0xff]
        %v2492 = vld [vmem:[%s1808 + $0x1390] sm:$0xff]
        %v2493 = vld [vmem:[%s1808 + $0x1398] sm:$0xff]
        %v2494 = vld [vmem:[%s1808 + $0x13a0] sm:$0xff]
        %v2495 = vld [vmem:[%s1808 + $0x13a8] sm:$0xff]
        %v2496 = vld [vmem:[%s1808 + $0x13b0] sm:$0xff]
        %v2497 = vld [vmem:[%s1808 + $0x13b8] sm:$0xff]
        %v2498 = vld [vmem:[%s1808 + $0x13c0] sm:$0xff]
        %v2499 = vld [vmem:[%s1808 + $0x13c8] sm:$0xff]
        %v2500 = vld [vmem:[%s1808 + $0x13d0] sm:$0xff]
        %v2501 = vld [vmem:[%s1808 + $0x13d8] sm:$0xff]
        %v2502 = vld [vmem:[%s1808 + $0x13e0] sm:$0xff]
        %v2503 = vld [vmem:[%s1808 + $0x13e8] sm:$0xff]
        %v2504 = vld [vmem:[%s1808 + $0x13f0] sm:$0xff]
        %v2505 = vld [vmem:[%s1808 + $0x13f8] sm:$0xff]
        %v2506 = vld [vmem:[%s1808 + $0x1400] sm:$0xff]
        %v2507 = vld [vmem:[%s1808 + $0x1408] sm:$0xff]
        %v2508 = vld [vmem:[%s1808 + $0x1410] sm:$0xff]
        %v2509 = vld [vmem:[%s1808 + $0x1418] sm:$0xff]
        %v2510 = vld [vmem:[%s1808 + $0x1420] sm:$0xff]
        %v2511 = vld [vmem:[%s1808 + $0x1428] sm:$0xff]
        %v2512 = vld [vmem:[%s1808 + $0x1430] sm:$0xff]
        %v2513 = vld [vmem:[%s1808 + $0x1438] sm:$0xff]
        %v2514 = vld [vmem:[%s1808 + $0x1440] sm:$0xff]
        %v2515 = vld [vmem:[%s1808 + $0x1448] sm:$0xff]
        %v2516 = vld [vmem:[%s1808 + $0x1450] sm:$0xff]
        %v2517 = vld [vmem:[%s1808 + $0x1458] sm:$0xff]
        %v2518 = vld [vmem:[%s1808 + $0x1460] sm:$0xff]
        %v2519 = vld [vmem:[%s1808 + $0x1468] sm:$0xff]
        %v2520 = vld [vmem:[%s1808 + $0x1470] sm:$0xff]
        %v2521 = vld [vmem:[%s1808 + $0x1478] sm:$0xff]
        %v2522 = vld [vmem:[%s1808 + $0x1480] sm:$0xff]
        %v2523 = vld [vmem:[%s1808 + $0x1488] sm:$0xff]
        %v2524 = vld [vmem:[%s1808 + $0x1490] sm:$0xff]
        %v2525 = vld [vmem:[%s1808 + $0x1498] sm:$0xff]
        %v2526 = vld [vmem:[%s1808 + $0x14a0] sm:$0xff]
        %v2527 = vld [vmem:[%s1808 + $0x14a8] sm:$0xff]
        %v2528 = vld [vmem:[%s1808 + $0x14b0] sm:$0xff]
        %v2529 = vld [vmem:[%s1808 + $0x14b8] sm:$0xff]
        %v2530 = vld [vmem:[%s1808 + $0x14c0] sm:$0xff]
        %v2531 = vld [vmem:[%s1808 + $0x14c8] sm:$0xff]
        %v2532 = vld [vmem:[%s1808 + $0x14d0] sm:$0xff]
        %v2533 = vld [vmem:[%s1808 + $0x14d8] sm:$0xff]
        %v2534 = vld [vmem:[%s1808 + $0x14e0] sm:$0xff]
        %v2535 = vld [vmem:[%s1808 + $0x14e8] sm:$0xff]
        %v2536 = vld [vmem:[%s1808 + $0x14f0] sm:$0xff]
        %v2537 = vld [vmem:[%s1808 + $0x14f8] sm:$0xff]
        %v2538 = vld [vmem:[%s1808 + $0x1500] sm:$0xff]
        %v2539 = vld [vmem:[%s1808 + $0x1508] sm:$0xff]
        %v2540 = vld [vmem:[%s1808 + $0x1510] sm:$0xff]
        %v2541 = vld [vmem:[%s1808 + $0x1518] sm:$0xff]
        %v2542 = vld [vmem:[%s1808 + $0x1520] sm:$0xff]
        %v2543 = vld [vmem:[%s1808 + $0x1528] sm:$0xff]
        %v2544 = vld [vmem:[%s1808 + $0x1530] sm:$0xff]
        %v2545 = vld [vmem:[%s1808 + $0x1538] sm:$0xff]
        %v2546 = vld [vmem:[%s1808 + $0x1540] sm:$0xff]
        %v2547 = vld [vmem:[%s1808 + $0x1548] sm:$0xff]
        %v2548 = vld [vmem:[%s1808 + $0x1550] sm:$0xff]
        %v2549 = vld [vmem:[%s1808 + $0x1558] sm:$0xff]
        %v2550 = vld [vmem:[%s1808 + $0x1560] sm:$0xff]
        %v2551 = vld [vmem:[%s1808 + $0x1568] sm:$0xff]
        %v2552 = vld [vmem:[%s1808 + $0x1570] sm:$0xff]
        %v2553 = vld [vmem:[%s1808 + $0x1578] sm:$0xff]
        %v2554 = vld [vmem:[%s1808 + $0x1580] sm:$0xff]
        %v2555 = vld [vmem:[%s1808 + $0x1588] sm:$0xff]
        %v2556 = vld [vmem:[%s1808 + $0x1590] sm:$0xff]
        %v2557 = vld [vmem:[%s1808 + $0x1598] sm:$0xff]
        %v2558 = vld [vmem:[%s1808 + $0x15a0] sm:$0xff]
        %v2559 = vld [vmem:[%s1808 + $0x15a8] sm:$0xff]
        %v2560 = vld [vmem:[%s1808 + $0x15b0] sm:$0xff]
        %v2561 = vld [vmem:[%s1808 + $0x15b8] sm:$0xff]
        %v2562 = vld [vmem:[%s1808 + $0x15c0] sm:$0xff]
        %v2563 = vld [vmem:[%s1808 + $0x15c8] sm:$0xff]
        %v2564 = vld [vmem:[%s1808 + $0x15d0] sm:$0xff]
        %v2565 = vld [vmem:[%s1808 + $0x15d8] sm:$0xff]
        %v2566 = vld [vmem:[%s1808 + $0x15e0] sm:$0xff]
        %v2567 = vld [vmem:[%s1808 + $0x15e8] sm:$0xff]
        %v2568 = vld [vmem:[%s1808 + $0x15f0] sm:$0xff]
        %v2569 = vld [vmem:[%s1808 + $0x15f8] sm:$0xff]
        %v2570 = vld [vmem:[%s1808 + $0x1600] sm:$0xff]
        %v2571 = vld [vmem:[%s1808 + $0x1608] sm:$0xff]
        %v2572 = vld [vmem:[%s1808 + $0x1610] sm:$0xff]
        %v2573 = vld [vmem:[%s1808 + $0x1618] sm:$0xff]
        %v2574 = vld [vmem:[%s1808 + $0x1620] sm:$0xff]
        %v2575 = vld [vmem:[%s1808 + $0x1628] sm:$0xff]
        %v2576 = vld [vmem:[%s1808 + $0x1630] sm:$0xff]
        %v2577 = vld [vmem:[%s1808 + $0x1638] sm:$0xff]
        %v2578 = vld [vmem:[%s1808 + $0x1640] sm:$0xff]
        %v2579 = vld [vmem:[%s1808 + $0x1648] sm:$0xff]
        %v2580 = vld [vmem:[%s1808 + $0x1650] sm:$0xff]
        %v2581 = vld [vmem:[%s1808 + $0x1658] sm:$0xff]
        %v2582 = vld [vmem:[%s1808 + $0x1660] sm:$0xff]
        %v2583 = vld [vmem:[%s1808 + $0x1668] sm:$0xff]
        %v2584 = vld [vmem:[%s1808 + $0x1670] sm:$0xff]
        %v2585 = vld [vmem:[%s1808 + $0x1678] sm:$0xff]
        %v2586 = vld [vmem:[%s1808 + $0x1680] sm:$0xff]
        %v2587 = vld [vmem:[%s1808 + $0x1688] sm:$0xff]
        %v2588 = vld [vmem:[%s1808 + $0x1690] sm:$0xff]
        %v2589 = vld [vmem:[%s1808 + $0x1698] sm:$0xff]
        %v2590 = vld [vmem:[%s1808 + $0x16a0] sm:$0xff]
        %v2591 = vld [vmem:[%s1808 + $0x16a8] sm:$0xff]
        %v2592 = vld [vmem:[%s1808 + $0x16b0] sm:$0xff]
        %v2593 = vld [vmem:[%s1808 + $0x16b8] sm:$0xff]
        %v2594 = vld [vmem:[%s1808 + $0x16c0] sm:$0xff]
        %v2595 = vld [vmem:[%s1808 + $0x16c8] sm:$0xff]
        %v2596 = vld [vmem:[%s1808 + $0x16d0] sm:$0xff]
        %v2597 = vld [vmem:[%s1808 + $0x16d8] sm:$0xff]
        %v2598 = vld [vmem:[%s1808 + $0x16e0] sm:$0xff]
        %v2599 = vld [vmem:[%s1808 + $0x16e8] sm:$0xff]
        %v2600 = vld [vmem:[%s1808 + $0x16f0] sm:$0xff]
        %v2601 = vld [vmem:[%s1808 + $0x16f8] sm:$0xff]
        %v2602 = vld [vmem:[%s1808 + $0x1700] sm:$0xff]
        %v2603 = vld [vmem:[%s1808 + $0x1708] sm:$0xff]
        %v2604 = vld [vmem:[%s1808 + $0x1710] sm:$0xff]
        %v2605 = vld [vmem:[%s1808 + $0x1718] sm:$0xff]
        %v2606 = vld [vmem:[%s1808 + $0x1720] sm:$0xff]
        %v2607 = vld [vmem:[%s1808 + $0x1728] sm:$0xff]
        %v2608 = vld [vmem:[%s1808 + $0x1730] sm:$0xff]
        %v2609 = vld [vmem:[%s1808 + $0x1738] sm:$0xff]
        %v2610 = vld [vmem:[%s1808 + $0x1740] sm:$0xff]
        %v2611 = vld [vmem:[%s1808 + $0x1748] sm:$0xff]
        %v2612 = vld [vmem:[%s1808 + $0x1750] sm:$0xff]
        %v2613 = vld [vmem:[%s1808 + $0x1758] sm:$0xff]
        %v2614 = vld [vmem:[%s1808 + $0x1760] sm:$0xff]
        %v2615 = vld [vmem:[%s1808 + $0x1768] sm:$0xff]
        %v2616 = vld [vmem:[%s1808 + $0x1770] sm:$0xff]
        %v2617 = vld [vmem:[%s1808 + $0x1778] sm:$0xff]
        %v2618 = vld [vmem:[%s1808 + $0x1780] sm:$0xff]
        %v2619 = vld [vmem:[%s1808 + $0x1788] sm:$0xff]
        %v2620 = vld [vmem:[%s1808 + $0x1790] sm:$0xff]
        %v2621 = vld [vmem:[%s1808 + $0x1798] sm:$0xff]
        %v2622 = vld [vmem:[%s1808 + $0x17a0] sm:$0xff]
        %v2623 = vld [vmem:[%s1808 + $0x17a8] sm:$0xff]
        %v2624 = vld [vmem:[%s1808 + $0x17b0] sm:$0xff]
        %v2625 = vld [vmem:[%s1808 + $0x17b8] sm:$0xff]
        %v2626 = vld [vmem:[%s1808 + $0x17c0] sm:$0xff]
        %v2627 = vld [vmem:[%s1808 + $0x17c8] sm:$0xff]
        %v2628 = vld [vmem:[%s1808 + $0x17d0] sm:$0xff]
        %v2629 = vld [vmem:[%s1808 + $0x17d8] sm:$0xff]
        %v2630 = vld [vmem:[%s1808 + $0x17e0] sm:$0xff]
        %v2631 = vld [vmem:[%s1808 + $0x17e8] sm:$0xff]
        %v2632 = vld [vmem:[%s1808 + $0x17f0] sm:$0xff]
        %v2633 = vld [vmem:[%s1808 + $0x17f8] sm:$0xff]
        %v2634 = vld [vmem:[%s1808 + $0x1800] sm:$0xff]
        %v2635 = vld [vmem:[%s1808 + $0x1808] sm:$0xff]
        %v2636 = vld [vmem:[%s1808 + $0x1810] sm:$0xff]
        %v2637 = vld [vmem:[%s1808 + $0x1818] sm:$0xff]
        %v2638 = vld [vmem:[%s1808 + $0x1820] sm:$0xff]
        %v2639 = vld [vmem:[%s1808 + $0x1828] sm:$0xff]
        %v2640 = vld [vmem:[%s1808 + $0x1830] sm:$0xff]
        %v2641 = vld [vmem:[%s1808 + $0x1838] sm:$0xff]
        %v2642 = vld [vmem:[%s1808 + $0x1840] sm:$0xff]
        %v2643 = vld [vmem:[%s1808 + $0x1848] sm:$0xff]
        %v2644 = vld [vmem:[%s1808 + $0x1850] sm:$0xff]
        %v2645 = vld [vmem:[%s1808 + $0x1858] sm:$0xff]
        %v2646 = vld [vmem:[%s1808 + $0x1860] sm:$0xff]
        %v2647 = vld [vmem:[%s1808 + $0x1868] sm:$0xff]
        %v2648 = vld [vmem:[%s1808 + $0x1870] sm:$0xff]
        %v2649 = vld [vmem:[%s1808 + $0x1878] sm:$0xff]
        %v2650 = vld [vmem:[%s1848] sm:$0xf]
        %v2652 = vlaneseq
        %v2653 = vshrl.u32 %v2652, 7
        %v2654 = vsub.s32 0, %v2653
        %v2655 = vrot.slane %v2650, %v2654
        %v2656 = vlaneseq
        %v2657 = vshrl.u32 %v2656, 7
        %v2658 = vsub.s32 1, %v2657
        %v2659 = vrot.slane %v2650, %v2658
        %v2660 = vlaneseq
        %v2661 = vshrl.u32 %v2660, 7
        %v2662 = vsub.s32 2, %v2661
        %v2663 = vrot.slane %v2650, %v2662
        %v2664 = vlaneseq
        %v2665 = vshrl.u32 %v2664, 7
        %v2666 = vsub.s32 3, %v2665
        %v2667 = vrot.slane %v2650, %v2666
        %v2676 = vcombine.high %v1862, %v1862
        %v2678 = vunpack.c.l.s4 1966171168
        %v2679 = vunpack.c.0.s8 %v2678
        %v2680 = vlaneseq
        %v2681 = vshrl.u32 %v2680, 7
        %v2682 = vsub.s32 %v2679, %v2681
        %v2683 = vrot.slane %v1862, %v2682
        %v2685 = vunpack.c.l.s4 1966171168
        %v2686 = vunpack.c.0.s8 %v2685
        %v2687 = vlaneseq
        %v2688 = vshrl.u32 %v2687, 7
        %v2689 = vsub.s32 %v2686, %v2688
        %v2690 = vrot.slane %v2676, %v2689
        %v2691 = vcombine.high %v2683, %v2683
        %v2692 = vcombine.high %v2690, %v2690
        %v2694 = vunpack.c.l.s4 1966171168
        %v2695 = vunpack.c.0.s8 %v2694
        %v2696 = vlaneseq
        %v2697 = vshrl.u32 %v2696, 7
        %v2698 = vsub.s32 %v2695, %v2697
        %v2699 = vrot.slane %v2683, %v2698
        %v2701 = vunpack.c.l.s4 1966171168
        %v2702 = vunpack.c.0.s8 %v2701
        %v2703 = vlaneseq
        %v2704 = vshrl.u32 %v2703, 7
        %v2705 = vsub.s32 %v2702, %v2704
        %v2706 = vrot.slane %v2690, %v2705
        %v2708 = vunpack.c.l.s4 1966171168
        %v2709 = vunpack.c.0.s8 %v2708
        %v2710 = vlaneseq
        %v2711 = vshrl.u32 %v2710, 7
        %v2712 = vsub.s32 %v2709, %v2711
        %v2713 = vrot.slane %v2691, %v2712
        %v2715 = vunpack.c.l.s4 1966171168
        %v2716 = vunpack.c.0.s8 %v2715
        %v2717 = vlaneseq
        %v2718 = vshrl.u32 %v2717, 7
        %v2719 = vsub.s32 %v2716, %v2718
        %v2720 = vrot.slane %v2692, %v2719
        %v2721 = vcombine.high %v2699, %v2699
        %v2722 = vcombine.high %v2706, %v2706
        %v2723 = vcombine.high %v2713, %v2713
        %v2724 = vcombine.high %v2720, %v2720
        %v2725 = vcombine.high %v1863, %v1863
        %v2727 = vunpack.c.l.s4 1966171168
        %v2728 = vunpack.c.0.s8 %v2727
        %v2729 = vlaneseq
        %v2730 = vshrl.u32 %v2729, 7
        %v2731 = vsub.s32 %v2728, %v2730
        %v2732 = vrot.slane %v1863, %v2731
        %v2734 = vunpack.c.l.s4 1966171168
        %v2735 = vunpack.c.0.s8 %v2734
        %v2736 = vlaneseq
        %v2737 = vshrl.u32 %v2736, 7
        %v2738 = vsub.s32 %v2735, %v2737
        %v2739 = vrot.slane %v2725, %v2738
        %v2740 = vcombine.high %v2732, %v2732
        %v2741 = vcombine.high %v2739, %v2739
        %v2743 = vunpack.c.l.s4 1966171168
        %v2744 = vunpack.c.0.s8 %v2743
        %v2745 = vlaneseq
        %v2746 = vshrl.u32 %v2745, 7
        %v2747 = vsub.s32 %v2744, %v2746
        %v2748 = vrot.slane %v2732, %v2747
        %v2750 = vunpack.c.l.s4 1966171168
        %v2751 = vunpack.c.0.s8 %v2750
        %v2752 = vlaneseq
        %v2753 = vshrl.u32 %v2752, 7
        %v2754 = vsub.s32 %v2751, %v2753
        %v2755 = vrot.slane %v2739, %v2754
        %v2757 = vunpack.c.l.s4 1966171168
        %v2758 = vunpack.c.0.s8 %v2757
        %v2759 = vlaneseq
        %v2760 = vshrl.u32 %v2759, 7
        %v2761 = vsub.s32 %v2758, %v2760
        %v2762 = vrot.slane %v2740, %v2761
        %v2764 = vunpack.c.l.s4 1966171168
        %v2765 = vunpack.c.0.s8 %v2764
        %v2766 = vlaneseq
        %v2767 = vshrl.u32 %v2766, 7
        %v2768 = vsub.s32 %v2765, %v2767
        %v2769 = vrot.slane %v2741, %v2768
        %v2770 = vcombine.high %v2748, %v2748
        %v2771 = vcombine.high %v2755, %v2755
        %v2772 = vcombine.high %v2762, %v2762
        %v2773 = vcombine.high %v2769, %v2769
        %v2774 = vcombine.high %v1864, %v1864
        %v2776 = vunpack.c.l.s4 1966171168
        %v2777 = vunpack.c.0.s8 %v2776
        %v2778 = vlaneseq
        %v2779 = vshrl.u32 %v2778, 7
        %v2780 = vsub.s32 %v2777, %v2779
        %v2781 = vrot.slane %v1864, %v2780
        %v2783 = vunpack.c.l.s4 1966171168
        %v2784 = vunpack.c.0.s8 %v2783
        %v2785 = vlaneseq
        %v2786 = vshrl.u32 %v2785, 7
        %v2787 = vsub.s32 %v2784, %v2786
        %v2788 = vrot.slane %v2774, %v2787
        %v2789 = vcombine.high %v2781, %v2781
        %v2790 = vcombine.high %v2788, %v2788
        %v2792 = vunpack.c.l.s4 1966171168
        %v2793 = vunpack.c.0.s8 %v2792
        %v2794 = vlaneseq
        %v2795 = vshrl.u32 %v2794, 7
        %v2796 = vsub.s32 %v2793, %v2795
        %v2797 = vrot.slane %v2781, %v2796
        %v2799 = vunpack.c.l.s4 1966171168
        %v2800 = vunpack.c.0.s8 %v2799
        %v2801 = vlaneseq
        %v2802 = vshrl.u32 %v2801, 7
        %v2803 = vsub.s32 %v2800, %v2802
        %v2804 = vrot.slane %v2788, %v2803
        %v2806 = vunpack.c.l.s4 1966171168
        %v2807 = vunpack.c.0.s8 %v2806
        %v2808 = vlaneseq
        %v2809 = vshrl.u32 %v2808, 7
        %v2810 = vsub.s32 %v2807, %v2809
        %v2811 = vrot.slane %v2789, %v2810
        %v2813 = vunpack.c.l.s4 1966171168
        %v2814 = vunpack.c.0.s8 %v2813
        %v2815 = vlaneseq
        %v2816 = vshrl.u32 %v2815, 7
        %v2817 = vsub.s32 %v2814, %v2816
        %v2818 = vrot.slane %v2790, %v2817
        %v2819 = vcombine.high %v2797, %v2797
        %v2820 = vcombine.high %v2804, %v2804
        %v2821 = vcombine.high %v2811, %v2811
        %v2822 = vcombine.high %v2818, %v2818
        %v2824 = vunpack.c.l.s4 1966171168
        %v2825 = vunpack.c.0.s8 %v2824
        %v2826 = vlaneseq
        %v2827 = vshrl.u32 %v2826, 7
        %v2828 = vsub.s32 %v2825, %v2827
        %v2829 = vrot.slane %v1865, %v2828
        %v2831 = vunpack.c.l.s4 1966171168
        %v2832 = vunpack.c.0.s8 %v2831
        %v2833 = vlaneseq
        %v2834 = vshrl.u32 %v2833, 7
        %v2835 = vsub.s32 %v2832, %v2834
        %v2836 = vrot.slane %v2829, %v2835
        %v3645 = vunpack.c.l.b16 %v1866
        %v3646 = vunpack.c.h.b16 %v1866
        %v3647 = vunpack.c.l.b16 %v1867
        %v3648 = vunpack.c.h.b16 %v1867
        %v3649 = vunpack.c.l.b16 %v1868
        %v3650 = vunpack.c.h.b16 %v1868
        %v3651 = vunpack.c.l.b16 %v1869
        %v3652 = vunpack.c.h.b16 %v1869
        %v3653 = vunpack.c.l.b16 %v1870
        %v3654 = vunpack.c.h.b16 %v1870
        %v3655 = vunpack.c.l.b16 %v1871
        %v3656 = vunpack.c.h.b16 %v1871
        %v3657 = vunpack.c.l.b16 %v1872
        %v3658 = vunpack.c.h.b16 %v1872
        %v3659 = vunpack.c.l.b16 %v1873
        %v3660 = vunpack.c.h.b16 %v1873
        %v3661 = vunpack.c.l.b16 %v1874
        %v3662 = vunpack.c.h.b16 %v1874
        %v3663 = vunpack.c.l.b16 %v1875
        %v3664 = vunpack.c.h.b16 %v1875
        %v3665 = vunpack.c.l.b16 %v1876
        %v3666 = vunpack.c.h.b16 %v1876
        %v3667 = vunpack.c.l.b16 %v1877
        %v3668 = vunpack.c.h.b16 %v1877
        %v3669 = vunpack.c.l.b16 %v1878
        %v3670 = vunpack.c.h.b16 %v1878
        %v3671 = vunpack.c.l.b16 %v1879
        %v3672 = vunpack.c.h.b16 %v1879
        %v3673 = vunpack.c.l.b16 %v1880
        %v3674 = vunpack.c.h.b16 %v1880
        %v3675 = vunpack.c.l.b16 %v1881
        %v3676 = vunpack.c.h.b16 %v1881
        %v3677 = vunpack.c.l.b16 %v1882
        %v3678 = vunpack.c.h.b16 %v1882
        %v3679 = vunpack.c.l.b16 %v1883
        %v3680 = vunpack.c.h.b16 %v1883
        %v3681 = vunpack.c.l.b16 %v1884
        %v3682 = vunpack.c.h.b16 %v1884
        %v3683 = vunpack.c.l.b16 %v1885
        %v3684 = vunpack.c.h.b16 %v1885
        %v3685 = vunpack.c.l.b16 %v1886
        %v3686 = vunpack.c.h.b16 %v1886
        %v3687 = vunpack.c.l.b16 %v1887
        %v3688 = vunpack.c.h.b16 %v1887
        %v3689 = vunpack.c.l.b16 %v1888
        %v3690 = vunpack.c.h.b16 %v1888
        %v3691 = vunpack.c.l.b16 %v1889
        %v3692 = vunpack.c.h.b16 %v1889
        %v3693 = vunpack.c.l.b16 %v1890
        %v3694 = vunpack.c.h.b16 %v1890
        %v3695 = vunpack.c.l.b16 %v1891
        %v3696 = vunpack.c.h.b16 %v1891
        %v3697 = vunpack.c.l.b16 %v1892
        %v3698 = vunpack.c.h.b16 %v1892
        %v3699 = vunpack.c.l.b16 %v1893
        %v3700 = vunpack.c.h.b16 %v1893
        %v3701 = vunpack.c.l.b16 %v1894
        %v3702 = vunpack.c.h.b16 %v1894
        %v3703 = vunpack.c.l.b16 %v1895
        %v3704 = vunpack.c.h.b16 %v1895
        %v3705 = vunpack.c.l.b16 %v1896
        %v3706 = vunpack.c.h.b16 %v1896
        %v3707 = vunpack.c.l.b16 %v1897
        %v3708 = vunpack.c.h.b16 %v1897
        %v3709 = vunpack.c.l.b16 %v1898
        %v3710 = vunpack.c.h.b16 %v1898
        %v3711 = vunpack.c.l.b16 %v1899
        %v3712 = vunpack.c.h.b16 %v1899
        %v3713 = vunpack.c.l.b16 %v1900
        %v3714 = vunpack.c.h.b16 %v1900
        %v3715 = vunpack.c.l.b16 %v1901
        %v3716 = vunpack.c.h.b16 %v1901
        %v3717 = vunpack.c.l.b16 %v1902
        %v3718 = vunpack.c.h.b16 %v1902
        %v3719 = vunpack.c.l.b16 %v1903
        %v3720 = vunpack.c.h.b16 %v1903
        %v3721 = vunpack.c.l.b16 %v1904
        %v3722 = vunpack.c.h.b16 %v1904
        %v3723 = vunpack.c.l.b16 %v1905
        %v3724 = vunpack.c.h.b16 %v1905
        %v3725 = vunpack.c.l.b16 %v1906
        %v3726 = vunpack.c.h.b16 %v1906
        %v3727 = vunpack.c.l.b16 %v1907
        %v3728 = vunpack.c.h.b16 %v1907
        %v3729 = vunpack.c.l.b16 %v1908
        %v3730 = vunpack.c.h.b16 %v1908
        %v3731 = vunpack.c.l.b16 %v1909
        %v3732 = vunpack.c.h.b16 %v1909
        %v3733 = vunpack.c.l.b16 %v1910
        %v3734 = vunpack.c.h.b16 %v1910
        %v3735 = vunpack.c.l.b16 %v1911
        %v3736 = vunpack.c.h.b16 %v1911
        %v3737 = vunpack.c.l.b16 %v1912
        %v3738 = vunpack.c.h.b16 %v1912
        %v3739 = vunpack.c.l.b16 %v1913
        %v3740 = vunpack.c.h.b16 %v1913
        %v3741 = vunpack.c.l.b16 %v1914
        %v3742 = vunpack.c.h.b16 %v1914
        %v3743 = vunpack.c.l.b16 %v1915
        %v3744 = vunpack.c.h.b16 %v1915
        %v3745 = vunpack.c.l.b16 %v1916
        %v3746 = vunpack.c.h.b16 %v1916
        %v3747 = vunpack.c.l.b16 %v1917
        %v3748 = vunpack.c.h.b16 %v1917
        %v3749 = vunpack.c.l.b16 %v1918
        %v3750 = vunpack.c.h.b16 %v1918
        %v3751 = vunpack.c.l.b16 %v1919
        %v3752 = vunpack.c.h.b16 %v1919
        %v3753 = vunpack.c.l.b16 %v1920
        %v3754 = vunpack.c.h.b16 %v1920
        %v3755 = vunpack.c.l.b16 %v1921
        %v3756 = vunpack.c.h.b16 %v1921
        %v3757 = vunpack.c.l.b16 %v1922
        %v3758 = vunpack.c.h.b16 %v1922
        %v3759 = vunpack.c.l.b16 %v1923
        %v3760 = vunpack.c.h.b16 %v1923
        %v3761 = vunpack.c.l.b16 %v1924
        %v3762 = vunpack.c.h.b16 %v1924
        %v3763 = vunpack.c.l.b16 %v1925
        %v3764 = vunpack.c.h.b16 %v1925
        %v3765 = vunpack.c.l.b16 %v1926
        %v3766 = vunpack.c.h.b16 %v1926
        %v3767 = vunpack.c.l.b16 %v1927
        %v3768 = vunpack.c.h.b16 %v1927
        %v3769 = vunpack.c.l.b16 %v1928
        %v3770 = vunpack.c.h.b16 %v1928
        %v3771 = vunpack.c.l.b16 %v1929
        %v3772 = vunpack.c.h.b16 %v1929
        %v3773 = vunpack.c.l.b16 %v1930
        %v3774 = vunpack.c.h.b16 %v1930
        %v3775 = vunpack.c.l.b16 %v1931
        %v3776 = vunpack.c.h.b16 %v1931
        %v3777 = vunpack.c.l.b16 %v1932
        %v3778 = vunpack.c.h.b16 %v1932
        %v3779 = vunpack.c.l.b16 %v1933
        %v3780 = vunpack.c.h.b16 %v1933
        %v3781 = vunpack.c.l.b16 %v1934
        %v3782 = vunpack.c.h.b16 %v1934
        %v3783 = vunpack.c.l.b16 %v1935
        %v3784 = vunpack.c.h.b16 %v1935
        %v3785 = vunpack.c.l.b16 %v1936
        %v3786 = vunpack.c.h.b16 %v1936
        %v3787 = vunpack.c.l.b16 %v1937
        %v3788 = vunpack.c.h.b16 %v1937
        %v3789 = vunpack.c.l.b16 %v1938
        %v3790 = vunpack.c.h.b16 %v1938
        %v3791 = vunpack.c.l.b16 %v1939
        %v3792 = vunpack.c.h.b16 %v1939
        %v3793 = vunpack.c.l.b16 %v1940
        %v3794 = vunpack.c.h.b16 %v1940
        %v3795 = vunpack.c.l.b16 %v1941
        %v3796 = vunpack.c.h.b16 %v1941
        %v3797 = vunpack.c.l.b16 %v1942
        %v3798 = vunpack.c.h.b16 %v1942
        %v3799 = vunpack.c.l.b16 %v1943
        %v3800 = vunpack.c.h.b16 %v1943
        %v3801 = vunpack.c.l.b16 %v1944
        %v3802 = vunpack.c.h.b16 %v1944
        %v3803 = vunpack.c.l.b16 %v1945
        %v3804 = vunpack.c.h.b16 %v1945
        %v3805 = vunpack.c.l.b16 %v1946
        %v3806 = vunpack.c.h.b16 %v1946
        %v3807 = vunpack.c.l.b16 %v1947
        %v3808 = vunpack.c.h.b16 %v1947
        %v3809 = vunpack.c.l.b16 %v1948
        %v3810 = vunpack.c.h.b16 %v1948
        %v3811 = vunpack.c.l.b16 %v1949
        %v3812 = vunpack.c.h.b16 %v1949
        %v3813 = vunpack.c.l.b16 %v1950
        %v3814 = vunpack.c.h.b16 %v1950
        %v3815 = vunpack.c.l.b16 %v1951
        %v3816 = vunpack.c.h.b16 %v1951
        %v3817 = vunpack.c.l.b16 %v1952
        %v3818 = vunpack.c.h.b16 %v1952
        %v3819 = vunpack.c.l.b16 %v1953
        %v3820 = vunpack.c.h.b16 %v1953
        %v3821 = vunpack.c.l.b16 %v1954
        %v3822 = vunpack.c.h.b16 %v1954
        %v3823 = vunpack.c.l.b16 %v1955
        %v3824 = vunpack.c.h.b16 %v1955
        %v3825 = vunpack.c.l.b16 %v1956
        %v3826 = vunpack.c.h.b16 %v1956
        %v3827 = vunpack.c.l.b16 %v1957
        %v3828 = vunpack.c.h.b16 %v1957
        %v3829 = vunpack.c.l.b16 %v1958
        %v3830 = vunpack.c.h.b16 %v1958
        %v3831 = vunpack.c.l.b16 %v1959
        %v3832 = vunpack.c.h.b16 %v1959
        %v3833 = vunpack.c.l.b16 %v1960
        %v3834 = vunpack.c.h.b16 %v1960
        %v3835 = vunpack.c.l.b16 %v1961
        %v3836 = vunpack.c.h.b16 %v1961
        %v3837 = vunpack.c.l.b16 %v1962
        %v3838 = vunpack.c.h.b16 %v1962
        %v3839 = vunpack.c.l.b16 %v1963
        %v3840 = vunpack.c.h.b16 %v1963
        %v3841 = vunpack.c.l.b16 %v1964
        %v3842 = vunpack.c.h.b16 %v1964
        %v3843 = vunpack.c.l.b16 %v1965
        %v3844 = vunpack.c.h.b16 %v1965
        %v3845 = vunpack.c.l.b16 %v1966
        %v3846 = vunpack.c.h.b16 %v1966
        %v3847 = vunpack.c.l.b16 %v1967
        %v3848 = vunpack.c.h.b16 %v1967
        %v3849 = vunpack.c.l.b16 %v1968
        %v3850 = vunpack.c.h.b16 %v1968
        %v3851 = vunpack.c.l.b16 %v1969
        %v3852 = vunpack.c.h.b16 %v1969
        %v3853 = vunpack.c.l.b16 %v1970
        %v3854 = vunpack.c.h.b16 %v1970
        %v3855 = vunpack.c.l.b16 %v1971
        %v3856 = vunpack.c.h.b16 %v1971
        %v3857 = vunpack.c.l.b16 %v1972
        %v3858 = vunpack.c.h.b16 %v1972
        %v3859 = vunpack.c.l.b16 %v1973
        %v3860 = vunpack.c.h.b16 %v1973
        %v3861 = vunpack.c.l.b16 %v1974
        %v3862 = vunpack.c.h.b16 %v1974
        %v3863 = vunpack.c.l.b16 %v1975
        %v3864 = vunpack.c.h.b16 %v1975
        %v3865 = vunpack.c.l.b16 %v1976
        %v3866 = vunpack.c.h.b16 %v1976
        %v3867 = vunpack.c.l.b16 %v1977
        %v3868 = vunpack.c.h.b16 %v1977
        %v3869 = vunpack.c.l.b16 %v1978
        %v3870 = vunpack.c.h.b16 %v1978
        %v3871 = vunpack.c.l.b16 %v1979
        %v3872 = vunpack.c.h.b16 %v1979
        %v3873 = vunpack.c.l.b16 %v1980
        %v3874 = vunpack.c.h.b16 %v1980
        %v3875 = vunpack.c.l.b16 %v1981
        %v3876 = vunpack.c.h.b16 %v1981
        %v3877 = vunpack.c.l.b16 %v1982
        %v3878 = vunpack.c.h.b16 %v1982
        %v3879 = vunpack.c.l.b16 %v1983
        %v3880 = vunpack.c.h.b16 %v1983
        %v3881 = vunpack.c.l.b16 %v1984
        %v3882 = vunpack.c.h.b16 %v1984
        %v3883 = vunpack.c.l.b16 %v1985
        %v3884 = vunpack.c.h.b16 %v1985
        %v3885 = vunpack.c.l.b16 %v1986
        %v3886 = vunpack.c.h.b16 %v1986
        %v3887 = vunpack.c.l.b16 %v1987
        %v3888 = vunpack.c.h.b16 %v1987
        %v3889 = vunpack.c.l.b16 %v1988
        %v3890 = vunpack.c.h.b16 %v1988
        %v3891 = vunpack.c.l.b16 %v1989
        %v3892 = vunpack.c.h.b16 %v1989
        %v3893 = vunpack.c.l.b16 %v1990
        %v3894 = vunpack.c.h.b16 %v1990
        %v3895 = vunpack.c.l.b16 %v1991
        %v3896 = vunpack.c.h.b16 %v1991
        %v3897 = vunpack.c.l.b16 %v1992
        %v3898 = vunpack.c.h.b16 %v1992
        %v3899 = vunpack.c.l.b16 %v1993
        %v3900 = vunpack.c.h.b16 %v1993
        %v3901 = vunpack.c.l.b16 %v1994
        %v3902 = vunpack.c.h.b16 %v1994
        %v3903 = vunpack.c.l.b16 %v1995
        %v3904 = vunpack.c.h.b16 %v1995
        %v3905 = vunpack.c.l.b16 %v1996
        %v3906 = vunpack.c.h.b16 %v1996
        %v3907 = vunpack.c.l.b16 %v1997
        %v3908 = vunpack.c.h.b16 %v1997
        %v3909 = vunpack.c.l.b16 %v1998
        %v3910 = vunpack.c.h.b16 %v1998
        %v3911 = vunpack.c.l.b16 %v1999
        %v3912 = vunpack.c.h.b16 %v1999
        %v3913 = vunpack.c.l.b16 %v2000
        %v3914 = vunpack.c.h.b16 %v2000
        %v3915 = vunpack.c.l.b16 %v2001
        %v3916 = vunpack.c.h.b16 %v2001
        %v3917 = vunpack.c.l.b16 %v2002
        %v3918 = vunpack.c.h.b16 %v2002
        %v3919 = vunpack.c.l.b16 %v2003
        %v3920 = vunpack.c.h.b16 %v2003
        %v3921 = vunpack.c.l.b16 %v2004
        %v3922 = vunpack.c.h.b16 %v2004
        %v3923 = vunpack.c.l.b16 %v2005
        %v3924 = vunpack.c.h.b16 %v2005
        %v3925 = vunpack.c.l.b16 %v2006
        %v3926 = vunpack.c.h.b16 %v2006
        %v3927 = vunpack.c.l.b16 %v2007
        %v3928 = vunpack.c.h.b16 %v2007
        %v3929 = vunpack.c.l.b16 %v2008
        %v3930 = vunpack.c.h.b16 %v2008
        %v3931 = vunpack.c.l.b16 %v2009
        %v3932 = vunpack.c.h.b16 %v2009
        %v3933 = vunpack.c.l.b16 %v2010
        %v3934 = vunpack.c.h.b16 %v2010
        %v3935 = vunpack.c.l.b16 %v2011
        %v3936 = vunpack.c.h.b16 %v2011
        %v3937 = vunpack.c.l.b16 %v2012
        %v3938 = vunpack.c.h.b16 %v2012
        %v3939 = vunpack.c.l.b16 %v2013
        %v3940 = vunpack.c.h.b16 %v2013
        %v3941 = vunpack.c.l.b16 %v2014
        %v3942 = vunpack.c.h.b16 %v2014
        %v3943 = vunpack.c.l.b16 %v2015
        %v3944 = vunpack.c.h.b16 %v2015
        %v3945 = vunpack.c.l.b16 %v2016
        %v3946 = vunpack.c.h.b16 %v2016
        %v3947 = vunpack.c.l.b16 %v2017
        %v3948 = vunpack.c.h.b16 %v2017
        %v3949 = vunpack.c.l.b16 %v2018
        %v3950 = vunpack.c.h.b16 %v2018
        %v3951 = vunpack.c.l.b16 %v2019
        %v3952 = vunpack.c.h.b16 %v2019
        %v3953 = vunpack.c.l.b16 %v2020
        %v3954 = vunpack.c.h.b16 %v2020
        %v3955 = vunpack.c.l.b16 %v2021
        %v3956 = vunpack.c.h.b16 %v2021
        %v3957 = vunpack.c.l.b16 %v2022
        %v3958 = vunpack.c.h.b16 %v2022
        %v3959 = vunpack.c.l.b16 %v2023
        %v3960 = vunpack.c.h.b16 %v2023
        %v3961 = vunpack.c.l.b16 %v2024
        %v3962 = vunpack.c.h.b16 %v2024
        %v3963 = vunpack.c.l.b16 %v2025
        %v3964 = vunpack.c.h.b16 %v2025
        %v3965 = vunpack.c.l.b16 %v2026
        %v3966 = vunpack.c.h.b16 %v2026
        %v3967 = vunpack.c.l.b16 %v2027
        %v3968 = vunpack.c.h.b16 %v2027
        %v3969 = vunpack.c.l.b16 %v2028
        %v3970 = vunpack.c.h.b16 %v2028
        %v3971 = vunpack.c.l.b16 %v2029
        %v3972 = vunpack.c.h.b16 %v2029
        %v3973 = vunpack.c.l.b16 %v2030
        %v3974 = vunpack.c.h.b16 %v2030
        %v3975 = vunpack.c.l.b16 %v2031
        %v3976 = vunpack.c.h.b16 %v2031
        %v3977 = vunpack.c.l.b16 %v2032
        %v3978 = vunpack.c.h.b16 %v2032
        %v3979 = vunpack.c.l.b16 %v2033
        %v3980 = vunpack.c.h.b16 %v2033
        %v3981 = vunpack.c.l.b16 %v2034
        %v3982 = vunpack.c.h.b16 %v2034
        %v3983 = vunpack.c.l.b16 %v2035
        %v3984 = vunpack.c.h.b16 %v2035
        %v3985 = vunpack.c.l.b16 %v2036
        %v3986 = vunpack.c.h.b16 %v2036
        %v3987 = vunpack.c.l.b16 %v2037
        %v3988 = vunpack.c.h.b16 %v2037
        %v3989 = vunpack.c.l.b16 %v2038
        %v3990 = vunpack.c.h.b16 %v2038
        %v3991 = vunpack.c.l.b16 %v2039
        %v3992 = vunpack.c.h.b16 %v2039
        %v3993 = vunpack.c.l.b16 %v2040
        %v3994 = vunpack.c.h.b16 %v2040
        %v3995 = vunpack.c.l.b16 %v2041
        %v3996 = vunpack.c.h.b16 %v2041
        %v3997 = vunpack.c.l.b16 %v2042
        %v3998 = vunpack.c.h.b16 %v2042
        %v3999 = vunpack.c.l.b16 %v2043
        %v4000 = vunpack.c.h.b16 %v2043
        %v4001 = vunpack.c.l.b16 %v2044
        %v4002 = vunpack.c.h.b16 %v2044
        %v4003 = vunpack.c.l.b16 %v2045
        %v4004 = vunpack.c.h.b16 %v2045
        %v4005 = vunpack.c.l.b16 %v2046
        %v4006 = vunpack.c.h.b16 %v2046
        %v4007 = vunpack.c.l.b16 %v2047
        %v4008 = vunpack.c.h.b16 %v2047
        %v4009 = vunpack.c.l.b16 %v2048
        %v4010 = vunpack.c.h.b16 %v2048
        %v4011 = vunpack.c.l.b16 %v2049
        %v4012 = vunpack.c.h.b16 %v2049
        %v4013 = vunpack.c.l.b16 %v2050
        %v4014 = vunpack.c.h.b16 %v2050
        %v4015 = vunpack.c.l.b16 %v2051
        %v4016 = vunpack.c.h.b16 %v2051
        %v4017 = vunpack.c.l.b16 %v2052
        %v4018 = vunpack.c.h.b16 %v2052
        %v4019 = vunpack.c.l.b16 %v2053
        %v4020 = vunpack.c.h.b16 %v2053
        %v4021 = vunpack.c.l.b16 %v2054
        %v4022 = vunpack.c.h.b16 %v2054
        %v4023 = vunpack.c.l.b16 %v2055
        %v4024 = vunpack.c.h.b16 %v2055
        %v4025 = vunpack.c.l.b16 %v2056
        %v4026 = vunpack.c.h.b16 %v2056
        %v4027 = vunpack.c.l.b16 %v2057
        %v4028 = vunpack.c.h.b16 %v2057
        %v4029 = vunpack.c.l.b16 %v2058
        %v4030 = vunpack.c.h.b16 %v2058
        %v4031 = vunpack.c.l.b16 %v2059
        %v4032 = vunpack.c.h.b16 %v2059
        %v4033 = vunpack.c.l.b16 %v2060
        %v4034 = vunpack.c.h.b16 %v2060
        %v4035 = vunpack.c.l.b16 %v2061
        %v4036 = vunpack.c.h.b16 %v2061
        %v4037 = vunpack.c.l.b16 %v2062
        %v4038 = vunpack.c.h.b16 %v2062
        %v4039 = vunpack.c.l.b16 %v2063
        %v4040 = vunpack.c.h.b16 %v2063
        %v4041 = vunpack.c.l.b16 %v2064
        %v4042 = vunpack.c.h.b16 %v2064
        %v4043 = vunpack.c.l.b16 %v2065
        %v4044 = vunpack.c.h.b16 %v2065
        %v4045 = vunpack.c.l.b16 %v2066
        %v4046 = vunpack.c.h.b16 %v2066
        %v4047 = vunpack.c.l.b16 %v2067
        %v4048 = vunpack.c.h.b16 %v2067
        %v4049 = vunpack.c.l.b16 %v2068
        %v4050 = vunpack.c.h.b16 %v2068
        %v4051 = vunpack.c.l.b16 %v2069
        %v4052 = vunpack.c.h.b16 %v2069
        %v4053 = vunpack.c.l.b16 %v2070
        %v4054 = vunpack.c.h.b16 %v2070
        %v4055 = vunpack.c.l.b16 %v2071
        %v4056 = vunpack.c.h.b16 %v2071
        %v4057 = vunpack.c.l.b16 %v2072
        %v4058 = vunpack.c.h.b16 %v2072
        %v4059 = vunpack.c.l.b16 %v2073
        %v4060 = vunpack.c.h.b16 %v2073
        %v4061 = vunpack.c.l.b16 %v2074
        %v4062 = vunpack.c.h.b16 %v2074
        %v4063 = vunpack.c.l.b16 %v2075
        %v4064 = vunpack.c.h.b16 %v2075
        %v4065 = vunpack.c.l.b16 %v2076
        %v4066 = vunpack.c.h.b16 %v2076
        %v4067 = vunpack.c.l.b16 %v2077
        %v4068 = vunpack.c.h.b16 %v2077
        %v4069 = vunpack.c.l.b16 %v2078
        %v4070 = vunpack.c.h.b16 %v2078
        %v4071 = vunpack.c.l.b16 %v2079
        %v4072 = vunpack.c.h.b16 %v2079
        %v4073 = vunpack.c.l.b16 %v2080
        %v4074 = vunpack.c.h.b16 %v2080
        %v4075 = vunpack.c.l.b16 %v2081
        %v4076 = vunpack.c.h.b16 %v2081
        %v4077 = vunpack.c.l.b16 %v2082
        %v4078 = vunpack.c.h.b16 %v2082
        %v4079 = vunpack.c.l.b16 %v2083
        %v4080 = vunpack.c.h.b16 %v2083
        %v4081 = vunpack.c.l.b16 %v2084
        %v4082 = vunpack.c.h.b16 %v2084
        %v4083 = vunpack.c.l.b16 %v2085
        %v4084 = vunpack.c.h.b16 %v2085
        %v4085 = vunpack.c.l.b16 %v2086
        %v4086 = vunpack.c.h.b16 %v2086
        %v4087 = vunpack.c.l.b16 %v2087
        %v4088 = vunpack.c.h.b16 %v2087
        %v4089 = vunpack.c.l.b16 %v2088
        %v4090 = vunpack.c.h.b16 %v2088
        %v4091 = vunpack.c.l.b16 %v2089
        %v4092 = vunpack.c.h.b16 %v2089
        %v4093 = vunpack.c.l.b16 %v2090
        %v4094 = vunpack.c.h.b16 %v2090
        %v4095 = vunpack.c.l.b16 %v2091
        %v4096 = vunpack.c.h.b16 %v2091
        %v4097 = vunpack.c.l.b16 %v2092
        %v4098 = vunpack.c.h.b16 %v2092
        %v4099 = vunpack.c.l.b16 %v2093
        %v4100 = vunpack.c.h.b16 %v2093
        %v4101 = vunpack.c.l.b16 %v2094
        %v4102 = vunpack.c.h.b16 %v2094
        %v4103 = vunpack.c.l.b16 %v2095
        %v4104 = vunpack.c.h.b16 %v2095
        %v4105 = vunpack.c.l.b16 %v2096
        %v4106 = vunpack.c.h.b16 %v2096
        %v4107 = vunpack.c.l.b16 %v2097
        %v4108 = vunpack.c.h.b16 %v2097
        %v4109 = vunpack.c.l.b16 %v2098
        %v4110 = vunpack.c.h.b16 %v2098
        %v4111 = vunpack.c.l.b16 %v2099
        %v4112 = vunpack.c.h.b16 %v2099
        %v4113 = vunpack.c.l.b16 %v2100
        %v4114 = vunpack.c.h.b16 %v2100
        %v4115 = vunpack.c.l.b16 %v2101
        %v4116 = vunpack.c.h.b16 %v2101
        %v4117 = vunpack.c.l.b16 %v2102
        %v4118 = vunpack.c.h.b16 %v2102
        %v4119 = vunpack.c.l.b16 %v2103
        %v4120 = vunpack.c.h.b16 %v2103
        %v4121 = vunpack.c.l.b16 %v2104
        %v4122 = vunpack.c.h.b16 %v2104
        %v4123 = vunpack.c.l.b16 %v2105
        %v4124 = vunpack.c.h.b16 %v2105
        %v4125 = vunpack.c.l.b16 %v2106
        %v4126 = vunpack.c.h.b16 %v2106
        %v4127 = vunpack.c.l.b16 %v2107
        %v4128 = vunpack.c.h.b16 %v2107
        %v4129 = vunpack.c.l.b16 %v2108
        %v4130 = vunpack.c.h.b16 %v2108
        %v4131 = vunpack.c.l.b16 %v2109
        %v4132 = vunpack.c.h.b16 %v2109
        %v4133 = vunpack.c.l.b16 %v2110
        %v4134 = vunpack.c.h.b16 %v2110
        %v4135 = vunpack.c.l.b16 %v2111
        %v4136 = vunpack.c.h.b16 %v2111
        %v4137 = vunpack.c.l.b16 %v2112
        %v4138 = vunpack.c.h.b16 %v2112
        %v4139 = vunpack.c.l.b16 %v2113
        %v4140 = vunpack.c.h.b16 %v2113
        %v4141 = vunpack.c.l.b16 %v2114
        %v4142 = vunpack.c.h.b16 %v2114
        %v4143 = vunpack.c.l.b16 %v2115
        %v4144 = vunpack.c.h.b16 %v2115
        %v4145 = vunpack.c.l.b16 %v2116
        %v4146 = vunpack.c.h.b16 %v2116
        %v4147 = vunpack.c.l.b16 %v2117
        %v4148 = vunpack.c.h.b16 %v2117
        %v4149 = vunpack.c.l.b16 %v2118
        %v4150 = vunpack.c.h.b16 %v2118
        %v4151 = vunpack.c.l.b16 %v2119
        %v4152 = vunpack.c.h.b16 %v2119
        %v4153 = vunpack.c.l.b16 %v2120
        %v4154 = vunpack.c.h.b16 %v2120
        %v4155 = vunpack.c.l.b16 %v2121
        %v4156 = vunpack.c.h.b16 %v2121
        %v4157 = vunpack.c.l.b16 %v2122
        %v4158 = vunpack.c.h.b16 %v2122
        %v4159 = vunpack.c.l.b16 %v2123
        %v4160 = vunpack.c.h.b16 %v2123
        %v4161 = vunpack.c.l.b16 %v2124
        %v4162 = vunpack.c.h.b16 %v2124
        %v4163 = vunpack.c.l.b16 %v2125
        %v4164 = vunpack.c.h.b16 %v2125
        %v4165 = vunpack.c.l.b16 %v2126
        %v4166 = vunpack.c.h.b16 %v2126
        %v4167 = vunpack.c.l.b16 %v2127
        %v4168 = vunpack.c.h.b16 %v2127
        %v4169 = vunpack.c.l.b16 %v2128
        %v4170 = vunpack.c.h.b16 %v2128
        %v4171 = vunpack.c.l.b16 %v2129
        %v4172 = vunpack.c.h.b16 %v2129
        %v4173 = vunpack.c.l.b16 %v2130
        %v4174 = vunpack.c.h.b16 %v2130
        %v4175 = vunpack.c.l.b16 %v2131
        %v4176 = vunpack.c.h.b16 %v2131
        %v4177 = vunpack.c.l.b16 %v2132
        %v4178 = vunpack.c.h.b16 %v2132
        %v4179 = vunpack.c.l.b16 %v2133
        %v4180 = vunpack.c.h.b16 %v2133
        %v4181 = vunpack.c.l.b16 %v2134
        %v4182 = vunpack.c.h.b16 %v2134
        %v4183 = vunpack.c.l.b16 %v2135
        %v4184 = vunpack.c.h.b16 %v2135
        %v4185 = vunpack.c.l.b16 %v2136
        %v4186 = vunpack.c.h.b16 %v2136
        %v4187 = vunpack.c.l.b16 %v2137
        %v4188 = vunpack.c.h.b16 %v2137
        %v4189 = vunpack.c.l.b16 %v2138
        %v4190 = vunpack.c.h.b16 %v2138
        %v4191 = vunpack.c.l.b16 %v2139
        %v4192 = vunpack.c.h.b16 %v2139
        %v4193 = vunpack.c.l.b16 %v2140
        %v4194 = vunpack.c.h.b16 %v2140
        %v4195 = vunpack.c.l.b16 %v2141
        %v4196 = vunpack.c.h.b16 %v2141
        %v4197 = vunpack.c.l.b16 %v2142
        %v4198 = vunpack.c.h.b16 %v2142
        %v4199 = vunpack.c.l.b16 %v2143
        %v4200 = vunpack.c.h.b16 %v2143
        %v4201 = vunpack.c.l.b16 %v2144
        %v4202 = vunpack.c.h.b16 %v2144
        %v4203 = vunpack.c.l.b16 %v2145
        %v4204 = vunpack.c.h.b16 %v2145
        %v4205 = vunpack.c.l.b16 %v2146
        %v4206 = vunpack.c.h.b16 %v2146
        %v4207 = vunpack.c.l.b16 %v2147
        %v4208 = vunpack.c.h.b16 %v2147
        %v4209 = vunpack.c.l.b16 %v2148
        %v4210 = vunpack.c.h.b16 %v2148
        %v4211 = vunpack.c.l.b16 %v2149
        %v4212 = vunpack.c.h.b16 %v2149
        %v4213 = vunpack.c.l.b16 %v2150
        %v4214 = vunpack.c.h.b16 %v2150
        %v4215 = vunpack.c.l.b16 %v2151
        %v4216 = vunpack.c.h.b16 %v2151
        %v4217 = vunpack.c.l.b16 %v2152
        %v4218 = vunpack.c.h.b16 %v2152
        %v4219 = vunpack.c.l.b16 %v2153
        %v4220 = vunpack.c.h.b16 %v2153
        %v4221 = vunpack.c.l.b16 %v2154
        %v4222 = vunpack.c.h.b16 %v2154
        %v4223 = vunpack.c.l.b16 %v2155
        %v4224 = vunpack.c.h.b16 %v2155
        %v4225 = vunpack.c.l.b16 %v2156
        %v4226 = vunpack.c.h.b16 %v2156
        %v4227 = vunpack.c.l.b16 %v2157
        %v4228 = vunpack.c.h.b16 %v2157
        %v4229 = vunpack.c.l.b16 %v2158
        %v4230 = vunpack.c.h.b16 %v2158
        %v4231 = vunpack.c.l.b16 %v2159
        %v4232 = vunpack.c.h.b16 %v2159
        %v4233 = vunpack.c.l.b16 %v2160
        %v4234 = vunpack.c.h.b16 %v2160
        %v4235 = vunpack.c.l.b16 %v2161
        %v4236 = vunpack.c.h.b16 %v2161
        %v4237 = vunpack.c.l.b16 %v2162
        %v4238 = vunpack.c.h.b16 %v2162
        %v4239 = vunpack.c.l.b16 %v2163
        %v4240 = vunpack.c.h.b16 %v2163
        %v4241 = vunpack.c.l.b16 %v2164
        %v4242 = vunpack.c.h.b16 %v2164
        %v4243 = vunpack.c.l.b16 %v2165
        %v4244 = vunpack.c.h.b16 %v2165
        %v4245 = vunpack.c.l.b16 %v2166
        %v4246 = vunpack.c.h.b16 %v2166
        %v4247 = vunpack.c.l.b16 %v2167
        %v4248 = vunpack.c.h.b16 %v2167
        %v4249 = vunpack.c.l.b16 %v2168
        %v4250 = vunpack.c.h.b16 %v2168
        %v4251 = vunpack.c.l.b16 %v2169
        %v4252 = vunpack.c.h.b16 %v2169
        %v4253 = vunpack.c.l.b16 %v2170
        %v4254 = vunpack.c.h.b16 %v2170
        %v4255 = vunpack.c.l.b16 %v2171
        %v4256 = vunpack.c.h.b16 %v2171
        %v4257 = vunpack.c.l.b16 %v2172
        %v4258 = vunpack.c.h.b16 %v2172
        %v4259 = vunpack.c.l.b16 %v2173
        %v4260 = vunpack.c.h.b16 %v2173
        %v4261 = vunpack.c.l.b16 %v2174
        %v4262 = vunpack.c.h.b16 %v2174
        %v4263 = vunpack.c.l.b16 %v2175
        %v4264 = vunpack.c.h.b16 %v2175
        %v4265 = vunpack.c.l.b16 %v2176
        %v4266 = vunpack.c.h.b16 %v2176
        %v4267 = vunpack.c.l.b16 %v2177
        %v4268 = vunpack.c.h.b16 %v2177
        %v4269 = vunpack.c.l.b16 %v2178
        %v4270 = vunpack.c.h.b16 %v2178
        %v4271 = vunpack.c.l.b16 %v2179
        %v4272 = vunpack.c.h.b16 %v2179
        %v4273 = vunpack.c.l.b16 %v2180
        %v4274 = vunpack.c.h.b16 %v2180
        %v4275 = vunpack.c.l.b16 %v2181
        %v4276 = vunpack.c.h.b16 %v2181
        %v4277 = vunpack.c.l.b16 %v2182
        %v4278 = vunpack.c.h.b16 %v2182
        %v4279 = vunpack.c.l.b16 %v2183
        %v4280 = vunpack.c.h.b16 %v2183
        %v4281 = vunpack.c.l.b16 %v2184
        %v4282 = vunpack.c.h.b16 %v2184
        %v4283 = vunpack.c.l.b16 %v2185
        %v4284 = vunpack.c.h.b16 %v2185
        %v4285 = vunpack.c.l.b16 %v2186
        %v4286 = vunpack.c.h.b16 %v2186
        %v4287 = vunpack.c.l.b16 %v2187
        %v4288 = vunpack.c.h.b16 %v2187
        %v4289 = vunpack.c.l.b16 %v2188
        %v4290 = vunpack.c.h.b16 %v2188
        %v4291 = vunpack.c.l.b16 %v2189
        %v4292 = vunpack.c.h.b16 %v2189
        %v4293 = vunpack.c.l.b16 %v2190
        %v4294 = vunpack.c.h.b16 %v2190
        %v4295 = vunpack.c.l.b16 %v2191
        %v4296 = vunpack.c.h.b16 %v2191
        %v4297 = vunpack.c.l.b16 %v2192
        %v4298 = vunpack.c.h.b16 %v2192
        %v4299 = vunpack.c.l.b16 %v2193
        %v4300 = vunpack.c.h.b16 %v2193
        %v4301 = vunpack.c.l.b16 %v2194
        %v4302 = vunpack.c.h.b16 %v2194
        %v4303 = vunpack.c.l.b16 %v2195
        %v4304 = vunpack.c.h.b16 %v2195
        %v4305 = vunpack.c.l.b16 %v2196
        %v4306 = vunpack.c.h.b16 %v2196
        %v4307 = vunpack.c.l.b16 %v2197
        %v4308 = vunpack.c.h.b16 %v2197
        %v4309 = vunpack.c.l.b16 %v2198
        %v4310 = vunpack.c.h.b16 %v2198
        %v4311 = vunpack.c.l.b16 %v2199
        %v4312 = vunpack.c.h.b16 %v2199
        %v4313 = vunpack.c.l.b16 %v2200
        %v4314 = vunpack.c.h.b16 %v2200
        %v4315 = vunpack.c.l.b16 %v2201
        %v4316 = vunpack.c.h.b16 %v2201
        %v4317 = vunpack.c.l.b16 %v2202
        %v4318 = vunpack.c.h.b16 %v2202
        %v4319 = vunpack.c.l.b16 %v2203
        %v4320 = vunpack.c.h.b16 %v2203
        %v4321 = vunpack.c.l.b16 %v2204
        %v4322 = vunpack.c.h.b16 %v2204
        %v4323 = vunpack.c.l.b16 %v2205
        %v4324 = vunpack.c.h.b16 %v2205
        %v4325 = vunpack.c.l.b16 %v2206
        %v4326 = vunpack.c.h.b16 %v2206
        %v4327 = vunpack.c.l.b16 %v2207
        %v4328 = vunpack.c.h.b16 %v2207
        %v4329 = vunpack.c.l.b16 %v2208
        %v4330 = vunpack.c.h.b16 %v2208
        %v4331 = vunpack.c.l.b16 %v2209
        %v4332 = vunpack.c.h.b16 %v2209
        %v4333 = vunpack.c.l.b16 %v2210
        %v4334 = vunpack.c.h.b16 %v2210
        %v4335 = vunpack.c.l.b16 %v2211
        %v4336 = vunpack.c.h.b16 %v2211
        %v4337 = vunpack.c.l.b16 %v2212
        %v4338 = vunpack.c.h.b16 %v2212
        %v4339 = vunpack.c.l.b16 %v2213
        %v4340 = vunpack.c.h.b16 %v2213
        %v4341 = vunpack.c.l.b16 %v2214
        %v4342 = vunpack.c.h.b16 %v2214
        %v4343 = vunpack.c.l.b16 %v2215
        %v4344 = vunpack.c.h.b16 %v2215
        %v4345 = vunpack.c.l.b16 %v2216
        %v4346 = vunpack.c.h.b16 %v2216
        %v4347 = vunpack.c.l.b16 %v2217
        %v4348 = vunpack.c.h.b16 %v2217
        %v4349 = vunpack.c.l.b16 %v2218
        %v4350 = vunpack.c.h.b16 %v2218
        %v4351 = vunpack.c.l.b16 %v2219
        %v4352 = vunpack.c.h.b16 %v2219
        %v4353 = vunpack.c.l.b16 %v2220
        %v4354 = vunpack.c.h.b16 %v2220
        %v4355 = vunpack.c.l.b16 %v2221
        %v4356 = vunpack.c.h.b16 %v2221
        %v4357 = vunpack.c.l.b16 %v2222
        %v4358 = vunpack.c.h.b16 %v2222
        %v4359 = vunpack.c.l.b16 %v2223
        %v4360 = vunpack.c.h.b16 %v2223
        %v4361 = vunpack.c.l.b16 %v2224
        %v4362 = vunpack.c.h.b16 %v2224
        %v4363 = vunpack.c.l.b16 %v2225
        %v4364 = vunpack.c.h.b16 %v2225
        %v4365 = vunpack.c.l.b16 %v2226
        %v4366 = vunpack.c.h.b16 %v2226
        %v4367 = vunpack.c.l.b16 %v2227
        %v4368 = vunpack.c.h.b16 %v2227
        %v4369 = vunpack.c.l.b16 %v2228
        %v4370 = vunpack.c.h.b16 %v2228
        %v4371 = vunpack.c.l.b16 %v2229
        %v4372 = vunpack.c.h.b16 %v2229
        %v4373 = vunpack.c.l.b16 %v2230
        %v4374 = vunpack.c.h.b16 %v2230
        %v4375 = vunpack.c.l.b16 %v2231
        %v4376 = vunpack.c.h.b16 %v2231
        %v4377 = vunpack.c.l.b16 %v2232
        %v4378 = vunpack.c.h.b16 %v2232
        %v4379 = vunpack.c.l.b16 %v2233
        %v4380 = vunpack.c.h.b16 %v2233
        %v4381 = vunpack.c.l.b16 %v2234
        %v4382 = vunpack.c.h.b16 %v2234
        %v4383 = vunpack.c.l.b16 %v2235
        %v4384 = vunpack.c.h.b16 %v2235
        %v4385 = vunpack.c.l.b16 %v2236
        %v4386 = vunpack.c.h.b16 %v2236
        %v4387 = vunpack.c.l.b16 %v2237
        %v4388 = vunpack.c.h.b16 %v2237
        %v4389 = vunpack.c.l.b16 %v2238
        %v4390 = vunpack.c.h.b16 %v2238
        %v4391 = vunpack.c.l.b16 %v2239
        %v4392 = vunpack.c.h.b16 %v2239
        %v4393 = vunpack.c.l.b16 %v2240
        %v4394 = vunpack.c.h.b16 %v2240
        %v4395 = vunpack.c.l.b16 %v2241
        %v4396 = vunpack.c.h.b16 %v2241
        %v4397 = vunpack.c.l.b16 %v2242
        %v4398 = vunpack.c.h.b16 %v2242
        %v4399 = vunpack.c.l.b16 %v2243
        %v4400 = vunpack.c.h.b16 %v2243
        %v4401 = vunpack.c.l.b16 %v2244
        %v4402 = vunpack.c.h.b16 %v2244
        %v4403 = vunpack.c.l.b16 %v2245
        %v4404 = vunpack.c.h.b16 %v2245
        %v4405 = vunpack.c.l.b16 %v2246
        %v4406 = vunpack.c.h.b16 %v2246
        %v4407 = vunpack.c.l.b16 %v2247
        %v4408 = vunpack.c.h.b16 %v2247
        %v4409 = vunpack.c.l.b16 %v2248
        %v4410 = vunpack.c.h.b16 %v2248
        %v4411 = vunpack.c.l.b16 %v2249
        %v4412 = vunpack.c.h.b16 %v2249
        %v4413 = vunpack.c.l.b16 %v2250
        %v4414 = vunpack.c.h.b16 %v2250
        %v4415 = vunpack.c.l.b16 %v2251
        %v4416 = vunpack.c.h.b16 %v2251
        %v4417 = vunpack.c.l.b16 %v2252
        %v4418 = vunpack.c.h.b16 %v2252
        %v4419 = vunpack.c.l.b16 %v2253
        %v4420 = vunpack.c.h.b16 %v2253
        %v4421 = vunpack.c.l.b16 %v2254
        %v4422 = vunpack.c.h.b16 %v2254
        %v4423 = vunpack.c.l.b16 %v2255
        %v4424 = vunpack.c.h.b16 %v2255
        %v4425 = vunpack.c.l.b16 %v2256
        %v4426 = vunpack.c.h.b16 %v2256
        %v4427 = vunpack.c.l.b16 %v2257
        %v4428 = vunpack.c.h.b16 %v2257
        %v4429 = vunpack.c.l.b16 %v2258
        %v4430 = vunpack.c.h.b16 %v2258
        %v4431 = vunpack.c.l.b16 %v2259
        %v4432 = vunpack.c.h.b16 %v2259
        %v4433 = vunpack.c.l.b16 %v2260
        %v4434 = vunpack.c.h.b16 %v2260
        %v4435 = vunpack.c.l.b16 %v2261
        %v4436 = vunpack.c.h.b16 %v2261
        %v4437 = vunpack.c.l.b16 %v2262
        %v4438 = vunpack.c.h.b16 %v2262
        %v4439 = vunpack.c.l.b16 %v2263
        %v4440 = vunpack.c.h.b16 %v2263
        %v4441 = vunpack.c.l.b16 %v2264
        %v4442 = vunpack.c.h.b16 %v2264
        %v4443 = vunpack.c.l.b16 %v2265
        %v4444 = vunpack.c.h.b16 %v2265
        %v4445 = vunpack.c.l.b16 %v2266
        %v4446 = vunpack.c.h.b16 %v2266
        %v4447 = vunpack.c.l.b16 %v2267
        %v4448 = vunpack.c.h.b16 %v2267
        %v4449 = vunpack.c.l.b16 %v2268
        %v4450 = vunpack.c.h.b16 %v2268
        %v4451 = vunpack.c.l.b16 %v2269
        %v4452 = vunpack.c.h.b16 %v2269
        %v4453 = vunpack.c.l.b16 %v2270
        %v4454 = vunpack.c.h.b16 %v2270
        %v4455 = vunpack.c.l.b16 %v2271
        %v4456 = vunpack.c.h.b16 %v2271
        %v4457 = vunpack.c.l.b16 %v2272
        %v4458 = vunpack.c.h.b16 %v2272
        %v4459 = vunpack.c.l.b16 %v2273
        %v4460 = vunpack.c.h.b16 %v2273
        %v4461 = vunpack.c.l.b16 %v2274
        %v4462 = vunpack.c.h.b16 %v2274
        %v4463 = vunpack.c.l.b16 %v2275
        %v4464 = vunpack.c.h.b16 %v2275
        %v4465 = vunpack.c.l.b16 %v2276
        %v4466 = vunpack.c.h.b16 %v2276
        %v4467 = vunpack.c.l.b16 %v2277
        %v4468 = vunpack.c.h.b16 %v2277
        %v4469 = vunpack.c.l.b16 %v2278
        %v4470 = vunpack.c.h.b16 %v2278
        %v4471 = vunpack.c.l.b16 %v2279
        %v4472 = vunpack.c.h.b16 %v2279
        %v4473 = vunpack.c.l.b16 %v2280
        %v4474 = vunpack.c.h.b16 %v2280
        %v4475 = vunpack.c.l.b16 %v2281
        %v4476 = vunpack.c.h.b16 %v2281
        %v4477 = vunpack.c.l.b16 %v2282
        %v4478 = vunpack.c.h.b16 %v2282
        %v4479 = vunpack.c.l.b16 %v2283
        %v4480 = vunpack.c.h.b16 %v2283
        %v4481 = vunpack.c.l.b16 %v2284
        %v4482 = vunpack.c.h.b16 %v2284
        %v4483 = vunpack.c.l.b16 %v2285
        %v4484 = vunpack.c.h.b16 %v2285
        %v4485 = vunpack.c.l.b16 %v2286
        %v4486 = vunpack.c.h.b16 %v2286
        %v4487 = vunpack.c.l.b16 %v2287
        %v4488 = vunpack.c.h.b16 %v2287
        %v4489 = vunpack.c.l.b16 %v2288
        %v4490 = vunpack.c.h.b16 %v2288
        %v4491 = vunpack.c.l.b16 %v2289
        %v4492 = vunpack.c.h.b16 %v2289
        %v4493 = vunpack.c.l.b16 %v2290
        %v4494 = vunpack.c.h.b16 %v2290
        %v4495 = vunpack.c.l.b16 %v2291
        %v4496 = vunpack.c.h.b16 %v2291
        %v4497 = vunpack.c.l.b16 %v2292
        %v4498 = vunpack.c.h.b16 %v2292
        %v4499 = vunpack.c.l.b16 %v2293
        %v4500 = vunpack.c.h.b16 %v2293
        %v4501 = vunpack.c.l.b16 %v2294
        %v4502 = vunpack.c.h.b16 %v2294
        %v4503 = vunpack.c.l.b16 %v2295
        %v4504 = vunpack.c.h.b16 %v2295
        %v4505 = vunpack.c.l.b16 %v2296
        %v4506 = vunpack.c.h.b16 %v2296
        %v4507 = vunpack.c.l.b16 %v2297
        %v4508 = vunpack.c.h.b16 %v2297
        %v4509 = vunpack.c.l.b16 %v2298
        %v4510 = vunpack.c.h.b16 %v2298
        %v4511 = vunpack.c.l.b16 %v2299
        %v4512 = vunpack.c.h.b16 %v2299
        %v4513 = vunpack.c.l.b16 %v2300
        %v4514 = vunpack.c.h.b16 %v2300
        %v4515 = vunpack.c.l.b16 %v2301
        %v4516 = vunpack.c.h.b16 %v2301
        %v4517 = vunpack.c.l.b16 %v2302
        %v4518 = vunpack.c.h.b16 %v2302
        %v4519 = vunpack.c.l.b16 %v2303
        %v4520 = vunpack.c.h.b16 %v2303
        %v4521 = vunpack.c.l.b16 %v2304
        %v4522 = vunpack.c.h.b16 %v2304
        %v4523 = vunpack.c.l.b16 %v2305
        %v4524 = vunpack.c.h.b16 %v2305
        %v4525 = vunpack.c.l.b16 %v2306
        %v4526 = vunpack.c.h.b16 %v2306
        %v4527 = vunpack.c.l.b16 %v2307
        %v4528 = vunpack.c.h.b16 %v2307
        %v4529 = vunpack.c.l.b16 %v2308
        %v4530 = vunpack.c.h.b16 %v2308
        %v4531 = vunpack.c.l.b16 %v2309
        %v4532 = vunpack.c.h.b16 %v2309
        %v4533 = vunpack.c.l.b16 %v2310
        %v4534 = vunpack.c.h.b16 %v2310
        %v4535 = vunpack.c.l.b16 %v2311
        %v4536 = vunpack.c.h.b16 %v2311
        %v4537 = vunpack.c.l.b16 %v2312
        %v4538 = vunpack.c.h.b16 %v2312
        %v4539 = vunpack.c.l.b16 %v2313
        %v4540 = vunpack.c.h.b16 %v2313
        %v4541 = vunpack.c.l.b16 %v2314
        %v4542 = vunpack.c.h.b16 %v2314
        %v4543 = vunpack.c.l.b16 %v2315
        %v4544 = vunpack.c.h.b16 %v2315
        %v4545 = vunpack.c.l.b16 %v2316
        %v4546 = vunpack.c.h.b16 %v2316
        %v4547 = vunpack.c.l.b16 %v2317
        %v4548 = vunpack.c.h.b16 %v2317
        %v4549 = vunpack.c.l.b16 %v2318
        %v4550 = vunpack.c.h.b16 %v2318
        %v4551 = vunpack.c.l.b16 %v2319
        %v4552 = vunpack.c.h.b16 %v2319
        %v4553 = vunpack.c.l.b16 %v2320
        %v4554 = vunpack.c.h.b16 %v2320
        %v4555 = vunpack.c.l.b16 %v2321
        %v4556 = vunpack.c.h.b16 %v2321
        %v4557 = vunpack.c.l.b16 %v2322
        %v4558 = vunpack.c.h.b16 %v2322
        %v4559 = vunpack.c.l.b16 %v2323
        %v4560 = vunpack.c.h.b16 %v2323
        %v4561 = vunpack.c.l.b16 %v2324
        %v4562 = vunpack.c.h.b16 %v2324
        %v4563 = vunpack.c.l.b16 %v2325
        %v4564 = vunpack.c.h.b16 %v2325
        %v4565 = vunpack.c.l.b16 %v2326
        %v4566 = vunpack.c.h.b16 %v2326
        %v4567 = vunpack.c.l.b16 %v2327
        %v4568 = vunpack.c.h.b16 %v2327
        %v4569 = vunpack.c.l.b16 %v2328
        %v4570 = vunpack.c.h.b16 %v2328
        %v4571 = vunpack.c.l.b16 %v2329
        %v4572 = vunpack.c.h.b16 %v2329
        %v4573 = vunpack.c.l.b16 %v2330
        %v4574 = vunpack.c.h.b16 %v2330
        %v4575 = vunpack.c.l.b16 %v2331
        %v4576 = vunpack.c.h.b16 %v2331
        %v4577 = vunpack.c.l.b16 %v2332
        %v4578 = vunpack.c.h.b16 %v2332
        %v4579 = vunpack.c.l.b16 %v2333
        %v4580 = vunpack.c.h.b16 %v2333
        %v4581 = vunpack.c.l.b16 %v2334
        %v4582 = vunpack.c.h.b16 %v2334
        %v4583 = vunpack.c.l.b16 %v2335
        %v4584 = vunpack.c.h.b16 %v2335
        %v4585 = vunpack.c.l.b16 %v2336
        %v4586 = vunpack.c.h.b16 %v2336
        %v4587 = vunpack.c.l.b16 %v2337
        %v4588 = vunpack.c.h.b16 %v2337
        %v4589 = vunpack.c.l.b16 %v2338
        %v4590 = vunpack.c.h.b16 %v2338
        %v4591 = vunpack.c.l.b16 %v2339
        %v4592 = vunpack.c.h.b16 %v2339
        %v4593 = vunpack.c.l.b16 %v2340
        %v4594 = vunpack.c.h.b16 %v2340
        %v4595 = vunpack.c.l.b16 %v2341
        %v4596 = vunpack.c.h.b16 %v2341
        %v4597 = vunpack.c.l.b16 %v2342
        %v4598 = vunpack.c.h.b16 %v2342
        %v4599 = vunpack.c.l.b16 %v2343
        %v4600 = vunpack.c.h.b16 %v2343
        %v4601 = vunpack.c.l.b16 %v2344
        %v4602 = vunpack.c.h.b16 %v2344
        %v4603 = vunpack.c.l.b16 %v2345
        %v4604 = vunpack.c.h.b16 %v2345
        %v4605 = vunpack.c.l.b16 %v2346
        %v4606 = vunpack.c.h.b16 %v2346
        %v4607 = vunpack.c.l.b16 %v2347
        %v4608 = vunpack.c.h.b16 %v2347
        %v4609 = vunpack.c.l.b16 %v2348
        %v4610 = vunpack.c.h.b16 %v2348
        %v4611 = vunpack.c.l.b16 %v2349
        %v4612 = vunpack.c.h.b16 %v2349
        %v4613 = vunpack.c.l.b16 %v2350
        %v4614 = vunpack.c.h.b16 %v2350
        %v4615 = vunpack.c.l.b16 %v2351
        %v4616 = vunpack.c.h.b16 %v2351
        %v4617 = vunpack.c.l.b16 %v2352
        %v4618 = vunpack.c.h.b16 %v2352
        %v4619 = vunpack.c.l.b16 %v2353
        %v4620 = vunpack.c.h.b16 %v2353
        %v4621 = vunpack.c.l.b16 %v2354
        %v4622 = vunpack.c.h.b16 %v2354
        %v4623 = vunpack.c.l.b16 %v2355
        %v4624 = vunpack.c.h.b16 %v2355
        %v4625 = vunpack.c.l.b16 %v2356
        %v4626 = vunpack.c.h.b16 %v2356
        %v4627 = vunpack.c.l.b16 %v2357
        %v4628 = vunpack.c.h.b16 %v2357
        %v4629 = vunpack.c.l.b16 %v2358
        %v4630 = vunpack.c.h.b16 %v2358
        %v4631 = vunpack.c.l.b16 %v2359
        %v4632 = vunpack.c.h.b16 %v2359
        %v4633 = vunpack.c.l.b16 %v2360
        %v4634 = vunpack.c.h.b16 %v2360
        %v4635 = vunpack.c.l.b16 %v2361
        %v4636 = vunpack.c.h.b16 %v2361
        %v4637 = vunpack.c.l.b16 %v2362
        %v4638 = vunpack.c.h.b16 %v2362
        %v4639 = vunpack.c.l.b16 %v2363
        %v4640 = vunpack.c.h.b16 %v2363
        %v4641 = vunpack.c.l.b16 %v2364
        %v4642 = vunpack.c.h.b16 %v2364
        %v4643 = vunpack.c.l.b16 %v2365
        %v4644 = vunpack.c.h.b16 %v2365
        %v4645 = vunpack.c.l.b16 %v2366
        %v4646 = vunpack.c.h.b16 %v2366
        %v4647 = vunpack.c.l.b16 %v2367
        %v4648 = vunpack.c.h.b16 %v2367
        %v4649 = vunpack.c.l.b16 %v2368
        %v4650 = vunpack.c.h.b16 %v2368
        %v4651 = vunpack.c.l.b16 %v2369
        %v4652 = vunpack.c.h.b16 %v2369
        %v4653 = vunpack.c.l.b16 %v2370
        %v4654 = vunpack.c.h.b16 %v2370
        %v4655 = vunpack.c.l.b16 %v2371
        %v4656 = vunpack.c.h.b16 %v2371
        %v4657 = vunpack.c.l.b16 %v2372
        %v4658 = vunpack.c.h.b16 %v2372
        %v4659 = vunpack.c.l.b16 %v2373
        %v4660 = vunpack.c.h.b16 %v2373
        %v4661 = vunpack.c.l.b16 %v2374
        %v4662 = vunpack.c.h.b16 %v2374
        %v4663 = vunpack.c.l.b16 %v2375
        %v4664 = vunpack.c.h.b16 %v2375
        %v4665 = vunpack.c.l.b16 %v2376
        %v4666 = vunpack.c.h.b16 %v2376
        %v4667 = vunpack.c.l.b16 %v2377
        %v4668 = vunpack.c.h.b16 %v2377
        %v4669 = vunpack.c.l.b16 %v2378
        %v4670 = vunpack.c.h.b16 %v2378
        %v4671 = vunpack.c.l.b16 %v2379
        %v4672 = vunpack.c.h.b16 %v2379
        %v4673 = vunpack.c.l.b16 %v2380
        %v4674 = vunpack.c.h.b16 %v2380
        %v4675 = vunpack.c.l.b16 %v2381
        %v4676 = vunpack.c.h.b16 %v2381
        %v4677 = vunpack.c.l.b16 %v2382
        %v4678 = vunpack.c.h.b16 %v2382
        %v4679 = vunpack.c.l.b16 %v2383
        %v4680 = vunpack.c.h.b16 %v2383
        %v4681 = vunpack.c.l.b16 %v2384
        %v4682 = vunpack.c.h.b16 %v2384
        %v4683 = vunpack.c.l.b16 %v2385
        %v4684 = vunpack.c.h.b16 %v2385
        %v4685 = vunpack.c.l.b16 %v2386
        %v4686 = vunpack.c.h.b16 %v2386
        %v4687 = vunpack.c.l.b16 %v2387
        %v4688 = vunpack.c.h.b16 %v2387
        %v4689 = vunpack.c.l.b16 %v2388
        %v4690 = vunpack.c.h.b16 %v2388
        %v4691 = vunpack.c.l.b16 %v2389
        %v4692 = vunpack.c.h.b16 %v2389
        %v4693 = vunpack.c.l.b16 %v2390
        %v4694 = vunpack.c.h.b16 %v2390
        %v4695 = vunpack.c.l.b16 %v2391
        %v4696 = vunpack.c.h.b16 %v2391
        %v4697 = vunpack.c.l.b16 %v2392
        %v4698 = vunpack.c.h.b16 %v2392
        %v4699 = vunpack.c.l.b16 %v2393
        %v4700 = vunpack.c.h.b16 %v2393
        %v4701 = vunpack.c.l.b16 %v2394
        %v4702 = vunpack.c.h.b16 %v2394
        %v4703 = vunpack.c.l.b16 %v2395
        %v4704 = vunpack.c.h.b16 %v2395
        %v4705 = vunpack.c.l.b16 %v2396
        %v4706 = vunpack.c.h.b16 %v2396
        %v4707 = vunpack.c.l.b16 %v2397
        %v4708 = vunpack.c.h.b16 %v2397
        %v4709 = vunpack.c.l.b16 %v2398
        %v4710 = vunpack.c.h.b16 %v2398
        %v4711 = vunpack.c.l.b16 %v2399
        %v4712 = vunpack.c.h.b16 %v2399
        %v4713 = vunpack.c.l.b16 %v2400
        %v4714 = vunpack.c.h.b16 %v2400
        %v4715 = vunpack.c.l.b16 %v2401
        %v4716 = vunpack.c.h.b16 %v2401
        %v4717 = vunpack.c.l.b16 %v2402
        %v4718 = vunpack.c.h.b16 %v2402
        %v4719 = vunpack.c.l.b16 %v2403
        %v4720 = vunpack.c.h.b16 %v2403
        %v4721 = vunpack.c.l.b16 %v2404
        %v4722 = vunpack.c.h.b16 %v2404
        %v4723 = vunpack.c.l.b16 %v2405
        %v4724 = vunpack.c.h.b16 %v2405
        %v4725 = vunpack.c.l.b16 %v2406
        %v4726 = vunpack.c.h.b16 %v2406
        %v4727 = vunpack.c.l.b16 %v2407
        %v4728 = vunpack.c.h.b16 %v2407
        %v4729 = vunpack.c.l.b16 %v2408
        %v4730 = vunpack.c.h.b16 %v2408
        %v4731 = vunpack.c.l.b16 %v2409
        %v4732 = vunpack.c.h.b16 %v2409
        %v4733 = vunpack.c.l.b16 %v2410
        %v4734 = vunpack.c.h.b16 %v2410
        %v4735 = vunpack.c.l.b16 %v2411
        %v4736 = vunpack.c.h.b16 %v2411
        %v4737 = vunpack.c.l.b16 %v2412
        %v4738 = vunpack.c.h.b16 %v2412
        %v4739 = vunpack.c.l.b16 %v2413
        %v4740 = vunpack.c.h.b16 %v2413
        %v4741 = vunpack.c.l.b16 %v2414
        %v4742 = vunpack.c.h.b16 %v2414
        %v4743 = vunpack.c.l.b16 %v2415
        %v4744 = vunpack.c.h.b16 %v2415
        %v4745 = vunpack.c.l.b16 %v2416
        %v4746 = vunpack.c.h.b16 %v2416
        %v4747 = vunpack.c.l.b16 %v2417
        %v4748 = vunpack.c.h.b16 %v2417
        %v4749 = vunpack.c.l.b16 %v2418
        %v4750 = vunpack.c.h.b16 %v2418
        %v4751 = vunpack.c.l.b16 %v2419
        %v4752 = vunpack.c.h.b16 %v2419
        %v4753 = vunpack.c.l.b16 %v2420
        %v4754 = vunpack.c.h.b16 %v2420
        %v4755 = vunpack.c.l.b16 %v2421
        %v4756 = vunpack.c.h.b16 %v2421
        %v4757 = vunpack.c.l.b16 %v2422
        %v4758 = vunpack.c.h.b16 %v2422
        %v4759 = vunpack.c.l.b16 %v2423
        %v4760 = vunpack.c.h.b16 %v2423
        %v4761 = vunpack.c.l.b16 %v2424
        %v4762 = vunpack.c.h.b16 %v2424
        %v4763 = vunpack.c.l.b16 %v2425
        %v4764 = vunpack.c.h.b16 %v2425
        %v4765 = vunpack.c.l.b16 %v2426
        %v4766 = vunpack.c.h.b16 %v2426
        %v4767 = vunpack.c.l.b16 %v2427
        %v4768 = vunpack.c.h.b16 %v2427
        %v4769 = vunpack.c.l.b16 %v2428
        %v4770 = vunpack.c.h.b16 %v2428
        %v4771 = vunpack.c.l.b16 %v2429
        %v4772 = vunpack.c.h.b16 %v2429
        %v4773 = vunpack.c.l.b16 %v2430
        %v4774 = vunpack.c.h.b16 %v2430
        %v4775 = vunpack.c.l.b16 %v2431
        %v4776 = vunpack.c.h.b16 %v2431
        %v4777 = vunpack.c.l.b16 %v2432
        %v4778 = vunpack.c.h.b16 %v2432
        %v4779 = vunpack.c.l.b16 %v2433
        %v4780 = vunpack.c.h.b16 %v2433
        %v4781 = vunpack.c.l.b16 %v2434
        %v4782 = vunpack.c.h.b16 %v2434
        %v4783 = vunpack.c.l.b16 %v2435
        %v4784 = vunpack.c.h.b16 %v2435
        %v4785 = vunpack.c.l.b16 %v2436
        %v4786 = vunpack.c.h.b16 %v2436
        %v4787 = vunpack.c.l.b16 %v2437
        %v4788 = vunpack.c.h.b16 %v2437
        %v4789 = vunpack.c.l.b16 %v2438
        %v4790 = vunpack.c.h.b16 %v2438
        %v4791 = vunpack.c.l.b16 %v2439
        %v4792 = vunpack.c.h.b16 %v2439
        %v4793 = vunpack.c.l.b16 %v2440
        %v4794 = vunpack.c.h.b16 %v2440
        %v4795 = vunpack.c.l.b16 %v2441
        %v4796 = vunpack.c.h.b16 %v2441
        %v4797 = vunpack.c.l.b16 %v2442
        %v4798 = vunpack.c.h.b16 %v2442
        %v4799 = vunpack.c.l.b16 %v2443
        %v4800 = vunpack.c.h.b16 %v2443
        %v4801 = vunpack.c.l.b16 %v2444
        %v4802 = vunpack.c.h.b16 %v2444
        %v4803 = vunpack.c.l.b16 %v2445
        %v4804 = vunpack.c.h.b16 %v2445
        %v4805 = vunpack.c.l.b16 %v2446
        %v4806 = vunpack.c.h.b16 %v2446
        %v4807 = vunpack.c.l.b16 %v2447
        %v4808 = vunpack.c.h.b16 %v2447
        %v4809 = vunpack.c.l.b16 %v2448
        %v4810 = vunpack.c.h.b16 %v2448
        %v4811 = vunpack.c.l.b16 %v2449
        %v4812 = vunpack.c.h.b16 %v2449
        %v4813 = vunpack.c.l.b16 %v2450
        %v4814 = vunpack.c.h.b16 %v2450
        %v4815 = vunpack.c.l.b16 %v2451
        %v4816 = vunpack.c.h.b16 %v2451
        %v4817 = vunpack.c.l.b16 %v2452
        %v4818 = vunpack.c.h.b16 %v2452
        %v4819 = vunpack.c.l.b16 %v2453
        %v4820 = vunpack.c.h.b16 %v2453
        %v4821 = vunpack.c.l.b16 %v2454
        %v4822 = vunpack.c.h.b16 %v2454
        %v4823 = vunpack.c.l.b16 %v2455
        %v4824 = vunpack.c.h.b16 %v2455
        %v4825 = vunpack.c.l.b16 %v2456
        %v4826 = vunpack.c.h.b16 %v2456
        %v4827 = vunpack.c.l.b16 %v2457
        %v4828 = vunpack.c.h.b16 %v2457
        %v4829 = vunpack.c.l.b16 %v2458
        %v4830 = vunpack.c.h.b16 %v2458
        %v4831 = vunpack.c.l.b16 %v2459
        %v4832 = vunpack.c.h.b16 %v2459
        %v4833 = vunpack.c.l.b16 %v2460
        %v4834 = vunpack.c.h.b16 %v2460
        %v4835 = vunpack.c.l.b16 %v2461
        %v4836 = vunpack.c.h.b16 %v2461
        %v4837 = vunpack.c.l.b16 %v2462
        %v4838 = vunpack.c.h.b16 %v2462
        %v4839 = vunpack.c.l.b16 %v2463
        %v4840 = vunpack.c.h.b16 %v2463
        %v4841 = vunpack.c.l.b16 %v2464
        %v4842 = vunpack.c.h.b16 %v2464
        %v4843 = vunpack.c.l.b16 %v2465
        %v4844 = vunpack.c.h.b16 %v2465
        %v4845 = vunpack.c.l.b16 %v2466
        %v4846 = vunpack.c.h.b16 %v2466
        %v4847 = vunpack.c.l.b16 %v2467
        %v4848 = vunpack.c.h.b16 %v2467
        %v4849 = vunpack.c.l.b16 %v2468
        %v4850 = vunpack.c.h.b16 %v2468
        %v4851 = vunpack.c.l.b16 %v2469
        %v4852 = vunpack.c.h.b16 %v2469
        %v4853 = vunpack.c.l.b16 %v2470
        %v4854 = vunpack.c.h.b16 %v2470
        %v4855 = vunpack.c.l.b16 %v2471
        %v4856 = vunpack.c.h.b16 %v2471
        %v4857 = vunpack.c.l.b16 %v2472
        %v4858 = vunpack.c.h.b16 %v2472
        %v4859 = vunpack.c.l.b16 %v2473
        %v4860 = vunpack.c.h.b16 %v2473
        %v4861 = vunpack.c.l.b16 %v2474
        %v4862 = vunpack.c.h.b16 %v2474
        %v4863 = vunpack.c.l.b16 %v2475
        %v4864 = vunpack.c.h.b16 %v2475
        %v4865 = vunpack.c.l.b16 %v2476
        %v4866 = vunpack.c.h.b16 %v2476
        %v4867 = vunpack.c.l.b16 %v2477
        %v4868 = vunpack.c.h.b16 %v2477
        %v4869 = vunpack.c.l.b16 %v2478
        %v4870 = vunpack.c.h.b16 %v2478
        %v4871 = vunpack.c.l.b16 %v2479
        %v4872 = vunpack.c.h.b16 %v2479
        %v4873 = vunpack.c.l.b16 %v2480
        %v4874 = vunpack.c.h.b16 %v2480
        %v4875 = vunpack.c.l.b16 %v2481
        %v4876 = vunpack.c.h.b16 %v2481
        %v4877 = vunpack.c.l.b16 %v2482
        %v4878 = vunpack.c.h.b16 %v2482
        %v4879 = vunpack.c.l.b16 %v2483
        %v4880 = vunpack.c.h.b16 %v2483
        %v4881 = vunpack.c.l.b16 %v2484
        %v4882 = vunpack.c.h.b16 %v2484
        %v4883 = vunpack.c.l.b16 %v2485
        %v4884 = vunpack.c.h.b16 %v2485
        %v4885 = vunpack.c.l.b16 %v2486
        %v4886 = vunpack.c.h.b16 %v2486
        %v4887 = vunpack.c.l.b16 %v2487
        %v4888 = vunpack.c.h.b16 %v2487
        %v4889 = vunpack.c.l.b16 %v2488
        %v4890 = vunpack.c.h.b16 %v2488
        %v4891 = vunpack.c.l.b16 %v2489
        %v4892 = vunpack.c.h.b16 %v2489
        %v4893 = vunpack.c.l.b16 %v2490
        %v4894 = vunpack.c.h.b16 %v2490
        %v4895 = vunpack.c.l.b16 %v2491
        %v4896 = vunpack.c.h.b16 %v2491
        %v4897 = vunpack.c.l.b16 %v2492
        %v4898 = vunpack.c.h.b16 %v2492
        %v4899 = vunpack.c.l.b16 %v2493
        %v4900 = vunpack.c.h.b16 %v2493
        %v4901 = vunpack.c.l.b16 %v2494
        %v4902 = vunpack.c.h.b16 %v2494
        %v4903 = vunpack.c.l.b16 %v2495
        %v4904 = vunpack.c.h.b16 %v2495
        %v4905 = vunpack.c.l.b16 %v2496
        %v4906 = vunpack.c.h.b16 %v2496
        %v4907 = vunpack.c.l.b16 %v2497
        %v4908 = vunpack.c.h.b16 %v2497
        %v4909 = vunpack.c.l.b16 %v2498
        %v4910 = vunpack.c.h.b16 %v2498
        %v4911 = vunpack.c.l.b16 %v2499
        %v4912 = vunpack.c.h.b16 %v2499
        %v4913 = vunpack.c.l.b16 %v2500
        %v4914 = vunpack.c.h.b16 %v2500
        %v4915 = vunpack.c.l.b16 %v2501
        %v4916 = vunpack.c.h.b16 %v2501
        %v4917 = vunpack.c.l.b16 %v2502
        %v4918 = vunpack.c.h.b16 %v2502
        %v4919 = vunpack.c.l.b16 %v2503
        %v4920 = vunpack.c.h.b16 %v2503
        %v4921 = vunpack.c.l.b16 %v2504
        %v4922 = vunpack.c.h.b16 %v2504
        %v4923 = vunpack.c.l.b16 %v2505
        %v4924 = vunpack.c.h.b16 %v2505
        %v4925 = vunpack.c.l.b16 %v2506
        %v4926 = vunpack.c.h.b16 %v2506
        %v4927 = vunpack.c.l.b16 %v2507
        %v4928 = vunpack.c.h.b16 %v2507
        %v4929 = vunpack.c.l.b16 %v2508
        %v4930 = vunpack.c.h.b16 %v2508
        %v4931 = vunpack.c.l.b16 %v2509
        %v4932 = vunpack.c.h.b16 %v2509
        %v4933 = vunpack.c.l.b16 %v2510
        %v4934 = vunpack.c.h.b16 %v2510
        %v4935 = vunpack.c.l.b16 %v2511
        %v4936 = vunpack.c.h.b16 %v2511
        %v4937 = vunpack.c.l.b16 %v2512
        %v4938 = vunpack.c.h.b16 %v2512
        %v4939 = vunpack.c.l.b16 %v2513
        %v4940 = vunpack.c.h.b16 %v2513
        %v4941 = vunpack.c.l.b16 %v2514
        %v4942 = vunpack.c.h.b16 %v2514
        %v4943 = vunpack.c.l.b16 %v2515
        %v4944 = vunpack.c.h.b16 %v2515
        %v4945 = vunpack.c.l.b16 %v2516
        %v4946 = vunpack.c.h.b16 %v2516
        %v4947 = vunpack.c.l.b16 %v2517
        %v4948 = vunpack.c.h.b16 %v2517
        %v4949 = vunpack.c.l.b16 %v2518
        %v4950 = vunpack.c.h.b16 %v2518
        %v4951 = vunpack.c.l.b16 %v2519
        %v4952 = vunpack.c.h.b16 %v2519
        %v4953 = vunpack.c.l.b16 %v2520
        %v4954 = vunpack.c.h.b16 %v2520
        %v4955 = vunpack.c.l.b16 %v2521
        %v4956 = vunpack.c.h.b16 %v2521
        %v4957 = vunpack.c.l.b16 %v2522
        %v4958 = vunpack.c.h.b16 %v2522
        %v4959 = vunpack.c.l.b16 %v2523
        %v4960 = vunpack.c.h.b16 %v2523
        %v4961 = vunpack.c.l.b16 %v2524
        %v4962 = vunpack.c.h.b16 %v2524
        %v4963 = vunpack.c.l.b16 %v2525
        %v4964 = vunpack.c.h.b16 %v2525
        %v4965 = vunpack.c.l.b16 %v2526
        %v4966 = vunpack.c.h.b16 %v2526
        %v4967 = vunpack.c.l.b16 %v2527
        %v4968 = vunpack.c.h.b16 %v2527
        %v4969 = vunpack.c.l.b16 %v2528
        %v4970 = vunpack.c.h.b16 %v2528
        %v4971 = vunpack.c.l.b16 %v2529
        %v4972 = vunpack.c.h.b16 %v2529
        %v4973 = vunpack.c.l.b16 %v2530
        %v4974 = vunpack.c.h.b16 %v2530
        %v4975 = vunpack.c.l.b16 %v2531
        %v4976 = vunpack.c.h.b16 %v2531
        %v4977 = vunpack.c.l.b16 %v2532
        %v4978 = vunpack.c.h.b16 %v2532
        %v4979 = vunpack.c.l.b16 %v2533
        %v4980 = vunpack.c.h.b16 %v2533
        %v4981 = vunpack.c.l.b16 %v2534
        %v4982 = vunpack.c.h.b16 %v2534
        %v4983 = vunpack.c.l.b16 %v2535
        %v4984 = vunpack.c.h.b16 %v2535
        %v4985 = vunpack.c.l.b16 %v2536
        %v4986 = vunpack.c.h.b16 %v2536
        %v4987 = vunpack.c.l.b16 %v2537
        %v4988 = vunpack.c.h.b16 %v2537
        %v4989 = vunpack.c.l.b16 %v2538
        %v4990 = vunpack.c.h.b16 %v2538
        %v4991 = vunpack.c.l.b16 %v2539
        %v4992 = vunpack.c.h.b16 %v2539
        %v4993 = vunpack.c.l.b16 %v2540
        %v4994 = vunpack.c.h.b16 %v2540
        %v4995 = vunpack.c.l.b16 %v2541
        %v4996 = vunpack.c.h.b16 %v2541
        %v4997 = vunpack.c.l.b16 %v2542
        %v4998 = vunpack.c.h.b16 %v2542
        %v4999 = vunpack.c.l.b16 %v2543
        %v5000 = vunpack.c.h.b16 %v2543
        %v5001 = vunpack.c.l.b16 %v2544
        %v5002 = vunpack.c.h.b16 %v2544
        %v5003 = vunpack.c.l.b16 %v2545
        %v5004 = vunpack.c.h.b16 %v2545
        %v5005 = vunpack.c.l.b16 %v2546
        %v5006 = vunpack.c.h.b16 %v2546
        %v5007 = vunpack.c.l.b16 %v2547
        %v5008 = vunpack.c.h.b16 %v2547
        %v5009 = vunpack.c.l.b16 %v2548
        %v5010 = vunpack.c.h.b16 %v2548
        %v5011 = vunpack.c.l.b16 %v2549
        %v5012 = vunpack.c.h.b16 %v2549
        %v5013 = vunpack.c.l.b16 %v2550
        %v5014 = vunpack.c.h.b16 %v2550
        %v5015 = vunpack.c.l.b16 %v2551
        %v5016 = vunpack.c.h.b16 %v2551
        %v5017 = vunpack.c.l.b16 %v2552
        %v5018 = vunpack.c.h.b16 %v2552
        %v5019 = vunpack.c.l.b16 %v2553
        %v5020 = vunpack.c.h.b16 %v2553
        %v5021 = vunpack.c.l.b16 %v2554
        %v5022 = vunpack.c.h.b16 %v2554
        %v5023 = vunpack.c.l.b16 %v2555
        %v5024 = vunpack.c.h.b16 %v2555
        %v5025 = vunpack.c.l.b16 %v2556
        %v5026 = vunpack.c.h.b16 %v2556
        %v5027 = vunpack.c.l.b16 %v2557
        %v5028 = vunpack.c.h.b16 %v2557
        %v5029 = vunpack.c.l.b16 %v2558
        %v5030 = vunpack.c.h.b16 %v2558
        %v5031 = vunpack.c.l.b16 %v2559
        %v5032 = vunpack.c.h.b16 %v2559
        %v5033 = vunpack.c.l.b16 %v2560
        %v5034 = vunpack.c.h.b16 %v2560
        %v5035 = vunpack.c.l.b16 %v2561
        %v5036 = vunpack.c.h.b16 %v2561
        %v5037 = vunpack.c.l.b16 %v2562
        %v5038 = vunpack.c.h.b16 %v2562
        %v5039 = vunpack.c.l.b16 %v2563
        %v5040 = vunpack.c.h.b16 %v2563
        %v5041 = vunpack.c.l.b16 %v2564
        %v5042 = vunpack.c.h.b16 %v2564
        %v5043 = vunpack.c.l.b16 %v2565
        %v5044 = vunpack.c.h.b16 %v2565
        %v5045 = vunpack.c.l.b16 %v2566
        %v5046 = vunpack.c.h.b16 %v2566
        %v5047 = vunpack.c.l.b16 %v2567
        %v5048 = vunpack.c.h.b16 %v2567
        %v5049 = vunpack.c.l.b16 %v2568
        %v5050 = vunpack.c.h.b16 %v2568
        %v5051 = vunpack.c.l.b16 %v2569
        %v5052 = vunpack.c.h.b16 %v2569
        %v5053 = vunpack.c.l.b16 %v2570
        %v5054 = vunpack.c.h.b16 %v2570
        %v5055 = vunpack.c.l.b16 %v2571
        %v5056 = vunpack.c.h.b16 %v2571
        %v5057 = vunpack.c.l.b16 %v2572
        %v5058 = vunpack.c.h.b16 %v2572
        %v5059 = vunpack.c.l.b16 %v2573
        %v5060 = vunpack.c.h.b16 %v2573
        %v5061 = vunpack.c.l.b16 %v2574
        %v5062 = vunpack.c.h.b16 %v2574
        %v5063 = vunpack.c.l.b16 %v2575
        %v5064 = vunpack.c.h.b16 %v2575
        %v5065 = vunpack.c.l.b16 %v2576
        %v5066 = vunpack.c.h.b16 %v2576
        %v5067 = vunpack.c.l.b16 %v2577
        %v5068 = vunpack.c.h.b16 %v2577
        %v5069 = vunpack.c.l.b16 %v2578
        %v5070 = vunpack.c.h.b16 %v2578
        %v5071 = vunpack.c.l.b16 %v2579
        %v5072 = vunpack.c.h.b16 %v2579
        %v5073 = vunpack.c.l.b16 %v2580
        %v5074 = vunpack.c.h.b16 %v2580
        %v5075 = vunpack.c.l.b16 %v2581
        %v5076 = vunpack.c.h.b16 %v2581
        %v5077 = vunpack.c.l.b16 %v2582
        %v5078 = vunpack.c.h.b16 %v2582
        %v5079 = vunpack.c.l.b16 %v2583
        %v5080 = vunpack.c.h.b16 %v2583
        %v5081 = vunpack.c.l.b16 %v2584
        %v5082 = vunpack.c.h.b16 %v2584
        %v5083 = vunpack.c.l.b16 %v2585
        %v5084 = vunpack.c.h.b16 %v2585
        %v5085 = vunpack.c.l.b16 %v2586
        %v5086 = vunpack.c.h.b16 %v2586
        %v5087 = vunpack.c.l.b16 %v2587
        %v5088 = vunpack.c.h.b16 %v2587
        %v5089 = vunpack.c.l.b16 %v2588
        %v5090 = vunpack.c.h.b16 %v2588
        %v5091 = vunpack.c.l.b16 %v2589
        %v5092 = vunpack.c.h.b16 %v2589
        %v5093 = vunpack.c.l.b16 %v2590
        %v5094 = vunpack.c.h.b16 %v2590
        %v5095 = vunpack.c.l.b16 %v2591
        %v5096 = vunpack.c.h.b16 %v2591
        %v5097 = vunpack.c.l.b16 %v2592
        %v5098 = vunpack.c.h.b16 %v2592
        %v5099 = vunpack.c.l.b16 %v2593
        %v5100 = vunpack.c.h.b16 %v2593
        %v5101 = vunpack.c.l.b16 %v2594
        %v5102 = vunpack.c.h.b16 %v2594
        %v5103 = vunpack.c.l.b16 %v2595
        %v5104 = vunpack.c.h.b16 %v2595
        %v5105 = vunpack.c.l.b16 %v2596
        %v5106 = vunpack.c.h.b16 %v2596
        %v5107 = vunpack.c.l.b16 %v2597
        %v5108 = vunpack.c.h.b16 %v2597
        %v5109 = vunpack.c.l.b16 %v2598
        %v5110 = vunpack.c.h.b16 %v2598
        %v5111 = vunpack.c.l.b16 %v2599
        %v5112 = vunpack.c.h.b16 %v2599
        %v5113 = vunpack.c.l.b16 %v2600
        %v5114 = vunpack.c.h.b16 %v2600
        %v5115 = vunpack.c.l.b16 %v2601
        %v5116 = vunpack.c.h.b16 %v2601
        %v5117 = vunpack.c.l.b16 %v2602
        %v5118 = vunpack.c.h.b16 %v2602
        %v5119 = vunpack.c.l.b16 %v2603
        %v5120 = vunpack.c.h.b16 %v2603
        %v5121 = vunpack.c.l.b16 %v2604
        %v5122 = vunpack.c.h.b16 %v2604
        %v5123 = vunpack.c.l.b16 %v2605
        %v5124 = vunpack.c.h.b16 %v2605
        %v5125 = vunpack.c.l.b16 %v2606
        %v5126 = vunpack.c.h.b16 %v2606
        %v5127 = vunpack.c.l.b16 %v2607
        %v5128 = vunpack.c.h.b16 %v2607
        %v5129 = vunpack.c.l.b16 %v2608
        %v5130 = vunpack.c.h.b16 %v2608
        %v5131 = vunpack.c.l.b16 %v2609
        %v5132 = vunpack.c.h.b16 %v2609
        %v5133 = vunpack.c.l.b16 %v2610
        %v5134 = vunpack.c.h.b16 %v2610
        %v5135 = vunpack.c.l.b16 %v2611
        %v5136 = vunpack.c.h.b16 %v2611
        %v5137 = vunpack.c.l.b16 %v2612
        %v5138 = vunpack.c.h.b16 %v2612
        %v5139 = vunpack.c.l.b16 %v2613
        %v5140 = vunpack.c.h.b16 %v2613
        %v5141 = vunpack.c.l.b16 %v2614
        %v5142 = vunpack.c.h.b16 %v2614
        %v5143 = vunpack.c.l.b16 %v2615
        %v5144 = vunpack.c.h.b16 %v2615
        %v5145 = vunpack.c.l.b16 %v2616
        %v5146 = vunpack.c.h.b16 %v2616
        %v5147 = vunpack.c.l.b16 %v2617
        %v5148 = vunpack.c.h.b16 %v2617
        %v5149 = vunpack.c.l.b16 %v2618
        %v5150 = vunpack.c.h.b16 %v2618
        %v5151 = vunpack.c.l.b16 %v2619
        %v5152 = vunpack.c.h.b16 %v2619
        %v5153 = vunpack.c.l.b16 %v2620
        %v5154 = vunpack.c.h.b16 %v2620
        %v5155 = vunpack.c.l.b16 %v2621
        %v5156 = vunpack.c.h.b16 %v2621
        %v5157 = vunpack.c.l.b16 %v2622
        %v5158 = vunpack.c.h.b16 %v2622
        %v5159 = vunpack.c.l.b16 %v2623
        %v5160 = vunpack.c.h.b16 %v2623
        %v5161 = vunpack.c.l.b16 %v2624
        %v5162 = vunpack.c.h.b16 %v2624
        %v5163 = vunpack.c.l.b16 %v2625
        %v5164 = vunpack.c.h.b16 %v2625
        %v5165 = vunpack.c.l.b16 %v2626
        %v5166 = vunpack.c.h.b16 %v2626
        %v5167 = vunpack.c.l.b16 %v2627
        %v5168 = vunpack.c.h.b16 %v2627
        %v5169 = vunpack.c.l.b16 %v2628
        %v5170 = vunpack.c.h.b16 %v2628
        %v5171 = vunpack.c.l.b16 %v2629
        %v5172 = vunpack.c.h.b16 %v2629
        %v5173 = vunpack.c.l.b16 %v2630
        %v5174 = vunpack.c.h.b16 %v2630
        %v5175 = vunpack.c.l.b16 %v2631
        %v5176 = vunpack.c.h.b16 %v2631
        %v5177 = vunpack.c.l.b16 %v2632
        %v5178 = vunpack.c.h.b16 %v2632
        %v5179 = vunpack.c.l.b16 %v2633
        %v5180 = vunpack.c.h.b16 %v2633
        %v5181 = vunpack.c.l.b16 %v2634
        %v5182 = vunpack.c.h.b16 %v2634
        %v5183 = vunpack.c.l.b16 %v2635
        %v5184 = vunpack.c.h.b16 %v2635
        %v5185 = vunpack.c.l.b16 %v2636
        %v5186 = vunpack.c.h.b16 %v2636
        %v5187 = vunpack.c.l.b16 %v2637
        %v5188 = vunpack.c.h.b16 %v2637
        %v5189 = vunpack.c.l.b16 %v2638
        %v5190 = vunpack.c.h.b16 %v2638
        %v5191 = vunpack.c.l.b16 %v2639
        %v5192 = vunpack.c.h.b16 %v2639
        %v5193 = vunpack.c.l.b16 %v2640
        %v5194 = vunpack.c.h.b16 %v2640
        %v5195 = vunpack.c.l.b16 %v2641
        %v5196 = vunpack.c.h.b16 %v2641
        %v5197 = vunpack.c.l.b16 %v2642
        %v5198 = vunpack.c.h.b16 %v2642
        %v5199 = vunpack.c.l.b16 %v2643
        %v5200 = vunpack.c.h.b16 %v2643
        %v5201 = vunpack.c.l.b16 %v2644
        %v5202 = vunpack.c.h.b16 %v2644
        %v5203 = vunpack.c.l.b16 %v2645
        %v5204 = vunpack.c.h.b16 %v2645
        %v5205 = vunpack.c.l.b16 %v2646
        %v5206 = vunpack.c.h.b16 %v2646
        %v5207 = vunpack.c.l.b16 %v2647
        %v5208 = vunpack.c.h.b16 %v2647
        %v5209 = vunpack.c.l.b16 %v2648
        %v5210 = vunpack.c.h.b16 %v2648
        %v5211 = vunpack.c.l.b16 %v2649
        %v5212 = vunpack.c.h.b16 %v2649
        %v5213 = vpack.c.b16 %v3649, %v3645
        %v5214 = vpack.c.b16 %v3650, %v3646
        %v5215 = vpack.c.b16 %v3651, %v3647
        %v5216 = vpack.c.b16 %v3652, %v3648
        %v5217 = vpack.c.b16 %v3657, %v3653
        %v5218 = vpack.c.b16 %v3658, %v3654
        %v5219 = vpack.c.b16 %v3659, %v3655
        %v5220 = vpack.c.b16 %v3660, %v3656
        %v5221 = vpack.c.b16 %v3665, %v3661
        %v5222 = vpack.c.b16 %v3666, %v3662
        %v5223 = vpack.c.b16 %v3667, %v3663
        %v5224 = vpack.c.b16 %v3668, %v3664
        %v5225 = vpack.c.b16 %v3673, %v3669
        %v5226 = vpack.c.b16 %v3674, %v3670
        %v5227 = vpack.c.b16 %v3675, %v3671
        %v5228 = vpack.c.b16 %v3676, %v3672
        %v5229 = vpack.c.b16 %v3681, %v3677
        %v5230 = vpack.c.b16 %v3682, %v3678
        %v5231 = vpack.c.b16 %v3683, %v3679
        %v5232 = vpack.c.b16 %v3684, %v3680
        %v5233 = vpack.c.b16 %v3689, %v3685
        %v5234 = vpack.c.b16 %v3690, %v3686
        %v5235 = vpack.c.b16 %v3691, %v3687
        %v5236 = vpack.c.b16 %v3692, %v3688
        %v5237 = vpack.c.b16 %v3697, %v3693
        %v5238 = vpack.c.b16 %v3698, %v3694
        %v5239 = vpack.c.b16 %v3699, %v3695
        %v5240 = vpack.c.b16 %v3700, %v3696
        %v5241 = vpack.c.b16 %v3705, %v3701
        %v5242 = vpack.c.b16 %v3706, %v3702
        %v5243 = vpack.c.b16 %v3707, %v3703
        %v5244 = vpack.c.b16 %v3708, %v3704
        %v5245 = vpack.c.b16 %v3713, %v3709
        %v5246 = vpack.c.b16 %v3714, %v3710
        %v5247 = vpack.c.b16 %v3715, %v3711
        %v5248 = vpack.c.b16 %v3716, %v3712
        %v5249 = vpack.c.b16 %v3721, %v3717
        %v5250 = vpack.c.b16 %v3722, %v3718
        %v5251 = vpack.c.b16 %v3723, %v3719
        %v5252 = vpack.c.b16 %v3724, %v3720
        %v5253 = vpack.c.b16 %v3729, %v3725
        %v5254 = vpack.c.b16 %v3730, %v3726
        %v5255 = vpack.c.b16 %v3731, %v3727
        %v5256 = vpack.c.b16 %v3732, %v3728
        %v5257 = vpack.c.b16 %v3737, %v3733
        %v5258 = vpack.c.b16 %v3738, %v3734
        %v5259 = vpack.c.b16 %v3739, %v3735
        %v5260 = vpack.c.b16 %v3740, %v3736
        %v5261 = vpack.c.b16 %v3745, %v3741
        %v5262 = vpack.c.b16 %v3746, %v3742
        %v5263 = vpack.c.b16 %v3747, %v3743
        %v5264 = vpack.c.b16 %v3748, %v3744
        %v5265 = vpack.c.b16 %v3753, %v3749
        %v5266 = vpack.c.b16 %v3754, %v3750
        %v5267 = vpack.c.b16 %v3755, %v3751
        %v5268 = vpack.c.b16 %v3756, %v3752
        %v5269 = vpack.c.b16 %v3761, %v3757
        %v5270 = vpack.c.b16 %v3762, %v3758
        %v5271 = vpack.c.b16 %v3763, %v3759
        %v5272 = vpack.c.b16 %v3764, %v3760
        %v5273 = vpack.c.b16 %v3769, %v3765
        %v5274 = vpack.c.b16 %v3770, %v3766
        %v5275 = vpack.c.b16 %v3771, %v3767
        %v5276 = vpack.c.b16 %v3772, %v3768
        %v5277 = vpack.c.b16 %v3777, %v3773
        %v5278 = vpack.c.b16 %v3778, %v3774
        %v5279 = vpack.c.b16 %v3779, %v3775
        %v5280 = vpack.c.b16 %v3780, %v3776
        %v5281 = vpack.c.b16 %v3785, %v3781
        %v5282 = vpack.c.b16 %v3786, %v3782
        %v5283 = vpack.c.b16 %v3787, %v3783
        %v5284 = vpack.c.b16 %v3788, %v3784
        %v5285 = vpack.c.b16 %v3793, %v3789
        %v5286 = vpack.c.b16 %v3794, %v3790
        %v5287 = vpack.c.b16 %v3795, %v3791
        %v5288 = vpack.c.b16 %v3796, %v3792
        %v5289 = vpack.c.b16 %v3801, %v3797
        %v5290 = vpack.c.b16 %v3802, %v3798
        %v5291 = vpack.c.b16 %v3803, %v3799
        %v5292 = vpack.c.b16 %v3804, %v3800
        %v5293 = vpack.c.b16 %v3809, %v3805
        %v5294 = vpack.c.b16 %v3810, %v3806
        %v5295 = vpack.c.b16 %v3811, %v3807
        %v5296 = vpack.c.b16 %v3812, %v3808
        %v5297 = vpack.c.b16 %v3817, %v3813
        %v5298 = vpack.c.b16 %v3818, %v3814
        %v5299 = vpack.c.b16 %v3819, %v3815
        %v5300 = vpack.c.b16 %v3820, %v3816
        %v5301 = vpack.c.b16 %v3825, %v3821
        %v5302 = vpack.c.b16 %v3826, %v3822
        %v5303 = vpack.c.b16 %v3827, %v3823
        %v5304 = vpack.c.b16 %v3828, %v3824
        %v5305 = vpack.c.b16 %v3833, %v3829
        %v5306 = vpack.c.b16 %v3834, %v3830
        %v5307 = vpack.c.b16 %v3835, %v3831
        %v5308 = vpack.c.b16 %v3836, %v3832
        %v5309 = vpack.c.b16 %v3841, %v3837
        %v5310 = vpack.c.b16 %v3842, %v3838
        %v5311 = vpack.c.b16 %v3843, %v3839
        %v5312 = vpack.c.b16 %v3844, %v3840
        %v5313 = vpack.c.b16 %v3849, %v3845
        %v5314 = vpack.c.b16 %v3850, %v3846
        %v5315 = vpack.c.b16 %v3851, %v3847
        %v5316 = vpack.c.b16 %v3852, %v3848
        %v5317 = vpack.c.b16 %v3857, %v3853
        %v5318 = vpack.c.b16 %v3858, %v3854
        %v5319 = vpack.c.b16 %v3859, %v3855
        %v5320 = vpack.c.b16 %v3860, %v3856
        %v5321 = vpack.c.b16 %v3865, %v3861
        %v5322 = vpack.c.b16 %v3866, %v3862
        %v5323 = vpack.c.b16 %v3867, %v3863
        %v5324 = vpack.c.b16 %v3868, %v3864
        %v5325 = vpack.c.b16 %v3873, %v3869
        %v5326 = vpack.c.b16 %v3874, %v3870
        %v5327 = vpack.c.b16 %v3875, %v3871
        %v5328 = vpack.c.b16 %v3876, %v3872
        %v5329 = vpack.c.b16 %v3881, %v3877
        %v5330 = vpack.c.b16 %v3882, %v3878
        %v5331 = vpack.c.b16 %v3883, %v3879
        %v5332 = vpack.c.b16 %v3884, %v3880
        %v5333 = vpack.c.b16 %v3889, %v3885
        %v5334 = vpack.c.b16 %v3890, %v3886
        %v5335 = vpack.c.b16 %v3891, %v3887
        %v5336 = vpack.c.b16 %v3892, %v3888
        %v5337 = vpack.c.b16 %v3897, %v3893
        %v5338 = vpack.c.b16 %v3898, %v3894
        %v5339 = vpack.c.b16 %v3899, %v3895
        %v5340 = vpack.c.b16 %v3900, %v3896
        %v5341 = vpack.c.b16 %v3905, %v3901
        %v5342 = vpack.c.b16 %v3906, %v3902
        %v5343 = vpack.c.b16 %v3907, %v3903
        %v5344 = vpack.c.b16 %v3908, %v3904
        %v5345 = vpack.c.b16 %v3913, %v3909
        %v5346 = vpack.c.b16 %v3914, %v3910
        %v5347 = vpack.c.b16 %v3915, %v3911
        %v5348 = vpack.c.b16 %v3916, %v3912
        %v5349 = vpack.c.b16 %v3921, %v3917
        %v5350 = vpack.c.b16 %v3922, %v3918
        %v5351 = vpack.c.b16 %v3923, %v3919
        %v5352 = vpack.c.b16 %v3924, %v3920
        %v5353 = vpack.c.b16 %v3929, %v3925
        %v5354 = vpack.c.b16 %v3930, %v3926
        %v5355 = vpack.c.b16 %v3931, %v3927
        %v5356 = vpack.c.b16 %v3932, %v3928
        %v5357 = vpack.c.b16 %v3937, %v3933
        %v5358 = vpack.c.b16 %v3938, %v3934
        %v5359 = vpack.c.b16 %v3939, %v3935
        %v5360 = vpack.c.b16 %v3940, %v3936
        %v5361 = vpack.c.b16 %v3945, %v3941
        %v5362 = vpack.c.b16 %v3946, %v3942
        %v5363 = vpack.c.b16 %v3947, %v3943
        %v5364 = vpack.c.b16 %v3948, %v3944
        %v5365 = vpack.c.b16 %v3953, %v3949
        %v5366 = vpack.c.b16 %v3954, %v3950
        %v5367 = vpack.c.b16 %v3955, %v3951
        %v5368 = vpack.c.b16 %v3956, %v3952
        %v5369 = vpack.c.b16 %v3961, %v3957
        %v5370 = vpack.c.b16 %v3962, %v3958
        %v5371 = vpack.c.b16 %v3963, %v3959
        %v5372 = vpack.c.b16 %v3964, %v3960
        %v5373 = vpack.c.b16 %v3969, %v3965
        %v5374 = vpack.c.b16 %v3970, %v3966
        %v5375 = vpack.c.b16 %v3971, %v3967
        %v5376 = vpack.c.b16 %v3972, %v3968
        %v5377 = vpack.c.b16 %v3977, %v3973
        %v5378 = vpack.c.b16 %v3978, %v3974
        %v5379 = vpack.c.b16 %v3979, %v3975
        %v5380 = vpack.c.b16 %v3980, %v3976
        %v5381 = vpack.c.b16 %v3985, %v3981
        %v5382 = vpack.c.b16 %v3986, %v3982
        %v5383 = vpack.c.b16 %v3987, %v3983
        %v5384 = vpack.c.b16 %v3988, %v3984
        %v5385 = vpack.c.b16 %v3993, %v3989
        %v5386 = vpack.c.b16 %v3994, %v3990
        %v5387 = vpack.c.b16 %v3995, %v3991
        %v5388 = vpack.c.b16 %v3996, %v3992
        %v5389 = vpack.c.b16 %v4001, %v3997
        %v5390 = vpack.c.b16 %v4002, %v3998
        %v5391 = vpack.c.b16 %v4003, %v3999
        %v5392 = vpack.c.b16 %v4004, %v4000
        %v5393 = vpack.c.b16 %v4009, %v4005
        %v5394 = vpack.c.b16 %v4010, %v4006
        %v5395 = vpack.c.b16 %v4011, %v4007
        %v5396 = vpack.c.b16 %v4012, %v4008
        %v5397 = vpack.c.b16 %v4017, %v4013
        %v5398 = vpack.c.b16 %v4018, %v4014
        %v5399 = vpack.c.b16 %v4019, %v4015
        %v5400 = vpack.c.b16 %v4020, %v4016
        %v5401 = vpack.c.b16 %v4025, %v4021
        %v5402 = vpack.c.b16 %v4026, %v4022
        %v5403 = vpack.c.b16 %v4027, %v4023
        %v5404 = vpack.c.b16 %v4028, %v4024
        %v5405 = vpack.c.b16 %v4033, %v4029
        %v5406 = vpack.c.b16 %v4034, %v4030
        %v5407 = vpack.c.b16 %v4035, %v4031
        %v5408 = vpack.c.b16 %v4036, %v4032
        %v5409 = vpack.c.b16 %v4041, %v4037
        %v5410 = vpack.c.b16 %v4042, %v4038
        %v5411 = vpack.c.b16 %v4043, %v4039
        %v5412 = vpack.c.b16 %v4044, %v4040
        %v5413 = vpack.c.b16 %v4049, %v4045
        %v5414 = vpack.c.b16 %v4050, %v4046
        %v5415 = vpack.c.b16 %v4051, %v4047
        %v5416 = vpack.c.b16 %v4052, %v4048
        %v5417 = vpack.c.b16 %v4057, %v4053
        %v5418 = vpack.c.b16 %v4058, %v4054
        %v5419 = vpack.c.b16 %v4059, %v4055
        %v5420 = vpack.c.b16 %v4060, %v4056
        %v5421 = vpack.c.b16 %v4065, %v4061
        %v5422 = vpack.c.b16 %v4066, %v4062
        %v5423 = vpack.c.b16 %v4067, %v4063
        %v5424 = vpack.c.b16 %v4068, %v4064
        %v5425 = vpack.c.b16 %v4073, %v4069
        %v5426 = vpack.c.b16 %v4074, %v4070
        %v5427 = vpack.c.b16 %v4075, %v4071
        %v5428 = vpack.c.b16 %v4076, %v4072
        %v5429 = vpack.c.b16 %v4081, %v4077
        %v5430 = vpack.c.b16 %v4082, %v4078
        %v5431 = vpack.c.b16 %v4083, %v4079
        %v5432 = vpack.c.b16 %v4084, %v4080
        %v5433 = vpack.c.b16 %v4089, %v4085
        %v5434 = vpack.c.b16 %v4090, %v4086
        %v5435 = vpack.c.b16 %v4091, %v4087
        %v5436 = vpack.c.b16 %v4092, %v4088
        %v5437 = vpack.c.b16 %v4097, %v4093
        %v5438 = vpack.c.b16 %v4098, %v4094
        %v5439 = vpack.c.b16 %v4099, %v4095
        %v5440 = vpack.c.b16 %v4100, %v4096
        %v5441 = vpack.c.b16 %v4105, %v4101
        %v5442 = vpack.c.b16 %v4106, %v4102
        %v5443 = vpack.c.b16 %v4107, %v4103
        %v5444 = vpack.c.b16 %v4108, %v4104
        %v5445 = vpack.c.b16 %v4113, %v4109
        %v5446 = vpack.c.b16 %v4114, %v4110
        %v5447 = vpack.c.b16 %v4115, %v4111
        %v5448 = vpack.c.b16 %v4116, %v4112
        %v5449 = vpack.c.b16 %v4121, %v4117
        %v5450 = vpack.c.b16 %v4122, %v4118
        %v5451 = vpack.c.b16 %v4123, %v4119
        %v5452 = vpack.c.b16 %v4124, %v4120
        %v5453 = vpack.c.b16 %v4129, %v4125
        %v5454 = vpack.c.b16 %v4130, %v4126
        %v5455 = vpack.c.b16 %v4131, %v4127
        %v5456 = vpack.c.b16 %v4132, %v4128
        %v5457 = vpack.c.b16 %v4137, %v4133
        %v5458 = vpack.c.b16 %v4138, %v4134
        %v5459 = vpack.c.b16 %v4139, %v4135
        %v5460 = vpack.c.b16 %v4140, %v4136
        %v5461 = vpack.c.b16 %v4145, %v4141
        %v5462 = vpack.c.b16 %v4146, %v4142
        %v5463 = vpack.c.b16 %v4147, %v4143
        %v5464 = vpack.c.b16 %v4148, %v4144
        %v5465 = vpack.c.b16 %v4153, %v4149
        %v5466 = vpack.c.b16 %v4154, %v4150
        %v5467 = vpack.c.b16 %v4155, %v4151
        %v5468 = vpack.c.b16 %v4156, %v4152
        %v5469 = vpack.c.b16 %v4161, %v4157
        %v5470 = vpack.c.b16 %v4162, %v4158
        %v5471 = vpack.c.b16 %v4163, %v4159
        %v5472 = vpack.c.b16 %v4164, %v4160
        %v5473 = vpack.c.b16 %v4169, %v4165
        %v5474 = vpack.c.b16 %v4170, %v4166
        %v5475 = vpack.c.b16 %v4171, %v4167
        %v5476 = vpack.c.b16 %v4172, %v4168
        %v5477 = vpack.c.b16 %v4177, %v4173
        %v5478 = vpack.c.b16 %v4178, %v4174
        %v5479 = vpack.c.b16 %v4179, %v4175
        %v5480 = vpack.c.b16 %v4180, %v4176
        %v5481 = vpack.c.b16 %v4185, %v4181
        %v5482 = vpack.c.b16 %v4186, %v4182
        %v5483 = vpack.c.b16 %v4187, %v4183
        %v5484 = vpack.c.b16 %v4188, %v4184
        %v5485 = vpack.c.b16 %v4193, %v4189
        %v5486 = vpack.c.b16 %v4194, %v4190
        %v5487 = vpack.c.b16 %v4195, %v4191
        %v5488 = vpack.c.b16 %v4196, %v4192
        %v5489 = vpack.c.b16 %v4201, %v4197
        %v5490 = vpack.c.b16 %v4202, %v4198
        %v5491 = vpack.c.b16 %v4203, %v4199
        %v5492 = vpack.c.b16 %v4204, %v4200
        %v5493 = vpack.c.b16 %v4209, %v4205
        %v5494 = vpack.c.b16 %v4210, %v4206
        %v5495 = vpack.c.b16 %v4211, %v4207
        %v5496 = vpack.c.b16 %v4212, %v4208
        %v5497 = vpack.c.b16 %v4217, %v4213
        %v5498 = vpack.c.b16 %v4218, %v4214
        %v5499 = vpack.c.b16 %v4219, %v4215
        %v5500 = vpack.c.b16 %v4220, %v4216
        %v5501 = vpack.c.b16 %v4225, %v4221
        %v5502 = vpack.c.b16 %v4226, %v4222
        %v5503 = vpack.c.b16 %v4227, %v4223
        %v5504 = vpack.c.b16 %v4228, %v4224
        %v5505 = vpack.c.b16 %v4233, %v4229
        %v5506 = vpack.c.b16 %v4234, %v4230
        %v5507 = vpack.c.b16 %v4235, %v4231
        %v5508 = vpack.c.b16 %v4236, %v4232
        %v5509 = vpack.c.b16 %v4241, %v4237
        %v5510 = vpack.c.b16 %v4242, %v4238
        %v5511 = vpack.c.b16 %v4243, %v4239
        %v5512 = vpack.c.b16 %v4244, %v4240
        %v5513 = vpack.c.b16 %v4249, %v4245
        %v5514 = vpack.c.b16 %v4250, %v4246
        %v5515 = vpack.c.b16 %v4251, %v4247
        %v5516 = vpack.c.b16 %v4252, %v4248
        %v5517 = vpack.c.b16 %v4257, %v4253
        %v5518 = vpack.c.b16 %v4258, %v4254
        %v5519 = vpack.c.b16 %v4259, %v4255
        %v5520 = vpack.c.b16 %v4260, %v4256
        %v5521 = vpack.c.b16 %v4265, %v4261
        %v5522 = vpack.c.b16 %v4266, %v4262
        %v5523 = vpack.c.b16 %v4267, %v4263
        %v5524 = vpack.c.b16 %v4268, %v4264
        %v5525 = vpack.c.b16 %v4273, %v4269
        %v5526 = vpack.c.b16 %v4274, %v4270
        %v5527 = vpack.c.b16 %v4275, %v4271
        %v5528 = vpack.c.b16 %v4276, %v4272
        %v5529 = vpack.c.b16 %v4281, %v4277
        %v5530 = vpack.c.b16 %v4282, %v4278
        %v5531 = vpack.c.b16 %v4283, %v4279
        %v5532 = vpack.c.b16 %v4284, %v4280
        %v5533 = vpack.c.b16 %v4289, %v4285
        %v5534 = vpack.c.b16 %v4290, %v4286
        %v5535 = vpack.c.b16 %v4291, %v4287
        %v5536 = vpack.c.b16 %v4292, %v4288
        %v5537 = vpack.c.b16 %v4297, %v4293
        %v5538 = vpack.c.b16 %v4298, %v4294
        %v5539 = vpack.c.b16 %v4299, %v4295
        %v5540 = vpack.c.b16 %v4300, %v4296
        %v5541 = vpack.c.b16 %v4305, %v4301
        %v5542 = vpack.c.b16 %v4306, %v4302
        %v5543 = vpack.c.b16 %v4307, %v4303
        %v5544 = vpack.c.b16 %v4308, %v4304
        %v5545 = vpack.c.b16 %v4313, %v4309
        %v5546 = vpack.c.b16 %v4314, %v4310
        %v5547 = vpack.c.b16 %v4315, %v4311
        %v5548 = vpack.c.b16 %v4316, %v4312
        %v5549 = vpack.c.b16 %v4321, %v4317
        %v5550 = vpack.c.b16 %v4322, %v4318
        %v5551 = vpack.c.b16 %v4323, %v4319
        %v5552 = vpack.c.b16 %v4324, %v4320
        %v5553 = vpack.c.b16 %v4329, %v4325
        %v5554 = vpack.c.b16 %v4330, %v4326
        %v5555 = vpack.c.b16 %v4331, %v4327
        %v5556 = vpack.c.b16 %v4332, %v4328
        %v5557 = vpack.c.b16 %v4337, %v4333
        %v5558 = vpack.c.b16 %v4338, %v4334
        %v5559 = vpack.c.b16 %v4339, %v4335
        %v5560 = vpack.c.b16 %v4340, %v4336
        %v5561 = vpack.c.b16 %v4345, %v4341
        %v5562 = vpack.c.b16 %v4346, %v4342
        %v5563 = vpack.c.b16 %v4347, %v4343
        %v5564 = vpack.c.b16 %v4348, %v4344
        %v5565 = vpack.c.b16 %v4353, %v4349
        %v5566 = vpack.c.b16 %v4354, %v4350
        %v5567 = vpack.c.b16 %v4355, %v4351
        %v5568 = vpack.c.b16 %v4356, %v4352
        %v5569 = vpack.c.b16 %v4361, %v4357
        %v5570 = vpack.c.b16 %v4362, %v4358
        %v5571 = vpack.c.b16 %v4363, %v4359
        %v5572 = vpack.c.b16 %v4364, %v4360
        %v5573 = vpack.c.b16 %v4369, %v4365
        %v5574 = vpack.c.b16 %v4370, %v4366
        %v5575 = vpack.c.b16 %v4371, %v4367
        %v5576 = vpack.c.b16 %v4372, %v4368
        %v5577 = vpack.c.b16 %v4377, %v4373
        %v5578 = vpack.c.b16 %v4378, %v4374
        %v5579 = vpack.c.b16 %v4379, %v4375
        %v5580 = vpack.c.b16 %v4380, %v4376
        %v5581 = vpack.c.b16 %v4385, %v4381
        %v5582 = vpack.c.b16 %v4386, %v4382
        %v5583 = vpack.c.b16 %v4387, %v4383
        %v5584 = vpack.c.b16 %v4388, %v4384
        %v5585 = vpack.c.b16 %v4393, %v4389
        %v5586 = vpack.c.b16 %v4394, %v4390
        %v5587 = vpack.c.b16 %v4395, %v4391
        %v5588 = vpack.c.b16 %v4396, %v4392
        %v5589 = vpack.c.b16 %v4401, %v4397
        %v5590 = vpack.c.b16 %v4402, %v4398
        %v5591 = vpack.c.b16 %v4403, %v4399
        %v5592 = vpack.c.b16 %v4404, %v4400
        %v5593 = vpack.c.b16 %v4409, %v4405
        %v5594 = vpack.c.b16 %v4410, %v4406
        %v5595 = vpack.c.b16 %v4411, %v4407
        %v5596 = vpack.c.b16 %v4412, %v4408
        %v5597 = vpack.c.b16 %v4417, %v4413
        %v5598 = vpack.c.b16 %v4418, %v4414
        %v5599 = vpack.c.b16 %v4419, %v4415
        %v5600 = vpack.c.b16 %v4420, %v4416
        %v5601 = vpack.c.b16 %v4425, %v4421
        %v5602 = vpack.c.b16 %v4426, %v4422
        %v5603 = vpack.c.b16 %v4427, %v4423
        %v5604 = vpack.c.b16 %v4428, %v4424
        %v5605 = vpack.c.b16 %v4433, %v4429
        %v5606 = vpack.c.b16 %v4434, %v4430
        %v5607 = vpack.c.b16 %v4435, %v4431
        %v5608 = vpack.c.b16 %v4436, %v4432
        %v5609 = vpack.c.b16 %v4441, %v4437
        %v5610 = vpack.c.b16 %v4442, %v4438
        %v5611 = vpack.c.b16 %v4443, %v4439
        %v5612 = vpack.c.b16 %v4444, %v4440
        %v5613 = vpack.c.b16 %v4449, %v4445
        %v5614 = vpack.c.b16 %v4450, %v4446
        %v5615 = vpack.c.b16 %v4451, %v4447
        %v5616 = vpack.c.b16 %v4452, %v4448
        %v5617 = vpack.c.b16 %v4457, %v4453
        %v5618 = vpack.c.b16 %v4458, %v4454
        %v5619 = vpack.c.b16 %v4459, %v4455
        %v5620 = vpack.c.b16 %v4460, %v4456
        %v5621 = vpack.c.b16 %v4465, %v4461
        %v5622 = vpack.c.b16 %v4466, %v4462
        %v5623 = vpack.c.b16 %v4467, %v4463
        %v5624 = vpack.c.b16 %v4468, %v4464
        %v5625 = vpack.c.b16 %v4473, %v4469
        %v5626 = vpack.c.b16 %v4474, %v4470
        %v5627 = vpack.c.b16 %v4475, %v4471
        %v5628 = vpack.c.b16 %v4476, %v4472
        %v5629 = vpack.c.b16 %v4481, %v4477
        %v5630 = vpack.c.b16 %v4482, %v4478
        %v5631 = vpack.c.b16 %v4483, %v4479
        %v5632 = vpack.c.b16 %v4484, %v4480
        %v5633 = vpack.c.b16 %v4489, %v4485
        %v5634 = vpack.c.b16 %v4490, %v4486
        %v5635 = vpack.c.b16 %v4491, %v4487
        %v5636 = vpack.c.b16 %v4492, %v4488
        %v5637 = vpack.c.b16 %v4497, %v4493
        %v5638 = vpack.c.b16 %v4498, %v4494
        %v5639 = vpack.c.b16 %v4499, %v4495
        %v5640 = vpack.c.b16 %v4500, %v4496
        %v5641 = vpack.c.b16 %v4505, %v4501
        %v5642 = vpack.c.b16 %v4506, %v4502
        %v5643 = vpack.c.b16 %v4507, %v4503
        %v5644 = vpack.c.b16 %v4508, %v4504
        %v5645 = vpack.c.b16 %v4513, %v4509
        %v5646 = vpack.c.b16 %v4514, %v4510
        %v5647 = vpack.c.b16 %v4515, %v4511
        %v5648 = vpack.c.b16 %v4516, %v4512
        %v5649 = vpack.c.b16 %v4521, %v4517
        %v5650 = vpack.c.b16 %v4522, %v4518
        %v5651 = vpack.c.b16 %v4523, %v4519
        %v5652 = vpack.c.b16 %v4524, %v4520
        %v5653 = vpack.c.b16 %v4529, %v4525
        %v5654 = vpack.c.b16 %v4530, %v4526
        %v5655 = vpack.c.b16 %v4531, %v4527
        %v5656 = vpack.c.b16 %v4532, %v4528
        %v5657 = vpack.c.b16 %v4537, %v4533
        %v5658 = vpack.c.b16 %v4538, %v4534
        %v5659 = vpack.c.b16 %v4539, %v4535
        %v5660 = vpack.c.b16 %v4540, %v4536
        %v5661 = vpack.c.b16 %v4545, %v4541
        %v5662 = vpack.c.b16 %v4546, %v4542
        %v5663 = vpack.c.b16 %v4547, %v4543
        %v5664 = vpack.c.b16 %v4548, %v4544
        %v5665 = vpack.c.b16 %v4553, %v4549
        %v5666 = vpack.c.b16 %v4554, %v4550
        %v5667 = vpack.c.b16 %v4555, %v4551
        %v5668 = vpack.c.b16 %v4556, %v4552
        %v5669 = vpack.c.b16 %v4561, %v4557
        %v5670 = vpack.c.b16 %v4562, %v4558
        %v5671 = vpack.c.b16 %v4563, %v4559
        %v5672 = vpack.c.b16 %v4564, %v4560
        %v5673 = vpack.c.b16 %v4569, %v4565
        %v5674 = vpack.c.b16 %v4570, %v4566
        %v5675 = vpack.c.b16 %v4571, %v4567
        %v5676 = vpack.c.b16 %v4572, %v4568
        %v5677 = vpack.c.b16 %v4577, %v4573
        %v5678 = vpack.c.b16 %v4578, %v4574
        %v5679 = vpack.c.b16 %v4579, %v4575
        %v5680 = vpack.c.b16 %v4580, %v4576
        %v5681 = vpack.c.b16 %v4585, %v4581
        %v5682 = vpack.c.b16 %v4586, %v4582
        %v5683 = vpack.c.b16 %v4587, %v4583
        %v5684 = vpack.c.b16 %v4588, %v4584
        %v5685 = vpack.c.b16 %v4593, %v4589
        %v5686 = vpack.c.b16 %v4594, %v4590
        %v5687 = vpack.c.b16 %v4595, %v4591
        %v5688 = vpack.c.b16 %v4596, %v4592
        %v5689 = vpack.c.b16 %v4601, %v4597
        %v5690 = vpack.c.b16 %v4602, %v4598
        %v5691 = vpack.c.b16 %v4603, %v4599
        %v5692 = vpack.c.b16 %v4604, %v4600
        %v5693 = vpack.c.b16 %v4609, %v4605
        %v5694 = vpack.c.b16 %v4610, %v4606
        %v5695 = vpack.c.b16 %v4611, %v4607
        %v5696 = vpack.c.b16 %v4612, %v4608
        %v5697 = vpack.c.b16 %v4617, %v4613
        %v5698 = vpack.c.b16 %v4618, %v4614
        %v5699 = vpack.c.b16 %v4619, %v4615
        %v5700 = vpack.c.b16 %v4620, %v4616
        %v5701 = vpack.c.b16 %v4625, %v4621
        %v5702 = vpack.c.b16 %v4626, %v4622
        %v5703 = vpack.c.b16 %v4627, %v4623
        %v5704 = vpack.c.b16 %v4628, %v4624
        %v5705 = vpack.c.b16 %v4633, %v4629
        %v5706 = vpack.c.b16 %v4634, %v4630
        %v5707 = vpack.c.b16 %v4635, %v4631
        %v5708 = vpack.c.b16 %v4636, %v4632
        %v5709 = vpack.c.b16 %v4641, %v4637
        %v5710 = vpack.c.b16 %v4642, %v4638
        %v5711 = vpack.c.b16 %v4643, %v4639
        %v5712 = vpack.c.b16 %v4644, %v4640
        %v5713 = vpack.c.b16 %v4649, %v4645
        %v5714 = vpack.c.b16 %v4650, %v4646
        %v5715 = vpack.c.b16 %v4651, %v4647
        %v5716 = vpack.c.b16 %v4652, %v4648
        %v5717 = vpack.c.b16 %v4657, %v4653
        %v5718 = vpack.c.b16 %v4658, %v4654
        %v5719 = vpack.c.b16 %v4659, %v4655
        %v5720 = vpack.c.b16 %v4660, %v4656
        %v5721 = vpack.c.b16 %v4665, %v4661
        %v5722 = vpack.c.b16 %v4666, %v4662
        %v5723 = vpack.c.b16 %v4667, %v4663
        %v5724 = vpack.c.b16 %v4668, %v4664
        %v5725 = vpack.c.b16 %v4673, %v4669
        %v5726 = vpack.c.b16 %v4674, %v4670
        %v5727 = vpack.c.b16 %v4675, %v4671
        %v5728 = vpack.c.b16 %v4676, %v4672
        %v5729 = vpack.c.b16 %v4681, %v4677
        %v5730 = vpack.c.b16 %v4682, %v4678
        %v5731 = vpack.c.b16 %v4683, %v4679
        %v5732 = vpack.c.b16 %v4684, %v4680
        %v5733 = vpack.c.b16 %v4689, %v4685
        %v5734 = vpack.c.b16 %v4690, %v4686
        %v5735 = vpack.c.b16 %v4691, %v4687
        %v5736 = vpack.c.b16 %v4692, %v4688
        %v5737 = vpack.c.b16 %v4697, %v4693
        %v5738 = vpack.c.b16 %v4698, %v4694
        %v5739 = vpack.c.b16 %v4699, %v4695
        %v5740 = vpack.c.b16 %v4700, %v4696
        %v5741 = vpack.c.b16 %v4705, %v4701
        %v5742 = vpack.c.b16 %v4706, %v4702
        %v5743 = vpack.c.b16 %v4707, %v4703
        %v5744 = vpack.c.b16 %v4708, %v4704
        %v5745 = vpack.c.b16 %v4713, %v4709
        %v5746 = vpack.c.b16 %v4714, %v4710
        %v5747 = vpack.c.b16 %v4715, %v4711
        %v5748 = vpack.c.b16 %v4716, %v4712
        %v5749 = vpack.c.b16 %v4721, %v4717
        %v5750 = vpack.c.b16 %v4722, %v4718
        %v5751 = vpack.c.b16 %v4723, %v4719
        %v5752 = vpack.c.b16 %v4724, %v4720
        %v5753 = vpack.c.b16 %v4729, %v4725
        %v5754 = vpack.c.b16 %v4730, %v4726
        %v5755 = vpack.c.b16 %v4731, %v4727
        %v5756 = vpack.c.b16 %v4732, %v4728
        %v5757 = vpack.c.b16 %v4737, %v4733
        %v5758 = vpack.c.b16 %v4738, %v4734
        %v5759 = vpack.c.b16 %v4739, %v4735
        %v5760 = vpack.c.b16 %v4740, %v4736
        %v5761 = vpack.c.b16 %v4745, %v4741
        %v5762 = vpack.c.b16 %v4746, %v4742
        %v5763 = vpack.c.b16 %v4747, %v4743
        %v5764 = vpack.c.b16 %v4748, %v4744
        %v5765 = vpack.c.b16 %v4753, %v4749
        %v5766 = vpack.c.b16 %v4754, %v4750
        %v5767 = vpack.c.b16 %v4755, %v4751
        %v5768 = vpack.c.b16 %v4756, %v4752
        %v5769 = vpack.c.b16 %v4761, %v4757
        %v5770 = vpack.c.b16 %v4762, %v4758
        %v5771 = vpack.c.b16 %v4763, %v4759
        %v5772 = vpack.c.b16 %v4764, %v4760
        %v5773 = vpack.c.b16 %v4769, %v4765
        %v5774 = vpack.c.b16 %v4770, %v4766
        %v5775 = vpack.c.b16 %v4771, %v4767
        %v5776 = vpack.c.b16 %v4772, %v4768
        %v5777 = vpack.c.b16 %v4777, %v4773
        %v5778 = vpack.c.b16 %v4778, %v4774
        %v5779 = vpack.c.b16 %v4779, %v4775
        %v5780 = vpack.c.b16 %v4780, %v4776
        %v5781 = vpack.c.b16 %v4785, %v4781
        %v5782 = vpack.c.b16 %v4786, %v4782
        %v5783 = vpack.c.b16 %v4787, %v4783
        %v5784 = vpack.c.b16 %v4788, %v4784
        %v5785 = vpack.c.b16 %v4793, %v4789
        %v5786 = vpack.c.b16 %v4794, %v4790
        %v5787 = vpack.c.b16 %v4795, %v4791
        %v5788 = vpack.c.b16 %v4796, %v4792
        %v5789 = vpack.c.b16 %v4801, %v4797
        %v5790 = vpack.c.b16 %v4802, %v4798
        %v5791 = vpack.c.b16 %v4803, %v4799
        %v5792 = vpack.c.b16 %v4804, %v4800
        %v5793 = vpack.c.b16 %v4809, %v4805
        %v5794 = vpack.c.b16 %v4810, %v4806
        %v5795 = vpack.c.b16 %v4811, %v4807
        %v5796 = vpack.c.b16 %v4812, %v4808
        %v5797 = vpack.c.b16 %v4817, %v4813
        %v5798 = vpack.c.b16 %v4818, %v4814
        %v5799 = vpack.c.b16 %v4819, %v4815
        %v5800 = vpack.c.b16 %v4820, %v4816
        %v5801 = vpack.c.b16 %v4825, %v4821
        %v5802 = vpack.c.b16 %v4826, %v4822
        %v5803 = vpack.c.b16 %v4827, %v4823
        %v5804 = vpack.c.b16 %v4828, %v4824
        %v5805 = vpack.c.b16 %v4833, %v4829
        %v5806 = vpack.c.b16 %v4834, %v4830
        %v5807 = vpack.c.b16 %v4835, %v4831
        %v5808 = vpack.c.b16 %v4836, %v4832
        %v5809 = vpack.c.b16 %v4841, %v4837
        %v5810 = vpack.c.b16 %v4842, %v4838
        %v5811 = vpack.c.b16 %v4843, %v4839
        %v5812 = vpack.c.b16 %v4844, %v4840
        %v5813 = vpack.c.b16 %v4849, %v4845
        %v5814 = vpack.c.b16 %v4850, %v4846
        %v5815 = vpack.c.b16 %v4851, %v4847
        %v5816 = vpack.c.b16 %v4852, %v4848
        %v5817 = vpack.c.b16 %v4857, %v4853
        %v5818 = vpack.c.b16 %v4858, %v4854
        %v5819 = vpack.c.b16 %v4859, %v4855
        %v5820 = vpack.c.b16 %v4860, %v4856
        %v5821 = vpack.c.b16 %v4865, %v4861
        %v5822 = vpack.c.b16 %v4866, %v4862
        %v5823 = vpack.c.b16 %v4867, %v4863
        %v5824 = vpack.c.b16 %v4868, %v4864
        %v5825 = vpack.c.b16 %v4873, %v4869
        %v5826 = vpack.c.b16 %v4874, %v4870
        %v5827 = vpack.c.b16 %v4875, %v4871
        %v5828 = vpack.c.b16 %v4876, %v4872
        %v5829 = vpack.c.b16 %v4881, %v4877
        %v5830 = vpack.c.b16 %v4882, %v4878
        %v5831 = vpack.c.b16 %v4883, %v4879
        %v5832 = vpack.c.b16 %v4884, %v4880
        %v5833 = vpack.c.b16 %v4889, %v4885
        %v5834 = vpack.c.b16 %v4890, %v4886
        %v5835 = vpack.c.b16 %v4891, %v4887
        %v5836 = vpack.c.b16 %v4892, %v4888
        %v5837 = vpack.c.b16 %v4897, %v4893
        %v5838 = vpack.c.b16 %v4898, %v4894
        %v5839 = vpack.c.b16 %v4899, %v4895
        %v5840 = vpack.c.b16 %v4900, %v4896
        %v5841 = vpack.c.b16 %v4905, %v4901
        %v5842 = vpack.c.b16 %v4906, %v4902
        %v5843 = vpack.c.b16 %v4907, %v4903
        %v5844 = vpack.c.b16 %v4908, %v4904
        %v5845 = vpack.c.b16 %v4913, %v4909
        %v5846 = vpack.c.b16 %v4914, %v4910
        %v5847 = vpack.c.b16 %v4915, %v4911
        %v5848 = vpack.c.b16 %v4916, %v4912
        %v5849 = vpack.c.b16 %v4921, %v4917
        %v5850 = vpack.c.b16 %v4922, %v4918
        %v5851 = vpack.c.b16 %v4923, %v4919
        %v5852 = vpack.c.b16 %v4924, %v4920
        %v5853 = vpack.c.b16 %v4929, %v4925
        %v5854 = vpack.c.b16 %v4930, %v4926
        %v5855 = vpack.c.b16 %v4931, %v4927
        %v5856 = vpack.c.b16 %v4932, %v4928
        %v5857 = vpack.c.b16 %v4937, %v4933
        %v5858 = vpack.c.b16 %v4938, %v4934
        %v5859 = vpack.c.b16 %v4939, %v4935
        %v5860 = vpack.c.b16 %v4940, %v4936
        %v5861 = vpack.c.b16 %v4945, %v4941
        %v5862 = vpack.c.b16 %v4946, %v4942
        %v5863 = vpack.c.b16 %v4947, %v4943
        %v5864 = vpack.c.b16 %v4948, %v4944
        %v5865 = vpack.c.b16 %v4953, %v4949
        %v5866 = vpack.c.b16 %v4954, %v4950
        %v5867 = vpack.c.b16 %v4955, %v4951
        %v5868 = vpack.c.b16 %v4956, %v4952
        %v5869 = vpack.c.b16 %v4961, %v4957
        %v5870 = vpack.c.b16 %v4962, %v4958
        %v5871 = vpack.c.b16 %v4963, %v4959
        %v5872 = vpack.c.b16 %v4964, %v4960
        %v5873 = vpack.c.b16 %v4969, %v4965
        %v5874 = vpack.c.b16 %v4970, %v4966
        %v5875 = vpack.c.b16 %v4971, %v4967
        %v5876 = vpack.c.b16 %v4972, %v4968
        %v5877 = vpack.c.b16 %v4977, %v4973
        %v5878 = vpack.c.b16 %v4978, %v4974
        %v5879 = vpack.c.b16 %v4979, %v4975
        %v5880 = vpack.c.b16 %v4980, %v4976
        %v5881 = vpack.c.b16 %v4985, %v4981
        %v5882 = vpack.c.b16 %v4986, %v4982
        %v5883 = vpack.c.b16 %v4987, %v4983
        %v5884 = vpack.c.b16 %v4988, %v4984
        %v5885 = vpack.c.b16 %v4993, %v4989
        %v5886 = vpack.c.b16 %v4994, %v4990
        %v5887 = vpack.c.b16 %v4995, %v4991
        %v5888 = vpack.c.b16 %v4996, %v4992
        %v5889 = vpack.c.b16 %v5001, %v4997
        %v5890 = vpack.c.b16 %v5002, %v4998
        %v5891 = vpack.c.b16 %v5003, %v4999
        %v5892 = vpack.c.b16 %v5004, %v5000
        %v5893 = vpack.c.b16 %v5009, %v5005
        %v5894 = vpack.c.b16 %v5010, %v5006
        %v5895 = vpack.c.b16 %v5011, %v5007
        %v5896 = vpack.c.b16 %v5012, %v5008
        %v5897 = vpack.c.b16 %v5017, %v5013
        %v5898 = vpack.c.b16 %v5018, %v5014
        %v5899 = vpack.c.b16 %v5019, %v5015
        %v5900 = vpack.c.b16 %v5020, %v5016
        %v5901 = vpack.c.b16 %v5025, %v5021
        %v5902 = vpack.c.b16 %v5026, %v5022
        %v5903 = vpack.c.b16 %v5027, %v5023
        %v5904 = vpack.c.b16 %v5028, %v5024
        %v5905 = vpack.c.b16 %v5033, %v5029
        %v5906 = vpack.c.b16 %v5034, %v5030
        %v5907 = vpack.c.b16 %v5035, %v5031
        %v5908 = vpack.c.b16 %v5036, %v5032
        %v5909 = vpack.c.b16 %v5041, %v5037
        %v5910 = vpack.c.b16 %v5042, %v5038
        %v5911 = vpack.c.b16 %v5043, %v5039
        %v5912 = vpack.c.b16 %v5044, %v5040
        %v5913 = vpack.c.b16 %v5049, %v5045
        %v5914 = vpack.c.b16 %v5050, %v5046
        %v5915 = vpack.c.b16 %v5051, %v5047
        %v5916 = vpack.c.b16 %v5052, %v5048
        %v5917 = vpack.c.b16 %v5057, %v5053
        %v5918 = vpack.c.b16 %v5058, %v5054
        %v5919 = vpack.c.b16 %v5059, %v5055
        %v5920 = vpack.c.b16 %v5060, %v5056
        %v5921 = vpack.c.b16 %v5065, %v5061
        %v5922 = vpack.c.b16 %v5066, %v5062
        %v5923 = vpack.c.b16 %v5067, %v5063
        %v5924 = vpack.c.b16 %v5068, %v5064
        %v5925 = vpack.c.b16 %v5073, %v5069
        %v5926 = vpack.c.b16 %v5074, %v5070
        %v5927 = vpack.c.b16 %v5075, %v5071
        %v5928 = vpack.c.b16 %v5076, %v5072
        %v5929 = vpack.c.b16 %v5081, %v5077
        %v5930 = vpack.c.b16 %v5082, %v5078
        %v5931 = vpack.c.b16 %v5083, %v5079
        %v5932 = vpack.c.b16 %v5084, %v5080
        %v5933 = vpack.c.b16 %v5089, %v5085
        %v5934 = vpack.c.b16 %v5090, %v5086
        %v5935 = vpack.c.b16 %v5091, %v5087
        %v5936 = vpack.c.b16 %v5092, %v5088
        %v5937 = vpack.c.b16 %v5097, %v5093
        %v5938 = vpack.c.b16 %v5098, %v5094
        %v5939 = vpack.c.b16 %v5099, %v5095
        %v5940 = vpack.c.b16 %v5100, %v5096
        %v5941 = vpack.c.b16 %v5105, %v5101
        %v5942 = vpack.c.b16 %v5106, %v5102
        %v5943 = vpack.c.b16 %v5107, %v5103
        %v5944 = vpack.c.b16 %v5108, %v5104
        %v5945 = vpack.c.b16 %v5113, %v5109
        %v5946 = vpack.c.b16 %v5114, %v5110
        %v5947 = vpack.c.b16 %v5115, %v5111
        %v5948 = vpack.c.b16 %v5116, %v5112
        %v5949 = vpack.c.b16 %v5121, %v5117
        %v5950 = vpack.c.b16 %v5122, %v5118
        %v5951 = vpack.c.b16 %v5123, %v5119
        %v5952 = vpack.c.b16 %v5124, %v5120
        %v5953 = vpack.c.b16 %v5129, %v5125
        %v5954 = vpack.c.b16 %v5130, %v5126
        %v5955 = vpack.c.b16 %v5131, %v5127
        %v5956 = vpack.c.b16 %v5132, %v5128
        %v5957 = vpack.c.b16 %v5137, %v5133
        %v5958 = vpack.c.b16 %v5138, %v5134
        %v5959 = vpack.c.b16 %v5139, %v5135
        %v5960 = vpack.c.b16 %v5140, %v5136
        %v5961 = vpack.c.b16 %v5145, %v5141
        %v5962 = vpack.c.b16 %v5146, %v5142
        %v5963 = vpack.c.b16 %v5147, %v5143
        %v5964 = vpack.c.b16 %v5148, %v5144
        %v5965 = vpack.c.b16 %v5153, %v5149
        %v5966 = vpack.c.b16 %v5154, %v5150
        %v5967 = vpack.c.b16 %v5155, %v5151
        %v5968 = vpack.c.b16 %v5156, %v5152
        %v5969 = vpack.c.b16 %v5161, %v5157
        %v5970 = vpack.c.b16 %v5162, %v5158
        %v5971 = vpack.c.b16 %v5163, %v5159
        %v5972 = vpack.c.b16 %v5164, %v5160
        %v5973 = vpack.c.b16 %v5169, %v5165
        %v5974 = vpack.c.b16 %v5170, %v5166
        %v5975 = vpack.c.b16 %v5171, %v5167
        %v5976 = vpack.c.b16 %v5172, %v5168
        %v5977 = vpack.c.b16 %v5177, %v5173
        %v5978 = vpack.c.b16 %v5178, %v5174
        %v5979 = vpack.c.b16 %v5179, %v5175
        %v5980 = vpack.c.b16 %v5180, %v5176
        %v5981 = vpack.c.b16 %v5185, %v5181
        %v5982 = vpack.c.b16 %v5186, %v5182
        %v5983 = vpack.c.b16 %v5187, %v5183
        %v5984 = vpack.c.b16 %v5188, %v5184
        %v5985 = vpack.c.b16 %v5193, %v5189
        %v5986 = vpack.c.b16 %v5194, %v5190
        %v5987 = vpack.c.b16 %v5195, %v5191
        %v5988 = vpack.c.b16 %v5196, %v5192
        %v5989 = vpack.c.b16 %v5201, %v5197
        %v5990 = vpack.c.b16 %v5202, %v5198
        %v5991 = vpack.c.b16 %v5203, %v5199
        %v5992 = vpack.c.b16 %v5204, %v5200
        %v5993 = vpack.c.b16 %v5209, %v5205
        %v5994 = vpack.c.b16 %v5210, %v5206
        %v5995 = vpack.c.b16 %v5211, %v5207
        %v5996 = vpack.c.b16 %v5212, %v5208
        %vm6781 = vcmask 523264
        %v6783 = vsel %vm6781, %v2836, 0
        %6785 = vmatprep.subr.bf16.mxu0 %v5242
        %6786 = vmatpush1.bf16.msra.mxu0 %v5241
        %6787 = vmatprep.subr.bf16.mxu0 %v5238
        %6788 = vmatpush1.bf16.msra.mxu0 %v5237
        %6789 = vmatprep.subr.bf16.mxu0 %v5234
        %6790 = vmatpush1.bf16.msra.mxu0 %v5233
        %6791 = vmatprep.subr.bf16.mxu0 %v5230
        %6792 = vmatpush1.bf16.msra.mxu0 %v5229
        %6793 = vmatprep.subr.bf16.mxu0 %v5226
        %6794 = vmatpush1.bf16.msra.mxu0 %v5225
        %6795 = vmatprep.subr.bf16.mxu0 %v5222
        %6796 = vmatpush1.bf16.msra.mxu0 %v5221
        %6797 = vmatprep.subr.bf16.mxu0 %v5218
        %6798 = vmatpush1.bf16.msra.mxu0 %v5217
        %6799 = vmatprep.subr.bf16.mxu0 %v5214
        %6800 = vmatpush1.bf16.msra.mxu0 %v5213
        %6801 = vmatprep.subr.bf16.mxu0 %v5274
        %6802 = vmatpush2.bf16.msra.mxu0 %v5273
        %6803 = vmatprep.subr.bf16.mxu0 %v5270
        %6804 = vmatpush2.bf16.msra.mxu0 %v5269
        %6805 = vmatprep.subr.bf16.mxu0 %v5266
        %6806 = vmatpush2.bf16.msra.mxu0 %v5265
        %6807 = vmatprep.subr.bf16.mxu0 %v5262
        %6808 = vmatpush2.bf16.msra.mxu0 %v5261
        %6809 = vmatprep.subr.bf16.mxu0 %v5258
        %6810 = vmatpush2.bf16.msra.mxu0 %v5257
        %6811 = vmatprep.subr.bf16.mxu0 %v5254
        %6812 = vmatpush2.bf16.msra.mxu0 %v5253
        %6813 = vmatprep.subr.bf16.mxu0 %v5250
        %6814 = vmatpush2.bf16.msra.mxu0 %v5249
        %6815 = vmatprep.subr.bf16.mxu0 %v5246
        %6816 = vmatpush2.bf16.msra.mxu0 %v5245
        %6817 = vmatprep.mubr.bf16.mxu0 %v2713
        %6818 = vmatmul.mubr.bf16.gmra.mxu0 %v2699
        %v6819 = vpop.f32.mrf.mxu0
        %v6820 = vadd.f32 %v2655, %v6819
        %v6821 = vpop.f32.mrf.mxu0
        %v6822 = vadd.f32 %v2659, %v6821
        %v6823 = vpop.f32.mrf.mxu0
        %v6824 = vpop.f32.mrf.mxu0
        %6825 = vdwg.mxu0
        %6826 = vmatprep.subr.bf16.mxu0 %v5306
        %6827 = vmatpush1.bf16.msra.mxu0 %v5305
        %6828 = vmatprep.subr.bf16.mxu0 %v5302
        %6829 = vmatpush1.bf16.msra.mxu0 %v5301
        %6830 = vmatprep.subr.bf16.mxu0 %v5298
        %6831 = vmatpush1.bf16.msra.mxu0 %v5297
        %6832 = vmatprep.subr.bf16.mxu0 %v5294
        %6833 = vmatpush1.bf16.msra.mxu0 %v5293
        %6834 = vmatprep.subr.bf16.mxu0 %v5290
        %6835 = vmatpush1.bf16.msra.mxu0 %v5289
        %6836 = vmatprep.subr.bf16.mxu0 %v5286
        %6837 = vmatpush1.bf16.msra.mxu0 %v5285
        %6838 = vmatprep.subr.bf16.mxu0 %v5282
        %6839 = vmatpush1.bf16.msra.mxu0 %v5281
        %6840 = vmatprep.subr.bf16.mxu0 %v5278
        %6841 = vmatpush1.bf16.msra.mxu0 %v5277
        %6842 = vmatprep.subr.bf16.mxu0 %v5338
        %6843 = vmatpush2.bf16.msra.mxu0 %v5337
        %6844 = vmatprep.subr.bf16.mxu0 %v5334
        %6845 = vmatpush2.bf16.msra.mxu0 %v5333
        %6846 = vmatprep.subr.bf16.mxu0 %v5330
        %6847 = vmatpush2.bf16.msra.mxu0 %v5329
        %6848 = vmatprep.subr.bf16.mxu0 %v5326
        %6849 = vmatpush2.bf16.msra.mxu0 %v5325
        %6850 = vmatprep.subr.bf16.mxu0 %v5322
        %6851 = vmatpush2.bf16.msra.mxu0 %v5321
        %6852 = vmatprep.subr.bf16.mxu0 %v5318
        %6853 = vmatpush2.bf16.msra.mxu0 %v5317
        %6854 = vmatprep.subr.bf16.mxu0 %v5314
        %6855 = vmatpush2.bf16.msra.mxu0 %v5313
        %6856 = vmatprep.subr.bf16.mxu0 %v5310
        %6857 = vmatpush2.bf16.msra.mxu0 %v5309
        %6858 = vmatprep.mubr.bf16.mxu0 %v2723
        %6859 = vmatmul.mubr.bf16.gmra.mxu0 %v2721
        %v6860 = vpop.f32.mrf.mxu0
        %v6861 = vadd.f32 %v6820, %v6860
        %v6862 = vpop.f32.mrf.mxu0
        %v6863 = vadd.f32 %v6822, %v6862
        %v6864 = vpop.f32.mrf.mxu0
        %v6865 = vpop.f32.mrf.mxu0
        %6866 = vdwg.mxu0
        %6867 = vmatprep.subr.bf16.mxu0 %v5370
        %6868 = vmatpush1.bf16.msra.mxu0 %v5369
        %6869 = vmatprep.subr.bf16.mxu0 %v5366
        %6870 = vmatpush1.bf16.msra.mxu0 %v5365
        %6871 = vmatprep.subr.bf16.mxu0 %v5362
        %6872 = vmatpush1.bf16.msra.mxu0 %v5361
        %6873 = vmatprep.subr.bf16.mxu0 %v5358
        %6874 = vmatpush1.bf16.msra.mxu0 %v5357
        %6875 = vmatprep.subr.bf16.mxu0 %v5354
        %6876 = vmatpush1.bf16.msra.mxu0 %v5353
        %6877 = vmatprep.subr.bf16.mxu0 %v5350
        %6878 = vmatpush1.bf16.msra.mxu0 %v5349
        %6879 = vmatprep.subr.bf16.mxu0 %v5346
        %6880 = vmatpush1.bf16.msra.mxu0 %v5345
        %6881 = vmatprep.subr.bf16.mxu0 %v5342
        %6882 = vmatpush1.bf16.msra.mxu0 %v5341
        %6883 = vmatprep.subr.bf16.mxu0 %v5402
        %6884 = vmatpush2.bf16.msra.mxu0 %v5401
        %6885 = vmatprep.subr.bf16.mxu0 %v5398
        %6886 = vmatpush2.bf16.msra.mxu0 %v5397
        %6887 = vmatprep.subr.bf16.mxu0 %v5394
        %6888 = vmatpush2.bf16.msra.mxu0 %v5393
        %6889 = vmatprep.subr.bf16.mxu0 %v5390
        %6890 = vmatpush2.bf16.msra.mxu0 %v5389
        %6891 = vmatprep.subr.bf16.mxu0 %v5386
        %6892 = vmatpush2.bf16.msra.mxu0 %v5385
        %6893 = vmatprep.subr.bf16.mxu0 %v5382
        %6894 = vmatpush2.bf16.msra.mxu0 %v5381
        %6895 = vmatprep.subr.bf16.mxu0 %v5378
        %6896 = vmatpush2.bf16.msra.mxu0 %v5377
        %6897 = vmatprep.subr.bf16.mxu0 %v5374
        %6898 = vmatpush2.bf16.msra.mxu0 %v5373
        %6899 = vmatprep.mubr.bf16.mxu0 %v2720
        %6900 = vmatmul.mubr.bf16.gmra.mxu0 %v2706
        %v6901 = vpop.f32.mrf.mxu0
        %v6902 = vadd.f32 %v6861, %v6901
        %v6903 = vpop.f32.mrf.mxu0
        %v6904 = vadd.f32 %v6863, %v6903
        %v6905 = vpop.f32.mrf.mxu0
        %v6906 = vpop.f32.mrf.mxu0
        %6907 = vdwg.mxu0
        %6908 = vmatprep.subr.bf16.mxu0 %v5434
        %6909 = vmatpush1.bf16.msra.mxu0 %v5433
        %6910 = vmatprep.subr.bf16.mxu0 %v5430
        %6911 = vmatpush1.bf16.msra.mxu0 %v5429
        %6912 = vmatprep.subr.bf16.mxu0 %v5426
        %6913 = vmatpush1.bf16.msra.mxu0 %v5425
        %6914 = vmatprep.subr.bf16.mxu0 %v5422
        %6915 = vmatpush1.bf16.msra.mxu0 %v5421
        %6916 = vmatprep.subr.bf16.mxu0 %v5418
        %6917 = vmatpush1.bf16.msra.mxu0 %v5417
        %6918 = vmatprep.subr.bf16.mxu0 %v5414
        %6919 = vmatpush1.bf16.msra.mxu0 %v5413
        %6920 = vmatprep.subr.bf16.mxu0 %v5410
        %6921 = vmatpush1.bf16.msra.mxu0 %v5409
        %6922 = vmatprep.subr.bf16.mxu0 %v5406
        %6923 = vmatpush1.bf16.msra.mxu0 %v5405
        %6924 = vmatprep.subr.bf16.mxu0 %v5466
        %6925 = vmatpush2.bf16.msra.mxu0 %v5465
        %6926 = vmatprep.subr.bf16.mxu0 %v5462
        %6927 = vmatpush2.bf16.msra.mxu0 %v5461
        %6928 = vmatprep.subr.bf16.mxu0 %v5458
        %6929 = vmatpush2.bf16.msra.mxu0 %v5457
        %6930 = vmatprep.subr.bf16.mxu0 %v5454
        %6931 = vmatpush2.bf16.msra.mxu0 %v5453
        %6932 = vmatprep.subr.bf16.mxu0 %v5450
        %6933 = vmatpush2.bf16.msra.mxu0 %v5449
        %6934 = vmatprep.subr.bf16.mxu0 %v5446
        %6935 = vmatpush2.bf16.msra.mxu0 %v5445
        %6936 = vmatprep.subr.bf16.mxu0 %v5442
        %6937 = vmatpush2.bf16.msra.mxu0 %v5441
        %6938 = vmatprep.subr.bf16.mxu0 %v5438
        %6939 = vmatpush2.bf16.msra.mxu0 %v5437
        %6940 = vmatprep.mubr.bf16.mxu0 %v2724
        %6941 = vmatmul.mubr.bf16.gmra.mxu0 %v2722
        %v6942 = vpop.f32.mrf.mxu0
        %v6943 = vadd.f32 %v6902, %v6942
        %v6944 = vpop.f32.mrf.mxu0
        %v6945 = vadd.f32 %v6904, %v6944
        %v6946 = vpop.f32.mrf.mxu0
        %v6947 = vpop.f32.mrf.mxu0
        %6948 = vdwg.mxu0
        %6949 = vmatprep.subr.bf16.mxu0 %v5498
        %6950 = vmatpush1.bf16.msra.mxu0 %v5497
        %6951 = vmatprep.subr.bf16.mxu0 %v5494
        %6952 = vmatpush1.bf16.msra.mxu0 %v5493
        %6953 = vmatprep.subr.bf16.mxu0 %v5490
        %6954 = vmatpush1.bf16.msra.mxu0 %v5489
        %6955 = vmatprep.subr.bf16.mxu0 %v5486
        %6956 = vmatpush1.bf16.msra.mxu0 %v5485
        %6957 = vmatprep.subr.bf16.mxu0 %v5482
        %6958 = vmatpush1.bf16.msra.mxu0 %v5481
        %6959 = vmatprep.subr.bf16.mxu0 %v5478
        %6960 = vmatpush1.bf16.msra.mxu0 %v5477
        %6961 = vmatprep.subr.bf16.mxu0 %v5474
        %6962 = vmatpush1.bf16.msra.mxu0 %v5473
        %6963 = vmatprep.subr.bf16.mxu0 %v5470
        %6964 = vmatpush1.bf16.msra.mxu0 %v5469
        %6965 = vmatprep.subr.bf16.mxu0 %v5530
        %6966 = vmatpush2.bf16.msra.mxu0 %v5529
        %6967 = vmatprep.subr.bf16.mxu0 %v5526
        %6968 = vmatpush2.bf16.msra.mxu0 %v5525
        %6969 = vmatprep.subr.bf16.mxu0 %v5522
        %6970 = vmatpush2.bf16.msra.mxu0 %v5521
        %6971 = vmatprep.subr.bf16.mxu0 %v5518
        %6972 = vmatpush2.bf16.msra.mxu0 %v5517
        %6973 = vmatprep.subr.bf16.mxu0 %v5514
        %6974 = vmatpush2.bf16.msra.mxu0 %v5513
        %6975 = vmatprep.subr.bf16.mxu0 %v5510
        %6976 = vmatpush2.bf16.msra.mxu0 %v5509
        %6977 = vmatprep.subr.bf16.mxu0 %v5506
        %6978 = vmatpush2.bf16.msra.mxu0 %v5505
        %6979 = vmatprep.subr.bf16.mxu0 %v5502
        %6980 = vmatpush2.bf16.msra.mxu0 %v5501
        %6981 = vmatprep.mubr.bf16.mxu0 %v2762
        %6982 = vmatmul.mubr.bf16.gmra.mxu0 %v2748
        %v6983 = vpop.f32.mrf.mxu0
        %v6984 = vadd.f32 %v6943, %v6983
        %v6985 = vpop.f32.mrf.mxu0
        %v6986 = vadd.f32 %v6945, %v6985
        %v6987 = vpop.f32.mrf.mxu0
        %v6988 = vpop.f32.mrf.mxu0
        %6989 = vdwg.mxu0
        %6990 = vmatprep.subr.bf16.mxu0 %v5562
        %6991 = vmatpush1.bf16.msra.mxu0 %v5561
        %6992 = vmatprep.subr.bf16.mxu0 %v5558
        %6993 = vmatpush1.bf16.msra.mxu0 %v5557
        %6994 = vmatprep.subr.bf16.mxu0 %v5554
        %6995 = vmatpush1.bf16.msra.mxu0 %v5553
        %6996 = vmatprep.subr.bf16.mxu0 %v5550
        %6997 = vmatpush1.bf16.msra.mxu0 %v5549
        %6998 = vmatprep.subr.bf16.mxu0 %v5546
        %6999 = vmatpush1.bf16.msra.mxu0 %v5545
        %7000 = vmatprep.subr.bf16.mxu0 %v5542
        %7001 = vmatpush1.bf16.msra.mxu0 %v5541
        %7002 = vmatprep.subr.bf16.mxu0 %v5538
        %7003 = vmatpush1.bf16.msra.mxu0 %v5537
        %7004 = vmatprep.subr.bf16.mxu0 %v5534
        %7005 = vmatpush1.bf16.msra.mxu0 %v5533
        %7006 = vmatprep.subr.bf16.mxu0 %v5594
        %7007 = vmatpush2.bf16.msra.mxu0 %v5593
        %7008 = vmatprep.subr.bf16.mxu0 %v5590
        %7009 = vmatpush2.bf16.msra.mxu0 %v5589
        %7010 = vmatprep.subr.bf16.mxu0 %v5586
        %7011 = vmatpush2.bf16.msra.mxu0 %v5585
        %7012 = vmatprep.subr.bf16.mxu0 %v5582
        %7013 = vmatpush2.bf16.msra.mxu0 %v5581
        %7014 = vmatprep.subr.bf16.mxu0 %v5578
        %7015 = vmatpush2.bf16.msra.mxu0 %v5577
        %7016 = vmatprep.subr.bf16.mxu0 %v5574
        %7017 = vmatpush2.bf16.msra.mxu0 %v5573
        %7018 = vmatprep.subr.bf16.mxu0 %v5570
        %7019 = vmatpush2.bf16.msra.mxu0 %v5569
        %7020 = vmatprep.subr.bf16.mxu0 %v5566
        %7021 = vmatpush2.bf16.msra.mxu0 %v5565
        %7022 = vmatprep.mubr.bf16.mxu0 %v2772
        %7023 = vmatmul.mubr.bf16.gmra.mxu0 %v2770
        %v7024 = vpop.f32.mrf.mxu0
        %v7025 = vadd.f32 %v6984, %v7024
        %v7026 = vpop.f32.mrf.mxu0
        %v7027 = vadd.f32 %v6986, %v7026
        %v7028 = vpop.f32.mrf.mxu0
        %v7029 = vpop.f32.mrf.mxu0
        %7030 = vdwg.mxu0
        %7031 = vmatprep.subr.bf16.mxu0 %v5626
        %7032 = vmatpush1.bf16.msra.mxu0 %v5625
        %7033 = vmatprep.subr.bf16.mxu0 %v5622
        %7034 = vmatpush1.bf16.msra.mxu0 %v5621
        %7035 = vmatprep.subr.bf16.mxu0 %v5618
        %7036 = vmatpush1.bf16.msra.mxu0 %v5617
        %7037 = vmatprep.subr.bf16.mxu0 %v5614
        %7038 = vmatpush1.bf16.msra.mxu0 %v5613
        %7039 = vmatprep.subr.bf16.mxu0 %v5610
        %7040 = vmatpush1.bf16.msra.mxu0 %v5609
        %7041 = vmatprep.subr.bf16.mxu0 %v5606
        %7042 = vmatpush1.bf16.msra.mxu0 %v5605
        %7043 = vmatprep.subr.bf16.mxu0 %v5602
        %7044 = vmatpush1.bf16.msra.mxu0 %v5601
        %7045 = vmatprep.subr.bf16.mxu0 %v5598
        %7046 = vmatpush1.bf16.msra.mxu0 %v5597
        %7047 = vmatprep.subr.bf16.mxu0 %v5658
        %7048 = vmatpush2.bf16.msra.mxu0 %v5657
        %7049 = vmatprep.subr.bf16.mxu0 %v5654
        %7050 = vmatpush2.bf16.msra.mxu0 %v5653
        %7051 = vmatprep.subr.bf16.mxu0 %v5650
        %7052 = vmatpush2.bf16.msra.mxu0 %v5649
        %7053 = vmatprep.subr.bf16.mxu0 %v5646
        %7054 = vmatpush2.bf16.msra.mxu0 %v5645
        %7055 = vmatprep.subr.bf16.mxu0 %v5642
        %7056 = vmatpush2.bf16.msra.mxu0 %v5641
        %7057 = vmatprep.subr.bf16.mxu0 %v5638
        %7058 = vmatpush2.bf16.msra.mxu0 %v5637
        %7059 = vmatprep.subr.bf16.mxu0 %v5634
        %7060 = vmatpush2.bf16.msra.mxu0 %v5633
        %7061 = vmatprep.subr.bf16.mxu0 %v5630
        %7062 = vmatpush2.bf16.msra.mxu0 %v5629
        %7063 = vmatprep.mubr.bf16.mxu0 %v2769
        %7064 = vmatmul.mubr.bf16.gmra.mxu0 %v2755
        %v7065 = vpop.f32.mrf.mxu0
        %v7066 = vadd.f32 %v7025, %v7065
        %v7067 = vpop.f32.mrf.mxu0
        %v7068 = vadd.f32 %v7027, %v7067
        %v7069 = vpop.f32.mrf.mxu0
        %v7070 = vpop.f32.mrf.mxu0
        %7071 = vdwg.mxu0
        %7072 = vmatprep.subr.bf16.mxu0 %v5690
        %7073 = vmatpush1.bf16.msra.mxu0 %v5689
        %7074 = vmatprep.subr.bf16.mxu0 %v5686
        %7075 = vmatpush1.bf16.msra.mxu0 %v5685
        %7076 = vmatprep.subr.bf16.mxu0 %v5682
        %7077 = vmatpush1.bf16.msra.mxu0 %v5681
        %7078 = vmatprep.subr.bf16.mxu0 %v5678
        %7079 = vmatpush1.bf16.msra.mxu0 %v5677
        %7080 = vmatprep.subr.bf16.mxu0 %v5674
        %7081 = vmatpush1.bf16.msra.mxu0 %v5673
        %7082 = vmatprep.subr.bf16.mxu0 %v5670
        %7083 = vmatpush1.bf16.msra.mxu0 %v5669
        %7084 = vmatprep.subr.bf16.mxu0 %v5666
        %7085 = vmatpush1.bf16.msra.mxu0 %v5665
        %7086 = vmatprep.subr.bf16.mxu0 %v5662
        %7087 = vmatpush1.bf16.msra.mxu0 %v5661
        %7088 = vmatprep.subr.bf16.mxu0 %v5722
        %7089 = vmatpush2.bf16.msra.mxu0 %v5721
        %7090 = vmatprep.subr.bf16.mxu0 %v5718
        %7091 = vmatpush2.bf16.msra.mxu0 %v5717
        %7092 = vmatprep.subr.bf16.mxu0 %v5714
        %7093 = vmatpush2.bf16.msra.mxu0 %v5713
        %7094 = vmatprep.subr.bf16.mxu0 %v5710
        %7095 = vmatpush2.bf16.msra.mxu0 %v5709
        %7096 = vmatprep.subr.bf16.mxu0 %v5706
        %7097 = vmatpush2.bf16.msra.mxu0 %v5705
        %7098 = vmatprep.subr.bf16.mxu0 %v5702
        %7099 = vmatpush2.bf16.msra.mxu0 %v5701
        %7100 = vmatprep.subr.bf16.mxu0 %v5698
        %7101 = vmatpush2.bf16.msra.mxu0 %v5697
        %7102 = vmatprep.subr.bf16.mxu0 %v5694
        %7103 = vmatpush2.bf16.msra.mxu0 %v5693
        %7104 = vmatprep.mubr.bf16.mxu0 %v2773
        %7105 = vmatmul.mubr.bf16.gmra.mxu0 %v2771
        %v7106 = vpop.f32.mrf.mxu0
        %v7107 = vadd.f32 %v7066, %v7106
        %v7108 = vpop.f32.mrf.mxu0
        %v7109 = vadd.f32 %v7068, %v7108
        %v7110 = vpop.f32.mrf.mxu0
        %v7111 = vpop.f32.mrf.mxu0
        %7112 = vdwg.mxu0
        %7113 = vmatprep.subr.bf16.mxu0 %v5754
        %7114 = vmatpush1.bf16.msra.mxu0 %v5753
        %7115 = vmatprep.subr.bf16.mxu0 %v5750
        %7116 = vmatpush1.bf16.msra.mxu0 %v5749
        %7117 = vmatprep.subr.bf16.mxu0 %v5746
        %7118 = vmatpush1.bf16.msra.mxu0 %v5745
        %7119 = vmatprep.subr.bf16.mxu0 %v5742
        %7120 = vmatpush1.bf16.msra.mxu0 %v5741
        %7121 = vmatprep.subr.bf16.mxu0 %v5738
        %7122 = vmatpush1.bf16.msra.mxu0 %v5737
        %7123 = vmatprep.subr.bf16.mxu0 %v5734
        %7124 = vmatpush1.bf16.msra.mxu0 %v5733
        %7125 = vmatprep.subr.bf16.mxu0 %v5730
        %7126 = vmatpush1.bf16.msra.mxu0 %v5729
        %7127 = vmatprep.subr.bf16.mxu0 %v5726
        %7128 = vmatpush1.bf16.msra.mxu0 %v5725
        %7129 = vmatprep.subr.bf16.mxu0 %v5786
        %7130 = vmatpush2.bf16.msra.mxu0 %v5785
        %7131 = vmatprep.subr.bf16.mxu0 %v5782
        %7132 = vmatpush2.bf16.msra.mxu0 %v5781
        %7133 = vmatprep.subr.bf16.mxu0 %v5778
        %7134 = vmatpush2.bf16.msra.mxu0 %v5777
        %7135 = vmatprep.subr.bf16.mxu0 %v5774
        %7136 = vmatpush2.bf16.msra.mxu0 %v5773
        %7137 = vmatprep.subr.bf16.mxu0 %v5770
        %7138 = vmatpush2.bf16.msra.mxu0 %v5769
        %7139 = vmatprep.subr.bf16.mxu0 %v5766
        %7140 = vmatpush2.bf16.msra.mxu0 %v5765
        %7141 = vmatprep.subr.bf16.mxu0 %v5762
        %7142 = vmatpush2.bf16.msra.mxu0 %v5761
        %7143 = vmatprep.subr.bf16.mxu0 %v5758
        %7144 = vmatpush2.bf16.msra.mxu0 %v5757
        %7145 = vmatprep.mubr.bf16.mxu0 %v2811
        %7146 = vmatmul.mubr.bf16.gmra.mxu0 %v2797
        %v7147 = vpop.f32.mrf.mxu0
        %v7148 = vadd.f32 %v7107, %v7147
        %v7149 = vpop.f32.mrf.mxu0
        %v7150 = vadd.f32 %v7109, %v7149
        %v7151 = vpop.f32.mrf.mxu0
        %v7152 = vpop.f32.mrf.mxu0
        %7153 = vdwg.mxu0
        %7154 = vmatprep.subr.bf16.mxu0 %v5818
        %7155 = vmatpush1.bf16.msra.mxu0 %v5817
        %7156 = vmatprep.subr.bf16.mxu0 %v5814
        %7157 = vmatpush1.bf16.msra.mxu0 %v5813
        %7158 = vmatprep.subr.bf16.mxu0 %v5810
        %7159 = vmatpush1.bf16.msra.mxu0 %v5809
        %7160 = vmatprep.subr.bf16.mxu0 %v5806
        %7161 = vmatpush1.bf16.msra.mxu0 %v5805
        %7162 = vmatprep.subr.bf16.mxu0 %v5802
        %7163 = vmatpush1.bf16.msra.mxu0 %v5801
        %7164 = vmatprep.subr.bf16.mxu0 %v5798
        %7165 = vmatpush1.bf16.msra.mxu0 %v5797
        %7166 = vmatprep.subr.bf16.mxu0 %v5794
        %7167 = vmatpush1.bf16.msra.mxu0 %v5793
        %7168 = vmatprep.subr.bf16.mxu0 %v5790
        %7169 = vmatpush1.bf16.msra.mxu0 %v5789
        %7170 = vmatprep.subr.bf16.mxu0 %v5850
        %7171 = vmatpush2.bf16.msra.mxu0 %v5849
        %7172 = vmatprep.subr.bf16.mxu0 %v5846
        %7173 = vmatpush2.bf16.msra.mxu0 %v5845
        %7174 = vmatprep.subr.bf16.mxu0 %v5842
        %7175 = vmatpush2.bf16.msra.mxu0 %v5841
        %7176 = vmatprep.subr.bf16.mxu0 %v5838
        %7177 = vmatpush2.bf16.msra.mxu0 %v5837
        %7178 = vmatprep.subr.bf16.mxu0 %v5834
        %7179 = vmatpush2.bf16.msra.mxu0 %v5833
        %7180 = vmatprep.subr.bf16.mxu0 %v5830
        %7181 = vmatpush2.bf16.msra.mxu0 %v5829
        %7182 = vmatprep.subr.bf16.mxu0 %v5826
        %7183 = vmatpush2.bf16.msra.mxu0 %v5825
        %7184 = vmatprep.subr.bf16.mxu0 %v5822
        %7185 = vmatpush2.bf16.msra.mxu0 %v5821
        %7186 = vmatprep.mubr.bf16.mxu0 %v2821
        %7187 = vmatmul.mubr.bf16.gmra.mxu0 %v2819
        %v7188 = vpop.f32.mrf.mxu0
        %v7189 = vadd.f32 %v7148, %v7188
        %v7190 = vpop.f32.mrf.mxu0
        %v7191 = vadd.f32 %v7150, %v7190
        %v7192 = vpop.f32.mrf.mxu0
        %v7193 = vpop.f32.mrf.mxu0
        %7194 = vdwg.mxu0
        %7195 = vmatprep.subr.bf16.mxu0 %v5882
        %7196 = vmatpush1.bf16.msra.mxu0 %v5881
        %7197 = vmatprep.subr.bf16.mxu0 %v5878
        %7198 = vmatpush1.bf16.msra.mxu0 %v5877
        %7199 = vmatprep.subr.bf16.mxu0 %v5874
        %7200 = vmatpush1.bf16.msra.mxu0 %v5873
        %7201 = vmatprep.subr.bf16.mxu0 %v5870
        %7202 = vmatpush1.bf16.msra.mxu0 %v5869
        %7203 = vmatprep.subr.bf16.mxu0 %v5866
        %7204 = vmatpush1.bf16.msra.mxu0 %v5865
        %7205 = vmatprep.subr.bf16.mxu0 %v5862
        %7206 = vmatpush1.bf16.msra.mxu0 %v5861
        %7207 = vmatprep.subr.bf16.mxu0 %v5858
        %7208 = vmatpush1.bf16.msra.mxu0 %v5857
        %7209 = vmatprep.subr.bf16.mxu0 %v5854
        %7210 = vmatpush1.bf16.msra.mxu0 %v5853
        %7211 = vmatprep.subr.bf16.mxu0 %v5914
        %7212 = vmatpush2.bf16.msra.mxu0 %v5913
        %7213 = vmatprep.subr.bf16.mxu0 %v5910
        %7214 = vmatpush2.bf16.msra.mxu0 %v5909
        %7215 = vmatprep.subr.bf16.mxu0 %v5906
        %7216 = vmatpush2.bf16.msra.mxu0 %v5905
        %7217 = vmatprep.subr.bf16.mxu0 %v5902
        %7218 = vmatpush2.bf16.msra.mxu0 %v5901
        %7219 = vmatprep.subr.bf16.mxu0 %v5898
        %7220 = vmatpush2.bf16.msra.mxu0 %v5897
        %7221 = vmatprep.subr.bf16.mxu0 %v5894
        %7222 = vmatpush2.bf16.msra.mxu0 %v5893
        %7223 = vmatprep.subr.bf16.mxu0 %v5890
        %7224 = vmatpush2.bf16.msra.mxu0 %v5889
        %7225 = vmatprep.subr.bf16.mxu0 %v5886
        %7226 = vmatpush2.bf16.msra.mxu0 %v5885
        %7227 = vmatprep.mubr.bf16.mxu0 %v2818
        %7228 = vmatmul.mubr.bf16.gmra.mxu0 %v2804
        %v7229 = vpop.f32.mrf.mxu0
        %v7230 = vadd.f32 %v7189, %v7229
        %v7231 = vpop.f32.mrf.mxu0
        %v7232 = vadd.f32 %v7191, %v7231
        %v7233 = vpop.f32.mrf.mxu0
        %v7234 = vpop.f32.mrf.mxu0
        %7235 = vdwg.mxu0
        %7236 = vmatprep.subr.bf16.mxu0 %v5946
        %7237 = vmatpush1.bf16.msra.mxu0 %v5945
        %7238 = vmatprep.subr.bf16.mxu0 %v5942
        %7239 = vmatpush1.bf16.msra.mxu0 %v5941
        %7240 = vmatprep.subr.bf16.mxu0 %v5938
        %7241 = vmatpush1.bf16.msra.mxu0 %v5937
        %7242 = vmatprep.subr.bf16.mxu0 %v5934
        %7243 = vmatpush1.bf16.msra.mxu0 %v5933
        %7244 = vmatprep.subr.bf16.mxu0 %v5930
        %7245 = vmatpush1.bf16.msra.mxu0 %v5929
        %7246 = vmatprep.subr.bf16.mxu0 %v5926
        %7247 = vmatpush1.bf16.msra.mxu0 %v5925
        %7248 = vmatprep.subr.bf16.mxu0 %v5922
        %7249 = vmatpush1.bf16.msra.mxu0 %v5921
        %7250 = vmatprep.subr.bf16.mxu0 %v5918
        %7251 = vmatpush1.bf16.msra.mxu0 %v5917
        %7252 = vmatprep.subr.bf16.mxu0 %v5978
        %7253 = vmatpush2.bf16.msra.mxu0 %v5977
        %7254 = vmatprep.subr.bf16.mxu0 %v5974
        %7255 = vmatpush2.bf16.msra.mxu0 %v5973
        %7256 = vmatprep.subr.bf16.mxu0 %v5970
        %7257 = vmatpush2.bf16.msra.mxu0 %v5969
        %7258 = vmatprep.subr.bf16.mxu0 %v5966
        %7259 = vmatpush2.bf16.msra.mxu0 %v5965
        %7260 = vmatprep.subr.bf16.mxu0 %v5962
        %7261 = vmatpush2.bf16.msra.mxu0 %v5961
        %7262 = vmatprep.subr.bf16.mxu0 %v5958
        %7263 = vmatpush2.bf16.msra.mxu0 %v5957
        %7264 = vmatprep.subr.bf16.mxu0 %v5954
        %7265 = vmatpush2.bf16.msra.mxu0 %v5953
        %7266 = vmatprep.subr.bf16.mxu0 %v5950
        %7267 = vmatpush2.bf16.msra.mxu0 %v5949
        %7268 = vmatprep.mubr.bf16.mxu0 %v2822
        %7269 = vmatmul.mubr.bf16.gmra.mxu0 %v2820
        %v7270 = vpop.f32.mrf.mxu0
        %v7271 = vadd.f32 %v7230, %v7270
        %v7272 = vpop.f32.mrf.mxu0
        %v7273 = vadd.f32 %v7232, %v7272
        %v7274 = vpop.f32.mrf.mxu0
        %v7275 = vpop.f32.mrf.mxu0
        %7276 = vdwg.mxu0
        %7277 = vmatprep.subr.bf16.mxu0 0
        %7278 = vmatpush1.bf16.msra.mxu0 0
        %7279 = vmatprep.subr.bf16.mxu0 0
        %7280 = vmatpush1.bf16.msra.mxu0 0
        %7281 = vmatprep.subr.bf16.mxu0 0
        %7282 = vmatpush1.bf16.msra.mxu0 0
        %7283 = vmatprep.subr.bf16.mxu0 0
        %7284 = vmatpush1.bf16.msra.mxu0 0
        %7285 = vmatprep.subr.bf16.mxu0 %v5994
        %7286 = vmatpush1.bf16.msra.mxu0 %v5993
        %7287 = vmatprep.subr.bf16.mxu0 %v5990
        %7288 = vmatpush1.bf16.msra.mxu0 %v5989
        %7289 = vmatprep.subr.bf16.mxu0 %v5986
        %7290 = vmatpush1.bf16.msra.mxu0 %v5985
        %7291 = vmatprep.subr.bf16.mxu0 %v5982
        %7292 = vmatpush1.bf16.msra.mxu0 %v5981
        %7293 = vmatprep.subr.bf16.mxu0 0
        %7294 = vmatpush2.bf16.msra.mxu0 0
        %7295 = vmatprep.subr.bf16.mxu0 0
        %7296 = vmatpush2.bf16.msra.mxu0 0
        %7297 = vmatprep.subr.bf16.mxu0 0
        %7298 = vmatpush2.bf16.msra.mxu0 0
        %7299 = vmatprep.subr.bf16.mxu0 0
        %7300 = vmatpush2.bf16.msra.mxu0 0
        %7301 = vmatprep.subr.bf16.mxu0 0
        %7302 = vmatpush2.bf16.msra.mxu0 0
        %7303 = vmatprep.subr.bf16.mxu0 0
        %7304 = vmatpush2.bf16.msra.mxu0 0
        %7305 = vmatprep.subr.bf16.mxu0 0
        %7306 = vmatpush2.bf16.msra.mxu0 0
        %7307 = vmatprep.subr.bf16.mxu0 0
        %7308 = vmatpush2.bf16.msra.mxu0 0
        %7309 = vmatprep.mubr.bf16.mxu0 0
        %7310 = vmatmul.mubr.bf16.gmra.mxu0 %v6783
        %v7311 = vpop.f32.mrf.mxu0
        %v7312 = vadd.f32 %v7271, %v7311
        %v7313 = vpop.f32.mrf.mxu0
        %v7314 = vadd.f32 %v7273, %v7313
        %v7315 = vpop.f32.mrf.mxu0
        %v7316 = vpop.f32.mrf.mxu0
        %7317 = vdwg.mxu0
        %7318 = vmatprep.subr.bf16.mxu0 %v5244
        %7319 = vmatpush1.bf16.msra.mxu0 %v5243
        %7320 = vmatprep.subr.bf16.mxu0 %v5240
        %7321 = vmatpush1.bf16.msra.mxu0 %v5239
        %7322 = vmatprep.subr.bf16.mxu0 %v5236
        %7323 = vmatpush1.bf16.msra.mxu0 %v5235
        %7324 = vmatprep.subr.bf16.mxu0 %v5232
        %7325 = vmatpush1.bf16.msra.mxu0 %v5231
        %7326 = vmatprep.subr.bf16.mxu0 %v5228
        %7327 = vmatpush1.bf16.msra.mxu0 %v5227
        %7328 = vmatprep.subr.bf16.mxu0 %v5224
        %7329 = vmatpush1.bf16.msra.mxu0 %v5223
        %7330 = vmatprep.subr.bf16.mxu0 %v5220
        %7331 = vmatpush1.bf16.msra.mxu0 %v5219
        %7332 = vmatprep.subr.bf16.mxu0 %v5216
        %7333 = vmatpush1.bf16.msra.mxu0 %v5215
        %7334 = vmatprep.subr.bf16.mxu0 %v5276
        %7335 = vmatpush2.bf16.msra.mxu0 %v5275
        %7336 = vmatprep.subr.bf16.mxu0 %v5272
        %7337 = vmatpush2.bf16.msra.mxu0 %v5271
        %7338 = vmatprep.subr.bf16.mxu0 %v5268
        %7339 = vmatpush2.bf16.msra.mxu0 %v5267
        %7340 = vmatprep.subr.bf16.mxu0 %v5264
        %7341 = vmatpush2.bf16.msra.mxu0 %v5263
        %7342 = vmatprep.subr.bf16.mxu0 %v5260
        %7343 = vmatpush2.bf16.msra.mxu0 %v5259
        %7344 = vmatprep.subr.bf16.mxu0 %v5256
        %7345 = vmatpush2.bf16.msra.mxu0 %v5255
        %7346 = vmatprep.subr.bf16.mxu0 %v5252
        %7347 = vmatpush2.bf16.msra.mxu0 %v5251
        %7348 = vmatprep.subr.bf16.mxu0 %v5248
        %7349 = vmatpush2.bf16.msra.mxu0 %v5247
        %7350 = vmatprep.mubr.bf16.mxu0 %v2713
        %7351 = vmatmul.mubr.bf16.gmra.mxu0 %v2699
        %v7352 = vpop.f32.mrf.mxu0
        %v7353 = vadd.f32 %v2663, %v7352
        %v7354 = vpop.f32.mrf.mxu0
        %v7355 = vadd.f32 %v2667, %v7354
        %v7356 = vpop.f32.mrf.mxu0
        %v7357 = vpop.f32.mrf.mxu0
        %7358 = vdwg.mxu0
        %7359 = vmatprep.subr.bf16.mxu0 %v5308
        %7360 = vmatpush1.bf16.msra.mxu0 %v5307
        %7361 = vmatprep.subr.bf16.mxu0 %v5304
        %7362 = vmatpush1.bf16.msra.mxu0 %v5303
        %7363 = vmatprep.subr.bf16.mxu0 %v5300
        %7364 = vmatpush1.bf16.msra.mxu0 %v5299
        %7365 = vmatprep.subr.bf16.mxu0 %v5296
        %7366 = vmatpush1.bf16.msra.mxu0 %v5295
        %7367 = vmatprep.subr.bf16.mxu0 %v5292
        %7368 = vmatpush1.bf16.msra.mxu0 %v5291
        %7369 = vmatprep.subr.bf16.mxu0 %v5288
        %7370 = vmatpush1.bf16.msra.mxu0 %v5287
        %7371 = vmatprep.subr.bf16.mxu0 %v5284
        %7372 = vmatpush1.bf16.msra.mxu0 %v5283
        %7373 = vmatprep.subr.bf16.mxu0 %v5280
        %7374 = vmatpush1.bf16.msra.mxu0 %v5279
        %7375 = vmatprep.subr.bf16.mxu0 %v5340
        %7376 = vmatpush2.bf16.msra.mxu0 %v5339
        %7377 = vmatprep.subr.bf16.mxu0 %v5336
        %7378 = vmatpush2.bf16.msra.mxu0 %v5335
        %7379 = vmatprep.subr.bf16.mxu0 %v5332
        %7380 = vmatpush2.bf16.msra.mxu0 %v5331
        %7381 = vmatprep.subr.bf16.mxu0 %v5328
        %7382 = vmatpush2.bf16.msra.mxu0 %v5327
        %7383 = vmatprep.subr.bf16.mxu0 %v5324
        %7384 = vmatpush2.bf16.msra.mxu0 %v5323
        %7385 = vmatprep.subr.bf16.mxu0 %v5320
        %7386 = vmatpush2.bf16.msra.mxu0 %v5319
        %7387 = vmatprep.subr.bf16.mxu0 %v5316
        %7388 = vmatpush2.bf16.msra.mxu0 %v5315
        %7389 = vmatprep.subr.bf16.mxu0 %v5312
        %7390 = vmatpush2.bf16.msra.mxu0 %v5311
        %7391 = vmatprep.mubr.bf16.mxu0 %v2723
        %7392 = vmatmul.mubr.bf16.gmra.mxu0 %v2721
        %v7393 = vpop.f32.mrf.mxu0
        %v7394 = vadd.f32 %v7353, %v7393
        %v7395 = vpop.f32.mrf.mxu0
        %v7396 = vadd.f32 %v7355, %v7395
        %v7397 = vpop.f32.mrf.mxu0
        %v7398 = vpop.f32.mrf.mxu0
        %7399 = vdwg.mxu0
        %7400 = vmatprep.subr.bf16.mxu0 %v5372
        %7401 = vmatpush1.bf16.msra.mxu0 %v5371
        %7402 = vmatprep.subr.bf16.mxu0 %v5368
        %7403 = vmatpush1.bf16.msra.mxu0 %v5367
        %7404 = vmatprep.subr.bf16.mxu0 %v5364
        %7405 = vmatpush1.bf16.msra.mxu0 %v5363
        %7406 = vmatprep.subr.bf16.mxu0 %v5360
        %7407 = vmatpush1.bf16.msra.mxu0 %v5359
        %7408 = vmatprep.subr.bf16.mxu0 %v5356
        %7409 = vmatpush1.bf16.msra.mxu0 %v5355
        %7410 = vmatprep.subr.bf16.mxu0 %v5352
        %7411 = vmatpush1.bf16.msra.mxu0 %v5351
        %7412 = vmatprep.subr.bf16.mxu0 %v5348
        %7413 = vmatpush1.bf16.msra.mxu0 %v5347
        %7414 = vmatprep.subr.bf16.mxu0 %v5344
        %7415 = vmatpush1.bf16.msra.mxu0 %v5343
        %7416 = vmatprep.subr.bf16.mxu0 %v5404
        %7417 = vmatpush2.bf16.msra.mxu0 %v5403
        %7418 = vmatprep.subr.bf16.mxu0 %v5400
        %7419 = vmatpush2.bf16.msra.mxu0 %v5399
        %7420 = vmatprep.subr.bf16.mxu0 %v5396
        %7421 = vmatpush2.bf16.msra.mxu0 %v5395
        %7422 = vmatprep.subr.bf16.mxu0 %v5392
        %7423 = vmatpush2.bf16.msra.mxu0 %v5391
        %7424 = vmatprep.subr.bf16.mxu0 %v5388
        %7425 = vmatpush2.bf16.msra.mxu0 %v5387
        %7426 = vmatprep.subr.bf16.mxu0 %v5384
        %7427 = vmatpush2.bf16.msra.mxu0 %v5383
        %7428 = vmatprep.subr.bf16.mxu0 %v5380
        %7429 = vmatpush2.bf16.msra.mxu0 %v5379
        %7430 = vmatprep.subr.bf16.mxu0 %v5376
        %7431 = vmatpush2.bf16.msra.mxu0 %v5375
        %7432 = vmatprep.mubr.bf16.mxu0 %v2720
        %7433 = vmatmul.mubr.bf16.gmra.mxu0 %v2706
        %v7434 = vpop.f32.mrf.mxu0
        %v7435 = vadd.f32 %v7394, %v7434
        %v7436 = vpop.f32.mrf.mxu0
        %v7437 = vadd.f32 %v7396, %v7436
        %v7438 = vpop.f32.mrf.mxu0
        %v7439 = vpop.f32.mrf.mxu0
        %7440 = vdwg.mxu0
        %7441 = vmatprep.subr.bf16.mxu0 %v5436
        %7442 = vmatpush1.bf16.msra.mxu0 %v5435
        %7443 = vmatprep.subr.bf16.mxu0 %v5432
        %7444 = vmatpush1.bf16.msra.mxu0 %v5431
        %7445 = vmatprep.subr.bf16.mxu0 %v5428
        %7446 = vmatpush1.bf16.msra.mxu0 %v5427
        %7447 = vmatprep.subr.bf16.mxu0 %v5424
        %7448 = vmatpush1.bf16.msra.mxu0 %v5423
        %7449 = vmatprep.subr.bf16.mxu0 %v5420
        %7450 = vmatpush1.bf16.msra.mxu0 %v5419
        %7451 = vmatprep.subr.bf16.mxu0 %v5416
        %7452 = vmatpush1.bf16.msra.mxu0 %v5415
        %7453 = vmatprep.subr.bf16.mxu0 %v5412
        %7454 = vmatpush1.bf16.msra.mxu0 %v5411
        %7455 = vmatprep.subr.bf16.mxu0 %v5408
        %7456 = vmatpush1.bf16.msra.mxu0 %v5407
        %7457 = vmatprep.subr.bf16.mxu0 %v5468
        %7458 = vmatpush2.bf16.msra.mxu0 %v5467
        %7459 = vmatprep.subr.bf16.mxu0 %v5464
        %7460 = vmatpush2.bf16.msra.mxu0 %v5463
        %7461 = vmatprep.subr.bf16.mxu0 %v5460
        %7462 = vmatpush2.bf16.msra.mxu0 %v5459
        %7463 = vmatprep.subr.bf16.mxu0 %v5456
        %7464 = vmatpush2.bf16.msra.mxu0 %v5455
        %7465 = vmatprep.subr.bf16.mxu0 %v5452
        %7466 = vmatpush2.bf16.msra.mxu0 %v5451
        %7467 = vmatprep.subr.bf16.mxu0 %v5448
        %7468 = vmatpush2.bf16.msra.mxu0 %v5447
        %7469 = vmatprep.subr.bf16.mxu0 %v5444
        %7470 = vmatpush2.bf16.msra.mxu0 %v5443
        %7471 = vmatprep.subr.bf16.mxu0 %v5440
        %7472 = vmatpush2.bf16.msra.mxu0 %v5439
        %7473 = vmatprep.mubr.bf16.mxu0 %v2724
        %7474 = vmatmul.mubr.bf16.gmra.mxu0 %v2722
        %v7475 = vpop.f32.mrf.mxu0
        %v7476 = vadd.f32 %v7435, %v7475
        %v7477 = vpop.f32.mrf.mxu0
        %v7478 = vadd.f32 %v7437, %v7477
        %v7479 = vpop.f32.mrf.mxu0
        %v7480 = vpop.f32.mrf.mxu0
        %7481 = vdwg.mxu0
        %7482 = vmatprep.subr.bf16.mxu0 %v5500
        %7483 = vmatpush1.bf16.msra.mxu0 %v5499
        %7484 = vmatprep.subr.bf16.mxu0 %v5496
        %7485 = vmatpush1.bf16.msra.mxu0 %v5495
        %7486 = vmatprep.subr.bf16.mxu0 %v5492
        %7487 = vmatpush1.bf16.msra.mxu0 %v5491
        %7488 = vmatprep.subr.bf16.mxu0 %v5488
        %7489 = vmatpush1.bf16.msra.mxu0 %v5487
        %7490 = vmatprep.subr.bf16.mxu0 %v5484
        %7491 = vmatpush1.bf16.msra.mxu0 %v5483
        %7492 = vmatprep.subr.bf16.mxu0 %v5480
        %7493 = vmatpush1.bf16.msra.mxu0 %v5479
        %7494 = vmatprep.subr.bf16.mxu0 %v5476
        %7495 = vmatpush1.bf16.msra.mxu0 %v5475
        %7496 = vmatprep.subr.bf16.mxu0 %v5472
        %7497 = vmatpush1.bf16.msra.mxu0 %v5471
        %7498 = vmatprep.subr.bf16.mxu0 %v5532
        %7499 = vmatpush2.bf16.msra.mxu0 %v5531
        %7500 = vmatprep.subr.bf16.mxu0 %v5528
        %7501 = vmatpush2.bf16.msra.mxu0 %v5527
        %7502 = vmatprep.subr.bf16.mxu0 %v5524
        %7503 = vmatpush2.bf16.msra.mxu0 %v5523
        %7504 = vmatprep.subr.bf16.mxu0 %v5520
        %7505 = vmatpush2.bf16.msra.mxu0 %v5519
        %7506 = vmatprep.subr.bf16.mxu0 %v5516
        %7507 = vmatpush2.bf16.msra.mxu0 %v5515
        %7508 = vmatprep.subr.bf16.mxu0 %v5512
        %7509 = vmatpush2.bf16.msra.mxu0 %v5511
        %7510 = vmatprep.subr.bf16.mxu0 %v5508
        %7511 = vmatpush2.bf16.msra.mxu0 %v5507
        %7512 = vmatprep.subr.bf16.mxu0 %v5504
        %7513 = vmatpush2.bf16.msra.mxu0 %v5503
        %7514 = vmatprep.mubr.bf16.mxu0 %v2762
        %7515 = vmatmul.mubr.bf16.gmra.mxu0 %v2748
        %v7516 = vpop.f32.mrf.mxu0
        %v7517 = vadd.f32 %v7476, %v7516
        %v7518 = vpop.f32.mrf.mxu0
        %v7519 = vadd.f32 %v7478, %v7518
        %v7520 = vpop.f32.mrf.mxu0
        %v7521 = vpop.f32.mrf.mxu0
        %7522 = vdwg.mxu0
        %7523 = vmatprep.subr.bf16.mxu0 %v5564
        %7524 = vmatpush1.bf16.msra.mxu0 %v5563
        %7525 = vmatprep.subr.bf16.mxu0 %v5560
        %7526 = vmatpush1.bf16.msra.mxu0 %v5559
        %7527 = vmatprep.subr.bf16.mxu0 %v5556
        %7528 = vmatpush1.bf16.msra.mxu0 %v5555
        %7529 = vmatprep.subr.bf16.mxu0 %v5552
        %7530 = vmatpush1.bf16.msra.mxu0 %v5551
        %7531 = vmatprep.subr.bf16.mxu0 %v5548
        %7532 = vmatpush1.bf16.msra.mxu0 %v5547
        %7533 = vmatprep.subr.bf16.mxu0 %v5544
        %7534 = vmatpush1.bf16.msra.mxu0 %v5543
        %7535 = vmatprep.subr.bf16.mxu0 %v5540
        %7536 = vmatpush1.bf16.msra.mxu0 %v5539
        %7537 = vmatprep.subr.bf16.mxu0 %v5536
        %7538 = vmatpush1.bf16.msra.mxu0 %v5535
        %7539 = vmatprep.subr.bf16.mxu0 %v5596
        %7540 = vmatpush2.bf16.msra.mxu0 %v5595
        %7541 = vmatprep.subr.bf16.mxu0 %v5592
        %7542 = vmatpush2.bf16.msra.mxu0 %v5591
        %7543 = vmatprep.subr.bf16.mxu0 %v5588
        %7544 = vmatpush2.bf16.msra.mxu0 %v5587
        %7545 = vmatprep.subr.bf16.mxu0 %v5584
        %7546 = vmatpush2.bf16.msra.mxu0 %v5583
        %7547 = vmatprep.subr.bf16.mxu0 %v5580
        %7548 = vmatpush2.bf16.msra.mxu0 %v5579
        %7549 = vmatprep.subr.bf16.mxu0 %v5576
        %7550 = vmatpush2.bf16.msra.mxu0 %v5575
        %7551 = vmatprep.subr.bf16.mxu0 %v5572
        %7552 = vmatpush2.bf16.msra.mxu0 %v5571
        %7553 = vmatprep.subr.bf16.mxu0 %v5568
        %7554 = vmatpush2.bf16.msra.mxu0 %v5567
        %7555 = vmatprep.mubr.bf16.mxu0 %v2772
        %7556 = vmatmul.mubr.bf16.gmra.mxu0 %v2770
        %v7557 = vpop.f32.mrf.mxu0
        %v7558 = vadd.f32 %v7517, %v7557
        %v7559 = vpop.f32.mrf.mxu0
        %v7560 = vadd.f32 %v7519, %v7559
        %v7561 = vpop.f32.mrf.mxu0
        %v7562 = vpop.f32.mrf.mxu0
        %7563 = vdwg.mxu0
        %7564 = vmatprep.subr.bf16.mxu0 %v5628
        %7565 = vmatpush1.bf16.msra.mxu0 %v5627
        %7566 = vmatprep.subr.bf16.mxu0 %v5624
        %7567 = vmatpush1.bf16.msra.mxu0 %v5623
        %7568 = vmatprep.subr.bf16.mxu0 %v5620
        %7569 = vmatpush1.bf16.msra.mxu0 %v5619
        %7570 = vmatprep.subr.bf16.mxu0 %v5616
        %7571 = vmatpush1.bf16.msra.mxu0 %v5615
        %7572 = vmatprep.subr.bf16.mxu0 %v5612
        %7573 = vmatpush1.bf16.msra.mxu0 %v5611
        %7574 = vmatprep.subr.bf16.mxu0 %v5608
        %7575 = vmatpush1.bf16.msra.mxu0 %v5607
        %7576 = vmatprep.subr.bf16.mxu0 %v5604
        %7577 = vmatpush1.bf16.msra.mxu0 %v5603
        %7578 = vmatprep.subr.bf16.mxu0 %v5600
        %7579 = vmatpush1.bf16.msra.mxu0 %v5599
        %7580 = vmatprep.subr.bf16.mxu0 %v5660
        %7581 = vmatpush2.bf16.msra.mxu0 %v5659
        %7582 = vmatprep.subr.bf16.mxu0 %v5656
        %7583 = vmatpush2.bf16.msra.mxu0 %v5655
        %7584 = vmatprep.subr.bf16.mxu0 %v5652
        %7585 = vmatpush2.bf16.msra.mxu0 %v5651
        %7586 = vmatprep.subr.bf16.mxu0 %v5648
        %7587 = vmatpush2.bf16.msra.mxu0 %v5647
        %7588 = vmatprep.subr.bf16.mxu0 %v5644
        %7589 = vmatpush2.bf16.msra.mxu0 %v5643
        %7590 = vmatprep.subr.bf16.mxu0 %v5640
        %7591 = vmatpush2.bf16.msra.mxu0 %v5639
        %7592 = vmatprep.subr.bf16.mxu0 %v5636
        %7593 = vmatpush2.bf16.msra.mxu0 %v5635
        %7594 = vmatprep.subr.bf16.mxu0 %v5632
        %7595 = vmatpush2.bf16.msra.mxu0 %v5631
        %7596 = vmatprep.mubr.bf16.mxu0 %v2769
        %7597 = vmatmul.mubr.bf16.gmra.mxu0 %v2755
        %v7598 = vpop.f32.mrf.mxu0
        %v7599 = vadd.f32 %v7558, %v7598
        %v7600 = vpop.f32.mrf.mxu0
        %v7601 = vadd.f32 %v7560, %v7600
        %v7602 = vpop.f32.mrf.mxu0
        %v7603 = vpop.f32.mrf.mxu0
        %7604 = vdwg.mxu0
        %7605 = vmatprep.subr.bf16.mxu0 %v5692
        %7606 = vmatpush1.bf16.msra.mxu0 %v5691
        %7607 = vmatprep.subr.bf16.mxu0 %v5688
        %7608 = vmatpush1.bf16.msra.mxu0 %v5687
        %7609 = vmatprep.subr.bf16.mxu0 %v5684
        %7610 = vmatpush1.bf16.msra.mxu0 %v5683
        %7611 = vmatprep.subr.bf16.mxu0 %v5680
        %7612 = vmatpush1.bf16.msra.mxu0 %v5679
        %7613 = vmatprep.subr.bf16.mxu0 %v5676
        %7614 = vmatpush1.bf16.msra.mxu0 %v5675
        %7615 = vmatprep.subr.bf16.mxu0 %v5672
        %7616 = vmatpush1.bf16.msra.mxu0 %v5671
        %7617 = vmatprep.subr.bf16.mxu0 %v5668
        %7618 = vmatpush1.bf16.msra.mxu0 %v5667
        %7619 = vmatprep.subr.bf16.mxu0 %v5664
        %7620 = vmatpush1.bf16.msra.mxu0 %v5663
        %7621 = vmatprep.subr.bf16.mxu0 %v5724
        %7622 = vmatpush2.bf16.msra.mxu0 %v5723
        %7623 = vmatprep.subr.bf16.mxu0 %v5720
        %7624 = vmatpush2.bf16.msra.mxu0 %v5719
        %7625 = vmatprep.subr.bf16.mxu0 %v5716
        %7626 = vmatpush2.bf16.msra.mxu0 %v5715
        %7627 = vmatprep.subr.bf16.mxu0 %v5712
        %7628 = vmatpush2.bf16.msra.mxu0 %v5711
        %7629 = vmatprep.subr.bf16.mxu0 %v5708
        %7630 = vmatpush2.bf16.msra.mxu0 %v5707
        %7631 = vmatprep.subr.bf16.mxu0 %v5704
        %7632 = vmatpush2.bf16.msra.mxu0 %v5703
        %7633 = vmatprep.subr.bf16.mxu0 %v5700
        %7634 = vmatpush2.bf16.msra.mxu0 %v5699
        %7635 = vmatprep.subr.bf16.mxu0 %v5696
        %7636 = vmatpush2.bf16.msra.mxu0 %v5695
        %7637 = vmatprep.mubr.bf16.mxu0 %v2773
        %7638 = vmatmul.mubr.bf16.gmra.mxu0 %v2771
        %v7639 = vpop.f32.mrf.mxu0
        %v7640 = vadd.f32 %v7599, %v7639
        %v7641 = vpop.f32.mrf.mxu0
        %v7642 = vadd.f32 %v7601, %v7641
        %v7643 = vpop.f32.mrf.mxu0
        %v7644 = vpop.f32.mrf.mxu0
        %7645 = vdwg.mxu0
        %7646 = vmatprep.subr.bf16.mxu0 %v5756
        %7647 = vmatpush1.bf16.msra.mxu0 %v5755
        %7648 = vmatprep.subr.bf16.mxu0 %v5752
        %7649 = vmatpush1.bf16.msra.mxu0 %v5751
        %7650 = vmatprep.subr.bf16.mxu0 %v5748
        %7651 = vmatpush1.bf16.msra.mxu0 %v5747
        %7652 = vmatprep.subr.bf16.mxu0 %v5744
        %7653 = vmatpush1.bf16.msra.mxu0 %v5743
        %7654 = vmatprep.subr.bf16.mxu0 %v5740
        %7655 = vmatpush1.bf16.msra.mxu0 %v5739
        %7656 = vmatprep.subr.bf16.mxu0 %v5736
        %7657 = vmatpush1.bf16.msra.mxu0 %v5735
        %7658 = vmatprep.subr.bf16.mxu0 %v5732
        %7659 = vmatpush1.bf16.msra.mxu0 %v5731
        %7660 = vmatprep.subr.bf16.mxu0 %v5728
        %7661 = vmatpush1.bf16.msra.mxu0 %v5727
        %7662 = vmatprep.subr.bf16.mxu0 %v5788
        %7663 = vmatpush2.bf16.msra.mxu0 %v5787
        %7664 = vmatprep.subr.bf16.mxu0 %v5784
        %7665 = vmatpush2.bf16.msra.mxu0 %v5783
        %7666 = vmatprep.subr.bf16.mxu0 %v5780
        %7667 = vmatpush2.bf16.msra.mxu0 %v5779
        %7668 = vmatprep.subr.bf16.mxu0 %v5776
        %7669 = vmatpush2.bf16.msra.mxu0 %v5775
        %7670 = vmatprep.subr.bf16.mxu0 %v5772
        %7671 = vmatpush2.bf16.msra.mxu0 %v5771
        %7672 = vmatprep.subr.bf16.mxu0 %v5768
        %7673 = vmatpush2.bf16.msra.mxu0 %v5767
        %7674 = vmatprep.subr.bf16.mxu0 %v5764
        %7675 = vmatpush2.bf16.msra.mxu0 %v5763
        %7676 = vmatprep.subr.bf16.mxu0 %v5760
        %7677 = vmatpush2.bf16.msra.mxu0 %v5759
        %7678 = vmatprep.mubr.bf16.mxu0 %v2811
        %7679 = vmatmul.mubr.bf16.gmra.mxu0 %v2797
        %v7680 = vpop.f32.mrf.mxu0
        %v7681 = vadd.f32 %v7640, %v7680
        %v7682 = vpop.f32.mrf.mxu0
        %v7683 = vadd.f32 %v7642, %v7682
        %v7684 = vpop.f32.mrf.mxu0
        %v7685 = vpop.f32.mrf.mxu0
        %7686 = vdwg.mxu0
        %7687 = vmatprep.subr.bf16.mxu0 %v5820
        %7688 = vmatpush1.bf16.msra.mxu0 %v5819
        %7689 = vmatprep.subr.bf16.mxu0 %v5816
        %7690 = vmatpush1.bf16.msra.mxu0 %v5815
        %7691 = vmatprep.subr.bf16.mxu0 %v5812
        %7692 = vmatpush1.bf16.msra.mxu0 %v5811
        %7693 = vmatprep.subr.bf16.mxu0 %v5808
        %7694 = vmatpush1.bf16.msra.mxu0 %v5807
        %7695 = vmatprep.subr.bf16.mxu0 %v5804
        %7696 = vmatpush1.bf16.msra.mxu0 %v5803
        %7697 = vmatprep.subr.bf16.mxu0 %v5800
        %7698 = vmatpush1.bf16.msra.mxu0 %v5799
        %7699 = vmatprep.subr.bf16.mxu0 %v5796
        %7700 = vmatpush1.bf16.msra.mxu0 %v5795
        %7701 = vmatprep.subr.bf16.mxu0 %v5792
        %7702 = vmatpush1.bf16.msra.mxu0 %v5791
        %7703 = vmatprep.subr.bf16.mxu0 %v5852
        %7704 = vmatpush2.bf16.msra.mxu0 %v5851
        %7705 = vmatprep.subr.bf16.mxu0 %v5848
        %7706 = vmatpush2.bf16.msra.mxu0 %v5847
        %7707 = vmatprep.subr.bf16.mxu0 %v5844
        %7708 = vmatpush2.bf16.msra.mxu0 %v5843
        %7709 = vmatprep.subr.bf16.mxu0 %v5840
        %7710 = vmatpush2.bf16.msra.mxu0 %v5839
        %7711 = vmatprep.subr.bf16.mxu0 %v5836
        %7712 = vmatpush2.bf16.msra.mxu0 %v5835
        %7713 = vmatprep.subr.bf16.mxu0 %v5832
        %7714 = vmatpush2.bf16.msra.mxu0 %v5831
        %7715 = vmatprep.subr.bf16.mxu0 %v5828
        %7716 = vmatpush2.bf16.msra.mxu0 %v5827
        %7717 = vmatprep.subr.bf16.mxu0 %v5824
        %7718 = vmatpush2.bf16.msra.mxu0 %v5823
        %7719 = vmatprep.mubr.bf16.mxu0 %v2821
        %7720 = vmatmul.mubr.bf16.gmra.mxu0 %v2819
        %v7721 = vpop.f32.mrf.mxu0
        %v7722 = vadd.f32 %v7681, %v7721
        %v7723 = vpop.f32.mrf.mxu0
        %v7724 = vadd.f32 %v7683, %v7723
        %v7725 = vpop.f32.mrf.mxu0
        %v7726 = vpop.f32.mrf.mxu0
        %7727 = vdwg.mxu0
        %7728 = vmatprep.subr.bf16.mxu0 %v5884
        %7729 = vmatpush1.bf16.msra.mxu0 %v5883
        %7730 = vmatprep.subr.bf16.mxu0 %v5880
        %7731 = vmatpush1.bf16.msra.mxu0 %v5879
        %7732 = vmatprep.subr.bf16.mxu0 %v5876
        %7733 = vmatpush1.bf16.msra.mxu0 %v5875
        %7734 = vmatprep.subr.bf16.mxu0 %v5872
        %7735 = vmatpush1.bf16.msra.mxu0 %v5871
        %7736 = vmatprep.subr.bf16.mxu0 %v5868
        %7737 = vmatpush1.bf16.msra.mxu0 %v5867
        %7738 = vmatprep.subr.bf16.mxu0 %v5864
        %7739 = vmatpush1.bf16.msra.mxu0 %v5863
        %7740 = vmatprep.subr.bf16.mxu0 %v5860
        %7741 = vmatpush1.bf16.msra.mxu0 %v5859
        %7742 = vmatprep.subr.bf16.mxu0 %v5856
        %7743 = vmatpush1.bf16.msra.mxu0 %v5855
        %7744 = vmatprep.subr.bf16.mxu0 %v5916
        %7745 = vmatpush2.bf16.msra.mxu0 %v5915
        %7746 = vmatprep.subr.bf16.mxu0 %v5912
        %7747 = vmatpush2.bf16.msra.mxu0 %v5911
        %7748 = vmatprep.subr.bf16.mxu0 %v5908
        %7749 = vmatpush2.bf16.msra.mxu0 %v5907
        %7750 = vmatprep.subr.bf16.mxu0 %v5904
        %7751 = vmatpush2.bf16.msra.mxu0 %v5903
        %7752 = vmatprep.subr.bf16.mxu0 %v5900
        %7753 = vmatpush2.bf16.msra.mxu0 %v5899
        %7754 = vmatprep.subr.bf16.mxu0 %v5896
        %7755 = vmatpush2.bf16.msra.mxu0 %v5895
        %7756 = vmatprep.subr.bf16.mxu0 %v5892
        %7757 = vmatpush2.bf16.msra.mxu0 %v5891
        %7758 = vmatprep.subr.bf16.mxu0 %v5888
        %7759 = vmatpush2.bf16.msra.mxu0 %v5887
        %7760 = vmatprep.mubr.bf16.mxu0 %v2818
        %7761 = vmatmul.mubr.bf16.gmra.mxu0 %v2804
        %v7762 = vpop.f32.mrf.mxu0
        %v7763 = vadd.f32 %v7722, %v7762
        %v7764 = vpop.f32.mrf.mxu0
        %v7765 = vadd.f32 %v7724, %v7764
        %v7766 = vpop.f32.mrf.mxu0
        %v7767 = vpop.f32.mrf.mxu0
        %7768 = vdwg.mxu0
        %7769 = vmatprep.subr.bf16.mxu0 %v5948
        %7770 = vmatpush1.bf16.msra.mxu0 %v5947
        %7771 = vmatprep.subr.bf16.mxu0 %v5944
        %7772 = vmatpush1.bf16.msra.mxu0 %v5943
        %7773 = vmatprep.subr.bf16.mxu0 %v5940
        %7774 = vmatpush1.bf16.msra.mxu0 %v5939
        %7775 = vmatprep.subr.bf16.mxu0 %v5936
        %7776 = vmatpush1.bf16.msra.mxu0 %v5935
        %7777 = vmatprep.subr.bf16.mxu0 %v5932
        %7778 = vmatpush1.bf16.msra.mxu0 %v5931
        %7779 = vmatprep.subr.bf16.mxu0 %v5928
        %7780 = vmatpush1.bf16.msra.mxu0 %v5927
        %7781 = vmatprep.subr.bf16.mxu0 %v5924
        %7782 = vmatpush1.bf16.msra.mxu0 %v5923
        %7783 = vmatprep.subr.bf16.mxu0 %v5920
        %7784 = vmatpush1.bf16.msra.mxu0 %v5919
        %7785 = vmatprep.subr.bf16.mxu0 %v5980
        %7786 = vmatpush2.bf16.msra.mxu0 %v5979
        %7787 = vmatprep.subr.bf16.mxu0 %v5976
        %7788 = vmatpush2.bf16.msra.mxu0 %v5975
        %7789 = vmatprep.subr.bf16.mxu0 %v5972
        %7790 = vmatpush2.bf16.msra.mxu0 %v5971
        %7791 = vmatprep.subr.bf16.mxu0 %v5968
        %7792 = vmatpush2.bf16.msra.mxu0 %v5967
        %7793 = vmatprep.subr.bf16.mxu0 %v5964
        %7794 = vmatpush2.bf16.msra.mxu0 %v5963
        %7795 = vmatprep.subr.bf16.mxu0 %v5960
        %7796 = vmatpush2.bf16.msra.mxu0 %v5959
        %7797 = vmatprep.subr.bf16.mxu0 %v5956
        %7798 = vmatpush2.bf16.msra.mxu0 %v5955
        %7799 = vmatprep.subr.bf16.mxu0 %v5952
        %7800 = vmatpush2.bf16.msra.mxu0 %v5951
        %7801 = vmatprep.mubr.bf16.mxu0 %v2822
        %7802 = vmatmul.mubr.bf16.gmra.mxu0 %v2820
        %v7803 = vpop.f32.mrf.mxu0
        %v7804 = vadd.f32 %v7763, %v7803
        %v7805 = vpop.f32.mrf.mxu0
        %v7806 = vadd.f32 %v7765, %v7805
        %v7807 = vpop.f32.mrf.mxu0
        %v7808 = vpop.f32.mrf.mxu0
        %7809 = vdwg.mxu0
        %7810 = vmatprep.subr.bf16.mxu0 0
        %7811 = vmatpush1.bf16.msra.mxu0 0
        %7812 = vmatprep.subr.bf16.mxu0 0
        %7813 = vmatpush1.bf16.msra.mxu0 0
        %7814 = vmatprep.subr.bf16.mxu0 0
        %7815 = vmatpush1.bf16.msra.mxu0 0
        %7816 = vmatprep.subr.bf16.mxu0 0
        %7817 = vmatpush1.bf16.msra.mxu0 0
        %7818 = vmatprep.subr.bf16.mxu0 %v5996
        %7819 = vmatpush1.bf16.msra.mxu0 %v5995
        %7820 = vmatprep.subr.bf16.mxu0 %v5992
        %7821 = vmatpush1.bf16.msra.mxu0 %v5991
        %7822 = vmatprep.subr.bf16.mxu0 %v5988
        %7823 = vmatpush1.bf16.msra.mxu0 %v5987
        %7824 = vmatprep.subr.bf16.mxu0 %v5984
        %7825 = vmatpush1.bf16.msra.mxu0 %v5983
        %7826 = vmatprep.subr.bf16.mxu0 0
        %7827 = vmatpush2.bf16.msra.mxu0 0
        %7828 = vmatprep.subr.bf16.mxu0 0
        %7829 = vmatpush2.bf16.msra.mxu0 0
        %7830 = vmatprep.subr.bf16.mxu0 0
        %7831 = vmatpush2.bf16.msra.mxu0 0
        %7832 = vmatprep.subr.bf16.mxu0 0
        %7833 = vmatpush2.bf16.msra.mxu0 0
        %7834 = vmatprep.subr.bf16.mxu0 0
        %7835 = vmatpush2.bf16.msra.mxu0 0
        %7836 = vmatprep.subr.bf16.mxu0 0
        %7837 = vmatpush2.bf16.msra.mxu0 0
        %7838 = vmatprep.subr.bf16.mxu0 0
        %7839 = vmatpush2.bf16.msra.mxu0 0
        %7840 = vmatprep.subr.bf16.mxu0 0
        %7841 = vmatpush2.bf16.msra.mxu0 0
        %7842 = vmatprep.mubr.bf16.mxu0 0
        %7843 = vmatmul.mubr.bf16.gmra.mxu0 %v6783
        %v7844 = vpop.f32.mrf.mxu0
        %v7845 = vadd.f32 %v7804, %v7844
        %v7846 = vpop.f32.mrf.mxu0
        %v7847 = vadd.f32 %v7806, %v7846
        %v7848 = vpop.f32.mrf.mxu0
        %v7849 = vpop.f32.mrf.mxu0
        %7850 = vdwg.mxu0
        %v7851 = vmax.f32 %v7312, 0.0
        %v7852 = vmax.f32 %v7314, 0.0
        %v7853 = vmax.f32 %v7845, 0.0
        %v7854 = vmax.f32 %v7847, 0.0
        %v7855 = vpack.c.bf16 %v7851, %v7851
        %v7856 = vpack.c.bf16 %v7852, %v7852
        %v7857 = vpack.c.bf16 %v7853, %v7853
        %v7858 = vpack.c.bf16 %v7854, %v7854
        %v7859 = vld [vmem:[%s1853] sm:$0xf]
        %v7860 = vld [vmem:[%s1853 + $0x4] sm:$0xf]
        %v7861 = vld [vmem:[%s1853 + $0x8] sm:$0xf]
        %v7862 = vld [vmem:[%s1853 + $0xc] sm:$0xf]
        %v7863 = vld [vmem:[%s1853 + $0x10] sm:$0xf]
        %v7864 = vld [vmem:[%s1853 + $0x14] sm:$0xf]
        %v7865 = vld [vmem:[%s1853 + $0x18] sm:$0xf]
        %v7866 = vld [vmem:[%s1853 + $0x1c] sm:$0xf]
        %v7867 = vld [vmem:[%s1853 + $0x20] sm:$0xf]
        %v7868 = vld [vmem:[%s1853 + $0x24] sm:$0xf]
        %v7869 = vld [vmem:[%s1853 + $0x28] sm:$0xf]
        %v7870 = vld [vmem:[%s1853 + $0x2c] sm:$0xf]
        %v7871 = vld [vmem:[%s1853 + $0x30] sm:$0xf]
        %v7872 = vld [vmem:[%s1853 + $0x34] sm:$0xf]
        %v7873 = vld [vmem:[%s1853 + $0x38] sm:$0xf]
        %v7874 = vld [vmem:[%s1853 + $0x3c] sm:$0xf]
        %v7875 = vld [vmem:[%s1853 + $0x40] sm:$0xf]
        %v7876 = vld [vmem:[%s1853 + $0x44] sm:$0xf]
        %v7877 = vld [vmem:[%s1853 + $0x48] sm:$0xf]
        %v7878 = vld [vmem:[%s1853 + $0x4c] sm:$0xf]
        %v7879 = vld [vmem:[%s1853 + $0x50] sm:$0xf]
        %v7880 = vld [vmem:[%s1853 + $0x54] sm:$0xf]
        %v7881 = vld [vmem:[%s1853 + $0x58] sm:$0xf]
        %v7882 = vld [vmem:[%s1853 + $0x5c] sm:$0xf]
        %v7883 = vld [vmem:[%s1853 + $0x60] sm:$0xf]
        %v7884 = vld [vmem:[%s1853 + $0x64] sm:$0xf]
        %v7885 = vld [vmem:[%s1853 + $0x68] sm:$0xf]
        %v7886 = vld [vmem:[%s1853 + $0x6c] sm:$0xf]
        %v7887 = vld [vmem:[%s1853 + $0x70] sm:$0xf]
        %v7888 = vld [vmem:[%s1853 + $0x74] sm:$0xf]
        %v7889 = vld [vmem:[%s1853 + $0x78] sm:$0xf]
        %v7890 = vld [vmem:[%s1853 + $0x7c] sm:$0xf]
        %v7891 = vld [vmem:[%s1853 + $0x80] sm:$0xf]
        %v7892 = vld [vmem:[%s1853 + $0x84] sm:$0xf]
        %v7893 = vld [vmem:[%s1853 + $0x88] sm:$0xf]
        %v7894 = vld [vmem:[%s1853 + $0x8c] sm:$0xf]
        %v7895 = vld [vmem:[%s1853 + $0x90] sm:$0xf]
        %v7896 = vld [vmem:[%s1853 + $0x94] sm:$0xf]
        %v7897 = vld [vmem:[%s1853 + $0x98] sm:$0xf]
        %v7898 = vld [vmem:[%s1853 + $0x9c] sm:$0xf]
        %v7899 = vld [vmem:[%s1853 + $0xa0] sm:$0xf]
        %v7900 = vld [vmem:[%s1853 + $0xa4] sm:$0xf]
        %v7901 = vld [vmem:[%s1853 + $0xa8] sm:$0xf]
        %v7902 = vld [vmem:[%s1853 + $0xac] sm:$0xf]
        %v7903 = vld [vmem:[%s1853 + $0xb0] sm:$0xf]
        %v7904 = vld [vmem:[%s1853 + $0xb4] sm:$0xf]
        %v7905 = vld [vmem:[%s1853 + $0xb8] sm:$0xf]
        %v7906 = vld [vmem:[%s1853 + $0xbc] sm:$0xf]
        %v7907 = vld [vmem:[%s1853 + $0xc0] sm:$0xf]
        %v7908 = vld [vmem:[%s1853 + $0xc4] sm:$0xf]
        %v7909 = vld [vmem:[%s1853 + $0xc8] sm:$0xf]
        %v7910 = vld [vmem:[%s1853 + $0xcc] sm:$0xf]
        %v7911 = vld [vmem:[%s1853 + $0xd0] sm:$0xf]
        %v7912 = vld [vmem:[%s1853 + $0xd4] sm:$0xf]
        %v7913 = vld [vmem:[%s1853 + $0xd8] sm:$0xf]
        %v7914 = vld [vmem:[%s1853 + $0xdc] sm:$0xf]
        %v7915 = vld [vmem:[%s1853 + $0xe0] sm:$0xf]
        %v7916 = vld [vmem:[%s1853 + $0xe4] sm:$0xf]
        %v7917 = vld [vmem:[%s1853 + $0xe8] sm:$0xf]
        %v7918 = vld [vmem:[%s1853 + $0xec] sm:$0xf]
        %v7919 = vld [vmem:[%s1853 + $0xf0] sm:$0xf]
        %v7920 = vld [vmem:[%s1853 + $0xf4] sm:$0xf]
        %v7921 = vld [vmem:[%s1853 + $0xf8] sm:$0xf]
        %v7922 = vld [vmem:[%s1853 + $0xfc] sm:$0xf]
        %v7923 = vld [vmem:[%s1856] sm:$0x1]
        %v7925 = vlaneseq
        %v7926 = vshrl.u32 %v7925, 7
        %v7927 = vsub.s32 0, %v7926
        %v7928 = vrot.slane %v7923, %v7927
        %v7994 = vunpack.c.l.b16 %v7859
        %v7995 = vunpack.c.l.b16 %v7860
        %v7996 = vunpack.c.l.b16 %v7861
        %v7997 = vunpack.c.l.b16 %v7862
        %v7998 = vunpack.c.l.b16 %v7863
        %v7999 = vunpack.c.l.b16 %v7864
        %v8000 = vunpack.c.l.b16 %v7865
        %v8001 = vunpack.c.l.b16 %v7866
        %v8002 = vunpack.c.l.b16 %v7867
        %v8003 = vunpack.c.l.b16 %v7868
        %v8004 = vunpack.c.l.b16 %v7869
        %v8005 = vunpack.c.l.b16 %v7870
        %v8006 = vunpack.c.l.b16 %v7871
        %v8007 = vunpack.c.l.b16 %v7872
        %v8008 = vunpack.c.l.b16 %v7873
        %v8009 = vunpack.c.l.b16 %v7874
        %v8010 = vunpack.c.l.b16 %v7875
        %v8011 = vunpack.c.l.b16 %v7876
        %v8012 = vunpack.c.l.b16 %v7877
        %v8013 = vunpack.c.l.b16 %v7878
        %v8014 = vunpack.c.l.b16 %v7879
        %v8015 = vunpack.c.l.b16 %v7880
        %v8016 = vunpack.c.l.b16 %v7881
        %v8017 = vunpack.c.l.b16 %v7882
        %v8018 = vunpack.c.l.b16 %v7883
        %v8019 = vunpack.c.l.b16 %v7884
        %v8020 = vunpack.c.l.b16 %v7885
        %v8021 = vunpack.c.l.b16 %v7886
        %v8022 = vunpack.c.l.b16 %v7887
        %v8023 = vunpack.c.l.b16 %v7888
        %v8024 = vunpack.c.l.b16 %v7889
        %v8025 = vunpack.c.l.b16 %v7890
        %v8026 = vunpack.c.l.b16 %v7891
        %v8027 = vunpack.c.l.b16 %v7892
        %v8028 = vunpack.c.l.b16 %v7893
        %v8029 = vunpack.c.l.b16 %v7894
        %v8030 = vunpack.c.l.b16 %v7895
        %v8031 = vunpack.c.l.b16 %v7896
        %v8032 = vunpack.c.l.b16 %v7897
        %v8033 = vunpack.c.l.b16 %v7898
        %v8034 = vunpack.c.l.b16 %v7899
        %v8035 = vunpack.c.l.b16 %v7900
        %v8036 = vunpack.c.l.b16 %v7901
        %v8037 = vunpack.c.l.b16 %v7902
        %v8038 = vunpack.c.l.b16 %v7903
        %v8039 = vunpack.c.l.b16 %v7904
        %v8040 = vunpack.c.l.b16 %v7905
        %v8041 = vunpack.c.l.b16 %v7906
        %v8042 = vunpack.c.l.b16 %v7907
        %v8043 = vunpack.c.l.b16 %v7908
        %v8044 = vunpack.c.l.b16 %v7909
        %v8045 = vunpack.c.l.b16 %v7910
        %v8046 = vunpack.c.l.b16 %v7911
        %v8047 = vunpack.c.l.b16 %v7912
        %v8048 = vunpack.c.l.b16 %v7913
        %v8049 = vunpack.c.l.b16 %v7914
        %v8050 = vunpack.c.l.b16 %v7915
        %v8051 = vunpack.c.l.b16 %v7916
        %v8052 = vunpack.c.l.b16 %v7917
        %v8053 = vunpack.c.l.b16 %v7918
        %v8054 = vunpack.c.l.b16 %v7919
        %v8055 = vunpack.c.l.b16 %v7920
        %v8056 = vunpack.c.l.b16 %v7921
        %v8057 = vunpack.c.l.b16 %v7922
        %v8058 = vpack.c.b16 %v7995, %v7994
        %v8059 = vpack.c.b16 %v7997, %v7996
        %v8060 = vpack.c.b16 %v7999, %v7998
        %v8061 = vpack.c.b16 %v8001, %v8000
        %v8062 = vpack.c.b16 %v8003, %v8002
        %v8063 = vpack.c.b16 %v8005, %v8004
        %v8064 = vpack.c.b16 %v8007, %v8006
        %v8065 = vpack.c.b16 %v8009, %v8008
        %v8066 = vpack.c.b16 %v8011, %v8010
        %v8067 = vpack.c.b16 %v8013, %v8012
        %v8068 = vpack.c.b16 %v8015, %v8014
        %v8069 = vpack.c.b16 %v8017, %v8016
        %v8070 = vpack.c.b16 %v8019, %v8018
        %v8071 = vpack.c.b16 %v8021, %v8020
        %v8072 = vpack.c.b16 %v8023, %v8022
        %v8073 = vpack.c.b16 %v8025, %v8024
        %v8074 = vpack.c.b16 %v8027, %v8026
        %v8075 = vpack.c.b16 %v8029, %v8028
        %v8076 = vpack.c.b16 %v8031, %v8030
        %v8077 = vpack.c.b16 %v8033, %v8032
        %v8078 = vpack.c.b16 %v8035, %v8034
        %v8079 = vpack.c.b16 %v8037, %v8036
        %v8080 = vpack.c.b16 %v8039, %v8038
        %v8081 = vpack.c.b16 %v8041, %v8040
        %v8082 = vpack.c.b16 %v8043, %v8042
        %v8083 = vpack.c.b16 %v8045, %v8044
        %v8084 = vpack.c.b16 %v8047, %v8046
        %v8085 = vpack.c.b16 %v8049, %v8048
        %v8086 = vpack.c.b16 %v8051, %v8050
        %v8087 = vpack.c.b16 %v8053, %v8052
        %v8088 = vpack.c.b16 %v8055, %v8054
        %v8089 = vpack.c.b16 %v8057, %v8056
        %8122 = vmatprep.subr.bf16.mxu0 0
        %8123 = vmatpush1.bf16.msra.mxu0 %v8065
        %8124 = vmatprep.subr.bf16.mxu0 0
        %8125 = vmatpush1.bf16.msra.mxu0 %v8064
        %8126 = vmatprep.subr.bf16.mxu0 0
        %8127 = vmatpush1.bf16.msra.mxu0 %v8063
        %8128 = vmatprep.subr.bf16.mxu0 0
        %8129 = vmatpush1.bf16.msra.mxu0 %v8062
        %8130 = vmatprep.subr.bf16.mxu0 0
        %8131 = vmatpush1.bf16.msra.mxu0 %v8061
        %8132 = vmatprep.subr.bf16.mxu0 0
        %8133 = vmatpush1.bf16.msra.mxu0 %v8060
        %8134 = vmatprep.subr.bf16.mxu0 0
        %8135 = vmatpush1.bf16.msra.mxu0 %v8059
        %8136 = vmatprep.subr.bf16.mxu0 0
        %8137 = vmatpush1.bf16.msra.mxu0 %v8058
        %8138 = vmatprep.subr.bf16.mxu0 0
        %8139 = vmatpush2.bf16.msra.mxu0 %v8073
        %8140 = vmatprep.subr.bf16.mxu0 0
        %8141 = vmatpush2.bf16.msra.mxu0 %v8072
        %8142 = vmatprep.subr.bf16.mxu0 0
        %8143 = vmatpush2.bf16.msra.mxu0 %v8071
        %8144 = vmatprep.subr.bf16.mxu0 0
        %8145 = vmatpush2.bf16.msra.mxu0 %v8070
        %8146 = vmatprep.subr.bf16.mxu0 0
        %8147 = vmatpush2.bf16.msra.mxu0 %v8069
        %8148 = vmatprep.subr.bf16.mxu0 0
        %8149 = vmatpush2.bf16.msra.mxu0 %v8068
        %8150 = vmatprep.subr.bf16.mxu0 0
        %8151 = vmatpush2.bf16.msra.mxu0 %v8067
        %8152 = vmatprep.subr.bf16.mxu0 0
        %8153 = vmatpush2.bf16.msra.mxu0 %v8066
        %8154 = vmatprep.mubr.bf16.mxu0 %v7856
        %8155 = vmatmul.mubr.bf16.gmra.mxu0 %v7855
        %v8156 = vpop.f32.mrf.mxu0
        %v8157 = vadd.f32 %v7928, %v8156
        %v8158 = vpop.f32.mrf.mxu0
        %v8159 = vpop.f32.mrf.mxu0
        %v8160 = vpop.f32.mrf.mxu0
        %8161 = vdwg.mxu0
        %8162 = vmatprep.subr.bf16.mxu0 0
        %8163 = vmatpush1.bf16.msra.mxu0 %v8081
        %8164 = vmatprep.subr.bf16.mxu0 0
        %8165 = vmatpush1.bf16.msra.mxu0 %v8080
        %8166 = vmatprep.subr.bf16.mxu0 0
        %8167 = vmatpush1.bf16.msra.mxu0 %v8079
        %8168 = vmatprep.subr.bf16.mxu0 0
        %8169 = vmatpush1.bf16.msra.mxu0 %v8078
        %8170 = vmatprep.subr.bf16.mxu0 0
        %8171 = vmatpush1.bf16.msra.mxu0 %v8077
        %8172 = vmatprep.subr.bf16.mxu0 0
        %8173 = vmatpush1.bf16.msra.mxu0 %v8076
        %8174 = vmatprep.subr.bf16.mxu0 0
        %8175 = vmatpush1.bf16.msra.mxu0 %v8075
        %8176 = vmatprep.subr.bf16.mxu0 0
        %8177 = vmatpush1.bf16.msra.mxu0 %v8074
        %8178 = vmatprep.subr.bf16.mxu0 0
        %8179 = vmatpush2.bf16.msra.mxu0 %v8089
        %8180 = vmatprep.subr.bf16.mxu0 0
        %8181 = vmatpush2.bf16.msra.mxu0 %v8088
        %8182 = vmatprep.subr.bf16.mxu0 0
        %8183 = vmatpush2.bf16.msra.mxu0 %v8087
        %8184 = vmatprep.subr.bf16.mxu0 0
        %8185 = vmatpush2.bf16.msra.mxu0 %v8086
        %8186 = vmatprep.subr.bf16.mxu0 0
        %8187 = vmatpush2.bf16.msra.mxu0 %v8085
        %8188 = vmatprep.subr.bf16.mxu0 0
        %8189 = vmatpush2.bf16.msra.mxu0 %v8084
        %8190 = vmatprep.subr.bf16.mxu0 0
        %8191 = vmatpush2.bf16.msra.mxu0 %v8083
        %8192 = vmatprep.subr.bf16.mxu0 0
        %8193 = vmatpush2.bf16.msra.mxu0 %v8082
        %8194 = vmatprep.mubr.bf16.mxu0 %v7858
        %8195 = vmatmul.mubr.bf16.gmra.mxu0 %v7857
        %v8196 = vpop.f32.mrf.mxu0
        %v8197 = vadd.f32 %v8157, %v8196
        %v8198 = vpop.f32.mrf.mxu0
        %v8199 = vpop.f32.mrf.mxu0
        %v8200 = vpop.f32.mrf.mxu0
        %8201 = vdwg.mxu0
        %8202 = vst [vmem:[%s1860] sm:$0x3] %v8197
        %p8203 = scmp.lt.s32.totalorder %s16, 1
        %s8204 = scalar_select %p8203, %s16, 1
        %s8205 = smul.addr %s8204, 2
        %s8206 = scalar_lea.vmem %s5, %s8205
        // Predicated region
        $region64: #{cnn_forward.7} parent=58 // pred_check
          %p8207 = pneg %p159
        $region65: #{cnn_forward.7} parent=58 // pred_check_branch
          %8209 = sbr.rel (%p8207) target = $region67
        $region66: #{cnn_forward.7} parent=58 // pred_region
          _
        $region67: #{cnn_forward.7} parent=58 // pred_fallthru
          _
      $region59: #{cnn_forward.7} parent=5 // pred_fallthru
        _
      %p8210 = scmp.le.s32.totalorder 2, %s11
      // Predicated region
      $region68: #{cnn_forward.7} parent=5 // pred_check
        %p8211 = pneg %p8210
      $region69: #{cnn_forward.7} parent=5 // pred_check_branch
        %8213 = sbr.rel (%p8211) target = $region71
      $region70: #{cnn_forward.7} parent=5 // pred_region
        %s8214 = ssub.s32 %s11, 2
        // Predicated region
        $region72: #{cnn_forward.7} parent=70 // pred_check
          %p8215 = pneg %p165
        $region73: #{cnn_forward.7} parent=70 // pred_check_branch
          %8217 = sbr.rel (%p8215) target = $region75
        $region74: #{cnn_forward.7} parent=70 // pred_region
          %p8218 = scmp.lt.s32.totalorder %s17, 1
          %s8219 = scalar_select %p8218, %s17, 1
          %s8220 = smul.addr %s8219, 2
          %s8221 = scalar_lea.vmem %s5, %s8220
        $region75: #{cnn_forward.7} parent=70 // pred_fallthru
          _
      $region71: #{cnn_forward.7} parent=5 // pred_fallthru
        _
    $region6: #{cnn_forward.7} parent=1 // loop_footer
      %s15 = sadd.s32 1, %s11
    $region7: #{cnn_forward.7} parent=1 // loop_footer_branch
      %10 = sbr.rel target = $region3
    $region8: #{cnn_forward.7} parent=1 // loop_exit
      _

</llo_original>
